<compile_context>
chip_gen: v6e
topology: v6e:2x2x1
jax: 0.10.0
libtpu: 0.0.40
codegen_flags: <defaults>
</compile_context>

<pallas_src>
import functools

import jax
import jax.numpy as jnp
import numpy as np
from jax.experimental import pallas as pl
from jax.experimental.pallas import tpu as pltpu

LANE = 128
_VMEM_LIMIT = 32 * 1024 * 1024  # safe on v5e/v6e (128 MiB) and v7x (64 MiB)


def _round_up(x, m):
    return -(-x // m) * m


def _cpad(c):
    return _round_up(c, LANE)


def _choose_tm(m):
    """Largest tile that divides m and still leaves >=2 programs (megacore)."""
    for tm in (256, 128, 64, 32, 16, 8):
        if m % tm == 0 and m // tm >= 2:
            return tm
    return m


# ----------------------------------------------------------------------------
# Pallas kernels
# ----------------------------------------------------------------------------
def _mm_bn_kernel(x_ref, w_ref, s_ref, b_ref, o_ref, *, relu):
    """out = maybe_relu((x @ w) * scale + bias); bf16 operands, f32 accumulate."""
    y = jnp.dot(x_ref[...], w_ref[...], preferred_element_type=jnp.float32)
    y = y * s_ref[...] + b_ref[...]
    if relu:
        y = jnp.maximum(y, 0.0)
    o_ref[...] = y.astype(o_ref.dtype)


def _mm2_bn_res_kernel(p_ref, w2_ref, s2_ref, b2_ref,
                       w3_ref, s3_ref, b3_ref, r_ref, o_ref):
    """Fused bottleneck tail: relu(BN(p@W2)) @ W3 -> BN -> +residual -> relu."""
    t = jnp.dot(p_ref[...], w2_ref[...], preferred_element_type=jnp.float32)
    t = jnp.maximum(t * s2_ref[...] + b2_ref[...], 0.0)
    y = jnp.dot(t.astype(w3_ref.dtype), w3_ref[...],
                preferred_element_type=jnp.float32)
    y = y * s3_ref[...] + b3_ref[...] + r_ref[...].astype(jnp.float32)
    o_ref[...] = jnp.maximum(y, 0.0).astype(o_ref.dtype)


def _max_pool_kernel(x_ref, o_ref):
    o_ref[...] = jnp.max(x_ref[...], axis=1)


# ----------------------------------------------------------------------------
# pallas_call wrappers
# ----------------------------------------------------------------------------
def fused_matmul(x, w, scale, bias, relu=True, out_dtype=jnp.bfloat16):
    """x: [M,K] bf16, w: [K,N] bf16 (pre-padded), scale/bias: [1,N] f32."""
    M, K = x.shape
    K2, N = w.shape
    assert K == K2 and K % LANE == 0 and N % LANE == 0, (x.shape, w.shape)
    Mp = _round_up(M, 8)
    if Mp != M:  # only triggers for the tiny M=2 layers
        x = jnp.pad(x, ((0, Mp - M), (0, 0)))
    tm = _choose_tm(Mp)

    flops = 2 * Mp * K * N
    bytes_accessed = 2 * (Mp * K + K * N + Mp * N) + 8 * N

    out = pl.pallas_call(
        functools.partial(_mm_bn_kernel, relu=relu),
        out_shape=jax.ShapeDtypeStruct((Mp, N), out_dtype),
        grid_spec=pltpu.PrefetchScalarGridSpec(
            num_scalar_prefetch=0,
            grid=(Mp // tm,),
            in_specs=[
                pl.BlockSpec((tm, K), lambda i: (i, 0)),
                pl.BlockSpec((K, N), lambda i: (0, 0)),
                pl.BlockSpec((1, N), lambda i: (0, 0)),
                pl.BlockSpec((1, N), lambda i: (0, 0)),
            ],
            out_specs=pl.BlockSpec((tm, N), lambda i: (i, 0)),
        ),
        compiler_params=pltpu.CompilerParams(
            dimension_semantics=("parallel",),
            vmem_limit_bytes=_VMEM_LIMIT),
        cost_estimate=pl.CostEstimate(flops=flops, transcendentals=0,
                                      bytes_accessed=bytes_accessed),
    )(x, w, scale, bias)
    if Mp != M:
        out = out[:M]
    return out


def fused_conv2_conv3_res(patches, w2, s2, b2, w3, s3, b3, residual,
                          out_dtype=jnp.bfloat16):
    """One pallas_call for 3x3 conv (as patch matmul) + 1x1 expand + residual."""
    M, K = patches.shape
    K2, C2 = w2.shape
    C2b, C3 = w3.shape
    assert K == K2 and C2 == C2b and residual.shape == (M, C3)
    Mp = _round_up(M, 8)
    if Mp != M:
        patches = jnp.pad(patches, ((0, Mp - M), (0, 0)))
        residual = jnp.pad(residual, ((0, Mp - M), (0, 0)))
    tm = _choose_tm(Mp)

    flops = 2 * Mp * K * C2 + 2 * Mp * C2 * C3
    bytes_accessed = 2 * (Mp * K + K * C2 + C2 * C3 + 2 * Mp * C3)

    out = pl.pallas_call(
        _mm2_bn_res_kernel,
        out_shape=jax.ShapeDtypeStruct((Mp, C3), out_dtype),
        grid_spec=pltpu.PrefetchScalarGridSpec(
            num_scalar_prefetch=0,
            grid=(Mp // tm,),
            in_specs=[
                pl.BlockSpec((tm, K), lambda i: (i, 0)),
                pl.BlockSpec((K, C2), lambda i: (0, 0)),
                pl.BlockSpec((1, C2), lambda i: (0, 0)),
                pl.BlockSpec((1, C2), lambda i: (0, 0)),
                pl.BlockSpec((C2, C3), lambda i: (0, 0)),
                pl.BlockSpec((1, C3), lambda i: (0, 0)),
                pl.BlockSpec((1, C3), lambda i: (0, 0)),
                pl.BlockSpec((tm, C3), lambda i: (i, 0)),
            ],
            out_specs=pl.BlockSpec((tm, C3), lambda i: (i, 0)),
        ),
        compiler_params=pltpu.CompilerParams(
            dimension_semantics=("parallel",),
            vmem_limit_bytes=_VMEM_LIMIT),
        cost_estimate=pl.CostEstimate(flops=flops, transcendentals=0,
                                      bytes_accessed=bytes_accessed),
    )(patches, w2, s2, b2, w3, s3, b3, residual)
    if Mp != M:
        out = out[:M]
    return out


def max_pool_windows(x3):
    """x3: [M, R, C] -> max over R, tiled over M."""
    M, R, C = x3.shape
    tm = _choose_tm(M)
    return pl.pallas_call(
        _max_pool_kernel,
        out_shape=jax.ShapeDtypeStruct((M, C), x3.dtype),
        grid_spec=pltpu.PrefetchScalarGridSpec(
            num_scalar_prefetch=0,
            grid=(M // tm,),
            in_specs=[pl.BlockSpec((tm, R, C), lambda i: (i, 0, 0))],
            out_specs=pl.BlockSpec((tm, C), lambda i: (i, 0)),
        ),
        compiler_params=pltpu.CompilerParams(
            dimension_semantics=("parallel",),
            vmem_limit_bytes=_VMEM_LIMIT),
        cost_estimate=pl.CostEstimate(flops=M * R * C, transcendentals=0,
                                      bytes_accessed=2 * (M * R * C + M * C)),
    )(x3)


# ----------------------------------------------------------------------------
# JAX glue (bf16 activations, channel-padded end-to-end)
# ----------------------------------------------------------------------------
def _im2col(x, kh, kw, stride, pad, pad_value=0.0):
    """x: NHWC -> patches [N, Ho, Wo, kh*kw*C] ordered (dy, dx, C)."""
    N, H, W, C = x.shape
    xp = jnp.pad(x, ((0, 0), (pad, pad), (pad, pad), (0, 0)),
                 constant_values=pad_value)
    Ho = (H + 2 * pad - kh) // stride + 1
    Wo = (W + 2 * pad - kw) // stride + 1
    cols = []
    for dy in range(kh):
        for dx in range(kw):
            patch = jax.lax.slice(
                xp,
                (0, dy, dx, 0),
                (N, dy + (Ho - 1) * stride + 1, dx + (Wo - 1) * stride + 1, C),
                (1, stride, stride, 1))
            cols.append(patch)
    return jnp.concatenate(cols, axis=-1), Ho, Wo


def conv1x1_bn(x, w, scale, bias, stride=1, relu=True):
    N, H, W, C = x.shape
    if stride > 1:
        x = x[:, ::stride, ::stride, :]
        H, W = x.shape[1], x.shape[2]
    y = fused_matmul(x.reshape(N * H * W, C), w, scale, bias, relu=relu)
    return y.reshape(N, H, W, w.shape[1])


def stem_conv_bn(x, w, scale, bias):
    """7x7 stride-2 pad-3 conv + BN + ReLU on the raw image."""
    N = x.shape[0]
    patches, Ho, Wo = _im2col(x, 7, 7, 2, 3)
    p2 = patches.reshape(N * Ho * Wo, patches.shape[-1])
    Kp = w.shape[0]
    if p2.shape[1] != Kp:  # 147 -> 256, one tiny pad per forward
        p2 = jnp.pad(p2, ((0, 0), (0, Kp - p2.shape[1])))
    y = fused_matmul(p2, w, scale, bias, relu=True)
    return y.reshape(N, Ho, Wo, w.shape[1])


def maxpool_3x3_s2(x):
    N, H, W, C = x.shape
    patches, Ho, Wo = _im2col(x, 3, 3, 2, 1, pad_value=-jnp.inf)
    y = max_pool_windows(patches.reshape(N * Ho * Wo, 9, C))
    return y.reshape(N, Ho, Wo, C)


def bottleneck(x, blk):
    N = x.shape[0]
    s = blk["stride"]
    # 1x1 reduce + BN + ReLU (one pallas_call)
    h1 = conv1x1_bn(x, blk["w1"], blk["s1"], blk["b1"], stride=1, relu=True)
    # identity / downsample path
    if "wd" in blk:
        identity = conv1x1_bn(x, blk["wd"], blk["sd"], blk["bd"],
                              stride=s, relu=False)
    else:
        identity = x
    Ho, Wo = identity.shape[1], identity.shape[2]
    cout = blk["w3"].shape[1]
    # 3x3 conv + BN + ReLU + 1x1 expand + BN + residual + ReLU (one pallas_call)
    patches, Ho2, Wo2 = _im2col(h1, 3, 3, s, 1)
    assert (Ho2, Wo2) == (Ho, Wo)
    M = N * Ho * Wo
    out = fused_conv2_conv3_res(
        patches.reshape(M, patches.shape[-1]),
        blk["w2"], blk["s2"], blk["b2"],
        blk["w3"], blk["s3"], blk["b3"],
        identity.reshape(M, cout))
    return out.reshape(N, Ho, Wo, cout)


# ----------------------------------------------------------------------------
# Deterministic parameter construction (synthetic weights, no checkpoint)
# ----------------------------------------------------------------------------
class _KeyGen:
    def __init__(self, key):
        self._key = key

    def __call__(self):
        self._key, k = jax.random.split(self._key)
        return k


def _bn_fold(gamma, beta, mean, var, eps=1e-5):
    scale = gamma / jnp.sqrt(var + eps)
    return scale, beta - mean * scale


def _init_conv(kg, kh, kw, cin, cout):
    fan_in = kh * kw * cin
    return (jax.random.normal(kg(), (kh, kw, cin, cout), jnp.float32)
            * (1.0 / np.sqrt(fan_in)))


def _init_bn(kg, c):
    gamma = 1.0 + 0.1 * jax.random.normal(kg(), (c,), jnp.float32)
    beta = 0.1 * jax.random.normal(kg(), (c,), jnp.float32)
    mean = 0.1 * jax.random.normal(kg(), (c,), jnp.float32)
    var = 0.9 + 0.2 * jax.random.uniform(kg(), (c,), jnp.float32)
    return _bn_fold(gamma, beta, mean, var)


def _pack_conv(w, cin_pad, cout_pad, kpad_to=None):
    """[kh,kw,cin,cout] f32 -> bf16 [K, cout_pad] with zero-padded cin/cout."""
    kh, kw, cin, cout = w.shape
    w = jnp.pad(w, ((0, 0), (0, 0), (0, cin_pad - cin), (0, cout_pad - cout)))
    w2 = w.reshape(kh * kw * cin_pad, cout_pad)
    if kpad_to is not None and w2.shape[0] != kpad_to:
        w2 = jnp.pad(w2, ((0, kpad_to - w2.shape[0]), (0, 0)))
    return w2.astype(jnp.bfloat16)


def _pack_bn(sb, cout_pad):
    s, b = sb
    c = s.shape[0]
    s = jnp.pad(s, (0, cout_pad - c)).reshape(1, cout_pad)
    b = jnp.pad(b, (0, cout_pad - c)).reshape(1, cout_pad)
    return s.astype(jnp.float32), b.astype(jnp.float32)


def build_params(key, width=16, embed_dim=32, in_ch=3):
    """ResNet-50 structure (3/4/6/3 bottlenecks, expansion 4), scaled width.
    Weights are BN-folded, reshaped to [K, Cout] and lane-padded at build time."""
    kg = _KeyGen(key)
    expansion = 4
    params = {}
    wpad = _cpad(width)
    params["conv1_w"] = _pack_conv(_init_conv(kg, 7, 7, in_ch, width),
                                   cin_pad=in_ch, cout_pad=wpad,
                                   kpad_to=_round_up(7 * 7 * in_ch, LANE))
    params["bn1"] = _pack_bn(_init_bn(kg, width), wpad)

    inplanes = width
    layers = []
    for li, (nblocks, planes) in enumerate(
            zip([3, 4, 6, 3], [width, 2 * width, 4 * width, 8 * width])):
        layer_stride = 1 if li == 0 else 2
        blocks = []
        for bi in range(nblocks):
            s = layer_stride if bi == 0 else 1
            cinp = _cpad(inplanes)
            pp = _cpad(planes)
            op = _cpad(planes * expansion)
            blk = {"stride": s}
            blk["w1"] = _pack_conv(_init_conv(kg, 1, 1, inplanes, planes), cinp, pp)
            blk["s1"], blk["b1"] = _pack_bn(_init_bn(kg, planes), pp)
            blk["w2"] = _pack_conv(_init_conv(kg, 3, 3, planes, planes), pp, pp)
            blk["s2"], blk["b2"] = _pack_bn(_init_bn(kg, planes), pp)
            blk["w3"] = _pack_conv(_init_conv(kg, 1, 1, planes, planes * expansion),
                                   pp, op)
            blk["s3"], blk["b3"] = _pack_bn(_init_bn(kg, planes * expansion), op)
            if s != 1 or inplanes != planes * expansion:
                blk["wd"] = _pack_conv(
                    _init_conv(kg, 1, 1, inplanes, planes * expansion), cinp, op)
                blk["sd"], blk["bd"] = _pack_bn(_init_bn(kg, planes * expansion), op)
            blocks.append(blk)
            inplanes = planes * expansion
        layers.append(blocks)
    params["layers"] = layers

    feat = inplanes                       # 8 * width * expansion
    featp = _cpad(feat)
    ep = _cpad(embed_dim)
    fc_w = (jax.random.normal(kg(), (feat, embed_dim), jnp.float32)
            * (1.0 / np.sqrt(feat)))
    fc_b = 0.01 * jax.random.normal(kg(), (embed_dim,), jnp.float32)
    params["fc_w"] = jnp.pad(fc_w, ((0, featp - feat),
                                    (0, ep - embed_dim))).astype(jnp.bfloat16)
    params["fc_scale"] = jnp.ones((1, ep), jnp.float32)
    params["fc_bias"] = jnp.pad(fc_b, (0, ep - embed_dim)).reshape(1, ep)
    params["embed_dim"] = embed_dim
    params["feat_dim"] = feat
    return params


# ----------------------------------------------------------------------------
# Forward pass (== Network.forward(x, labels=None))
# ----------------------------------------------------------------------------
def forward(params, x_nchw, normalize=False):
    # PyTorch conv input is NCHW; transpose once to NHWC and cast to bf16.
    x = jnp.transpose(x_nchw, (0, 2, 3, 1)).astype(jnp.bfloat16)

    s1, b1 = params["bn1"]
    x = stem_conv_bn(x, params["conv1_w"], s1, b1)
    x = maxpool_3x3_s2(x)

    for blocks in params["layers"]:
        for blk in blocks:
            x = bottleneck(x, blk)

    # global average pool (tiny: jnp.mean in the wrapper) + flatten
    enc_full = jnp.mean(x.astype(jnp.float32), axis=(1, 2))      # [N, Cpad]
    enc_out = enc_full[:, :params["feat_dim"]]                    # == x.view(N,-1)

    emb = fused_matmul(enc_full.astype(jnp.bfloat16), params["fc_w"],
                       params["fc_scale"], params["fc_bias"], relu=False,
                       out_dtype=jnp.float32)
    emb = emb[:, :params["embed_dim"]]
    if normalize:  # 'normalize' in opt.arch — not set for 'mixup_resnet50'
        emb = emb / jnp.sqrt(jnp.sum(emb * emb, axis=-1, keepdims=True) + 1e-12)
    return emb, enc_out


if __name__ == "__main__":
    key = jax.random.PRNGKey(0)
    pkey, xkey = jax.random.split(key)

    width, embed_dim = 16, 32
    params = build_params(pkey, width=width, embed_dim=embed_dim, in_ch=3)

    x = jax.random.normal(xkey, (2, 3, 32, 32), jnp.float32)  # NCHW like PyTorch

    fwd = jax.jit(functools.partial(forward, params))
    emb, enc = fwd(x)
    emb, enc = jax.block_until_ready((emb, enc))

    assert emb.shape == (2, embed_dim), emb.shape
    assert enc.shape == (2, width * 8 * 4), enc.shape
    assert bool(jnp.all(jnp.isfinite(emb))) and bool(jnp.all(jnp.isfinite(enc)))
    print("KERNEL_OK")
</pallas_src>

<mosaic_0001>
module attributes {stable_mosaic.version = 11 : i64} {
  func.func @_mm_bn_kernel(%arg0: i32, %arg1: memref<256x256xbf16, #tpu.memory_space<vmem>>, %arg2: memref<256x128xbf16, #tpu.memory_space<vmem>>, %arg3: memref<1x128xf32, #tpu.memory_space<vmem>>, %arg4: memref<1x128xf32, #tpu.memory_space<vmem>>, %arg5: memref<256x128xbf16, #tpu.memory_space<vmem>>) attributes {dimension_semantics = [#tpu.dimension_semantics<parallel>], iteration_bounds = array<i64: 2>, scalar_prefetch = 0 : i64, scratch_operands = 0 : i64, tpu.core_type = #tpu.core_type<tc>, window_params = [{transform_indices = @transform_0, window_bounds = array<i64: 256, 256>}, {pipeline_mode = #tpu.pipeline_mode<synchronous>, transform_indices = @transform_1, window_bounds = array<i64: 256, 128>}, {pipeline_mode = #tpu.pipeline_mode<synchronous>, transform_indices = @transform_2, window_bounds = array<i64: 1, 128>}, {pipeline_mode = #tpu.pipeline_mode<synchronous>, transform_indices = @transform_3, window_bounds = array<i64: 1, 128>}, {transform_indices = @transform_4, window_bounds = array<i64: 256, 128>}]} {
    %c0 = arith.constant 0 : index
    %c0_0 = arith.constant 0 : index
    %0 = vector.load %arg1[%c0, %c0_0] : memref<256x256xbf16, #tpu.memory_space<vmem>>, vector<256x256xbf16>
    %c0_1 = arith.constant 0 : index
    %c0_2 = arith.constant 0 : index
    %1 = vector.load %arg2[%c0_1, %c0_2] : memref<256x128xbf16, #tpu.memory_space<vmem>>, vector<256x128xbf16>
    %cst = arith.constant dense<0.000000e+00> : vector<256x128xf32>
    %2 = tpu.matmul %0, %1, %cst {dimension_numbers = #tpu.dot_dimension_numbers<[1], [0], [0], [1], [0, 0, 1, 1], [], []>} : vector<256x256xbf16>, vector<256x128xbf16>, vector<256x128xf32> -> vector<256x128xf32>
    %c0_3 = arith.constant 0 : index
    %c0_4 = arith.constant 0 : index
    %3 = vector.load %arg3[%c0_3, %c0_4] : memref<1x128xf32, #tpu.memory_space<vmem>>, vector<1x128xf32>
    %4 = vector.broadcast %3 : vector<1x128xf32> to vector<256x128xf32>
    %5 = arith.mulf %2, %4 : vector<256x128xf32>
    %c0_5 = arith.constant 0 : index
    %c0_6 = arith.constant 0 : index
    %6 = vector.load %arg4[%c0_5, %c0_6] : memref<1x128xf32, #tpu.memory_space<vmem>>, vector<1x128xf32>
    %7 = vector.broadcast %6 : vector<1x128xf32> to vector<256x128xf32>
    %8 = arith.addf %5, %7 : vector<256x128xf32>
    %cst_7 = arith.constant 0.000000e+00 : f32
    %9 = vector.broadcast %cst_7 : f32 to vector<256x128xf32>
    %10 = arith.maximumf %8, %9 : vector<256x128xf32>
    %11 = arith.truncf %10 : vector<256x128xf32> to vector<256x128xbf16>
    %c0_8 = arith.constant 0 : index
    %c0_9 = arith.constant 0 : index
    %12 = vector.load %arg5[%c0_8, %c0_9] : memref<256x128xbf16, #tpu.memory_space<vmem>>, vector<256x128xbf16>
    tpu.vector_store %arg5[%c0_8, %c0_9], %11 {strides = array<i32>} : memref<256x128xbf16, #tpu.memory_space<vmem>>, vector<256x128xbf16>,
    return
  }
  func.func @transform_0(%arg0: i32) -> (i32, i32) {
    %c0_i32 = arith.constant 0 : i32
    %c0_i32_0 = arith.constant 0 : i32
    return %arg0, %c0_i32 : i32, i32
  }
  func.func @transform_1(%arg0: i32) -> (i32, i32) {
    %c0_i32 = arith.constant 0 : i32
    %c0_i32_0 = arith.constant 0 : i32
    %c0_i32_1 = arith.constant 0 : i32
    return %c0_i32, %c0_i32_0 : i32, i32
  }
  func.func @transform_2(%arg0: i32) -> (i32, i32) {
    %c0_i32 = arith.constant 0 : i32
    %c0_i32_0 = arith.constant 0 : i32
    %c0_i32_1 = arith.constant 0 : i32
    return %c0_i32, %c0_i32_0 : i32, i32
  }
  func.func @transform_3(%arg0: i32) -> (i32, i32) {
    %c0_i32 = arith.constant 0 : i32
    %c0_i32_0 = arith.constant 0 : i32
    %c0_i32_1 = arith.constant 0 : i32
    return %c0_i32, %c0_i32_0 : i32, i32
  }
  func.func @transform_4(%arg0: i32) -> (i32, i32) {
    %c0_i32 = arith.constant 0 : i32
    %c0_i32_0 = arith.constant 0 : i32
    return %arg0, %c0_i32 : i32, i32
  }
}

module attributes {stable_mosaic.version = 11 : i64} {
  func.func @_max_pool_kernel(%arg0: i32, %arg1: memref<64x9x128xbf16, #tpu.memory_space<vmem>>, %arg2: memref<64x128xbf16, #tpu.memory_space<vmem>>) attributes {dimension_semantics = [#tpu.dimension_semantics<parallel>], iteration_bounds = array<i64: 2>, scalar_prefetch = 0 : i64, scratch_operands = 0 : i64, tpu.core_type = #tpu.core_type<tc>, window_params = [{transform_indices = @transform_0, window_bounds = array<i64: 64, 9, 128>}, {transform_indices = @transform_1, window_bounds = array<i64: 64, 128>}]} {
    %c0 = arith.constant 0 : index
    %c0_0 = arith.constant 0 : index
    %c0_1 = arith.constant 0 : index
    %0 = vector.load %arg1[%c0, %c0_0, %c0_1] : memref<64x9x128xbf16, #tpu.memory_space<vmem>>, vector<64x9x128xbf16>
    %cst = arith.constant dense<0xFF80> : vector<64x128xbf16>
    %1 = vector.multi_reduction <maximumf>, %0, %cst [1] : vector<64x9x128xbf16> to vector<64x128xbf16>
    %c0_2 = arith.constant 0 : index
    %c0_3 = arith.constant 0 : index
    %2 = vector.load %arg2[%c0_2, %c0_3] : memref<64x128xbf16, #tpu.memory_space<vmem>>, vector<64x128xbf16>
    tpu.vector_store %arg2[%c0_2, %c0_3], %1 {strides = array<i32>} : memref<64x128xbf16, #tpu.memory_space<vmem>>, vector<64x128xbf16>,
    return
  }
  func.func @transform_0(%arg0: i32) -> (i32, i32, i32) {
    %c0_i32 = arith.constant 0 : i32
    %c0_i32_0 = arith.constant 0 : i32
    %c0_i32_1 = arith.constant 0 : i32
    return %arg0, %c0_i32, %c0_i32_0 : i32, i32, i32
  }
  func.func @transform_1(%arg0: i32) -> (i32, i32) {
    %c0_i32 = arith.constant 0 : i32
    %c0_i32_0 = arith.constant 0 : i32
    return %arg0, %c0_i32 : i32, i32
  }
}

module attributes {stable_mosaic.version = 11 : i64} {
  func.func @_mm_bn_kernel(%arg0: i32, %arg1: memref<64x128xbf16, #tpu.memory_space<vmem>>, %arg2: memref<128x128xbf16, #tpu.memory_space<vmem>>, %arg3: memref<1x128xf32, #tpu.memory_space<vmem>>, %arg4: memref<1x128xf32, #tpu.memory_space<vmem>>, %arg5: memref<64x128xbf16, #tpu.memory_space<vmem>>) attributes {dimension_semantics = [#tpu.dimension_semantics<parallel>], iteration_bounds = array<i64: 2>, scalar_prefetch = 0 : i64, scratch_operands = 0 : i64, tpu.core_type = #tpu.core_type<tc>, window_params = [{transform_indices = @transform_0, window_bounds = array<i64: 64, 128>}, {pipeline_mode = #tpu.pipeline_mode<synchronous>, transform_indices = @transform_1, window_bounds = array<i64: 128, 128>}, {pipeline_mode = #tpu.pipeline_mode<synchronous>, transform_indices = @transform_2, window_bounds = array<i64: 1, 128>}, {pipeline_mode = #tpu.pipeline_mode<synchronous>, transform_indices = @transform_3, window_bounds = array<i64: 1, 128>}, {transform_indices = @transform_4, window_bounds = array<i64: 64, 128>}]} {
    %c0 = arith.constant 0 : index
    %c0_0 = arith.constant 0 : index
    %0 = vector.load %arg1[%c0, %c0_0] : memref<64x128xbf16, #tpu.memory_space<vmem>>, vector<64x128xbf16>
    %c0_1 = arith.constant 0 : index
    %c0_2 = arith.constant 0 : index
    %1 = vector.load %arg2[%c0_1, %c0_2] : memref<128x128xbf16, #tpu.memory_space<vmem>>, vector<128x128xbf16>
    %cst = arith.constant dense<0.000000e+00> : vector<64x128xf32>
    %2 = tpu.matmul %0, %1, %cst {dimension_numbers = #tpu.dot_dimension_numbers<[1], [0], [0], [1], [0, 0, 1, 1], [], []>} : vector<64x128xbf16>, vector<128x128xbf16>, vector<64x128xf32> -> vector<64x128xf32>
    %c0_3 = arith.constant 0 : index
    %c0_4 = arith.constant 0 : index
    %3 = vector.load %arg3[%c0_3, %c0_4] : memref<1x128xf32, #tpu.memory_space<vmem>>, vector<1x128xf32>
    %4 = vector.broadcast %3 : vector<1x128xf32> to vector<64x128xf32>
    %5 = arith.mulf %2, %4 : vector<64x128xf32>
    %c0_5 = arith.constant 0 : index
    %c0_6 = arith.constant 0 : index
    %6 = vector.load %arg4[%c0_5, %c0_6] : memref<1x128xf32, #tpu.memory_space<vmem>>, vector<1x128xf32>
    %7 = vector.broadcast %6 : vector<1x128xf32> to vector<64x128xf32>
    %8 = arith.addf %5, %7 : vector<64x128xf32>
    %cst_7 = arith.constant 0.000000e+00 : f32
    %9 = vector.broadcast %cst_7 : f32 to vector<64x128xf32>
    %10 = arith.maximumf %8, %9 : vector<64x128xf32>
    %11 = arith.truncf %10 : vector<64x128xf32> to vector<64x128xbf16>
    %c0_8 = arith.constant 0 : index
    %c0_9 = arith.constant 0 : index
    %12 = vector.load %arg5[%c0_8, %c0_9] : memref<64x128xbf16, #tpu.memory_space<vmem>>, vector<64x128xbf16>
    tpu.vector_store %arg5[%c0_8, %c0_9], %11 {strides = array<i32>} : memref<64x128xbf16, #tpu.memory_space<vmem>>, vector<64x128xbf16>,
    return
  }
  func.func @transform_0(%arg0: i32) -> (i32, i32) {
    %c0_i32 = arith.constant 0 : i32
    %c0_i32_0 = arith.constant 0 : i32
    return %arg0, %c0_i32 : i32, i32
  }
  func.func @transform_1(%arg0: i32) -> (i32, i32) {
    %c0_i32 = arith.constant 0 : i32
    %c0_i32_0 = arith.constant 0 : i32
    %c0_i32_1 = arith.constant 0 : i32
    return %c0_i32, %c0_i32_0 : i32, i32
  }
  func.func @transform_2(%arg0: i32) -> (i32, i32) {
    %c0_i32 = arith.constant 0 : i32
    %c0_i32_0 = arith.constant 0 : i32
    %c0_i32_1 = arith.constant 0 : i32
    return %c0_i32, %c0_i32_0 : i32, i32
  }
  func.func @transform_3(%arg0: i32) -> (i32, i32) {
    %c0_i32 = arith.constant 0 : i32
    %c0_i32_0 = arith.constant 0 : i32
    %c0_i32_1 = arith.constant 0 : i32
    return %c0_i32, %c0_i32_0 : i32, i32
  }
  func.func @transform_4(%arg0: i32) -> (i32, i32) {
    %c0_i32 = arith.constant 0 : i32
    %c0_i32_0 = arith.constant 0 : i32
    return %arg0, %c0_i32 : i32, i32
  }
}

module attributes {stable_mosaic.version = 11 : i64} {
  func.func @_mm2_bn_res_kernel(%arg0: i32, %arg1: memref<64x1152xbf16, #tpu.memory_space<vmem>>, %arg2: memref<1152x128xbf16, #tpu.memory_space<vmem>>, %arg3: memref<1x128xf32, #tpu.memory_space<vmem>>, %arg4: memref<1x128xf32, #tpu.memory_space<vmem>>, %arg5: memref<128x128xbf16, #tpu.memory_space<vmem>>, %arg6: memref<1x128xf32, #tpu.memory_space<vmem>>, %arg7: memref<1x128xf32, #tpu.memory_space<vmem>>, %arg8: memref<64x128xbf16, #tpu.memory_space<vmem>>, %arg9: memref<64x128xbf16, #tpu.memory_space<vmem>>) attributes {dimension_semantics = [#tpu.dimension_semantics<parallel>], iteration_bounds = array<i64: 2>, scalar_prefetch = 0 : i64, scratch_operands = 0 : i64, tpu.core_type = #tpu.core_type<tc>, window_params = [{transform_indices = @transform_0, window_bounds = array<i64: 64, 1152>}, {pipeline_mode = #tpu.pipeline_mode<synchronous>, transform_indices = @transform_1, window_bounds = array<i64: 1152, 128>}, {pipeline_mode = #tpu.pipeline_mode<synchronous>, transform_indices = @transform_2, window_bounds = array<i64: 1, 128>}, {pipeline_mode = #tpu.pipeline_mode<synchronous>, transform_indices = @transform_3, window_bounds = array<i64: 1, 128>}, {pipeline_mode = #tpu.pipeline_mode<synchronous>, transform_indices = @transform_4, window_bounds = array<i64: 128, 128>}, {pipeline_mode = #tpu.pipeline_mode<synchronous>, transform_indices = @transform_5, window_bounds = array<i64: 1, 128>}, {pipeline_mode = #tpu.pipeline_mode<synchronous>, transform_indices = @transform_6, window_bounds = array<i64: 1, 128>}, {transform_indices = @transform_7, window_bounds = array<i64: 64, 128>}, {transform_indices = @transform_8, window_bounds = array<i64: 64, 128>}]} {
    %c0 = arith.constant 0 : index
    %c0_0 = arith.constant 0 : index
    %0 = vector.load %arg1[%c0, %c0_0] : memref<64x1152xbf16, #tpu.memory_space<vmem>>, vector<64x1152xbf16>
    %c0_1 = arith.constant 0 : index
    %c0_2 = arith.constant 0 : index
    %1 = vector.load %arg2[%c0_1, %c0_2] : memref<1152x128xbf16, #tpu.memory_space<vmem>>, vector<1152x128xbf16>
    %cst = arith.constant dense<0.000000e+00> : vector<64x128xf32>
    %2 = tpu.matmul %0, %1, %cst {dimension_numbers = #tpu.dot_dimension_numbers<[1], [0], [0], [1], [0, 0, 1, 1], [], []>} : vector<64x1152xbf16>, vector<1152x128xbf16>, vector<64x128xf32> -> vector<64x128xf32>
    %c0_3 = arith.constant 0 : index
    %c0_4 = arith.constant 0 : index
    %3 = vector.load %arg3[%c0_3, %c0_4] : memref<1x128xf32, #tpu.memory_space<vmem>>, vector<1x128xf32>
    %4 = vector.broadcast %3 : vector<1x128xf32> to vector<64x128xf32>
    %5 = arith.mulf %2, %4 : vector<64x128xf32>
    %c0_5 = arith.constant 0 : index
    %c0_6 = arith.constant 0 : index
    %6 = vector.load %arg4[%c0_5, %c0_6] : memref<1x128xf32, #tpu.memory_space<vmem>>, vector<1x128xf32>
    %7 = vector.broadcast %6 : vector<1x128xf32> to vector<64x128xf32>
    %8 = arith.addf %5, %7 : vector<64x128xf32>
    %cst_7 = arith.constant 0.000000e+00 : f32
    %9 = vector.broadcast %cst_7 : f32 to vector<64x128xf32>
    %10 = arith.maximumf %8, %9 : vector<64x128xf32>
    %11 = arith.truncf %10 : vector<64x128xf32> to vector<64x128xbf16>
    %c0_8 = arith.constant 0 : index
    %c0_9 = arith.constant 0 : index
    %12 = vector.load %arg5[%c0_8, %c0_9] : memref<128x128xbf16, #tpu.memory_space<vmem>>, vector<128x128xbf16>
    %cst_10 = arith.constant dense<0.000000e+00> : vector<64x128xf32>
    %13 = tpu.matmul %11, %12, %cst_10 {dimension_numbers = #tpu.dot_dimension_numbers<[1], [0], [0], [1], [0, 0, 1, 1], [], []>} : vector<64x128xbf16>, vector<128x128xbf16>, vector<64x128xf32> -> vector<64x128xf32>
    %c0_11 = arith.constant 0 : index
    %c0_12 = arith.constant 0 : index
    %14 = vector.load %arg6[%c0_11, %c0_12] : memref<1x128xf32, #tpu.memory_space<vmem>>, vector<1x128xf32>
    %15 = vector.broadcast %14 : vector<1x128xf32> to vector<64x128xf32>
    %16 = arith.mulf %13, %15 : vector<64x128xf32>
    %c0_13 = arith.constant 0 : index
    %c0_14 = arith.constant 0 : index
    %17 = vector.load %arg7[%c0_13, %c0_14] : memref<1x128xf32, #tpu.memory_space<vmem>>, vector<1x128xf32>
    %18 = vector.broadcast %17 : vector<1x128xf32> to vector<64x128xf32>
    %19 = arith.addf %16, %18 : vector<64x128xf32>
    %c0_15 = arith.constant 0 : index
    %c0_16 = arith.constant 0 : index
    %20 = vector.load %arg8[%c0_15, %c0_16] : memref<64x128xbf16, #tpu.memory_space<vmem>>, vector<64x128xbf16>
    %21 = arith.extf %20 : vector<64x128xbf16> to vector<64x128xf32>
    %22 = arith.addf %19, %21 : vector<64x128xf32>
    %cst_17 = arith.constant 0.000000e+00 : f32
    %23 = vector.broadcast %cst_17 : f32 to vector<64x128xf32>
    %24 = arith.maximumf %22, %23 : vector<64x128xf32>
    %25 = arith.truncf %24 : vector<64x128xf32> to vector<64x128xbf16>
    %c0_18 = arith.constant 0 : index
    %c0_19 = arith.constant 0 : index
    %26 = vector.load %arg9[%c0_18, %c0_19] : memref<64x128xbf16, #tpu.memory_space<vmem>>, vector<64x128xbf16>
    tpu.vector_store %arg9[%c0_18, %c0_19], %25 {strides = array<i32>} : memref<64x128xbf16, #tpu.memory_space<vmem>>, vector<64x128xbf16>,
    return
  }
  func.func @transform_0(%arg0: i32) -> (i32, i32) {
    %c0_i32 = arith.constant 0 : i32
    %c0_i32_0 = arith.constant 0 : i32
    return %arg0, %c0_i32 : i32, i32
  }
  func.func @transform_1(%arg0: i32) -> (i32, i32) {
    %c0_i32 = arith.constant 0 : i32
    %c0_i32_0 = arith.constant 0 : i32
    %c0_i32_1 = arith.constant 0 : i32
    return %c0_i32, %c0_i32_0 : i32, i32
  }
  func.func @transform_2(%arg0: i32) -> (i32, i32) {
    %c0_i32 = arith.constant 0 : i32
    %c0_i32_0 = arith.constant 0 : i32
    %c0_i32_1 = arith.constant 0 : i32
    return %c0_i32, %c0_i32_0 : i32, i32
  }
  func.func @transform_3(%arg0: i32) -> (i32, i32) {
    %c0_i32 = arith.constant 0 : i32
    %c0_i32_0 = arith.constant 0 : i32
    %c0_i32_1 = arith.constant 0 : i32
    return %c0_i32, %c0_i32_0 : i32, i32
  }
  func.func @transform_4(%arg0: i32) -> (i32, i32) {
    %c0_i32 = arith.constant 0 : i32
    %c0_i32_0 = arith.constant 0 : i32
    %c0_i32_1 = arith.constant 0 : i32
    return %c0_i32, %c0_i32_0 : i32, i32
  }
  func.func @transform_5(%arg0: i32) -> (i32, i32) {
    %c0_i32 = arith.constant 0 : i32
    %c0_i32_0 = arith.constant 0 : i32
    %c0_i32_1 = arith.constant 0 : i32
    return %c0_i32, %c0_i32_0 : i32, i32
  }
  func.func @transform_6(%arg0: i32) -> (i32, i32) {
    %c0_i32 = arith.constant 0 : i32
    %c0_i32_0 = arith.constant 0 : i32
    %c0_i32_1 = arith.constant 0 : i32
    return %c0_i32, %c0_i32_0 : i32, i32
  }
  func.func @transform_7(%arg0: i32) -> (i32, i32) {
    %c0_i32 = arith.constant 0 : i32
    %c0_i32_0 = arith.constant 0 : i32
    return %arg0, %c0_i32 : i32, i32
  }
  func.func @transform_8(%arg0: i32) -> (i32, i32) {
    %c0_i32 = arith.constant 0 : i32
    %c0_i32_0 = arith.constant 0 : i32
    return %arg0, %c0_i32 : i32, i32
  }
}

module attributes {stable_mosaic.version = 11 : i64} {
  func.func @_mm_bn_kernel(%arg0: i32, %arg1: memref<64x128xbf16, #tpu.memory_space<vmem>>, %arg2: memref<128x128xbf16, #tpu.memory_space<vmem>>, %arg3: memref<1x128xf32, #tpu.memory_space<vmem>>, %arg4: memref<1x128xf32, #tpu.memory_space<vmem>>, %arg5: memref<64x128xbf16, #tpu.memory_space<vmem>>) attributes {dimension_semantics = [#tpu.dimension_semantics<parallel>], iteration_bounds = array<i64: 2>, scalar_prefetch = 0 : i64, scratch_operands = 0 : i64, tpu.core_type = #tpu.core_type<tc>, window_params = [{transform_indices = @transform_0, window_bounds = array<i64: 64, 128>}, {pipeline_mode = #tpu.pipeline_mode<synchronous>, transform_indices = @transform_1, window_bounds = array<i64: 128, 128>}, {pipeline_mode = #tpu.pipeline_mode<synchronous>, transform_indices = @transform_2, window_bounds = array<i64: 1, 128>}, {pipeline_mode = #tpu.pipeline_mode<synchronous>, transform_indices = @transform_3, window_bounds = array<i64: 1, 128>}, {transform_indices = @transform_4, window_bounds = array<i64: 64, 128>}]} {
    %c0 = arith.constant 0 : index
    %c0_0 = arith.constant 0 : index
    %0 = vector.load %arg1[%c0, %c0_0] : memref<64x128xbf16, #tpu.memory_space<vmem>>, vector<64x128xbf16>
    %c0_1 = arith.constant 0 : index
    %c0_2 = arith.constant 0 : index
    %1 = vector.load %arg2[%c0_1, %c0_2] : memref<128x128xbf16, #tpu.memory_space<vmem>>, vector<128x128xbf16>
    %cst = arith.constant dense<0.000000e+00> : vector<64x128xf32>
    %2 = tpu.matmul %0, %1, %cst {dimension_numbers = #tpu.dot_dimension_numbers<[1], [0], [0], [1], [0, 0, 1, 1], [], []>} : vector<64x128xbf16>, vector<128x128xbf16>, vector<64x128xf32> -> vector<64x128xf32>
    %c0_3 = arith.constant 0 : index
    %c0_4 = arith.constant 0 : index
    %3 = vector.load %arg3[%c0_3, %c0_4] : memref<1x128xf32, #tpu.memory_space<vmem>>, vector<1x128xf32>
    %4 = vector.broadcast %3 : vector<1x128xf32> to vector<64x128xf32>
    %5 = arith.mulf %2, %4 : vector<64x128xf32>
    %c0_5 = arith.constant 0 : index
    %c0_6 = arith.constant 0 : index
    %6 = vector.load %arg4[%c0_5, %c0_6] : memref<1x128xf32, #tpu.memory_space<vmem>>, vector<1x128xf32>
    %7 = vector.broadcast %6 : vector<1x128xf32> to vector<64x128xf32>
    %8 = arith.addf %5, %7 : vector<64x128xf32>
    %9 = arith.truncf %8 : vector<64x128xf32> to vector<64x128xbf16>
    %c0_7 = arith.constant 0 : index
    %c0_8 = arith.constant 0 : index
    %10 = vector.load %arg5[%c0_7, %c0_8] : memref<64x128xbf16, #tpu.memory_space<vmem>>, vector<64x128xbf16>
    tpu.vector_store %arg5[%c0_7, %c0_8], %9 {strides = array<i32>} : memref<64x128xbf16, #tpu.memory_space<vmem>>, vector<64x128xbf16>,
    return
  }
  func.func @transform_0(%arg0: i32) -> (i32, i32) {
    %c0_i32 = arith.constant 0 : i32
    %c0_i32_0 = arith.constant 0 : i32
    return %arg0, %c0_i32 : i32, i32
  }
  func.func @transform_1(%arg0: i32) -> (i32, i32) {
    %c0_i32 = arith.constant 0 : i32
    %c0_i32_0 = arith.constant 0 : i32
    %c0_i32_1 = arith.constant 0 : i32
    return %c0_i32, %c0_i32_0 : i32, i32
  }
  func.func @transform_2(%arg0: i32) -> (i32, i32) {
    %c0_i32 = arith.constant 0 : i32
    %c0_i32_0 = arith.constant 0 : i32
    %c0_i32_1 = arith.constant 0 : i32
    return %c0_i32, %c0_i32_0 : i32, i32
  }
  func.func @transform_3(%arg0: i32) -> (i32, i32) {
    %c0_i32 = arith.constant 0 : i32
    %c0_i32_0 = arith.constant 0 : i32
    %c0_i32_1 = arith.constant 0 : i32
    return %c0_i32, %c0_i32_0 : i32, i32
  }
  func.func @transform_4(%arg0: i32) -> (i32, i32) {
    %c0_i32 = arith.constant 0 : i32
    %c0_i32_0 = arith.constant 0 : i32
    return %arg0, %c0_i32 : i32, i32
  }
}

module attributes {stable_mosaic.version = 11 : i64} {
  func.func @_mm_bn_kernel(%arg0: i32, %arg1: memref<16x128xbf16, #tpu.memory_space<vmem>>, %arg2: memref<128x128xbf16, #tpu.memory_space<vmem>>, %arg3: memref<1x128xf32, #tpu.memory_space<vmem>>, %arg4: memref<1x128xf32, #tpu.memory_space<vmem>>, %arg5: memref<16x128xbf16, #tpu.memory_space<vmem>>) attributes {dimension_semantics = [#tpu.dimension_semantics<parallel>], iteration_bounds = array<i64: 2>, scalar_prefetch = 0 : i64, scratch_operands = 0 : i64, tpu.core_type = #tpu.core_type<tc>, window_params = [{transform_indices = @transform_0, window_bounds = array<i64: 16, 128>}, {pipeline_mode = #tpu.pipeline_mode<synchronous>, transform_indices = @transform_1, window_bounds = array<i64: 128, 128>}, {pipeline_mode = #tpu.pipeline_mode<synchronous>, transform_indices = @transform_2, window_bounds = array<i64: 1, 128>}, {pipeline_mode = #tpu.pipeline_mode<synchronous>, transform_indices = @transform_3, window_bounds = array<i64: 1, 128>}, {transform_indices = @transform_4, window_bounds = array<i64: 16, 128>}]} {
    %c0 = arith.constant 0 : index
    %c0_0 = arith.constant 0 : index
    %0 = vector.load %arg1[%c0, %c0_0] : memref<16x128xbf16, #tpu.memory_space<vmem>>, vector<16x128xbf16>
    %c0_1 = arith.constant 0 : index
    %c0_2 = arith.constant 0 : index
    %1 = vector.load %arg2[%c0_1, %c0_2] : memref<128x128xbf16, #tpu.memory_space<vmem>>, vector<128x128xbf16>
    %cst = arith.constant dense<0.000000e+00> : vector<16x128xf32>
    %2 = tpu.matmul %0, %1, %cst {dimension_numbers = #tpu.dot_dimension_numbers<[1], [0], [0], [1], [0, 0, 1, 1], [], []>} : vector<16x128xbf16>, vector<128x128xbf16>, vector<16x128xf32> -> vector<16x128xf32>
    %c0_3 = arith.constant 0 : index
    %c0_4 = arith.constant 0 : index
    %3 = vector.load %arg3[%c0_3, %c0_4] : memref<1x128xf32, #tpu.memory_space<vmem>>, vector<1x128xf32>
    %4 = vector.broadcast %3 : vector<1x128xf32> to vector<16x128xf32>
    %5 = arith.mulf %2, %4 : vector<16x128xf32>
    %c0_5 = arith.constant 0 : index
    %c0_6 = arith.constant 0 : index
    %6 = vector.load %arg4[%c0_5, %c0_6] : memref<1x128xf32, #tpu.memory_space<vmem>>, vector<1x128xf32>
    %7 = vector.broadcast %6 : vector<1x128xf32> to vector<16x128xf32>
    %8 = arith.addf %5, %7 : vector<16x128xf32>
    %9 = arith.truncf %8 : vector<16x128xf32> to vector<16x128xbf16>
    %c0_7 = arith.constant 0 : index
    %c0_8 = arith.constant 0 : index
    %10 = vector.load %arg5[%c0_7, %c0_8] : memref<16x128xbf16, #tpu.memory_space<vmem>>, vector<16x128xbf16>
    tpu.vector_store %arg5[%c0_7, %c0_8], %9 {strides = array<i32>} : memref<16x128xbf16, #tpu.memory_space<vmem>>, vector<16x128xbf16>,
    return
  }
  func.func @transform_0(%arg0: i32) -> (i32, i32) {
    %c0_i32 = arith.constant 0 : i32
    %c0_i32_0 = arith.constant 0 : i32
    return %arg0, %c0_i32 : i32, i32
  }
  func.func @transform_1(%arg0: i32) -> (i32, i32) {
    %c0_i32 = arith.constant 0 : i32
    %c0_i32_0 = arith.constant 0 : i32
    %c0_i32_1 = arith.constant 0 : i32
    return %c0_i32, %c0_i32_0 : i32, i32
  }
  func.func @transform_2(%arg0: i32) -> (i32, i32) {
    %c0_i32 = arith.constant 0 : i32
    %c0_i32_0 = arith.constant 0 : i32
    %c0_i32_1 = arith.constant 0 : i32
    return %c0_i32, %c0_i32_0 : i32, i32
  }
  func.func @transform_3(%arg0: i32) -> (i32, i32) {
    %c0_i32 = arith.constant 0 : i32
    %c0_i32_0 = arith.constant 0 : i32
    %c0_i32_1 = arith.constant 0 : i32
    return %c0_i32, %c0_i32_0 : i32, i32
  }
  func.func @transform_4(%arg0: i32) -> (i32, i32) {
    %c0_i32 = arith.constant 0 : i32
    %c0_i32_0 = arith.constant 0 : i32
    return %arg0, %c0_i32 : i32, i32
  }
}

module attributes {stable_mosaic.version = 11 : i64} {
  func.func @_mm_bn_kernel(%arg0: i32, %arg1: memref<16x128xbf16, #tpu.memory_space<vmem>>, %arg2: memref<128x128xbf16, #tpu.memory_space<vmem>>, %arg3: memref<1x128xf32, #tpu.memory_space<vmem>>, %arg4: memref<1x128xf32, #tpu.memory_space<vmem>>, %arg5: memref<16x128xbf16, #tpu.memory_space<vmem>>) attributes {dimension_semantics = [#tpu.dimension_semantics<parallel>], iteration_bounds = array<i64: 2>, scalar_prefetch = 0 : i64, scratch_operands = 0 : i64, tpu.core_type = #tpu.core_type<tc>, window_params = [{transform_indices = @transform_0, window_bounds = array<i64: 16, 128>}, {pipeline_mode = #tpu.pipeline_mode<synchronous>, transform_indices = @transform_1, window_bounds = array<i64: 128, 128>}, {pipeline_mode = #tpu.pipeline_mode<synchronous>, transform_indices = @transform_2, window_bounds = array<i64: 1, 128>}, {pipeline_mode = #tpu.pipeline_mode<synchronous>, transform_indices = @transform_3, window_bounds = array<i64: 1, 128>}, {transform_indices = @transform_4, window_bounds = array<i64: 16, 128>}]} {
    %c0 = arith.constant 0 : index
    %c0_0 = arith.constant 0 : index
    %0 = vector.load %arg1[%c0, %c0_0] : memref<16x128xbf16, #tpu.memory_space<vmem>>, vector<16x128xbf16>
    %c0_1 = arith.constant 0 : index
    %c0_2 = arith.constant 0 : index
    %1 = vector.load %arg2[%c0_1, %c0_2] : memref<128x128xbf16, #tpu.memory_space<vmem>>, vector<128x128xbf16>
    %cst = arith.constant dense<0.000000e+00> : vector<16x128xf32>
    %2 = tpu.matmul %0, %1, %cst {dimension_numbers = #tpu.dot_dimension_numbers<[1], [0], [0], [1], [0, 0, 1, 1], [], []>} : vector<16x128xbf16>, vector<128x128xbf16>, vector<16x128xf32> -> vector<16x128xf32>
    %c0_3 = arith.constant 0 : index
    %c0_4 = arith.constant 0 : index
    %3 = vector.load %arg3[%c0_3, %c0_4] : memref<1x128xf32, #tpu.memory_space<vmem>>, vector<1x128xf32>
    %4 = vector.broadcast %3 : vector<1x128xf32> to vector<16x128xf32>
    %5 = arith.mulf %2, %4 : vector<16x128xf32>
    %c0_5 = arith.constant 0 : index
    %c0_6 = arith.constant 0 : index
    %6 = vector.load %arg4[%c0_5, %c0_6] : memref<1x128xf32, #tpu.memory_space<vmem>>, vector<1x128xf32>
    %7 = vector.broadcast %6 : vector<1x128xf32> to vector<16x128xf32>
    %8 = arith.addf %5, %7 : vector<16x128xf32>
    %cst_7 = arith.constant 0.000000e+00 : f32
    %9 = vector.broadcast %cst_7 : f32 to vector<16x128xf32>
    %10 = arith.maximumf %8, %9 : vector<16x128xf32>
    %11 = arith.truncf %10 : vector<16x128xf32> to vector<16x128xbf16>
    %c0_8 = arith.constant 0 : index
    %c0_9 = arith.constant 0 : index
    %12 = vector.load %arg5[%c0_8, %c0_9] : memref<16x128xbf16, #tpu.memory_space<vmem>>, vector<16x128xbf16>
    tpu.vector_store %arg5[%c0_8, %c0_9], %11 {strides = array<i32>} : memref<16x128xbf16, #tpu.memory_space<vmem>>, vector<16x128xbf16>,
    return
  }
  func.func @transform_0(%arg0: i32) -> (i32, i32) {
    %c0_i32 = arith.constant 0 : i32
    %c0_i32_0 = arith.constant 0 : i32
    return %arg0, %c0_i32 : i32, i32
  }
  func.func @transform_1(%arg0: i32) -> (i32, i32) {
    %c0_i32 = arith.constant 0 : i32
    %c0_i32_0 = arith.constant 0 : i32
    %c0_i32_1 = arith.constant 0 : i32
    return %c0_i32, %c0_i32_0 : i32, i32
  }
  func.func @transform_2(%arg0: i32) -> (i32, i32) {
    %c0_i32 = arith.constant 0 : i32
    %c0_i32_0 = arith.constant 0 : i32
    %c0_i32_1 = arith.constant 0 : i32
    return %c0_i32, %c0_i32_0 : i32, i32
  }
  func.func @transform_3(%arg0: i32) -> (i32, i32) {
    %c0_i32 = arith.constant 0 : i32
    %c0_i32_0 = arith.constant 0 : i32
    %c0_i32_1 = arith.constant 0 : i32
    return %c0_i32, %c0_i32_0 : i32, i32
  }
  func.func @transform_4(%arg0: i32) -> (i32, i32) {
    %c0_i32 = arith.constant 0 : i32
    %c0_i32_0 = arith.constant 0 : i32
    return %arg0, %c0_i32 : i32, i32
  }
}

module attributes {stable_mosaic.version = 11 : i64} {
  func.func @_mm2_bn_res_kernel(%arg0: i32, %arg1: memref<16x1152xbf16, #tpu.memory_space<vmem>>, %arg2: memref<1152x128xbf16, #tpu.memory_space<vmem>>, %arg3: memref<1x128xf32, #tpu.memory_space<vmem>>, %arg4: memref<1x128xf32, #tpu.memory_space<vmem>>, %arg5: memref<128x128xbf16, #tpu.memory_space<vmem>>, %arg6: memref<1x128xf32, #tpu.memory_space<vmem>>, %arg7: memref<1x128xf32, #tpu.memory_space<vmem>>, %arg8: memref<16x128xbf16, #tpu.memory_space<vmem>>, %arg9: memref<16x128xbf16, #tpu.memory_space<vmem>>) attributes {dimension_semantics = [#tpu.dimension_semantics<parallel>], iteration_bounds = array<i64: 2>, scalar_prefetch = 0 : i64, scratch_operands = 0 : i64, tpu.core_type = #tpu.core_type<tc>, window_params = [{transform_indices = @transform_0, window_bounds = array<i64: 16, 1152>}, {pipeline_mode = #tpu.pipeline_mode<synchronous>, transform_indices = @transform_1, window_bounds = array<i64: 1152, 128>}, {pipeline_mode = #tpu.pipeline_mode<synchronous>, transform_indices = @transform_2, window_bounds = array<i64: 1, 128>}, {pipeline_mode = #tpu.pipeline_mode<synchronous>, transform_indices = @transform_3, window_bounds = array<i64: 1, 128>}, {pipeline_mode = #tpu.pipeline_mode<synchronous>, transform_indices = @transform_4, window_bounds = array<i64: 128, 128>}, {pipeline_mode = #tpu.pipeline_mode<synchronous>, transform_indices = @transform_5, window_bounds = array<i64: 1, 128>}, {pipeline_mode = #tpu.pipeline_mode<synchronous>, transform_indices = @transform_6, window_bounds = array<i64: 1, 128>}, {transform_indices = @transform_7, window_bounds = array<i64: 16, 128>}, {transform_indices = @transform_8, window_bounds = array<i64: 16, 128>}]} {
    %c0 = arith.constant 0 : index
    %c0_0 = arith.constant 0 : index
    %0 = vector.load %arg1[%c0, %c0_0] : memref<16x1152xbf16, #tpu.memory_space<vmem>>, vector<16x1152xbf16>
    %c0_1 = arith.constant 0 : index
    %c0_2 = arith.constant 0 : index
    %1 = vector.load %arg2[%c0_1, %c0_2] : memref<1152x128xbf16, #tpu.memory_space<vmem>>, vector<1152x128xbf16>
    %cst = arith.constant dense<0.000000e+00> : vector<16x128xf32>
    %2 = tpu.matmul %0, %1, %cst {dimension_numbers = #tpu.dot_dimension_numbers<[1], [0], [0], [1], [0, 0, 1, 1], [], []>} : vector<16x1152xbf16>, vector<1152x128xbf16>, vector<16x128xf32> -> vector<16x128xf32>
    %c0_3 = arith.constant 0 : index
    %c0_4 = arith.constant 0 : index
    %3 = vector.load %arg3[%c0_3, %c0_4] : memref<1x128xf32, #tpu.memory_space<vmem>>, vector<1x128xf32>
    %4 = vector.broadcast %3 : vector<1x128xf32> to vector<16x128xf32>
    %5 = arith.mulf %2, %4 : vector<16x128xf32>
    %c0_5 = arith.constant 0 : index
    %c0_6 = arith.constant 0 : index
    %6 = vector.load %arg4[%c0_5, %c0_6] : memref<1x128xf32, #tpu.memory_space<vmem>>, vector<1x128xf32>
    %7 = vector.broadcast %6 : vector<1x128xf32> to vector<16x128xf32>
    %8 = arith.addf %5, %7 : vector<16x128xf32>
    %cst_7 = arith.constant 0.000000e+00 : f32
    %9 = vector.broadcast %cst_7 : f32 to vector<16x128xf32>
    %10 = arith.maximumf %8, %9 : vector<16x128xf32>
    %11 = arith.truncf %10 : vector<16x128xf32> to vector<16x128xbf16>
    %c0_8 = arith.constant 0 : index
    %c0_9 = arith.constant 0 : index
    %12 = vector.load %arg5[%c0_8, %c0_9] : memref<128x128xbf16, #tpu.memory_space<vmem>>, vector<128x128xbf16>
    %cst_10 = arith.constant dense<0.000000e+00> : vector<16x128xf32>
    %13 = tpu.matmul %11, %12, %cst_10 {dimension_numbers = #tpu.dot_dimension_numbers<[1], [0], [0], [1], [0, 0, 1, 1], [], []>} : vector<16x128xbf16>, vector<128x128xbf16>, vector<16x128xf32> -> vector<16x128xf32>
    %c0_11 = arith.constant 0 : index
    %c0_12 = arith.constant 0 : index
    %14 = vector.load %arg6[%c0_11, %c0_12] : memref<1x128xf32, #tpu.memory_space<vmem>>, vector<1x128xf32>
    %15 = vector.broadcast %14 : vector<1x128xf32> to vector<16x128xf32>
    %16 = arith.mulf %13, %15 : vector<16x128xf32>
    %c0_13 = arith.constant 0 : index
    %c0_14 = arith.constant 0 : index
    %17 = vector.load %arg7[%c0_13, %c0_14] : memref<1x128xf32, #tpu.memory_space<vmem>>, vector<1x128xf32>
    %18 = vector.broadcast %17 : vector<1x128xf32> to vector<16x128xf32>
    %19 = arith.addf %16, %18 : vector<16x128xf32>
    %c0_15 = arith.constant 0 : index
    %c0_16 = arith.constant 0 : index
    %20 = vector.load %arg8[%c0_15, %c0_16] : memref<16x128xbf16, #tpu.memory_space<vmem>>, vector<16x128xbf16>
    %21 = arith.extf %20 : vector<16x128xbf16> to vector<16x128xf32>
    %22 = arith.addf %19, %21 : vector<16x128xf32>
    %cst_17 = arith.constant 0.000000e+00 : f32
    %23 = vector.broadcast %cst_17 : f32 to vector<16x128xf32>
    %24 = arith.maximumf %22, %23 : vector<16x128xf32>
    %25 = arith.truncf %24 : vector<16x128xf32> to vector<16x128xbf16>
    %c0_18 = arith.constant 0 : index
    %c0_19 = arith.constant 0 : index
    %26 = vector.load %arg9[%c0_18, %c0_19] : memref<16x128xbf16, #tpu.memory_space<vmem>>, vector<16x128xbf16>
    tpu.vector_store %arg9[%c0_18, %c0_19], %25 {strides = array<i32>} : memref<16x128xbf16, #tpu.memory_space<vmem>>, vector<16x128xbf16>,
    return
  }
  func.func @transform_0(%arg0: i32) -> (i32, i32) {
    %c0_i32 = arith.constant 0 : i32
    %c0_i32_0 = arith.constant 0 : i32
    return %arg0, %c0_i32 : i32, i32
  }
  func.func @transform_1(%arg0: i32) -> (i32, i32) {
    %c0_i32 = arith.constant 0 : i32
    %c0_i32_0 = arith.constant 0 : i32
    %c0_i32_1 = arith.constant 0 : i32
    return %c0_i32, %c0_i32_0 : i32, i32
  }
  func.func @transform_2(%arg0: i32) -> (i32, i32) {
    %c0_i32 = arith.constant 0 : i32
    %c0_i32_0 = arith.constant 0 : i32
    %c0_i32_1 = arith.constant 0 : i32
    return %c0_i32, %c0_i32_0 : i32, i32
  }
  func.func @transform_3(%arg0: i32) -> (i32, i32) {
    %c0_i32 = arith.constant 0 : i32
    %c0_i32_0 = arith.constant 0 : i32
    %c0_i32_1 = arith.constant 0 : i32
    return %c0_i32, %c0_i32_0 : i32, i32
  }
  func.func @transform_4(%arg0: i32) -> (i32, i32) {
    %c0_i32 = arith.constant 0 : i32
    %c0_i32_0 = arith.constant 0 : i32
    %c0_i32_1 = arith.constant 0 : i32
    return %c0_i32, %c0_i32_0 : i32, i32
  }
  func.func @transform_5(%arg0: i32) -> (i32, i32) {
    %c0_i32 = arith.constant 0 : i32
    %c0_i32_0 = arith.constant 0 : i32
    %c0_i32_1 = arith.constant 0 : i32
    return %c0_i32, %c0_i32_0 : i32, i32
  }
  func.func @transform_6(%arg0: i32) -> (i32, i32) {
    %c0_i32 = arith.constant 0 : i32
    %c0_i32_0 = arith.constant 0 : i32
    %c0_i32_1 = arith.constant 0 : i32
    return %c0_i32, %c0_i32_0 : i32, i32
  }
  func.func @transform_7(%arg0: i32) -> (i32, i32) {
    %c0_i32 = arith.constant 0 : i32
    %c0_i32_0 = arith.constant 0 : i32
    return %arg0, %c0_i32 : i32, i32
  }
  func.func @transform_8(%arg0: i32) -> (i32, i32) {
    %c0_i32 = arith.constant 0 : i32
    %c0_i32_0 = arith.constant 0 : i32
    return %arg0, %c0_i32 : i32, i32
  }
}

module attributes {stable_mosaic.version = 11 : i64} {
  func.func @_mm_bn_kernel(%arg0: i32, %arg1: memref<8x256xbf16, #tpu.memory_space<vmem>>, %arg2: memref<256x128xbf16, #tpu.memory_space<vmem>>, %arg3: memref<1x128xf32, #tpu.memory_space<vmem>>, %arg4: memref<1x128xf32, #tpu.memory_space<vmem>>, %arg5: memref<8x128xbf16, #tpu.memory_space<vmem>>) attributes {dimension_semantics = [#tpu.dimension_semantics<parallel>], iteration_bounds = array<i64: 1>, scalar_prefetch = 0 : i64, scratch_operands = 0 : i64, tpu.core_type = #tpu.core_type<tc>, window_params = [{transform_indices = @transform_0, window_bounds = array<i64: 8, 256>}, {pipeline_mode = #tpu.pipeline_mode<synchronous>, transform_indices = @transform_1, window_bounds = array<i64: 256, 128>}, {pipeline_mode = #tpu.pipeline_mode<synchronous>, transform_indices = @transform_2, window_bounds = array<i64: 1, 128>}, {pipeline_mode = #tpu.pipeline_mode<synchronous>, transform_indices = @transform_3, window_bounds = array<i64: 1, 128>}, {transform_indices = @transform_4, window_bounds = array<i64: 8, 128>}]} {
    %c0 = arith.constant 0 : index
    %c0_0 = arith.constant 0 : index
    %0 = vector.load %arg1[%c0, %c0_0] : memref<8x256xbf16, #tpu.memory_space<vmem>>, vector<8x256xbf16>
    %c0_1 = arith.constant 0 : index
    %c0_2 = arith.constant 0 : index
    %1 = vector.load %arg2[%c0_1, %c0_2] : memref<256x128xbf16, #tpu.memory_space<vmem>>, vector<256x128xbf16>
    %cst = arith.constant dense<0.000000e+00> : vector<8x128xf32>
    %2 = tpu.matmul %0, %1, %cst {dimension_numbers = #tpu.dot_dimension_numbers<[1], [0], [0], [1], [0, 0, 1, 1], [], []>} : vector<8x256xbf16>, vector<256x128xbf16>, vector<8x128xf32> -> vector<8x128xf32>
    %c0_3 = arith.constant 0 : index
    %c0_4 = arith.constant 0 : index
    %3 = vector.load %arg3[%c0_3, %c0_4] : memref<1x128xf32, #tpu.memory_space<vmem>>, vector<1x128xf32>
    %4 = vector.broadcast %3 : vector<1x128xf32> to vector<8x128xf32>
    %5 = arith.mulf %2, %4 : vector<8x128xf32>
    %c0_5 = arith.constant 0 : index
    %c0_6 = arith.constant 0 : index
    %6 = vector.load %arg4[%c0_5, %c0_6] : memref<1x128xf32, #tpu.memory_space<vmem>>, vector<1x128xf32>
    %7 = vector.broadcast %6 : vector<1x128xf32> to vector<8x128xf32>
    %8 = arith.addf %5, %7 : vector<8x128xf32>
    %cst_7 = arith.constant 0.000000e+00 : f32
    %9 = vector.broadcast %cst_7 : f32 to vector<8x128xf32>
    %10 = arith.maximumf %8, %9 : vector<8x128xf32>
    %11 = arith.truncf %10 : vector<8x128xf32> to vector<8x128xbf16>
    %c0_8 = arith.constant 0 : index
    %c0_9 = arith.constant 0 : index
    %12 = vector.load %arg5[%c0_8, %c0_9] : memref<8x128xbf16, #tpu.memory_space<vmem>>, vector<8x128xbf16>
    tpu.vector_store %arg5[%c0_8, %c0_9], %11 {strides = array<i32>} : memref<8x128xbf16, #tpu.memory_space<vmem>>, vector<8x128xbf16>,
    return
  }
  func.func @transform_0(%arg0: i32) -> (i32, i32) {
    %c0_i32 = arith.constant 0 : i32
    %c0_i32_0 = arith.constant 0 : i32
    return %arg0, %c0_i32 : i32, i32
  }
  func.func @transform_1(%arg0: i32) -> (i32, i32) {
    %c0_i32 = arith.constant 0 : i32
    %c0_i32_0 = arith.constant 0 : i32
    %c0_i32_1 = arith.constant 0 : i32
    return %c0_i32, %c0_i32_0 : i32, i32
  }
  func.func @transform_2(%arg0: i32) -> (i32, i32) {
    %c0_i32 = arith.constant 0 : i32
    %c0_i32_0 = arith.constant 0 : i32
    %c0_i32_1 = arith.constant 0 : i32
    return %c0_i32, %c0_i32_0 : i32, i32
  }
  func.func @transform_3(%arg0: i32) -> (i32, i32) {
    %c0_i32 = arith.constant 0 : i32
    %c0_i32_0 = arith.constant 0 : i32
    %c0_i32_1 = arith.constant 0 : i32
    return %c0_i32, %c0_i32_0 : i32, i32
  }
  func.func @transform_4(%arg0: i32) -> (i32, i32) {
    %c0_i32 = arith.constant 0 : i32
    %c0_i32_0 = arith.constant 0 : i32
    return %arg0, %c0_i32 : i32, i32
  }
}

module attributes {stable_mosaic.version = 11 : i64} {
  func.func @_mm2_bn_res_kernel(%arg0: i32, %arg1: memref<8x1152xbf16, #tpu.memory_space<vmem>>, %arg2: memref<1152x128xbf16, #tpu.memory_space<vmem>>, %arg3: memref<1x128xf32, #tpu.memory_space<vmem>>, %arg4: memref<1x128xf32, #tpu.memory_space<vmem>>, %arg5: memref<128x256xbf16, #tpu.memory_space<vmem>>, %arg6: memref<1x256xf32, #tpu.memory_space<vmem>>, %arg7: memref<1x256xf32, #tpu.memory_space<vmem>>, %arg8: memref<8x256xbf16, #tpu.memory_space<vmem>>, %arg9: memref<8x256xbf16, #tpu.memory_space<vmem>>) attributes {dimension_semantics = [#tpu.dimension_semantics<parallel>], iteration_bounds = array<i64: 1>, scalar_prefetch = 0 : i64, scratch_operands = 0 : i64, tpu.core_type = #tpu.core_type<tc>, window_params = [{transform_indices = @transform_0, window_bounds = array<i64: 8, 1152>}, {pipeline_mode = #tpu.pipeline_mode<synchronous>, transform_indices = @transform_1, window_bounds = array<i64: 1152, 128>}, {pipeline_mode = #tpu.pipeline_mode<synchronous>, transform_indices = @transform_2, window_bounds = array<i64: 1, 128>}, {pipeline_mode = #tpu.pipeline_mode<synchronous>, transform_indices = @transform_3, window_bounds = array<i64: 1, 128>}, {pipeline_mode = #tpu.pipeline_mode<synchronous>, transform_indices = @transform_4, window_bounds = array<i64: 128, 256>}, {pipeline_mode = #tpu.pipeline_mode<synchronous>, transform_indices = @transform_5, window_bounds = array<i64: 1, 256>}, {pipeline_mode = #tpu.pipeline_mode<synchronous>, transform_indices = @transform_6, window_bounds = array<i64: 1, 256>}, {transform_indices = @transform_7, window_bounds = array<i64: 8, 256>}, {transform_indices = @transform_8, window_bounds = array<i64: 8, 256>}]} {
    %c0 = arith.constant 0 : index
    %c0_0 = arith.constant 0 : index
    %0 = vector.load %arg1[%c0, %c0_0] : memref<8x1152xbf16, #tpu.memory_space<vmem>>, vector<8x1152xbf16>
    %c0_1 = arith.constant 0 : index
    %c0_2 = arith.constant 0 : index
    %1 = vector.load %arg2[%c0_1, %c0_2] : memref<1152x128xbf16, #tpu.memory_space<vmem>>, vector<1152x128xbf16>
    %cst = arith.constant dense<0.000000e+00> : vector<8x128xf32>
    %2 = tpu.matmul %0, %1, %cst {dimension_numbers = #tpu.dot_dimension_numbers<[1], [0], [0], [1], [0, 0, 1, 1], [], []>} : vector<8x1152xbf16>, vector<1152x128xbf16>, vector<8x128xf32> -> vector<8x128xf32>
    %c0_3 = arith.constant 0 : index
    %c0_4 = arith.constant 0 : index
    %3 = vector.load %arg3[%c0_3, %c0_4] : memref<1x128xf32, #tpu.memory_space<vmem>>, vector<1x128xf32>
    %4 = vector.broadcast %3 : vector<1x128xf32> to vector<8x128xf32>
    %5 = arith.mulf %2, %4 : vector<8x128xf32>
    %c0_5 = arith.constant 0 : index
    %c0_6 = arith.constant 0 : index
    %6 = vector.load %arg4[%c0_5, %c0_6] : memref<1x128xf32, #tpu.memory_space<vmem>>, vector<1x128xf32>
    %7 = vector.broadcast %6 : vector<1x128xf32> to vector<8x128xf32>
    %8 = arith.addf %5, %7 : vector<8x128xf32>
    %cst_7 = arith.constant 0.000000e+00 : f32
    %9 = vector.broadcast %cst_7 : f32 to vector<8x128xf32>
    %10 = arith.maximumf %8, %9 : vector<8x128xf32>
    %11 = arith.truncf %10 : vector<8x128xf32> to vector<8x128xbf16>
    %c0_8 = arith.constant 0 : index
    %c0_9 = arith.constant 0 : index
    %12 = vector.load %arg5[%c0_8, %c0_9] : memref<128x256xbf16, #tpu.memory_space<vmem>>, vector<128x256xbf16>
    %cst_10 = arith.constant dense<0.000000e+00> : vector<8x256xf32>
    %13 = tpu.matmul %11, %12, %cst_10 {dimension_numbers = #tpu.dot_dimension_numbers<[1], [0], [0], [1], [0, 0, 1, 1], [], []>} : vector<8x128xbf16>, vector<128x256xbf16>, vector<8x256xf32> -> vector<8x256xf32>
    %c0_11 = arith.constant 0 : index
    %c0_12 = arith.constant 0 : index
    %14 = vector.load %arg6[%c0_11, %c0_12] : memref<1x256xf32, #tpu.memory_space<vmem>>, vector<1x256xf32>
    %15 = vector.broadcast %14 : vector<1x256xf32> to vector<8x256xf32>
    %16 = arith.mulf %13, %15 : vector<8x256xf32>
    %c0_13 = arith.constant 0 : index
    %c0_14 = arith.constant 0 : index
    %17 = vector.load %arg7[%c0_13, %c0_14] : memref<1x256xf32, #tpu.memory_space<vmem>>, vector<1x256xf32>
    %18 = vector.broadcast %17 : vector<1x256xf32> to vector<8x256xf32>
    %19 = arith.addf %16, %18 : vector<8x256xf32>
    %c0_15 = arith.constant 0 : index
    %c0_16 = arith.constant 0 : index
    %20 = vector.load %arg8[%c0_15, %c0_16] : memref<8x256xbf16, #tpu.memory_space<vmem>>, vector<8x256xbf16>
    %21 = arith.extf %20 : vector<8x256xbf16> to vector<8x256xf32>
    %22 = arith.addf %19, %21 : vector<8x256xf32>
    %cst_17 = arith.constant 0.000000e+00 : f32
    %23 = vector.broadcast %cst_17 : f32 to vector<8x256xf32>
    %24 = arith.maximumf %22, %23 : vector<8x256xf32>
    %25 = arith.truncf %24 : vector<8x256xf32> to vector<8x256xbf16>
    %c0_18 = arith.constant 0 : index
    %c0_19 = arith.constant 0 : index
    %26 = vector.load %arg9[%c0_18, %c0_19] : memref<8x256xbf16, #tpu.memory_space<vmem>>, vector<8x256xbf16>
    tpu.vector_store %arg9[%c0_18, %c0_19], %25 {strides = array<i32>} : memref<8x256xbf16, #tpu.memory_space<vmem>>, vector<8x256xbf16>,
    return
  }
  func.func @transform_0(%arg0: i32) -> (i32, i32) {
    %c0_i32 = arith.constant 0 : i32
    %c0_i32_0 = arith.constant 0 : i32
    return %arg0, %c0_i32 : i32, i32
  }
  func.func @transform_1(%arg0: i32) -> (i32, i32) {
    %c0_i32 = arith.constant 0 : i32
    %c0_i32_0 = arith.constant 0 : i32
    %c0_i32_1 = arith.constant 0 : i32
    return %c0_i32, %c0_i32_0 : i32, i32
  }
  func.func @transform_2(%arg0: i32) -> (i32, i32) {
    %c0_i32 = arith.constant 0 : i32
    %c0_i32_0 = arith.constant 0 : i32
    %c0_i32_1 = arith.constant 0 : i32
    return %c0_i32, %c0_i32_0 : i32, i32
  }
  func.func @transform_3(%arg0: i32) -> (i32, i32) {
    %c0_i32 = arith.constant 0 : i32
    %c0_i32_0 = arith.constant 0 : i32
    %c0_i32_1 = arith.constant 0 : i32
    return %c0_i32, %c0_i32_0 : i32, i32
  }
  func.func @transform_4(%arg0: i32) -> (i32, i32) {
    %c0_i32 = arith.constant 0 : i32
    %c0_i32_0 = arith.constant 0 : i32
    %c0_i32_1 = arith.constant 0 : i32
    return %c0_i32, %c0_i32_0 : i32, i32
  }
  func.func @transform_5(%arg0: i32) -> (i32, i32) {
    %c0_i32 = arith.constant 0 : i32
    %c0_i32_0 = arith.constant 0 : i32
    %c0_i32_1 = arith.constant 0 : i32
    return %c0_i32, %c0_i32_0 : i32, i32
  }
  func.func @transform_6(%arg0: i32) -> (i32, i32) {
    %c0_i32 = arith.constant 0 : i32
    %c0_i32_0 = arith.constant 0 : i32
    %c0_i32_1 = arith.constant 0 : i32
    return %c0_i32, %c0_i32_0 : i32, i32
  }
  func.func @transform_7(%arg0: i32) -> (i32, i32) {
    %c0_i32 = arith.constant 0 : i32
    %c0_i32_0 = arith.constant 0 : i32
    return %arg0, %c0_i32 : i32, i32
  }
  func.func @transform_8(%arg0: i32) -> (i32, i32) {
    %c0_i32 = arith.constant 0 : i32
    %c0_i32_0 = arith.constant 0 : i32
    return %arg0, %c0_i32 : i32, i32
  }
}

module attributes {stable_mosaic.version = 11 : i64} {
  func.func @_mm_bn_kernel(%arg0: i32, %arg1: memref<8x128xbf16, #tpu.memory_space<vmem>>, %arg2: memref<128x256xbf16, #tpu.memory_space<vmem>>, %arg3: memref<1x256xf32, #tpu.memory_space<vmem>>, %arg4: memref<1x256xf32, #tpu.memory_space<vmem>>, %arg5: memref<8x256xbf16, #tpu.memory_space<vmem>>) attributes {dimension_semantics = [#tpu.dimension_semantics<parallel>], iteration_bounds = array<i64: 1>, scalar_prefetch = 0 : i64, scratch_operands = 0 : i64, tpu.core_type = #tpu.core_type<tc>, window_params = [{transform_indices = @transform_0, window_bounds = array<i64: 8, 128>}, {pipeline_mode = #tpu.pipeline_mode<synchronous>, transform_indices = @transform_1, window_bounds = array<i64: 128, 256>}, {pipeline_mode = #tpu.pipeline_mode<synchronous>, transform_indices = @transform_2, window_bounds = array<i64: 1, 256>}, {pipeline_mode = #tpu.pipeline_mode<synchronous>, transform_indices = @transform_3, window_bounds = array<i64: 1, 256>}, {transform_indices = @transform_4, window_bounds = array<i64: 8, 256>}]} {
    %c0 = arith.constant 0 : index
    %c0_0 = arith.constant 0 : index
    %0 = vector.load %arg1[%c0, %c0_0] : memref<8x128xbf16, #tpu.memory_space<vmem>>, vector<8x128xbf16>
    %c0_1 = arith.constant 0 : index
    %c0_2 = arith.constant 0 : index
    %1 = vector.load %arg2[%c0_1, %c0_2] : memref<128x256xbf16, #tpu.memory_space<vmem>>, vector<128x256xbf16>
    %cst = arith.constant dense<0.000000e+00> : vector<8x256xf32>
    %2 = tpu.matmul %0, %1, %cst {dimension_numbers = #tpu.dot_dimension_numbers<[1], [0], [0], [1], [0, 0, 1, 1], [], []>} : vector<8x128xbf16>, vector<128x256xbf16>, vector<8x256xf32> -> vector<8x256xf32>
    %c0_3 = arith.constant 0 : index
    %c0_4 = arith.constant 0 : index
    %3 = vector.load %arg3[%c0_3, %c0_4] : memref<1x256xf32, #tpu.memory_space<vmem>>, vector<1x256xf32>
    %4 = vector.broadcast %3 : vector<1x256xf32> to vector<8x256xf32>
    %5 = arith.mulf %2, %4 : vector<8x256xf32>
    %c0_5 = arith.constant 0 : index
    %c0_6 = arith.constant 0 : index
    %6 = vector.load %arg4[%c0_5, %c0_6] : memref<1x256xf32, #tpu.memory_space<vmem>>, vector<1x256xf32>
    %7 = vector.broadcast %6 : vector<1x256xf32> to vector<8x256xf32>
    %8 = arith.addf %5, %7 : vector<8x256xf32>
    %9 = arith.truncf %8 : vector<8x256xf32> to vector<8x256xbf16>
    %c0_7 = arith.constant 0 : index
    %c0_8 = arith.constant 0 : index
    %10 = vector.load %arg5[%c0_7, %c0_8] : memref<8x256xbf16, #tpu.memory_space<vmem>>, vector<8x256xbf16>
    tpu.vector_store %arg5[%c0_7, %c0_8], %9 {strides = array<i32>} : memref<8x256xbf16, #tpu.memory_space<vmem>>, vector<8x256xbf16>,
    return
  }
  func.func @transform_0(%arg0: i32) -> (i32, i32) {
    %c0_i32 = arith.constant 0 : i32
    %c0_i32_0 = arith.constant 0 : i32
    return %arg0, %c0_i32 : i32, i32
  }
  func.func @transform_1(%arg0: i32) -> (i32, i32) {
    %c0_i32 = arith.constant 0 : i32
    %c0_i32_0 = arith.constant 0 : i32
    %c0_i32_1 = arith.constant 0 : i32
    return %c0_i32, %c0_i32_0 : i32, i32
  }
  func.func @transform_2(%arg0: i32) -> (i32, i32) {
    %c0_i32 = arith.constant 0 : i32
    %c0_i32_0 = arith.constant 0 : i32
    %c0_i32_1 = arith.constant 0 : i32
    return %c0_i32, %c0_i32_0 : i32, i32
  }
  func.func @transform_3(%arg0: i32) -> (i32, i32) {
    %c0_i32 = arith.constant 0 : i32
    %c0_i32_0 = arith.constant 0 : i32
    %c0_i32_1 = arith.constant 0 : i32
    return %c0_i32, %c0_i32_0 : i32, i32
  }
  func.func @transform_4(%arg0: i32) -> (i32, i32) {
    %c0_i32 = arith.constant 0 : i32
    %c0_i32_0 = arith.constant 0 : i32
    return %arg0, %c0_i32 : i32, i32
  }
}

module attributes {stable_mosaic.version = 11 : i64} {
  func.func @_mm_bn_kernel(%arg0: i32, %arg1: memref<8x512xbf16, #tpu.memory_space<vmem>>, %arg2: memref<512x128xbf16, #tpu.memory_space<vmem>>, %arg3: memref<1x128xf32, #tpu.memory_space<vmem>>, %arg4: memref<1x128xf32, #tpu.memory_space<vmem>>, %arg5: memref<8x128xbf16, #tpu.memory_space<vmem>>) attributes {dimension_semantics = [#tpu.dimension_semantics<parallel>], iteration_bounds = array<i64: 1>, scalar_prefetch = 0 : i64, scratch_operands = 0 : i64, tpu.core_type = #tpu.core_type<tc>, window_params = [{transform_indices = @transform_0, window_bounds = array<i64: 8, 512>}, {pipeline_mode = #tpu.pipeline_mode<synchronous>, transform_indices = @transform_1, window_bounds = array<i64: 512, 128>}, {pipeline_mode = #tpu.pipeline_mode<synchronous>, transform_indices = @transform_2, window_bounds = array<i64: 1, 128>}, {pipeline_mode = #tpu.pipeline_mode<synchronous>, transform_indices = @transform_3, window_bounds = array<i64: 1, 128>}, {transform_indices = @transform_4, window_bounds = array<i64: 8, 128>}]} {
    %c0 = arith.constant 0 : index
    %c0_0 = arith.constant 0 : index
    %0 = vector.load %arg1[%c0, %c0_0] : memref<8x512xbf16, #tpu.memory_space<vmem>>, vector<8x512xbf16>
    %c0_1 = arith.constant 0 : index
    %c0_2 = arith.constant 0 : index
    %1 = vector.load %arg2[%c0_1, %c0_2] : memref<512x128xbf16, #tpu.memory_space<vmem>>, vector<512x128xbf16>
    %cst = arith.constant dense<0.000000e+00> : vector<8x128xf32>
    %2 = tpu.matmul %0, %1, %cst {dimension_numbers = #tpu.dot_dimension_numbers<[1], [0], [0], [1], [0, 0, 1, 1], [], []>} : vector<8x512xbf16>, vector<512x128xbf16>, vector<8x128xf32> -> vector<8x128xf32>
    %c0_3 = arith.constant 0 : index
    %c0_4 = arith.constant 0 : index
    %3 = vector.load %arg3[%c0_3, %c0_4] : memref<1x128xf32, #tpu.memory_space<vmem>>, vector<1x128xf32>
    %4 = vector.broadcast %3 : vector<1x128xf32> to vector<8x128xf32>
    %5 = arith.mulf %2, %4 : vector<8x128xf32>
    %c0_5 = arith.constant 0 : index
    %c0_6 = arith.constant 0 : index
    %6 = vector.load %arg4[%c0_5, %c0_6] : memref<1x128xf32, #tpu.memory_space<vmem>>, vector<1x128xf32>
    %7 = vector.broadcast %6 : vector<1x128xf32> to vector<8x128xf32>
    %8 = arith.addf %5, %7 : vector<8x128xf32>
    %cst_7 = arith.constant 0.000000e+00 : f32
    %9 = vector.broadcast %cst_7 : f32 to vector<8x128xf32>
    %10 = arith.maximumf %8, %9 : vector<8x128xf32>
    %11 = arith.truncf %10 : vector<8x128xf32> to vector<8x128xbf16>
    %c0_8 = arith.constant 0 : index
    %c0_9 = arith.constant 0 : index
    %12 = vector.load %arg5[%c0_8, %c0_9] : memref<8x128xbf16, #tpu.memory_space<vmem>>, vector<8x128xbf16>
    tpu.vector_store %arg5[%c0_8, %c0_9], %11 {strides = array<i32>} : memref<8x128xbf16, #tpu.memory_space<vmem>>, vector<8x128xbf16>,
    return
  }
  func.func @transform_0(%arg0: i32) -> (i32, i32) {
    %c0_i32 = arith.constant 0 : i32
    %c0_i32_0 = arith.constant 0 : i32
    return %arg0, %c0_i32 : i32, i32
  }
  func.func @transform_1(%arg0: i32) -> (i32, i32) {
    %c0_i32 = arith.constant 0 : i32
    %c0_i32_0 = arith.constant 0 : i32
    %c0_i32_1 = arith.constant 0 : i32
    return %c0_i32, %c0_i32_0 : i32, i32
  }
  func.func @transform_2(%arg0: i32) -> (i32, i32) {
    %c0_i32 = arith.constant 0 : i32
    %c0_i32_0 = arith.constant 0 : i32
    %c0_i32_1 = arith.constant 0 : i32
    return %c0_i32, %c0_i32_0 : i32, i32
  }
  func.func @transform_3(%arg0: i32) -> (i32, i32) {
    %c0_i32 = arith.constant 0 : i32
    %c0_i32_0 = arith.constant 0 : i32
    %c0_i32_1 = arith.constant 0 : i32
    return %c0_i32, %c0_i32_0 : i32, i32
  }
  func.func @transform_4(%arg0: i32) -> (i32, i32) {
    %c0_i32 = arith.constant 0 : i32
    %c0_i32_0 = arith.constant 0 : i32
    return %arg0, %c0_i32 : i32, i32
  }
}

module attributes {stable_mosaic.version = 11 : i64} {
  func.func @_mm_bn_kernel(%arg0: i32, %arg1: memref<8x256xbf16, #tpu.memory_space<vmem>>, %arg2: memref<256x512xbf16, #tpu.memory_space<vmem>>, %arg3: memref<1x512xf32, #tpu.memory_space<vmem>>, %arg4: memref<1x512xf32, #tpu.memory_space<vmem>>, %arg5: memref<8x512xbf16, #tpu.memory_space<vmem>>) attributes {dimension_semantics = [#tpu.dimension_semantics<parallel>], iteration_bounds = array<i64: 1>, scalar_prefetch = 0 : i64, scratch_operands = 0 : i64, tpu.core_type = #tpu.core_type<tc>, window_params = [{transform_indices = @transform_0, window_bounds = array<i64: 8, 256>}, {pipeline_mode = #tpu.pipeline_mode<synchronous>, transform_indices = @transform_1, window_bounds = array<i64: 256, 512>}, {pipeline_mode = #tpu.pipeline_mode<synchronous>, transform_indices = @transform_2, window_bounds = array<i64: 1, 512>}, {pipeline_mode = #tpu.pipeline_mode<synchronous>, transform_indices = @transform_3, window_bounds = array<i64: 1, 512>}, {transform_indices = @transform_4, window_bounds = array<i64: 8, 512>}]} {
    %c0 = arith.constant 0 : index
    %c0_0 = arith.constant 0 : index
    %0 = vector.load %arg1[%c0, %c0_0] : memref<8x256xbf16, #tpu.memory_space<vmem>>, vector<8x256xbf16>
    %c0_1 = arith.constant 0 : index
    %c0_2 = arith.constant 0 : index
    %1 = vector.load %arg2[%c0_1, %c0_2] : memref<256x512xbf16, #tpu.memory_space<vmem>>, vector<256x512xbf16>
    %cst = arith.constant dense<0.000000e+00> : vector<8x512xf32>
    %2 = tpu.matmul %0, %1, %cst {dimension_numbers = #tpu.dot_dimension_numbers<[1], [0], [0], [1], [0, 0, 1, 1], [], []>} : vector<8x256xbf16>, vector<256x512xbf16>, vector<8x512xf32> -> vector<8x512xf32>
    %c0_3 = arith.constant 0 : index
    %c0_4 = arith.constant 0 : index
    %3 = vector.load %arg3[%c0_3, %c0_4] : memref<1x512xf32, #tpu.memory_space<vmem>>, vector<1x512xf32>
    %4 = vector.broadcast %3 : vector<1x512xf32> to vector<8x512xf32>
    %5 = arith.mulf %2, %4 : vector<8x512xf32>
    %c0_5 = arith.constant 0 : index
    %c0_6 = arith.constant 0 : index
    %6 = vector.load %arg4[%c0_5, %c0_6] : memref<1x512xf32, #tpu.memory_space<vmem>>, vector<1x512xf32>
    %7 = vector.broadcast %6 : vector<1x512xf32> to vector<8x512xf32>
    %8 = arith.addf %5, %7 : vector<8x512xf32>
    %9 = arith.truncf %8 : vector<8x512xf32> to vector<8x512xbf16>
    %c0_7 = arith.constant 0 : index
    %c0_8 = arith.constant 0 : index
    %10 = vector.load %arg5[%c0_7, %c0_8] : memref<8x512xbf16, #tpu.memory_space<vmem>>, vector<8x512xbf16>
    tpu.vector_store %arg5[%c0_7, %c0_8], %9 {strides = array<i32>} : memref<8x512xbf16, #tpu.memory_space<vmem>>, vector<8x512xbf16>,
    return
  }
  func.func @transform_0(%arg0: i32) -> (i32, i32) {
    %c0_i32 = arith.constant 0 : i32
    %c0_i32_0 = arith.constant 0 : i32
    return %arg0, %c0_i32 : i32, i32
  }
  func.func @transform_1(%arg0: i32) -> (i32, i32) {
    %c0_i32 = arith.constant 0 : i32
    %c0_i32_0 = arith.constant 0 : i32
    %c0_i32_1 = arith.constant 0 : i32
    return %c0_i32, %c0_i32_0 : i32, i32
  }
  func.func @transform_2(%arg0: i32) -> (i32, i32) {
    %c0_i32 = arith.constant 0 : i32
    %c0_i32_0 = arith.constant 0 : i32
    %c0_i32_1 = arith.constant 0 : i32
    return %c0_i32, %c0_i32_0 : i32, i32
  }
  func.func @transform_3(%arg0: i32) -> (i32, i32) {
    %c0_i32 = arith.constant 0 : i32
    %c0_i32_0 = arith.constant 0 : i32
    %c0_i32_1 = arith.constant 0 : i32
    return %c0_i32, %c0_i32_0 : i32, i32
  }
  func.func @transform_4(%arg0: i32) -> (i32, i32) {
    %c0_i32 = arith.constant 0 : i32
    %c0_i32_0 = arith.constant 0 : i32
    return %arg0, %c0_i32 : i32, i32
  }
}

module attributes {stable_mosaic.version = 11 : i64} {
  func.func @_mm2_bn_res_kernel(%arg0: i32, %arg1: memref<8x1152xbf16, #tpu.memory_space<vmem>>, %arg2: memref<1152x128xbf16, #tpu.memory_space<vmem>>, %arg3: memref<1x128xf32, #tpu.memory_space<vmem>>, %arg4: memref<1x128xf32, #tpu.memory_space<vmem>>, %arg5: memref<128x512xbf16, #tpu.memory_space<vmem>>, %arg6: memref<1x512xf32, #tpu.memory_space<vmem>>, %arg7: memref<1x512xf32, #tpu.memory_space<vmem>>, %arg8: memref<8x512xbf16, #tpu.memory_space<vmem>>, %arg9: memref<8x512xbf16, #tpu.memory_space<vmem>>) attributes {dimension_semantics = [#tpu.dimension_semantics<parallel>], iteration_bounds = array<i64: 1>, scalar_prefetch = 0 : i64, scratch_operands = 0 : i64, tpu.core_type = #tpu.core_type<tc>, window_params = [{transform_indices = @transform_0, window_bounds = array<i64: 8, 1152>}, {pipeline_mode = #tpu.pipeline_mode<synchronous>, transform_indices = @transform_1, window_bounds = array<i64: 1152, 128>}, {pipeline_mode = #tpu.pipeline_mode<synchronous>, transform_indices = @transform_2, window_bounds = array<i64: 1, 128>}, {pipeline_mode = #tpu.pipeline_mode<synchronous>, transform_indices = @transform_3, window_bounds = array<i64: 1, 128>}, {pipeline_mode = #tpu.pipeline_mode<synchronous>, transform_indices = @transform_4, window_bounds = array<i64: 128, 512>}, {pipeline_mode = #tpu.pipeline_mode<synchronous>, transform_indices = @transform_5, window_bounds = array<i64: 1, 512>}, {pipeline_mode = #tpu.pipeline_mode<synchronous>, transform_indices = @transform_6, window_bounds = array<i64: 1, 512>}, {transform_indices = @transform_7, window_bounds = array<i64: 8, 512>}, {transform_indices = @transform_8, window_bounds = array<i64: 8, 512>}]} {
    %c0 = arith.constant 0 : index
    %c0_0 = arith.constant 0 : index
    %0 = vector.load %arg1[%c0, %c0_0] : memref<8x1152xbf16, #tpu.memory_space<vmem>>, vector<8x1152xbf16>
    %c0_1 = arith.constant 0 : index
    %c0_2 = arith.constant 0 : index
    %1 = vector.load %arg2[%c0_1, %c0_2] : memref<1152x128xbf16, #tpu.memory_space<vmem>>, vector<1152x128xbf16>
    %cst = arith.constant dense<0.000000e+00> : vector<8x128xf32>
    %2 = tpu.matmul %0, %1, %cst {dimension_numbers = #tpu.dot_dimension_numbers<[1], [0], [0], [1], [0, 0, 1, 1], [], []>} : vector<8x1152xbf16>, vector<1152x128xbf16>, vector<8x128xf32> -> vector<8x128xf32>
    %c0_3 = arith.constant 0 : index
    %c0_4 = arith.constant 0 : index
    %3 = vector.load %arg3[%c0_3, %c0_4] : memref<1x128xf32, #tpu.memory_space<vmem>>, vector<1x128xf32>
    %4 = vector.broadcast %3 : vector<1x128xf32> to vector<8x128xf32>
    %5 = arith.mulf %2, %4 : vector<8x128xf32>
    %c0_5 = arith.constant 0 : index
    %c0_6 = arith.constant 0 : index
    %6 = vector.load %arg4[%c0_5, %c0_6] : memref<1x128xf32, #tpu.memory_space<vmem>>, vector<1x128xf32>
    %7 = vector.broadcast %6 : vector<1x128xf32> to vector<8x128xf32>
    %8 = arith.addf %5, %7 : vector<8x128xf32>
    %cst_7 = arith.constant 0.000000e+00 : f32
    %9 = vector.broadcast %cst_7 : f32 to vector<8x128xf32>
    %10 = arith.maximumf %8, %9 : vector<8x128xf32>
    %11 = arith.truncf %10 : vector<8x128xf32> to vector<8x128xbf16>
    %c0_8 = arith.constant 0 : index
    %c0_9 = arith.constant 0 : index
    %12 = vector.load %arg5[%c0_8, %c0_9] : memref<128x512xbf16, #tpu.memory_space<vmem>>, vector<128x512xbf16>
    %cst_10 = arith.constant dense<0.000000e+00> : vector<8x512xf32>
    %13 = tpu.matmul %11, %12, %cst_10 {dimension_numbers = #tpu.dot_dimension_numbers<[1], [0], [0], [1], [0, 0, 1, 1], [], []>} : vector<8x128xbf16>, vector<128x512xbf16>, vector<8x512xf32> -> vector<8x512xf32>
    %c0_11 = arith.constant 0 : index
    %c0_12 = arith.constant 0 : index
    %14 = vector.load %arg6[%c0_11, %c0_12] : memref<1x512xf32, #tpu.memory_space<vmem>>, vector<1x512xf32>
    %15 = vector.broadcast %14 : vector<1x512xf32> to vector<8x512xf32>
    %16 = arith.mulf %13, %15 : vector<8x512xf32>
    %c0_13 = arith.constant 0 : index
    %c0_14 = arith.constant 0 : index
    %17 = vector.load %arg7[%c0_13, %c0_14] : memref<1x512xf32, #tpu.memory_space<vmem>>, vector<1x512xf32>
    %18 = vector.broadcast %17 : vector<1x512xf32> to vector<8x512xf32>
    %19 = arith.addf %16, %18 : vector<8x512xf32>
    %c0_15 = arith.constant 0 : index
    %c0_16 = arith.constant 0 : index
    %20 = vector.load %arg8[%c0_15, %c0_16] : memref<8x512xbf16, #tpu.memory_space<vmem>>, vector<8x512xbf16>
    %21 = arith.extf %20 : vector<8x512xbf16> to vector<8x512xf32>
    %22 = arith.addf %19, %21 : vector<8x512xf32>
    %cst_17 = arith.constant 0.000000e+00 : f32
    %23 = vector.broadcast %cst_17 : f32 to vector<8x512xf32>
    %24 = arith.maximumf %22, %23 : vector<8x512xf32>
    %25 = arith.truncf %24 : vector<8x512xf32> to vector<8x512xbf16>
    %c0_18 = arith.constant 0 : index
    %c0_19 = arith.constant 0 : index
    %26 = vector.load %arg9[%c0_18, %c0_19] : memref<8x512xbf16, #tpu.memory_space<vmem>>, vector<8x512xbf16>
    tpu.vector_store %arg9[%c0_18, %c0_19], %25 {strides = array<i32>} : memref<8x512xbf16, #tpu.memory_space<vmem>>, vector<8x512xbf16>,
    return
  }
  func.func @transform_0(%arg0: i32) -> (i32, i32) {
    %c0_i32 = arith.constant 0 : i32
    %c0_i32_0 = arith.constant 0 : i32
    return %arg0, %c0_i32 : i32, i32
  }
  func.func @transform_1(%arg0: i32) -> (i32, i32) {
    %c0_i32 = arith.constant 0 : i32
    %c0_i32_0 = arith.constant 0 : i32
    %c0_i32_1 = arith.constant 0 : i32
    return %c0_i32, %c0_i32_0 : i32, i32
  }
  func.func @transform_2(%arg0: i32) -> (i32, i32) {
    %c0_i32 = arith.constant 0 : i32
    %c0_i32_0 = arith.constant 0 : i32
    %c0_i32_1 = arith.constant 0 : i32
    return %c0_i32, %c0_i32_0 : i32, i32
  }
  func.func @transform_3(%arg0: i32) -> (i32, i32) {
    %c0_i32 = arith.constant 0 : i32
    %c0_i32_0 = arith.constant 0 : i32
    %c0_i32_1 = arith.constant 0 : i32
    return %c0_i32, %c0_i32_0 : i32, i32
  }
  func.func @transform_4(%arg0: i32) -> (i32, i32) {
    %c0_i32 = arith.constant 0 : i32
    %c0_i32_0 = arith.constant 0 : i32
    %c0_i32_1 = arith.constant 0 : i32
    return %c0_i32, %c0_i32_0 : i32, i32
  }
  func.func @transform_5(%arg0: i32) -> (i32, i32) {
    %c0_i32 = arith.constant 0 : i32
    %c0_i32_0 = arith.constant 0 : i32
    %c0_i32_1 = arith.constant 0 : i32
    return %c0_i32, %c0_i32_0 : i32, i32
  }
  func.func @transform_6(%arg0: i32) -> (i32, i32) {
    %c0_i32 = arith.constant 0 : i32
    %c0_i32_0 = arith.constant 0 : i32
    %c0_i32_1 = arith.constant 0 : i32
    return %c0_i32, %c0_i32_0 : i32, i32
  }
  func.func @transform_7(%arg0: i32) -> (i32, i32) {
    %c0_i32 = arith.constant 0 : i32
    %c0_i32_0 = arith.constant 0 : i32
    return %arg0, %c0_i32 : i32, i32
  }
  func.func @transform_8(%arg0: i32) -> (i32, i32) {
    %c0_i32 = arith.constant 0 : i32
    %c0_i32_0 = arith.constant 0 : i32
    return %arg0, %c0_i32 : i32, i32
  }
}

module attributes {stable_mosaic.version = 11 : i64} {
  func.func @_mm_bn_kernel(%arg0: i32, %arg1: memref<8x512xbf16, #tpu.memory_space<vmem>>, %arg2: memref<512x128xbf16, #tpu.memory_space<vmem>>, %arg3: memref<1x128xf32, #tpu.memory_space<vmem>>, %arg4: memref<1x128xf32, #tpu.memory_space<vmem>>, %arg5: memref<8x128xf32, #tpu.memory_space<vmem>>) attributes {dimension_semantics = [#tpu.dimension_semantics<parallel>], iteration_bounds = array<i64: 1>, scalar_prefetch = 0 : i64, scratch_operands = 0 : i64, tpu.core_type = #tpu.core_type<tc>, window_params = [{transform_indices = @transform_0, window_bounds = array<i64: 8, 512>}, {pipeline_mode = #tpu.pipeline_mode<synchronous>, transform_indices = @transform_1, window_bounds = array<i64: 512, 128>}, {pipeline_mode = #tpu.pipeline_mode<synchronous>, transform_indices = @transform_2, window_bounds = array<i64: 1, 128>}, {pipeline_mode = #tpu.pipeline_mode<synchronous>, transform_indices = @transform_3, window_bounds = array<i64: 1, 128>}, {transform_indices = @transform_4, window_bounds = array<i64: 8, 128>}]} {
    %c0 = arith.constant 0 : index
    %c0_0 = arith.constant 0 : index
    %0 = vector.load %arg1[%c0, %c0_0] : memref<8x512xbf16, #tpu.memory_space<vmem>>, vector<8x512xbf16>
    %c0_1 = arith.constant 0 : index
    %c0_2 = arith.constant 0 : index
    %1 = vector.load %arg2[%c0_1, %c0_2] : memref<512x128xbf16, #tpu.memory_space<vmem>>, vector<512x128xbf16>
    %cst = arith.constant dense<0.000000e+00> : vector<8x128xf32>
    %2 = tpu.matmul %0, %1, %cst {dimension_numbers = #tpu.dot_dimension_numbers<[1], [0], [0], [1], [0, 0, 1, 1], [], []>} : vector<8x512xbf16>, vector<512x128xbf16>, vector<8x128xf32> -> vector<8x128xf32>
    %c0_3 = arith.constant 0 : index
    %c0_4 = arith.constant 0 : index
    %3 = vector.load %arg3[%c0_3, %c0_4] : memref<1x128xf32, #tpu.memory_space<vmem>>, vector<1x128xf32>
    %4 = vector.broadcast %3 : vector<1x128xf32> to vector<8x128xf32>
    %5 = arith.mulf %2, %4 : vector<8x128xf32>
    %c0_5 = arith.constant 0 : index
    %c0_6 = arith.constant 0 : index
    %6 = vector.load %arg4[%c0_5, %c0_6] : memref<1x128xf32, #tpu.memory_space<vmem>>, vector<1x128xf32>
    %7 = vector.broadcast %6 : vector<1x128xf32> to vector<8x128xf32>
    %8 = arith.addf %5, %7 : vector<8x128xf32>
    %c0_7 = arith.constant 0 : index
    %c0_8 = arith.constant 0 : index
    %9 = vector.load %arg5[%c0_7, %c0_8] : memref<8x128xf32, #tpu.memory_space<vmem>>, vector<8x128xf32>
    tpu.vector_store %arg5[%c0_7, %c0_8], %8 {strides = array<i32>} : memref<8x128xf32, #tpu.memory_space<vmem>>, vector<8x128xf32>,
    return
  }
  func.func @transform_0(%arg0: i32) -> (i32, i32) {
    %c0_i32 = arith.constant 0 : i32
    %c0_i32_0 = arith.constant 0 : i32
    return %arg0, %c0_i32 : i32, i32
  }
  func.func @transform_1(%arg0: i32) -> (i32, i32) {
    %c0_i32 = arith.constant 0 : i32
    %c0_i32_0 = arith.constant 0 : i32
    %c0_i32_1 = arith.constant 0 : i32
    return %c0_i32, %c0_i32_0 : i32, i32
  }
  func.func @transform_2(%arg0: i32) -> (i32, i32) {
    %c0_i32 = arith.constant 0 : i32
    %c0_i32_0 = arith.constant 0 : i32
    %c0_i32_1 = arith.constant 0 : i32
    return %c0_i32, %c0_i32_0 : i32, i32
  }
  func.func @transform_3(%arg0: i32) -> (i32, i32) {
    %c0_i32 = arith.constant 0 : i32
    %c0_i32_0 = arith.constant 0 : i32
    %c0_i32_1 = arith.constant 0 : i32
    return %c0_i32, %c0_i32_0 : i32, i32
  }
  func.func @transform_4(%arg0: i32) -> (i32, i32) {
    %c0_i32 = arith.constant 0 : i32
    %c0_i32_0 = arith.constant 0 : i32
    return %arg0, %c0_i32 : i32, i32
  }
}

</mosaic_0001>

<llo_original>
// kernel: forward.39
$region0: #{forward.39}
  #allocation0 [shape = 'u32[]', space=smem, size = 0x4, offset = 0x4, fixed_abs, tag = 'smem constant byte address 0x4 - core index']
  #allocation1 [shape = 'u32[144,128]{1,0:T(1,128)}', space=vmem, size = 0x12000, scoped, tag = 'internal scratch']
  %s0 = inlined_call_operand.vmem [shape: bf16[512,256], index: 0, kind: input, shape index: {}]
  %s1 = inlined_call_operand.vmem [shape: bf16[256,128], index: 1, kind: input, shape index: {}]
  %s2 = inlined_call_operand.vmem [shape: f32[1,128], index: 2, kind: input, shape index: {}]
  %s3 = inlined_call_operand.vmem [shape: f32[1,128], index: 3, kind: input, shape index: {}]
  %s4 = inlined_call_operand.vmem [shape: bf16[512,128], index: 4, kind: output, shape index: {}]
  %s5 = sld [smem:[#allocation0]]
  $region49: #{forward.39} parent=0
    _
  %s7 = ssub.s32 1, %s5
  %s8 = scalar_select 0, %s7, %s5
  loop: start=0, step=1, limit=4
  $region2: #{forward.39} parent=0 // loop_pre_header
    _
  $region3: #{forward.39} parent=0 // loop_header
    %s10 = sphi 0, %s14
    %p11 = scmp.ge.s32.totalorder %s10, 4
    %s20 = sphi 0, %s22
    %s23 = sphi 0, %s20
    %s24 = sphi 0, %s23
    %s40 = sphi 0, %s24
    %s44 = sphi 0, %s44
    %s46 = sphi 0, %s44
    %s47 = sphi 0, %s46
    %s61 = sphi 0, %s47
    %s65 = sphi 0, %s65
    %s67 = sphi 0, %s65
    %s68 = sphi 0, %s67
    %s82 = sphi 0, %s68
    %s86 = sphi 0, %s86
    %s88 = sphi 0, %s86
    %s89 = sphi 0, %s88
    %s103 = sphi 0, %s89
    %s109 = sphi 0, %s111
    %s112 = sphi 0, %s109
    %s113 = sphi 0, %s112
    %s129 = sphi 0, %s113
  $region4: #{forward.39} parent=0 // loop_header_branch
    %13 = sbr.rel (%p11) target = $region8
  $region5: #{forward.39} parent=0 // loop_body
    %s15 = ssub.s32 %s10, 1
    %s16 = ssub.s32 %s10, 2
    %s17 = sadd.s32 %s10, 1
    %s18 = ssub.s32 %s10, %s17
    %p19 = scmp.eq.s32.totalorder %s18, 0
    %s21 = sadd.s32 %s20, 1
    %s22 = scalar_select %p19, %s20, %s21
    %p25 = pneg %p19
    %p26 = scmp.eq.s32.totalorder %s10, 1
    %p27 = por %p25, %p26
    %p28 = scmp.ne.s32.totalorder %s20, %s23
    %p29 = scmp.eq.s32.totalorder %s10, 0
    %p30 = por %p28, %p29
    %p31 = scmp.ne.s32.totalorder %s20, %s23
    %p32 = scmp.eq.s32.totalorder %s15, 1
    %p33 = por %p31, %p32
    %p34 = scmp.ne.s32.totalorder %s23, %s24
    %p35 = scmp.eq.s32.totalorder %s15, 0
    %p36 = por %p34, %p35
    %p37 = scmp.ne.s32.totalorder %s23, %s24
    %p38 = scmp.eq.s32.totalorder %s16, 1
    %p39 = por %p37, %p38
    %p41 = scmp.ne.s32.totalorder %s24, %s40
    %p42 = scmp.eq.s32.totalorder %s16, 0
    %p43 = por %p41, %p42
    %s45 = sadd.s32 %s44, 1
    %p48 = scmp.eq.s32.totalorder %s10, 1
    %p49 = scmp.ne.s32.totalorder %s44, %s46
    %p50 = scmp.eq.s32.totalorder %s10, 0
    %p51 = por %p49, %p50
    %p52 = scmp.ne.s32.totalorder %s44, %s46
    %p53 = scmp.eq.s32.totalorder %s15, 1
    %p54 = por %p52, %p53
    %p55 = scmp.ne.s32.totalorder %s46, %s47
    %p56 = scmp.eq.s32.totalorder %s15, 0
    %p57 = por %p55, %p56
    %p58 = scmp.ne.s32.totalorder %s46, %s47
    %p59 = scmp.eq.s32.totalorder %s16, 1
    %p60 = por %p58, %p59
    %p62 = scmp.ne.s32.totalorder %s47, %s61
    %p63 = scmp.eq.s32.totalorder %s16, 0
    %p64 = por %p62, %p63
    %s66 = sadd.s32 %s65, 1
    %p69 = scmp.eq.s32.totalorder %s10, 1
    %p70 = scmp.ne.s32.totalorder %s65, %s67
    %p71 = scmp.eq.s32.totalorder %s10, 0
    %p72 = por %p70, %p71
    %p73 = scmp.ne.s32.totalorder %s65, %s67
    %p74 = scmp.eq.s32.totalorder %s15, 1
    %p75 = por %p73, %p74
    %p76 = scmp.ne.s32.totalorder %s67, %s68
    %p77 = scmp.eq.s32.totalorder %s15, 0
    %p78 = por %p76, %p77
    %p79 = scmp.ne.s32.totalorder %s67, %s68
    %p80 = scmp.eq.s32.totalorder %s16, 1
    %p81 = por %p79, %p80
    %p83 = scmp.ne.s32.totalorder %s68, %s82
    %p84 = scmp.eq.s32.totalorder %s16, 0
    %p85 = por %p83, %p84
    %s87 = sadd.s32 %s86, 1
    %p90 = scmp.eq.s32.totalorder %s10, 1
    %p91 = scmp.ne.s32.totalorder %s86, %s88
    %p92 = scmp.eq.s32.totalorder %s10, 0
    %p93 = por %p91, %p92
    %p94 = scmp.ne.s32.totalorder %s86, %s88
    %p95 = scmp.eq.s32.totalorder %s15, 1
    %p96 = por %p94, %p95
    %p97 = scmp.ne.s32.totalorder %s88, %s89
    %p98 = scmp.eq.s32.totalorder %s15, 0
    %p99 = por %p97, %p98
    %p100 = scmp.ne.s32.totalorder %s88, %s89
    %p101 = scmp.eq.s32.totalorder %s16, 1
    %p102 = por %p100, %p101
    %p104 = scmp.ne.s32.totalorder %s89, %s103
    %p105 = scmp.eq.s32.totalorder %s16, 0
    %p106 = por %p104, %p105
    %s107 = ssub.s32 %s10, %s17
    %p108 = scmp.eq.s32.totalorder %s107, 0
    %s110 = sadd.s32 %s109, 1
    %s111 = scalar_select %p108, %s109, %s110
    %p114 = pneg %p108
    %p115 = scmp.eq.s32.totalorder %s10, 1
    %p116 = por %p114, %p115
    %p117 = scmp.ne.s32.totalorder %s109, %s112
    %p118 = scmp.eq.s32.totalorder %s10, 0
    %p119 = por %p117, %p118
    %p120 = scmp.ne.s32.totalorder %s109, %s112
    %p121 = scmp.eq.s32.totalorder %s15, 1
    %p122 = por %p120, %p121
    %p123 = scmp.ne.s32.totalorder %s112, %s113
    %p124 = scmp.eq.s32.totalorder %s15, 0
    %p125 = por %p123, %p124
    %p126 = scmp.ne.s32.totalorder %s112, %s113
    %p127 = scmp.eq.s32.totalorder %s16, 1
    %p128 = por %p126, %p127
    %p130 = scmp.ne.s32.totalorder %s113, %s129
    %p131 = scmp.eq.s32.totalorder %s16, 0
    %p132 = por %p130, %p131
    %p133 = scmp.le.s32.totalorder 1, %s10
    %p134 = scmp.lt.s32.totalorder %s10, 3
    %p135 = pnand %p133, %p134
    %p136 = pneg %p135
    // Predicated region
    $region9: #{forward.39} parent=5 // pred_check
      _
    $region10: #{forward.39} parent=5 // pred_check_branch
      %138 = sbr.rel (%p135) target = $region12
    $region11: #{forward.39} parent=5 // pred_region
      %s139 = ssub.s32 %s10, 1
      // Predicated region
      $region13: #{forward.39} parent=11 // pred_check
        %p140 = pneg %p57
      $region14: #{forward.39} parent=11 // pred_check_branch
        %142 = sbr.rel (%p140) target = $region16
      $region15: #{forward.39} parent=11 // pred_region
        _
      $region16: #{forward.39} parent=11 // pred_fallthru
        _
      // Predicated region
      $region17: #{forward.39} parent=11 // pred_check
        %p143 = pneg %p78
      $region18: #{forward.39} parent=11 // pred_check_branch
        %145 = sbr.rel (%p143) target = $region20
      $region19: #{forward.39} parent=11 // pred_region
        _
      $region20: #{forward.39} parent=11 // pred_fallthru
        _
      // Predicated region
      $region21: #{forward.39} parent=11 // pred_check
        %p146 = pneg %p99
      $region22: #{forward.39} parent=11 // pred_check_branch
        %148 = sbr.rel (%p146) target = $region24
      $region23: #{forward.39} parent=11 // pred_region
        _
      $region24: #{forward.39} parent=11 // pred_fallthru
        _
    $region12: #{forward.39} parent=5 // pred_fallthru
      _
    %p149 = scmp.lt.s32.totalorder %s10, 2
    // Predicated region
    $region25: #{forward.39} parent=5 // pred_check
      %p150 = pneg %p149
    $region26: #{forward.39} parent=5 // pred_check_branch
      %152 = sbr.rel (%p150) target = $region28
    $region27: #{forward.39} parent=5 // pred_region
      // Predicated region
      $region29: #{forward.39} parent=27 // pred_check
        %p153 = pneg %p30
      $region30: #{forward.39} parent=27 // pred_check_branch
        %155 = sbr.rel (%p153) target = $region32
      $region31: #{forward.39} parent=27 // pred_region
        %s156 = smul.u32 32, %s10
        %p157 = scmp.lt.s32.totalorder %s156, 63
        %s158 = scalar_select %p157, %s156, 63
        %s159 = smul.addr %s158, 2
        %s160 = smul.addr %s159, 4
        %s161 = scalar_lea.vmem %s0, %s160
        %s162 = smul.u32 32, %s10
      $region32: #{forward.39} parent=27 // pred_fallthru
        _
    $region28: #{forward.39} parent=5 // pred_fallthru
      _
    %p163 = scmp.le.s32.totalorder 1, %s10
    %p164 = scmp.lt.s32.totalorder %s10, 3
    %p165 = pnand %p163, %p164
    %p166 = pneg %p165
    // Predicated region
    $region33: #{forward.39} parent=5 // pred_check
      _
    $region34: #{forward.39} parent=5 // pred_check_branch
      %168 = sbr.rel (%p165) target = $region36
    $region35: #{forward.39} parent=5 // pred_region
      %s169 = ssub.s32 %s10, 1
      %s170 = smul.u32 32, %s15
      %p171 = scmp.lt.s32.totalorder %s170, 63
      %s172 = scalar_select %p171, %s170, 63
      %s173 = smul.addr %s172, 2
      %s174 = smul.addr %s173, 4
      %s175 = scalar_lea.vmem %s0, %s174
      %p176 = pneg %p36
      %p177 = pneg %p33
      %p178 = pneg %p57
      %p179 = pneg %p54
      %p180 = pneg %p78
      %p181 = pneg %p75
      %p182 = pneg %p99
      %p183 = pneg %p96
      %p184 = pneg %p125
      %p185 = pneg %p122
      %s186 = smul.u32 32, %s15
      %p187 = scmp.lt.s32.totalorder %s186, 63
      %s188 = scalar_select %p187, %s186, 63
      %s189 = smul.addr %s188, 4
      %s190 = scalar_lea.vmem %s4, %s189
      %s191 = smul.u32 32, %s15
      %p192 = scmp.lt.s32.totalorder %s191, 63
      %s193 = scalar_select %p192, %s191, 63
      %s194 = smul.addr %s193, 2
      %s195 = smul.addr %s194, 4
      %s196 = scalar_lea.vmem %s0, %s195
      %s197 = smul.u32 32, %s15
      %s198 = smul.u32 32, %s15
      %p199 = scmp.lt.s32.totalorder %s198, 63
      %s200 = scalar_select %p199, %s198, 63
      %s201 = smul.addr %s200, 4
      %s202 = scalar_lea.vmem %s4, %s201
      %s203 = smul.u32 32, %s15
      %v205 = vld [vmem:[%s196] sm:$0xff]
      %v206 = vld [vmem:[%s196 + $0x8] sm:$0xff]
      %v207 = vld [vmem:[%s196 + $0x10] sm:$0xff]
      %v208 = vld [vmem:[%s196 + $0x18] sm:$0xff]
      %v209 = vld [vmem:[%s196 + $0x20] sm:$0xff]
      %v210 = vld [vmem:[%s196 + $0x28] sm:$0xff]
      %v211 = vld [vmem:[%s196 + $0x30] sm:$0xff]
      %v212 = vld [vmem:[%s196 + $0x38] sm:$0xff]
      %v213 = vld [vmem:[%s196 + $0x40] sm:$0xff]
      %v214 = vld [vmem:[%s196 + $0x48] sm:$0xff]
      %v215 = vld [vmem:[%s196 + $0x50] sm:$0xff]
      %v216 = vld [vmem:[%s196 + $0x58] sm:$0xff]
      %v217 = vld [vmem:[%s196 + $0x60] sm:$0xff]
      %v218 = vld [vmem:[%s196 + $0x68] sm:$0xff]
      %v219 = vld [vmem:[%s196 + $0x70] sm:$0xff]
      %v220 = vld [vmem:[%s196 + $0x78] sm:$0xff]
      %v221 = vld [vmem:[%s196 + $0x80] sm:$0xff]
      %v222 = vld [vmem:[%s196 + $0x88] sm:$0xff]
      %v223 = vld [vmem:[%s196 + $0x90] sm:$0xff]
      %v224 = vld [vmem:[%s196 + $0x98] sm:$0xff]
      %v225 = vld [vmem:[%s196 + $0xa0] sm:$0xff]
      %v226 = vld [vmem:[%s196 + $0xa8] sm:$0xff]
      %v227 = vld [vmem:[%s196 + $0xb0] sm:$0xff]
      %v228 = vld [vmem:[%s196 + $0xb8] sm:$0xff]
      %v229 = vld [vmem:[%s196 + $0xc0] sm:$0xff]
      %v230 = vld [vmem:[%s196 + $0xc8] sm:$0xff]
      %v231 = vld [vmem:[%s196 + $0xd0] sm:$0xff]
      %v232 = vld [vmem:[%s196 + $0xd8] sm:$0xff]
      %v233 = vld [vmem:[%s196 + $0xe0] sm:$0xff]
      %v234 = vld [vmem:[%s196 + $0xe8] sm:$0xff]
      %v235 = vld [vmem:[%s196 + $0xf0] sm:$0xff]
      %v236 = vld [vmem:[%s196 + $0xf8] sm:$0xff]
      %v237 = vld [vmem:[%s1] sm:$0xf]
      %v238 = vld [vmem:[%s1 + $0x4] sm:$0xf]
      %v239 = vld [vmem:[%s1 + $0x8] sm:$0xf]
      %v240 = vld [vmem:[%s1 + $0xc] sm:$0xf]
      %v241 = vld [vmem:[%s1 + $0x10] sm:$0xf]
      %v242 = vld [vmem:[%s1 + $0x14] sm:$0xf]
      %v243 = vld [vmem:[%s1 + $0x18] sm:$0xf]
      %v244 = vld [vmem:[%s1 + $0x1c] sm:$0xf]
      %v245 = vld [vmem:[%s1 + $0x20] sm:$0xf]
      %v246 = vld [vmem:[%s1 + $0x24] sm:$0xf]
      %v247 = vld [vmem:[%s1 + $0x28] sm:$0xf]
      %v248 = vld [vmem:[%s1 + $0x2c] sm:$0xf]
      %v249 = vld [vmem:[%s1 + $0x30] sm:$0xf]
      %v250 = vld [vmem:[%s1 + $0x34] sm:$0xf]
      %v251 = vld [vmem:[%s1 + $0x38] sm:$0xf]
      %v252 = vld [vmem:[%s1 + $0x3c] sm:$0xf]
      %v253 = vld [vmem:[%s1 + $0x40] sm:$0xf]
      %v254 = vld [vmem:[%s1 + $0x44] sm:$0xf]
      %v255 = vld [vmem:[%s1 + $0x48] sm:$0xf]
      %v256 = vld [vmem:[%s1 + $0x4c] sm:$0xf]
      %v257 = vld [vmem:[%s1 + $0x50] sm:$0xf]
      %v258 = vld [vmem:[%s1 + $0x54] sm:$0xf]
      %v259 = vld [vmem:[%s1 + $0x58] sm:$0xf]
      %v260 = vld [vmem:[%s1 + $0x5c] sm:$0xf]
      %v261 = vld [vmem:[%s1 + $0x60] sm:$0xf]
      %v262 = vld [vmem:[%s1 + $0x64] sm:$0xf]
      %v263 = vld [vmem:[%s1 + $0x68] sm:$0xf]
      %v264 = vld [vmem:[%s1 + $0x6c] sm:$0xf]
      %v265 = vld [vmem:[%s1 + $0x70] sm:$0xf]
      %v266 = vld [vmem:[%s1 + $0x74] sm:$0xf]
      %v267 = vld [vmem:[%s1 + $0x78] sm:$0xf]
      %v268 = vld [vmem:[%s1 + $0x7c] sm:$0xf]
      %v301 = vunpack.c.l.b16 %v205
      %v302 = vunpack.c.h.b16 %v205
      %v303 = vunpack.c.l.b16 %v206
      %v304 = vunpack.c.h.b16 %v206
      %v305 = vunpack.c.l.b16 %v207
      %v306 = vunpack.c.h.b16 %v207
      %v307 = vunpack.c.l.b16 %v208
      %v308 = vunpack.c.h.b16 %v208
      %v309 = vunpack.c.l.b16 %v209
      %v310 = vunpack.c.h.b16 %v209
      %v311 = vunpack.c.l.b16 %v210
      %v312 = vunpack.c.h.b16 %v210
      %v313 = vunpack.c.l.b16 %v211
      %v314 = vunpack.c.h.b16 %v211
      %v315 = vunpack.c.l.b16 %v212
      %v316 = vunpack.c.h.b16 %v212
      %v317 = vunpack.c.l.b16 %v213
      %v318 = vunpack.c.h.b16 %v213
      %v319 = vunpack.c.l.b16 %v214
      %v320 = vunpack.c.h.b16 %v214
      %v321 = vunpack.c.l.b16 %v215
      %v322 = vunpack.c.h.b16 %v215
      %v323 = vunpack.c.l.b16 %v216
      %v324 = vunpack.c.h.b16 %v216
      %v325 = vunpack.c.l.b16 %v217
      %v326 = vunpack.c.h.b16 %v217
      %v327 = vunpack.c.l.b16 %v218
      %v328 = vunpack.c.h.b16 %v218
      %v329 = vunpack.c.l.b16 %v219
      %v330 = vunpack.c.h.b16 %v219
      %v331 = vunpack.c.l.b16 %v220
      %v332 = vunpack.c.h.b16 %v220
      %v333 = vunpack.c.l.b16 %v221
      %v334 = vunpack.c.h.b16 %v221
      %v335 = vunpack.c.l.b16 %v222
      %v336 = vunpack.c.h.b16 %v222
      %v337 = vunpack.c.l.b16 %v223
      %v338 = vunpack.c.h.b16 %v223
      %v339 = vunpack.c.l.b16 %v224
      %v340 = vunpack.c.h.b16 %v224
      %v341 = vunpack.c.l.b16 %v225
      %v342 = vunpack.c.h.b16 %v225
      %v343 = vunpack.c.l.b16 %v226
      %v344 = vunpack.c.h.b16 %v226
      %v345 = vunpack.c.l.b16 %v227
      %v346 = vunpack.c.h.b16 %v227
      %v347 = vunpack.c.l.b16 %v228
      %v348 = vunpack.c.h.b16 %v228
      %v349 = vunpack.c.l.b16 %v229
      %v350 = vunpack.c.h.b16 %v229
      %v351 = vunpack.c.l.b16 %v230
      %v352 = vunpack.c.h.b16 %v230
      %v353 = vunpack.c.l.b16 %v231
      %v354 = vunpack.c.h.b16 %v231
      %v355 = vunpack.c.l.b16 %v232
      %v356 = vunpack.c.h.b16 %v232
      %v357 = vunpack.c.l.b16 %v233
      %v358 = vunpack.c.h.b16 %v233
      %v359 = vunpack.c.l.b16 %v234
      %v360 = vunpack.c.h.b16 %v234
      %v361 = vunpack.c.l.b16 %v235
      %v362 = vunpack.c.h.b16 %v235
      %v363 = vunpack.c.l.b16 %v236
      %v364 = vunpack.c.h.b16 %v236
      %v365 = vpack.c.b16 %v303, %v301
      %v366 = vpack.c.b16 %v304, %v302
      %v367 = vpack.c.b16 %v307, %v305
      %v368 = vpack.c.b16 %v308, %v306
      %v369 = vpack.c.b16 %v311, %v309
      %v370 = vpack.c.b16 %v312, %v310
      %v371 = vpack.c.b16 %v315, %v313
      %v372 = vpack.c.b16 %v316, %v314
      %v373 = vpack.c.b16 %v319, %v317
      %v374 = vpack.c.b16 %v320, %v318
      %v375 = vpack.c.b16 %v323, %v321
      %v376 = vpack.c.b16 %v324, %v322
      %v377 = vpack.c.b16 %v327, %v325
      %v378 = vpack.c.b16 %v328, %v326
      %v379 = vpack.c.b16 %v331, %v329
      %v380 = vpack.c.b16 %v332, %v330
      %v381 = vpack.c.b16 %v335, %v333
      %v382 = vpack.c.b16 %v336, %v334
      %v383 = vpack.c.b16 %v339, %v337
      %v384 = vpack.c.b16 %v340, %v338
      %v385 = vpack.c.b16 %v343, %v341
      %v386 = vpack.c.b16 %v344, %v342
      %v387 = vpack.c.b16 %v347, %v345
      %v388 = vpack.c.b16 %v348, %v346
      %v389 = vpack.c.b16 %v351, %v349
      %v390 = vpack.c.b16 %v352, %v350
      %v391 = vpack.c.b16 %v355, %v353
      %v392 = vpack.c.b16 %v356, %v354
      %v393 = vpack.c.b16 %v359, %v357
      %v394 = vpack.c.b16 %v360, %v358
      %v395 = vpack.c.b16 %v363, %v361
      %v396 = vpack.c.b16 %v364, %v362
      %v461 = vunpack.c.l.b16 %v237
      %v462 = vunpack.c.l.b16 %v238
      %v463 = vunpack.c.l.b16 %v239
      %v464 = vunpack.c.l.b16 %v240
      %v465 = vunpack.c.l.b16 %v241
      %v466 = vunpack.c.l.b16 %v242
      %v467 = vunpack.c.l.b16 %v243
      %v468 = vunpack.c.l.b16 %v244
      %v469 = vunpack.c.l.b16 %v245
      %v470 = vunpack.c.l.b16 %v246
      %v471 = vunpack.c.l.b16 %v247
      %v472 = vunpack.c.l.b16 %v248
      %v473 = vunpack.c.l.b16 %v249
      %v474 = vunpack.c.l.b16 %v250
      %v475 = vunpack.c.l.b16 %v251
      %v476 = vunpack.c.l.b16 %v252
      %v477 = vunpack.c.l.b16 %v253
      %v478 = vunpack.c.l.b16 %v254
      %v479 = vunpack.c.l.b16 %v255
      %v480 = vunpack.c.l.b16 %v256
      %v481 = vunpack.c.l.b16 %v257
      %v482 = vunpack.c.l.b16 %v258
      %v483 = vunpack.c.l.b16 %v259
      %v484 = vunpack.c.l.b16 %v260
      %v485 = vunpack.c.l.b16 %v261
      %v486 = vunpack.c.l.b16 %v262
      %v487 = vunpack.c.l.b16 %v263
      %v488 = vunpack.c.l.b16 %v264
      %v489 = vunpack.c.l.b16 %v265
      %v490 = vunpack.c.l.b16 %v266
      %v491 = vunpack.c.l.b16 %v267
      %v492 = vunpack.c.l.b16 %v268
      %v493 = vpack.c.b16 %v462, %v461
      %v494 = vpack.c.b16 %v464, %v463
      %v495 = vpack.c.b16 %v466, %v465
      %v496 = vpack.c.b16 %v468, %v467
      %v497 = vpack.c.b16 %v470, %v469
      %v498 = vpack.c.b16 %v472, %v471
      %v499 = vpack.c.b16 %v474, %v473
      %v500 = vpack.c.b16 %v476, %v475
      %v501 = vpack.c.b16 %v478, %v477
      %v502 = vpack.c.b16 %v480, %v479
      %v503 = vpack.c.b16 %v482, %v481
      %v504 = vpack.c.b16 %v484, %v483
      %v505 = vpack.c.b16 %v486, %v485
      %v506 = vpack.c.b16 %v488, %v487
      %v507 = vpack.c.b16 %v490, %v489
      %v508 = vpack.c.b16 %v492, %v491
      %525 = vmatprep.subr.bf16.mxu0 0
      %526 = vmatpush1.bf16.msra.mxu0 %v500
      %527 = vmatprep.subr.bf16.mxu0 0
      %528 = vmatpush1.bf16.msra.mxu0 %v499
      %529 = vmatprep.subr.bf16.mxu0 0
      %530 = vmatpush1.bf16.msra.mxu0 %v498
      %531 = vmatprep.subr.bf16.mxu0 0
      %532 = vmatpush1.bf16.msra.mxu0 %v497
      %533 = vmatprep.subr.bf16.mxu0 0
      %534 = vmatpush1.bf16.msra.mxu0 %v496
      %535 = vmatprep.subr.bf16.mxu0 0
      %536 = vmatpush1.bf16.msra.mxu0 %v495
      %537 = vmatprep.subr.bf16.mxu0 0
      %538 = vmatpush1.bf16.msra.mxu0 %v494
      %539 = vmatprep.subr.bf16.mxu0 0
      %540 = vmatpush1.bf16.msra.mxu0 %v493
      %541 = vmatprep.subr.bf16.mxu0 0
      %542 = vmatpush2.bf16.msra.mxu0 %v508
      %543 = vmatprep.subr.bf16.mxu0 0
      %544 = vmatpush2.bf16.msra.mxu0 %v507
      %545 = vmatprep.subr.bf16.mxu0 0
      %546 = vmatpush2.bf16.msra.mxu0 %v506
      %547 = vmatprep.subr.bf16.mxu0 0
      %548 = vmatpush2.bf16.msra.mxu0 %v505
      %549 = vmatprep.subr.bf16.mxu0 0
      %550 = vmatpush2.bf16.msra.mxu0 %v504
      %551 = vmatprep.subr.bf16.mxu0 0
      %552 = vmatpush2.bf16.msra.mxu0 %v503
      %553 = vmatprep.subr.bf16.mxu0 0
      %554 = vmatpush2.bf16.msra.mxu0 %v502
      %555 = vmatprep.subr.bf16.mxu0 0
      %556 = vmatpush2.bf16.msra.mxu0 %v501
      %557 = vmatprep.mubr.bf16.mxu0 %v366
      %558 = vmatmul.mubr.bf16.gmra.mxu0 %v365
      %v559 = vpop.f32.mrf.mxu0
      %v560 = vadd.f32 0.0, %v559
      %v561 = vpop.f32.mrf.mxu0
      %v562 = vpop.f32.mrf.mxu0
      %v563 = vadd.f32 0.0, %v562
      %v564 = vpop.f32.mrf.mxu0
      %565 = vmatprep.mubr.bf16.mxu0 %v368
      %566 = vmatmul.mubr.bf16.gmra.mxu0 %v367
      %v567 = vpop.f32.mrf.mxu0
      %v568 = vadd.f32 0.0, %v567
      %v569 = vpop.f32.mrf.mxu0
      %v570 = vpop.f32.mrf.mxu0
      %v571 = vadd.f32 0.0, %v570
      %v572 = vpop.f32.mrf.mxu0
      %573 = vmatprep.mubr.bf16.mxu0 %v370
      %574 = vmatmul.mubr.bf16.gmra.mxu0 %v369
      %v575 = vpop.f32.mrf.mxu0
      %v576 = vadd.f32 0.0, %v575
      %v577 = vpop.f32.mrf.mxu0
      %v578 = vpop.f32.mrf.mxu0
      %v579 = vadd.f32 0.0, %v578
      %v580 = vpop.f32.mrf.mxu0
      %581 = vmatprep.mubr.bf16.mxu0 %v372
      %582 = vmatmul.mubr.bf16.gmra.mxu0 %v371
      %v583 = vpop.f32.mrf.mxu0
      %v584 = vadd.f32 0.0, %v583
      %v585 = vpop.f32.mrf.mxu0
      %v586 = vpop.f32.mrf.mxu0
      %v587 = vadd.f32 0.0, %v586
      %v588 = vpop.f32.mrf.mxu0
      %589 = vmatprep.mubr.bf16.mxu0 %v374
      %590 = vmatmul.mubr.bf16.gmra.mxu0 %v373
      %v591 = vpop.f32.mrf.mxu0
      %v592 = vadd.f32 0.0, %v591
      %v593 = vpop.f32.mrf.mxu0
      %v594 = vpop.f32.mrf.mxu0
      %v595 = vadd.f32 0.0, %v594
      %v596 = vpop.f32.mrf.mxu0
      %597 = vmatprep.mubr.bf16.mxu0 %v376
      %598 = vmatmul.mubr.bf16.gmra.mxu0 %v375
      %v599 = vpop.f32.mrf.mxu0
      %v600 = vadd.f32 0.0, %v599
      %v601 = vpop.f32.mrf.mxu0
      %v602 = vpop.f32.mrf.mxu0
      %v603 = vadd.f32 0.0, %v602
      %v604 = vpop.f32.mrf.mxu0
      %605 = vmatprep.mubr.bf16.mxu0 %v378
      %606 = vmatmul.mubr.bf16.gmra.mxu0 %v377
      %v607 = vpop.f32.mrf.mxu0
      %v608 = vadd.f32 0.0, %v607
      %v609 = vpop.f32.mrf.mxu0
      %v610 = vpop.f32.mrf.mxu0
      %v611 = vadd.f32 0.0, %v610
      %v612 = vpop.f32.mrf.mxu0
      %613 = vmatprep.mubr.bf16.mxu0 %v380
      %614 = vmatmul.mubr.bf16.gmra.mxu0 %v379
      %v615 = vpop.f32.mrf.mxu0
      %v616 = vadd.f32 0.0, %v615
      %v617 = vpop.f32.mrf.mxu0
      %v618 = vpop.f32.mrf.mxu0
      %v619 = vadd.f32 0.0, %v618
      %v620 = vpop.f32.mrf.mxu0
      %621 = vmatprep.mubr.bf16.mxu0 %v382
      %622 = vmatmul.mubr.bf16.gmra.mxu0 %v381
      %v623 = vpop.f32.mrf.mxu0
      %v624 = vadd.f32 0.0, %v623
      %v625 = vpop.f32.mrf.mxu0
      %v626 = vpop.f32.mrf.mxu0
      %v627 = vadd.f32 0.0, %v626
      %v628 = vpop.f32.mrf.mxu0
      %629 = vmatprep.mubr.bf16.mxu0 %v384
      %630 = vmatmul.mubr.bf16.gmra.mxu0 %v383
      %v631 = vpop.f32.mrf.mxu0
      %v632 = vadd.f32 0.0, %v631
      %v633 = vpop.f32.mrf.mxu0
      %v634 = vpop.f32.mrf.mxu0
      %v635 = vadd.f32 0.0, %v634
      %v636 = vpop.f32.mrf.mxu0
      %637 = vmatprep.mubr.bf16.mxu0 %v386
      %638 = vmatmul.mubr.bf16.gmra.mxu0 %v385
      %v639 = vpop.f32.mrf.mxu0
      %v640 = vadd.f32 0.0, %v639
      %v641 = vpop.f32.mrf.mxu0
      %v642 = vpop.f32.mrf.mxu0
      %v643 = vadd.f32 0.0, %v642
      %v644 = vpop.f32.mrf.mxu0
      %645 = vmatprep.mubr.bf16.mxu0 %v388
      %646 = vmatmul.mubr.bf16.gmra.mxu0 %v387
      %v647 = vpop.f32.mrf.mxu0
      %v648 = vadd.f32 0.0, %v647
      %v649 = vpop.f32.mrf.mxu0
      %v650 = vpop.f32.mrf.mxu0
      %v651 = vadd.f32 0.0, %v650
      %v652 = vpop.f32.mrf.mxu0
      %653 = vmatprep.mubr.bf16.mxu0 %v390
      %654 = vmatmul.mubr.bf16.gmra.mxu0 %v389
      %v655 = vpop.f32.mrf.mxu0
      %v656 = vadd.f32 0.0, %v655
      %v657 = vpop.f32.mrf.mxu0
      %v658 = vpop.f32.mrf.mxu0
      %v659 = vadd.f32 0.0, %v658
      %v660 = vpop.f32.mrf.mxu0
      %661 = vmatprep.mubr.bf16.mxu0 %v392
      %662 = vmatmul.mubr.bf16.gmra.mxu0 %v391
      %v663 = vpop.f32.mrf.mxu0
      %v664 = vadd.f32 0.0, %v663
      %v665 = vpop.f32.mrf.mxu0
      %v666 = vpop.f32.mrf.mxu0
      %v667 = vadd.f32 0.0, %v666
      %v668 = vpop.f32.mrf.mxu0
      %669 = vmatprep.mubr.bf16.mxu0 %v394
      %670 = vmatmul.mubr.bf16.gmra.mxu0 %v393
      %v671 = vpop.f32.mrf.mxu0
      %v672 = vadd.f32 0.0, %v671
      %v673 = vpop.f32.mrf.mxu0
      %v674 = vpop.f32.mrf.mxu0
      %v675 = vadd.f32 0.0, %v674
      %v676 = vpop.f32.mrf.mxu0
      %677 = vmatprep.mubr.bf16.mxu0 %v396
      %678 = vmatmul.mubr.bf16.gmra.mxu0 %v395
      %v679 = vpop.f32.mrf.mxu0
      %v680 = vadd.f32 0.0, %v679
      %v681 = vpop.f32.mrf.mxu0
      %v682 = vpop.f32.mrf.mxu0
      %v683 = vadd.f32 0.0, %v682
      %v684 = vpop.f32.mrf.mxu0
      %685 = vdwg.mxu0
      %v686 = vld [vmem:[%s2] sm:$0x1]
      %v688 = vlaneseq
      %v689 = vshrl.u32 %v688, 7
      %v690 = vsub.s32 0, %v689
      %v691 = vrot.slane %v686, %v690
      %v693 = vmul.f32 %v560, %v691
      %v694 = vmul.f32 %v563, %v691
      %v695 = vmul.f32 %v568, %v691
      %v696 = vmul.f32 %v571, %v691
      %v697 = vmul.f32 %v576, %v691
      %v698 = vmul.f32 %v579, %v691
      %v699 = vmul.f32 %v584, %v691
      %v700 = vmul.f32 %v587, %v691
      %v701 = vmul.f32 %v592, %v691
      %v702 = vmul.f32 %v595, %v691
      %v703 = vmul.f32 %v600, %v691
      %v704 = vmul.f32 %v603, %v691
      %v705 = vmul.f32 %v608, %v691
      %v706 = vmul.f32 %v611, %v691
      %v707 = vmul.f32 %v616, %v691
      %v708 = vmul.f32 %v619, %v691
      %v709 = vmul.f32 %v624, %v691
      %v710 = vmul.f32 %v627, %v691
      %v711 = vmul.f32 %v632, %v691
      %v712 = vmul.f32 %v635, %v691
      %v713 = vmul.f32 %v640, %v691
      %v714 = vmul.f32 %v643, %v691
      %v715 = vmul.f32 %v648, %v691
      %v716 = vmul.f32 %v651, %v691
      %v717 = vmul.f32 %v656, %v691
      %v718 = vmul.f32 %v659, %v691
      %v719 = vmul.f32 %v664, %v691
      %v720 = vmul.f32 %v667, %v691
      %v721 = vmul.f32 %v672, %v691
      %v722 = vmul.f32 %v675, %v691
      %v723 = vmul.f32 %v680, %v691
      %v724 = vmul.f32 %v683, %v691
      %v725 = vld [vmem:[%s3] sm:$0x1]
      %v727 = vlaneseq
      %v728 = vshrl.u32 %v727, 7
      %v729 = vsub.s32 0, %v728
      %v730 = vrot.slane %v725, %v729
      %v732 = vadd.f32 %v693, %v730
      %v733 = vadd.f32 %v694, %v730
      %v734 = vadd.f32 %v695, %v730
      %v735 = vadd.f32 %v696, %v730
      %v736 = vadd.f32 %v697, %v730
      %v737 = vadd.f32 %v698, %v730
      %v738 = vadd.f32 %v699, %v730
      %v739 = vadd.f32 %v700, %v730
      %v740 = vadd.f32 %v701, %v730
      %v741 = vadd.f32 %v702, %v730
      %v742 = vadd.f32 %v703, %v730
      %v743 = vadd.f32 %v704, %v730
      %v744 = vadd.f32 %v705, %v730
      %v745 = vadd.f32 %v706, %v730
      %v746 = vadd.f32 %v707, %v730
      %v747 = vadd.f32 %v708, %v730
      %v748 = vadd.f32 %v709, %v730
      %v749 = vadd.f32 %v710, %v730
      %v750 = vadd.f32 %v711, %v730
      %v751 = vadd.f32 %v712, %v730
      %v752 = vadd.f32 %v713, %v730
      %v753 = vadd.f32 %v714, %v730
      %v754 = vadd.f32 %v715, %v730
      %v755 = vadd.f32 %v716, %v730
      %v756 = vadd.f32 %v717, %v730
      %v757 = vadd.f32 %v718, %v730
      %v758 = vadd.f32 %v719, %v730
      %v759 = vadd.f32 %v720, %v730
      %v760 = vadd.f32 %v721, %v730
      %v761 = vadd.f32 %v722, %v730
      %v762 = vadd.f32 %v723, %v730
      %v763 = vadd.f32 %v724, %v730
      %v764 = vmax.f32 %v732, 0.0
      %v765 = vmax.f32 %v733, 0.0
      %v766 = vmax.f32 %v734, 0.0
      %v767 = vmax.f32 %v735, 0.0
      %v768 = vmax.f32 %v736, 0.0
      %v769 = vmax.f32 %v737, 0.0
      %v770 = vmax.f32 %v738, 0.0
      %v771 = vmax.f32 %v739, 0.0
      %v772 = vmax.f32 %v740, 0.0
      %v773 = vmax.f32 %v741, 0.0
      %v774 = vmax.f32 %v742, 0.0
      %v775 = vmax.f32 %v743, 0.0
      %v776 = vmax.f32 %v744, 0.0
      %v777 = vmax.f32 %v745, 0.0
      %v778 = vmax.f32 %v746, 0.0
      %v779 = vmax.f32 %v747, 0.0
      %v780 = vmax.f32 %v748, 0.0
      %v781 = vmax.f32 %v749, 0.0
      %v782 = vmax.f32 %v750, 0.0
      %v783 = vmax.f32 %v751, 0.0
      %v784 = vmax.f32 %v752, 0.0
      %v785 = vmax.f32 %v753, 0.0
      %v786 = vmax.f32 %v754, 0.0
      %v787 = vmax.f32 %v755, 0.0
      %v788 = vmax.f32 %v756, 0.0
      %v789 = vmax.f32 %v757, 0.0
      %v790 = vmax.f32 %v758, 0.0
      %v791 = vmax.f32 %v759, 0.0
      %v792 = vmax.f32 %v760, 0.0
      %v793 = vmax.f32 %v761, 0.0
      %v794 = vmax.f32 %v762, 0.0
      %v795 = vmax.f32 %v763, 0.0
      %v796 = vpack.c.bf16 %v765, %v764
      %v797 = vpack.c.bf16 %v767, %v766
      %v798 = vpack.c.bf16 %v769, %v768
      %v799 = vpack.c.bf16 %v771, %v770
      %v800 = vpack.c.bf16 %v773, %v772
      %v801 = vpack.c.bf16 %v775, %v774
      %v802 = vpack.c.bf16 %v777, %v776
      %v803 = vpack.c.bf16 %v779, %v778
      %v804 = vpack.c.bf16 %v781, %v780
      %v805 = vpack.c.bf16 %v783, %v782
      %v806 = vpack.c.bf16 %v785, %v784
      %v807 = vpack.c.bf16 %v787, %v786
      %v808 = vpack.c.bf16 %v789, %v788
      %v809 = vpack.c.bf16 %v791, %v790
      %v810 = vpack.c.bf16 %v793, %v792
      %v811 = vpack.c.bf16 %v795, %v794
      %v828 = vunpack.c.l.b16 %v796
      %v829 = vunpack.c.h.b16 %v796
      %v830 = vunpack.c.l.b16 %v797
      %v831 = vunpack.c.h.b16 %v797
      %v832 = vunpack.c.l.b16 %v798
      %v833 = vunpack.c.h.b16 %v798
      %v834 = vunpack.c.l.b16 %v799
      %v835 = vunpack.c.h.b16 %v799
      %v836 = vunpack.c.l.b16 %v800
      %v837 = vunpack.c.h.b16 %v800
      %v838 = vunpack.c.l.b16 %v801
      %v839 = vunpack.c.h.b16 %v801
      %v840 = vunpack.c.l.b16 %v802
      %v841 = vunpack.c.h.b16 %v802
      %v842 = vunpack.c.l.b16 %v803
      %v843 = vunpack.c.h.b16 %v803
      %v844 = vunpack.c.l.b16 %v804
      %v845 = vunpack.c.h.b16 %v804
      %v846 = vunpack.c.l.b16 %v805
      %v847 = vunpack.c.h.b16 %v805
      %v848 = vunpack.c.l.b16 %v806
      %v849 = vunpack.c.h.b16 %v806
      %v850 = vunpack.c.l.b16 %v807
      %v851 = vunpack.c.h.b16 %v807
      %v852 = vunpack.c.l.b16 %v808
      %v853 = vunpack.c.h.b16 %v808
      %v854 = vunpack.c.l.b16 %v809
      %v855 = vunpack.c.h.b16 %v809
      %v856 = vunpack.c.l.b16 %v810
      %v857 = vunpack.c.h.b16 %v810
      %v858 = vunpack.c.l.b16 %v811
      %v859 = vunpack.c.h.b16 %v811
      %v860 = vpack.c.b16 %v828, %v828
      %v861 = vpack.c.b16 %v829, %v829
      %v862 = vpack.c.b16 %v830, %v830
      %v863 = vpack.c.b16 %v831, %v831
      %v864 = vpack.c.b16 %v832, %v832
      %v865 = vpack.c.b16 %v833, %v833
      %v866 = vpack.c.b16 %v834, %v834
      %v867 = vpack.c.b16 %v835, %v835
      %v868 = vpack.c.b16 %v836, %v836
      %v869 = vpack.c.b16 %v837, %v837
      %v870 = vpack.c.b16 %v838, %v838
      %v871 = vpack.c.b16 %v839, %v839
      %v872 = vpack.c.b16 %v840, %v840
      %v873 = vpack.c.b16 %v841, %v841
      %v874 = vpack.c.b16 %v842, %v842
      %v875 = vpack.c.b16 %v843, %v843
      %v876 = vpack.c.b16 %v844, %v844
      %v877 = vpack.c.b16 %v845, %v845
      %v878 = vpack.c.b16 %v846, %v846
      %v879 = vpack.c.b16 %v847, %v847
      %v880 = vpack.c.b16 %v848, %v848
      %v881 = vpack.c.b16 %v849, %v849
      %v882 = vpack.c.b16 %v850, %v850
      %v883 = vpack.c.b16 %v851, %v851
      %v884 = vpack.c.b16 %v852, %v852
      %v885 = vpack.c.b16 %v853, %v853
      %v886 = vpack.c.b16 %v854, %v854
      %v887 = vpack.c.b16 %v855, %v855
      %v888 = vpack.c.b16 %v856, %v856
      %v889 = vpack.c.b16 %v857, %v857
      %v890 = vpack.c.b16 %v858, %v858
      %v891 = vpack.c.b16 %v859, %v859
      %924 = vst [vmem:[%s202] sm:$0xf] %v860
      %925 = vst [vmem:[%s202 + $0x4] sm:$0xf] %v861
      %926 = vst [vmem:[%s202 + $0x8] sm:$0xf] %v862
      %927 = vst [vmem:[%s202 + $0xc] sm:$0xf] %v863
      %928 = vst [vmem:[%s202 + $0x10] sm:$0xf] %v864
      %929 = vst [vmem:[%s202 + $0x14] sm:$0xf] %v865
      %930 = vst [vmem:[%s202 + $0x18] sm:$0xf] %v866
      %931 = vst [vmem:[%s202 + $0x1c] sm:$0xf] %v867
      %932 = vst [vmem:[%s202 + $0x20] sm:$0xf] %v868
      %933 = vst [vmem:[%s202 + $0x24] sm:$0xf] %v869
      %934 = vst [vmem:[%s202 + $0x28] sm:$0xf] %v870
      %935 = vst [vmem:[%s202 + $0x2c] sm:$0xf] %v871
      %936 = vst [vmem:[%s202 + $0x30] sm:$0xf] %v872
      %937 = vst [vmem:[%s202 + $0x34] sm:$0xf] %v873
      %938 = vst [vmem:[%s202 + $0x38] sm:$0xf] %v874
      %939 = vst [vmem:[%s202 + $0x3c] sm:$0xf] %v875
      %940 = vst [vmem:[%s202 + $0x40] sm:$0xf] %v876
      %941 = vst [vmem:[%s202 + $0x44] sm:$0xf] %v877
      %942 = vst [vmem:[%s202 + $0x48] sm:$0xf] %v878
      %943 = vst [vmem:[%s202 + $0x4c] sm:$0xf] %v879
      %944 = vst [vmem:[%s202 + $0x50] sm:$0xf] %v880
      %945 = vst [vmem:[%s202 + $0x54] sm:$0xf] %v881
      %946 = vst [vmem:[%s202 + $0x58] sm:$0xf] %v882
      %947 = vst [vmem:[%s202 + $0x5c] sm:$0xf] %v883
      %948 = vst [vmem:[%s202 + $0x60] sm:$0xf] %v884
      %949 = vst [vmem:[%s202 + $0x64] sm:$0xf] %v885
      %950 = vst [vmem:[%s202 + $0x68] sm:$0xf] %v886
      %951 = vst [vmem:[%s202 + $0x6c] sm:$0xf] %v887
      %952 = vst [vmem:[%s202 + $0x70] sm:$0xf] %v888
      %953 = vst [vmem:[%s202 + $0x74] sm:$0xf] %v889
      %954 = vst [vmem:[%s202 + $0x78] sm:$0xf] %v890
      %955 = vst [vmem:[%s202 + $0x7c] sm:$0xf] %v891
      %s956 = smul.u32 32, %s15
      %p957 = scmp.lt.s32.totalorder %s956, 63
      %s958 = scalar_select %p957, %s956, 63
      %s959 = smul.addr %s958, 4
      %s960 = scalar_lea.vmem %s4, %s959
      // Predicated region
      $region37: #{forward.39} parent=35 // pred_check
        %p961 = pneg %p122
      $region38: #{forward.39} parent=35 // pred_check_branch
        %963 = sbr.rel (%p961) target = $region40
      $region39: #{forward.39} parent=35 // pred_region
        %s964 = smul.u32 32, %s15
      $region40: #{forward.39} parent=35 // pred_fallthru
        _
    $region36: #{forward.39} parent=5 // pred_fallthru
      _
    %p965 = scmp.le.s32.totalorder 2, %s10
    // Predicated region
    $region41: #{forward.39} parent=5 // pred_check
      %p966 = pneg %p965
    $region42: #{forward.39} parent=5 // pred_check_branch
      %968 = sbr.rel (%p966) target = $region44
    $region43: #{forward.39} parent=5 // pred_region
      %s969 = ssub.s32 %s10, 2
      // Predicated region
      $region45: #{forward.39} parent=43 // pred_check
        %p970 = pneg %p128
      $region46: #{forward.39} parent=43 // pred_check_branch
        %972 = sbr.rel (%p970) target = $region48
      $region47: #{forward.39} parent=43 // pred_region
        %s973 = smul.u32 32, %s16
        %p974 = scmp.lt.s32.totalorder %s973, 63
        %s975 = scalar_select %p974, %s973, 63
        %s976 = smul.addr %s975, 4
        %s977 = scalar_lea.vmem %s4, %s976
      $region48: #{forward.39} parent=43 // pred_fallthru
        _
    $region44: #{forward.39} parent=5 // pred_fallthru
      _
  $region6: #{forward.39} parent=0 // loop_footer
    %s14 = sadd.s32 1, %s10
  $region7: #{forward.39} parent=0 // loop_footer_branch
    %9 = sbr.rel target = $region3
  $region8: #{forward.39} parent=0 // loop_exit
    _

// kernel: forward.41
$region0: #{forward.41}
  #allocation0 [shape = 'u32[]', space=smem, size = 0x4, offset = 0x4, fixed_abs, tag = 'smem constant byte address 0x4 - core index']
  #allocation1 [shape = 'u32[144,128]{1,0:T(1,128)}', space=vmem, size = 0x12000, scoped, tag = 'internal scratch']
  %s0 = inlined_call_operand.vmem [shape: bf16[128,128], index: 0, kind: input, shape index: {}]
  %s1 = inlined_call_operand.vmem [shape: bf16[128,128], index: 1, kind: input, shape index: {}]
  %s2 = inlined_call_operand.vmem [shape: f32[1,128], index: 2, kind: input, shape index: {}]
  %s3 = inlined_call_operand.vmem [shape: f32[1,128], index: 3, kind: input, shape index: {}]
  %s4 = inlined_call_operand.vmem [shape: bf16[128,128], index: 4, kind: output, shape index: {}]
  %s5 = sld [smem:[#allocation0]]
  $region49: #{forward.41} parent=0
    _
  %s7 = ssub.s32 1, %s5
  %s8 = scalar_select 0, %s7, %s5
  loop: start=0, step=1, limit=4
  $region2: #{forward.41} parent=0 // loop_pre_header
    _
  $region3: #{forward.41} parent=0 // loop_header
    %s10 = sphi 0, %s14
    %p11 = scmp.ge.s32.totalorder %s10, 4
    %s20 = sphi 0, %s22
    %s23 = sphi 0, %s20
    %s24 = sphi 0, %s23
    %s40 = sphi 0, %s24
    %s44 = sphi 0, %s44
    %s46 = sphi 0, %s44
    %s47 = sphi 0, %s46
    %s61 = sphi 0, %s47
    %s65 = sphi 0, %s65
    %s67 = sphi 0, %s65
    %s68 = sphi 0, %s67
    %s82 = sphi 0, %s68
    %s86 = sphi 0, %s86
    %s88 = sphi 0, %s86
    %s89 = sphi 0, %s88
    %s103 = sphi 0, %s89
    %s109 = sphi 0, %s111
    %s112 = sphi 0, %s109
    %s113 = sphi 0, %s112
    %s129 = sphi 0, %s113
  $region4: #{forward.41} parent=0 // loop_header_branch
    %13 = sbr.rel (%p11) target = $region8
  $region5: #{forward.41} parent=0 // loop_body
    %s15 = ssub.s32 %s10, 1
    %s16 = ssub.s32 %s10, 2
    %s17 = sadd.s32 %s10, 1
    %s18 = ssub.s32 %s10, %s17
    %p19 = scmp.eq.s32.totalorder %s18, 0
    %s21 = sadd.s32 %s20, 1
    %s22 = scalar_select %p19, %s20, %s21
    %p25 = pneg %p19
    %p26 = scmp.eq.s32.totalorder %s10, 1
    %p27 = por %p25, %p26
    %p28 = scmp.ne.s32.totalorder %s20, %s23
    %p29 = scmp.eq.s32.totalorder %s10, 0
    %p30 = por %p28, %p29
    %p31 = scmp.ne.s32.totalorder %s20, %s23
    %p32 = scmp.eq.s32.totalorder %s15, 1
    %p33 = por %p31, %p32
    %p34 = scmp.ne.s32.totalorder %s23, %s24
    %p35 = scmp.eq.s32.totalorder %s15, 0
    %p36 = por %p34, %p35
    %p37 = scmp.ne.s32.totalorder %s23, %s24
    %p38 = scmp.eq.s32.totalorder %s16, 1
    %p39 = por %p37, %p38
    %p41 = scmp.ne.s32.totalorder %s24, %s40
    %p42 = scmp.eq.s32.totalorder %s16, 0
    %p43 = por %p41, %p42
    %s45 = sadd.s32 %s44, 1
    %p48 = scmp.eq.s32.totalorder %s10, 1
    %p49 = scmp.ne.s32.totalorder %s44, %s46
    %p50 = scmp.eq.s32.totalorder %s10, 0
    %p51 = por %p49, %p50
    %p52 = scmp.ne.s32.totalorder %s44, %s46
    %p53 = scmp.eq.s32.totalorder %s15, 1
    %p54 = por %p52, %p53
    %p55 = scmp.ne.s32.totalorder %s46, %s47
    %p56 = scmp.eq.s32.totalorder %s15, 0
    %p57 = por %p55, %p56
    %p58 = scmp.ne.s32.totalorder %s46, %s47
    %p59 = scmp.eq.s32.totalorder %s16, 1
    %p60 = por %p58, %p59
    %p62 = scmp.ne.s32.totalorder %s47, %s61
    %p63 = scmp.eq.s32.totalorder %s16, 0
    %p64 = por %p62, %p63
    %s66 = sadd.s32 %s65, 1
    %p69 = scmp.eq.s32.totalorder %s10, 1
    %p70 = scmp.ne.s32.totalorder %s65, %s67
    %p71 = scmp.eq.s32.totalorder %s10, 0
    %p72 = por %p70, %p71
    %p73 = scmp.ne.s32.totalorder %s65, %s67
    %p74 = scmp.eq.s32.totalorder %s15, 1
    %p75 = por %p73, %p74
    %p76 = scmp.ne.s32.totalorder %s67, %s68
    %p77 = scmp.eq.s32.totalorder %s15, 0
    %p78 = por %p76, %p77
    %p79 = scmp.ne.s32.totalorder %s67, %s68
    %p80 = scmp.eq.s32.totalorder %s16, 1
    %p81 = por %p79, %p80
    %p83 = scmp.ne.s32.totalorder %s68, %s82
    %p84 = scmp.eq.s32.totalorder %s16, 0
    %p85 = por %p83, %p84
    %s87 = sadd.s32 %s86, 1
    %p90 = scmp.eq.s32.totalorder %s10, 1
    %p91 = scmp.ne.s32.totalorder %s86, %s88
    %p92 = scmp.eq.s32.totalorder %s10, 0
    %p93 = por %p91, %p92
    %p94 = scmp.ne.s32.totalorder %s86, %s88
    %p95 = scmp.eq.s32.totalorder %s15, 1
    %p96 = por %p94, %p95
    %p97 = scmp.ne.s32.totalorder %s88, %s89
    %p98 = scmp.eq.s32.totalorder %s15, 0
    %p99 = por %p97, %p98
    %p100 = scmp.ne.s32.totalorder %s88, %s89
    %p101 = scmp.eq.s32.totalorder %s16, 1
    %p102 = por %p100, %p101
    %p104 = scmp.ne.s32.totalorder %s89, %s103
    %p105 = scmp.eq.s32.totalorder %s16, 0
    %p106 = por %p104, %p105
    %s107 = ssub.s32 %s10, %s17
    %p108 = scmp.eq.s32.totalorder %s107, 0
    %s110 = sadd.s32 %s109, 1
    %s111 = scalar_select %p108, %s109, %s110
    %p114 = pneg %p108
    %p115 = scmp.eq.s32.totalorder %s10, 1
    %p116 = por %p114, %p115
    %p117 = scmp.ne.s32.totalorder %s109, %s112
    %p118 = scmp.eq.s32.totalorder %s10, 0
    %p119 = por %p117, %p118
    %p120 = scmp.ne.s32.totalorder %s109, %s112
    %p121 = scmp.eq.s32.totalorder %s15, 1
    %p122 = por %p120, %p121
    %p123 = scmp.ne.s32.totalorder %s112, %s113
    %p124 = scmp.eq.s32.totalorder %s15, 0
    %p125 = por %p123, %p124
    %p126 = scmp.ne.s32.totalorder %s112, %s113
    %p127 = scmp.eq.s32.totalorder %s16, 1
    %p128 = por %p126, %p127
    %p130 = scmp.ne.s32.totalorder %s113, %s129
    %p131 = scmp.eq.s32.totalorder %s16, 0
    %p132 = por %p130, %p131
    %p133 = scmp.le.s32.totalorder 1, %s10
    %p134 = scmp.lt.s32.totalorder %s10, 3
    %p135 = pnand %p133, %p134
    %p136 = pneg %p135
    // Predicated region
    $region9: #{forward.41} parent=5 // pred_check
      _
    $region10: #{forward.41} parent=5 // pred_check_branch
      %138 = sbr.rel (%p135) target = $region12
    $region11: #{forward.41} parent=5 // pred_region
      %s139 = ssub.s32 %s10, 1
      // Predicated region
      $region13: #{forward.41} parent=11 // pred_check
        %p140 = pneg %p57
      $region14: #{forward.41} parent=11 // pred_check_branch
        %142 = sbr.rel (%p140) target = $region16
      $region15: #{forward.41} parent=11 // pred_region
        _
      $region16: #{forward.41} parent=11 // pred_fallthru
        _
      // Predicated region
      $region17: #{forward.41} parent=11 // pred_check
        %p143 = pneg %p78
      $region18: #{forward.41} parent=11 // pred_check_branch
        %145 = sbr.rel (%p143) target = $region20
      $region19: #{forward.41} parent=11 // pred_region
        _
      $region20: #{forward.41} parent=11 // pred_fallthru
        _
      // Predicated region
      $region21: #{forward.41} parent=11 // pred_check
        %p146 = pneg %p99
      $region22: #{forward.41} parent=11 // pred_check_branch
        %148 = sbr.rel (%p146) target = $region24
      $region23: #{forward.41} parent=11 // pred_region
        _
      $region24: #{forward.41} parent=11 // pred_fallthru
        _
    $region12: #{forward.41} parent=5 // pred_fallthru
      _
    %p149 = scmp.lt.s32.totalorder %s10, 2
    // Predicated region
    $region25: #{forward.41} parent=5 // pred_check
      %p150 = pneg %p149
    $region26: #{forward.41} parent=5 // pred_check_branch
      %152 = sbr.rel (%p150) target = $region28
    $region27: #{forward.41} parent=5 // pred_region
      // Predicated region
      $region29: #{forward.41} parent=27 // pred_check
        %p153 = pneg %p30
      $region30: #{forward.41} parent=27 // pred_check_branch
        %155 = sbr.rel (%p153) target = $region32
      $region31: #{forward.41} parent=27 // pred_region
        %s156 = smul.u32 8, %s10
        %p157 = scmp.lt.s32.totalorder %s156, 15
        %s158 = scalar_select %p157, %s156, 15
        %s159 = smul.addr %s158, 4
        %s160 = scalar_lea.vmem %s0, %s159
        %s161 = smul.u32 8, %s10
      $region32: #{forward.41} parent=27 // pred_fallthru
        _
    $region28: #{forward.41} parent=5 // pred_fallthru
      _
    %p162 = scmp.le.s32.totalorder 1, %s10
    %p163 = scmp.lt.s32.totalorder %s10, 3
    %p164 = pnand %p162, %p163
    %p165 = pneg %p164
    // Predicated region
    $region33: #{forward.41} parent=5 // pred_check
      _
    $region34: #{forward.41} parent=5 // pred_check_branch
      %167 = sbr.rel (%p164) target = $region36
    $region35: #{forward.41} parent=5 // pred_region
      %s168 = ssub.s32 %s10, 1
      %s169 = smul.u32 8, %s15
      %p170 = scmp.lt.s32.totalorder %s169, 15
      %s171 = scalar_select %p170, %s169, 15
      %s172 = smul.addr %s171, 4
      %s173 = scalar_lea.vmem %s0, %s172
      %p174 = pneg %p36
      %p175 = pneg %p33
      %p176 = pneg %p57
      %p177 = pneg %p54
      %p178 = pneg %p78
      %p179 = pneg %p75
      %p180 = pneg %p99
      %p181 = pneg %p96
      %p182 = pneg %p125
      %p183 = pneg %p122
      %s184 = smul.u32 8, %s15
      %p185 = scmp.lt.s32.totalorder %s184, 15
      %s186 = scalar_select %p185, %s184, 15
      %s187 = smul.addr %s186, 4
      %s188 = scalar_lea.vmem %s4, %s187
      %s189 = smul.u32 8, %s15
      %p190 = scmp.lt.s32.totalorder %s189, 15
      %s191 = scalar_select %p190, %s189, 15
      %s192 = smul.addr %s191, 4
      %s193 = scalar_lea.vmem %s0, %s192
      %s194 = smul.u32 8, %s15
      %s195 = smul.u32 8, %s15
      %p196 = scmp.lt.s32.totalorder %s195, 15
      %s197 = scalar_select %p196, %s195, 15
      %s198 = smul.addr %s197, 4
      %s199 = scalar_lea.vmem %s4, %s198
      %s200 = smul.u32 8, %s15
      %v202 = vld [vmem:[%s193] sm:$0xf]
      %v203 = vld [vmem:[%s193 + $0x4] sm:$0xf]
      %v204 = vld [vmem:[%s193 + $0x8] sm:$0xf]
      %v205 = vld [vmem:[%s193 + $0xc] sm:$0xf]
      %v206 = vld [vmem:[%s193 + $0x10] sm:$0xf]
      %v207 = vld [vmem:[%s193 + $0x14] sm:$0xf]
      %v208 = vld [vmem:[%s193 + $0x18] sm:$0xf]
      %v209 = vld [vmem:[%s193 + $0x1c] sm:$0xf]
      %v210 = vld [vmem:[%s1] sm:$0xf]
      %v211 = vld [vmem:[%s1 + $0x4] sm:$0xf]
      %v212 = vld [vmem:[%s1 + $0x8] sm:$0xf]
      %v213 = vld [vmem:[%s1 + $0xc] sm:$0xf]
      %v214 = vld [vmem:[%s1 + $0x10] sm:$0xf]
      %v215 = vld [vmem:[%s1 + $0x14] sm:$0xf]
      %v216 = vld [vmem:[%s1 + $0x18] sm:$0xf]
      %v217 = vld [vmem:[%s1 + $0x1c] sm:$0xf]
      %v218 = vld [vmem:[%s1 + $0x20] sm:$0xf]
      %v219 = vld [vmem:[%s1 + $0x24] sm:$0xf]
      %v220 = vld [vmem:[%s1 + $0x28] sm:$0xf]
      %v221 = vld [vmem:[%s1 + $0x2c] sm:$0xf]
      %v222 = vld [vmem:[%s1 + $0x30] sm:$0xf]
      %v223 = vld [vmem:[%s1 + $0x34] sm:$0xf]
      %v224 = vld [vmem:[%s1 + $0x38] sm:$0xf]
      %v225 = vld [vmem:[%s1 + $0x3c] sm:$0xf]
      %v234 = vunpack.c.l.b16 %v202
      %v235 = vunpack.c.l.b16 %v203
      %v236 = vunpack.c.l.b16 %v204
      %v237 = vunpack.c.l.b16 %v205
      %v238 = vunpack.c.l.b16 %v206
      %v239 = vunpack.c.l.b16 %v207
      %v240 = vunpack.c.l.b16 %v208
      %v241 = vunpack.c.l.b16 %v209
      %v242 = vpack.c.b16 %v235, %v234
      %v243 = vpack.c.b16 %v237, %v236
      %v244 = vpack.c.b16 %v239, %v238
      %v245 = vpack.c.b16 %v241, %v240
      %v266 = vunpack.c.l.b16 %v210
      %v267 = vunpack.c.l.b16 %v211
      %v268 = vunpack.c.l.b16 %v212
      %v269 = vunpack.c.l.b16 %v213
      %v270 = vunpack.c.l.b16 %v214
      %v271 = vunpack.c.l.b16 %v215
      %v272 = vunpack.c.l.b16 %v216
      %v273 = vunpack.c.l.b16 %v217
      %v274 = vunpack.c.l.b16 %v218
      %v275 = vunpack.c.l.b16 %v219
      %v276 = vunpack.c.l.b16 %v220
      %v277 = vunpack.c.l.b16 %v221
      %v278 = vunpack.c.l.b16 %v222
      %v279 = vunpack.c.l.b16 %v223
      %v280 = vunpack.c.l.b16 %v224
      %v281 = vunpack.c.l.b16 %v225
      %v282 = vpack.c.b16 %v267, %v266
      %v283 = vpack.c.b16 %v269, %v268
      %v284 = vpack.c.b16 %v271, %v270
      %v285 = vpack.c.b16 %v273, %v272
      %v286 = vpack.c.b16 %v275, %v274
      %v287 = vpack.c.b16 %v277, %v276
      %v288 = vpack.c.b16 %v279, %v278
      %v289 = vpack.c.b16 %v281, %v280
      %298 = vmatprep.subr.bf16.mxu0 0
      %299 = vmatpush1.bf16.msra.mxu0 %v289
      %300 = vmatprep.subr.bf16.mxu0 0
      %301 = vmatpush1.bf16.msra.mxu0 %v288
      %302 = vmatprep.subr.bf16.mxu0 0
      %303 = vmatpush1.bf16.msra.mxu0 %v287
      %304 = vmatprep.subr.bf16.mxu0 0
      %305 = vmatpush1.bf16.msra.mxu0 %v286
      %306 = vmatprep.subr.bf16.mxu0 0
      %307 = vmatpush1.bf16.msra.mxu0 %v285
      %308 = vmatprep.subr.bf16.mxu0 0
      %309 = vmatpush1.bf16.msra.mxu0 %v284
      %310 = vmatprep.subr.bf16.mxu0 0
      %311 = vmatpush1.bf16.msra.mxu0 %v283
      %312 = vmatprep.subr.bf16.mxu0 0
      %313 = vmatpush1.bf16.msra.mxu0 %v282
      %314 = vmatprep.subr.bf16.mxu0 0
      %315 = vmatpush2.bf16.msra.mxu0 0
      %316 = vmatprep.subr.bf16.mxu0 0
      %317 = vmatpush2.bf16.msra.mxu0 0
      %318 = vmatprep.subr.bf16.mxu0 0
      %319 = vmatpush2.bf16.msra.mxu0 0
      %320 = vmatprep.subr.bf16.mxu0 0
      %321 = vmatpush2.bf16.msra.mxu0 0
      %322 = vmatprep.subr.bf16.mxu0 0
      %323 = vmatpush2.bf16.msra.mxu0 0
      %324 = vmatprep.subr.bf16.mxu0 0
      %325 = vmatpush2.bf16.msra.mxu0 0
      %326 = vmatprep.subr.bf16.mxu0 0
      %327 = vmatpush2.bf16.msra.mxu0 0
      %328 = vmatprep.subr.bf16.mxu0 0
      %329 = vmatpush2.bf16.msra.mxu0 0
      %330 = vmatprep.mubr.bf16.mxu0 0
      %331 = vmatmul.mubr.bf16.gmra.mxu0 %v242
      %v332 = vpop.f32.mrf.mxu0
      %v333 = vadd.f32 0.0, %v332
      %v334 = vpop.f32.mrf.mxu0
      %v335 = vpop.f32.mrf.mxu0
      %v336 = vadd.f32 0.0, %v335
      %v337 = vpop.f32.mrf.mxu0
      %338 = vmatprep.mubr.bf16.mxu0 0
      %339 = vmatmul.mubr.bf16.gmra.mxu0 %v243
      %v340 = vpop.f32.mrf.mxu0
      %v341 = vadd.f32 0.0, %v340
      %v342 = vpop.f32.mrf.mxu0
      %v343 = vpop.f32.mrf.mxu0
      %v344 = vadd.f32 0.0, %v343
      %v345 = vpop.f32.mrf.mxu0
      %346 = vmatprep.mubr.bf16.mxu0 0
      %347 = vmatmul.mubr.bf16.gmra.mxu0 %v244
      %v348 = vpop.f32.mrf.mxu0
      %v349 = vadd.f32 0.0, %v348
      %v350 = vpop.f32.mrf.mxu0
      %v351 = vpop.f32.mrf.mxu0
      %v352 = vadd.f32 0.0, %v351
      %v353 = vpop.f32.mrf.mxu0
      %354 = vmatprep.mubr.bf16.mxu0 0
      %355 = vmatmul.mubr.bf16.gmra.mxu0 %v245
      %v356 = vpop.f32.mrf.mxu0
      %v357 = vadd.f32 0.0, %v356
      %v358 = vpop.f32.mrf.mxu0
      %v359 = vpop.f32.mrf.mxu0
      %v360 = vadd.f32 0.0, %v359
      %v361 = vpop.f32.mrf.mxu0
      %362 = vdwg.mxu0
      %v363 = vld [vmem:[%s2] sm:$0x1]
      %v365 = vlaneseq
      %v366 = vshrl.u32 %v365, 7
      %v367 = vsub.s32 0, %v366
      %v368 = vrot.slane %v363, %v367
      %v370 = vmul.f32 %v333, %v368
      %v371 = vmul.f32 %v336, %v368
      %v372 = vmul.f32 %v341, %v368
      %v373 = vmul.f32 %v344, %v368
      %v374 = vmul.f32 %v349, %v368
      %v375 = vmul.f32 %v352, %v368
      %v376 = vmul.f32 %v357, %v368
      %v377 = vmul.f32 %v360, %v368
      %v378 = vld [vmem:[%s3] sm:$0x1]
      %v380 = vlaneseq
      %v381 = vshrl.u32 %v380, 7
      %v382 = vsub.s32 0, %v381
      %v383 = vrot.slane %v378, %v382
      %v385 = vadd.f32 %v370, %v383
      %v386 = vadd.f32 %v371, %v383
      %v387 = vadd.f32 %v372, %v383
      %v388 = vadd.f32 %v373, %v383
      %v389 = vadd.f32 %v374, %v383
      %v390 = vadd.f32 %v375, %v383
      %v391 = vadd.f32 %v376, %v383
      %v392 = vadd.f32 %v377, %v383
      %v393 = vmax.f32 %v385, 0.0
      %v394 = vmax.f32 %v386, 0.0
      %v395 = vmax.f32 %v387, 0.0
      %v396 = vmax.f32 %v388, 0.0
      %v397 = vmax.f32 %v389, 0.0
      %v398 = vmax.f32 %v390, 0.0
      %v399 = vmax.f32 %v391, 0.0
      %v400 = vmax.f32 %v392, 0.0
      %v401 = vpack.c.bf16 %v394, %v393
      %v402 = vpack.c.bf16 %v396, %v395
      %v403 = vpack.c.bf16 %v398, %v397
      %v404 = vpack.c.bf16 %v400, %v399
      %v409 = vunpack.c.l.b16 %v401
      %v410 = vunpack.c.h.b16 %v401
      %v411 = vunpack.c.l.b16 %v402
      %v412 = vunpack.c.h.b16 %v402
      %v413 = vunpack.c.l.b16 %v403
      %v414 = vunpack.c.h.b16 %v403
      %v415 = vunpack.c.l.b16 %v404
      %v416 = vunpack.c.h.b16 %v404
      %v417 = vpack.c.b16 %v409, %v409
      %v418 = vpack.c.b16 %v410, %v410
      %v419 = vpack.c.b16 %v411, %v411
      %v420 = vpack.c.b16 %v412, %v412
      %v421 = vpack.c.b16 %v413, %v413
      %v422 = vpack.c.b16 %v414, %v414
      %v423 = vpack.c.b16 %v415, %v415
      %v424 = vpack.c.b16 %v416, %v416
      %433 = vst [vmem:[%s199] sm:$0xf] %v417
      %434 = vst [vmem:[%s199 + $0x4] sm:$0xf] %v418
      %435 = vst [vmem:[%s199 + $0x8] sm:$0xf] %v419
      %436 = vst [vmem:[%s199 + $0xc] sm:$0xf] %v420
      %437 = vst [vmem:[%s199 + $0x10] sm:$0xf] %v421
      %438 = vst [vmem:[%s199 + $0x14] sm:$0xf] %v422
      %439 = vst [vmem:[%s199 + $0x18] sm:$0xf] %v423
      %440 = vst [vmem:[%s199 + $0x1c] sm:$0xf] %v424
      %s441 = smul.u32 8, %s15
      %p442 = scmp.lt.s32.totalorder %s441, 15
      %s443 = scalar_select %p442, %s441, 15
      %s444 = smul.addr %s443, 4
      %s445 = scalar_lea.vmem %s4, %s444
      // Predicated region
      $region37: #{forward.41} parent=35 // pred_check
        %p446 = pneg %p122
      $region38: #{forward.41} parent=35 // pred_check_branch
        %448 = sbr.rel (%p446) target = $region40
      $region39: #{forward.41} parent=35 // pred_region
        %s449 = smul.u32 8, %s15
      $region40: #{forward.41} parent=35 // pred_fallthru
        _
    $region36: #{forward.41} parent=5 // pred_fallthru
      _
    %p450 = scmp.le.s32.totalorder 2, %s10
    // Predicated region
    $region41: #{forward.41} parent=5 // pred_check
      %p451 = pneg %p450
    $region42: #{forward.41} parent=5 // pred_check_branch
      %453 = sbr.rel (%p451) target = $region44
    $region43: #{forward.41} parent=5 // pred_region
      %s454 = ssub.s32 %s10, 2
      // Predicated region
      $region45: #{forward.41} parent=43 // pred_check
        %p455 = pneg %p128
      $region46: #{forward.41} parent=43 // pred_check_branch
        %457 = sbr.rel (%p455) target = $region48
      $region47: #{forward.41} parent=43 // pred_region
        %s458 = smul.u32 8, %s16
        %p459 = scmp.lt.s32.totalorder %s458, 15
        %s460 = scalar_select %p459, %s458, 15
        %s461 = smul.addr %s460, 4
        %s462 = scalar_lea.vmem %s4, %s461
      $region48: #{forward.41} parent=43 // pred_fallthru
        _
    $region44: #{forward.41} parent=5 // pred_fallthru
      _
  $region6: #{forward.41} parent=0 // loop_footer
    %s14 = sadd.s32 1, %s10
  $region7: #{forward.41} parent=0 // loop_footer_branch
    %9 = sbr.rel target = $region3
  $region8: #{forward.41} parent=0 // loop_exit
    _

// kernel: forward.40
$region0: #{forward.40}
  #allocation0 [shape = 'u32[]', space=smem, size = 0x4, offset = 0x4, fixed_abs, tag = 'smem constant byte address 0x4 - core index']
  #allocation1 [shape = 'u32[144,128]{1,0:T(1,128)}', space=vmem, size = 0x12000, scoped, tag = 'internal scratch']
  %s0 = inlined_call_operand.vmem [shape: bf16[128,9,128], index: 0, kind: input, shape index: {}]
  %s1 = inlined_call_operand.vmem [shape: bf16[128,128], index: 1, kind: output, shape index: {}]
  %s2 = sld [smem:[#allocation0]]
  $region37: #{forward.40} parent=0
    _
  %s4 = ssub.s32 1, %s2
  %s5 = scalar_select 0, %s4, %s2
  loop: start=0, step=1, limit=4
  $region2: #{forward.40} parent=0 // loop_pre_header
    _
  $region3: #{forward.40} parent=0 // loop_header
    %s7 = sphi 0, %s11
    %p8 = scmp.ge.s32.totalorder %s7, 4
    %s17 = sphi 0, %s19
    %s20 = sphi 0, %s17
    %s21 = sphi 0, %s20
    %s37 = sphi 0, %s21
    %s43 = sphi 0, %s45
    %s46 = sphi 0, %s43
    %s47 = sphi 0, %s46
    %s63 = sphi 0, %s47
  $region4: #{forward.40} parent=0 // loop_header_branch
    %10 = sbr.rel (%p8) target = $region8
  $region5: #{forward.40} parent=0 // loop_body
    %s12 = ssub.s32 %s7, 1
    %s13 = ssub.s32 %s7, 2
    %s14 = sadd.s32 %s7, 1
    %s15 = ssub.s32 %s7, %s14
    %p16 = scmp.eq.s32.totalorder %s15, 0
    %s18 = sadd.s32 %s17, 1
    %s19 = scalar_select %p16, %s17, %s18
    %p22 = pneg %p16
    %p23 = scmp.eq.s32.totalorder %s7, 1
    %p24 = por %p22, %p23
    %p25 = scmp.ne.s32.totalorder %s17, %s20
    %p26 = scmp.eq.s32.totalorder %s7, 0
    %p27 = por %p25, %p26
    %p28 = scmp.ne.s32.totalorder %s17, %s20
    %p29 = scmp.eq.s32.totalorder %s12, 1
    %p30 = por %p28, %p29
    %p31 = scmp.ne.s32.totalorder %s20, %s21
    %p32 = scmp.eq.s32.totalorder %s12, 0
    %p33 = por %p31, %p32
    %p34 = scmp.ne.s32.totalorder %s20, %s21
    %p35 = scmp.eq.s32.totalorder %s13, 1
    %p36 = por %p34, %p35
    %p38 = scmp.ne.s32.totalorder %s21, %s37
    %p39 = scmp.eq.s32.totalorder %s13, 0
    %p40 = por %p38, %p39
    %s41 = ssub.s32 %s7, %s14
    %p42 = scmp.eq.s32.totalorder %s41, 0
    %s44 = sadd.s32 %s43, 1
    %s45 = scalar_select %p42, %s43, %s44
    %p48 = pneg %p42
    %p49 = scmp.eq.s32.totalorder %s7, 1
    %p50 = por %p48, %p49
    %p51 = scmp.ne.s32.totalorder %s43, %s46
    %p52 = scmp.eq.s32.totalorder %s7, 0
    %p53 = por %p51, %p52
    %p54 = scmp.ne.s32.totalorder %s43, %s46
    %p55 = scmp.eq.s32.totalorder %s12, 1
    %p56 = por %p54, %p55
    %p57 = scmp.ne.s32.totalorder %s46, %s47
    %p58 = scmp.eq.s32.totalorder %s12, 0
    %p59 = por %p57, %p58
    %p60 = scmp.ne.s32.totalorder %s46, %s47
    %p61 = scmp.eq.s32.totalorder %s13, 1
    %p62 = por %p60, %p61
    %p64 = scmp.ne.s32.totalorder %s47, %s63
    %p65 = scmp.eq.s32.totalorder %s13, 0
    %p66 = por %p64, %p65
    %p67 = scmp.le.s32.totalorder 1, %s7
    %p68 = scmp.lt.s32.totalorder %s7, 3
    %p69 = pnand %p67, %p68
    %p70 = pneg %p69
    // Predicated region
    $region9: #{forward.40} parent=5 // pred_check
      _
    $region10: #{forward.40} parent=5 // pred_check_branch
      %72 = sbr.rel (%p69) target = $region12
    $region11: #{forward.40} parent=5 // pred_region
      %s73 = ssub.s32 %s7, 1
    $region12: #{forward.40} parent=5 // pred_fallthru
      _
    %p74 = scmp.lt.s32.totalorder %s7, 2
    // Predicated region
    $region13: #{forward.40} parent=5 // pred_check
      %p75 = pneg %p74
    $region14: #{forward.40} parent=5 // pred_check_branch
      %77 = sbr.rel (%p75) target = $region16
    $region15: #{forward.40} parent=5 // pred_region
      // Predicated region
      $region17: #{forward.40} parent=15 // pred_check
        %p78 = pneg %p27
      $region18: #{forward.40} parent=15 // pred_check_branch
        %80 = sbr.rel (%p78) target = $region20
      $region19: #{forward.40} parent=15 // pred_region
        %s81 = smul.u32 64, %s7
        %p82 = scmp.lt.s32.totalorder %s81, 127
        %s83 = scalar_select %p82, %s81, 127
        %s84 = smul.addr %s83, 2
        %s85 = smul.addr %s84, 4
        %s86 = scalar_lea.vmem %s0, %s85
        %s87 = smul.u32 64, %s7
      $region20: #{forward.40} parent=15 // pred_fallthru
        _
    $region16: #{forward.40} parent=5 // pred_fallthru
      _
    %p88 = scmp.le.s32.totalorder 1, %s7
    %p89 = scmp.lt.s32.totalorder %s7, 3
    %p90 = pnand %p88, %p89
    %p91 = pneg %p90
    // Predicated region
    $region21: #{forward.40} parent=5 // pred_check
      _
    $region22: #{forward.40} parent=5 // pred_check_branch
      %93 = sbr.rel (%p90) target = $region24
    $region23: #{forward.40} parent=5 // pred_region
      %s94 = ssub.s32 %s7, 1
      %s95 = smul.u32 64, %s12
      %p96 = scmp.lt.s32.totalorder %s95, 127
      %s97 = scalar_select %p96, %s95, 127
      %s98 = smul.addr %s97, 2
      %s99 = smul.addr %s98, 4
      %s100 = scalar_lea.vmem %s0, %s99
      %p101 = pneg %p33
      %p102 = pneg %p30
      %p103 = pneg %p59
      %p104 = pneg %p56
      %s105 = smul.u32 8, %s12
      %p106 = scmp.lt.s32.totalorder %s105, 15
      %s107 = scalar_select %p106, %s105, 15
      %s108 = smul.addr %s107, 4
      %s109 = scalar_lea.vmem %s1, %s108
      %s110 = smul.u32 64, %s12
      %p111 = scmp.lt.s32.totalorder %s110, 127
      %s112 = scalar_select %p111, %s110, 127
      %s113 = smul.addr %s112, 2
      %s114 = smul.addr %s113, 4
      %s115 = scalar_lea.vmem %s0, %s114
      %s116 = smul.u32 64, %s12
      %s117 = smul.u32 8, %s12
      %p118 = scmp.lt.s32.totalorder %s117, 15
      %s119 = scalar_select %p118, %s117, 15
      %s120 = smul.addr %s119, 4
      %s121 = scalar_lea.vmem %s1, %s120
      %s122 = smul.u32 8, %s12
      %v124 = vld [vmem:[%s115] sm:$0xf]
      %v125 = vld [vmem:[%s115 + $0x4] sm:$0x1]
      %v126 = vld [vmem:[%s115 + $0x8] sm:$0xf]
      %v127 = vld [vmem:[%s115 + $0xc] sm:$0x1]
      %v128 = vld [vmem:[%s115 + $0x10] sm:$0xf]
      %v129 = vld [vmem:[%s115 + $0x14] sm:$0x1]
      %v130 = vld [vmem:[%s115 + $0x18] sm:$0xf]
      %v131 = vld [vmem:[%s115 + $0x1c] sm:$0x1]
      %v132 = vld [vmem:[%s115 + $0x20] sm:$0xf]
      %v133 = vld [vmem:[%s115 + $0x24] sm:$0x1]
      %v134 = vld [vmem:[%s115 + $0x28] sm:$0xf]
      %v135 = vld [vmem:[%s115 + $0x2c] sm:$0x1]
      %v136 = vld [vmem:[%s115 + $0x30] sm:$0xf]
      %v137 = vld [vmem:[%s115 + $0x34] sm:$0x1]
      %v138 = vld [vmem:[%s115 + $0x38] sm:$0xf]
      %v139 = vld [vmem:[%s115 + $0x3c] sm:$0x1]
      %v140 = vld [vmem:[%s115 + $0x40] sm:$0xf]
      %v141 = vld [vmem:[%s115 + $0x44] sm:$0x1]
      %v142 = vld [vmem:[%s115 + $0x48] sm:$0xf]
      %v143 = vld [vmem:[%s115 + $0x4c] sm:$0x1]
      %v144 = vld [vmem:[%s115 + $0x50] sm:$0xf]
      %v145 = vld [vmem:[%s115 + $0x54] sm:$0x1]
      %v146 = vld [vmem:[%s115 + $0x58] sm:$0xf]
      %v147 = vld [vmem:[%s115 + $0x5c] sm:$0x1]
      %v148 = vld [vmem:[%s115 + $0x60] sm:$0xf]
      %v149 = vld [vmem:[%s115 + $0x64] sm:$0x1]
      %v150 = vld [vmem:[%s115 + $0x68] sm:$0xf]
      %v151 = vld [vmem:[%s115 + $0x6c] sm:$0x1]
      %v152 = vld [vmem:[%s115 + $0x70] sm:$0xf]
      %v153 = vld [vmem:[%s115 + $0x74] sm:$0x1]
      %v154 = vld [vmem:[%s115 + $0x78] sm:$0xf]
      %v155 = vld [vmem:[%s115 + $0x7c] sm:$0x1]
      %v156 = vld [vmem:[%s115 + $0x80] sm:$0xf]
      %v157 = vld [vmem:[%s115 + $0x84] sm:$0x1]
      %v158 = vld [vmem:[%s115 + $0x88] sm:$0xf]
      %v159 = vld [vmem:[%s115 + $0x8c] sm:$0x1]
      %v160 = vld [vmem:[%s115 + $0x90] sm:$0xf]
      %v161 = vld [vmem:[%s115 + $0x94] sm:$0x1]
      %v162 = vld [vmem:[%s115 + $0x98] sm:$0xf]
      %v163 = vld [vmem:[%s115 + $0x9c] sm:$0x1]
      %v164 = vld [vmem:[%s115 + $0xa0] sm:$0xf]
      %v165 = vld [vmem:[%s115 + $0xa4] sm:$0x1]
      %v166 = vld [vmem:[%s115 + $0xa8] sm:$0xf]
      %v167 = vld [vmem:[%s115 + $0xac] sm:$0x1]
      %v168 = vld [vmem:[%s115 + $0xb0] sm:$0xf]
      %v169 = vld [vmem:[%s115 + $0xb4] sm:$0x1]
      %v170 = vld [vmem:[%s115 + $0xb8] sm:$0xf]
      %v171 = vld [vmem:[%s115 + $0xbc] sm:$0x1]
      %v172 = vld [vmem:[%s115 + $0xc0] sm:$0xf]
      %v173 = vld [vmem:[%s115 + $0xc4] sm:$0x1]
      %v174 = vld [vmem:[%s115 + $0xc8] sm:$0xf]
      %v175 = vld [vmem:[%s115 + $0xcc] sm:$0x1]
      %v176 = vld [vmem:[%s115 + $0xd0] sm:$0xf]
      %v177 = vld [vmem:[%s115 + $0xd4] sm:$0x1]
      %v178 = vld [vmem:[%s115 + $0xd8] sm:$0xf]
      %v179 = vld [vmem:[%s115 + $0xdc] sm:$0x1]
      %v180 = vld [vmem:[%s115 + $0xe0] sm:$0xf]
      %v181 = vld [vmem:[%s115 + $0xe4] sm:$0x1]
      %v182 = vld [vmem:[%s115 + $0xe8] sm:$0xf]
      %v183 = vld [vmem:[%s115 + $0xec] sm:$0x1]
      %v184 = vld [vmem:[%s115 + $0xf0] sm:$0xf]
      %v185 = vld [vmem:[%s115 + $0xf4] sm:$0x1]
      %v186 = vld [vmem:[%s115 + $0xf8] sm:$0xf]
      %v187 = vld [vmem:[%s115 + $0xfc] sm:$0x1]
      %v188 = vld [vmem:[%s115 + $0x100] sm:$0xf]
      %v189 = vld [vmem:[%s115 + $0x104] sm:$0x1]
      %v190 = vld [vmem:[%s115 + $0x108] sm:$0xf]
      %v191 = vld [vmem:[%s115 + $0x10c] sm:$0x1]
      %v192 = vld [vmem:[%s115 + $0x110] sm:$0xf]
      %v193 = vld [vmem:[%s115 + $0x114] sm:$0x1]
      %v194 = vld [vmem:[%s115 + $0x118] sm:$0xf]
      %v195 = vld [vmem:[%s115 + $0x11c] sm:$0x1]
      %v196 = vld [vmem:[%s115 + $0x120] sm:$0xf]
      %v197 = vld [vmem:[%s115 + $0x124] sm:$0x1]
      %v198 = vld [vmem:[%s115 + $0x128] sm:$0xf]
      %v199 = vld [vmem:[%s115 + $0x12c] sm:$0x1]
      %v200 = vld [vmem:[%s115 + $0x130] sm:$0xf]
      %v201 = vld [vmem:[%s115 + $0x134] sm:$0x1]
      %v202 = vld [vmem:[%s115 + $0x138] sm:$0xf]
      %v203 = vld [vmem:[%s115 + $0x13c] sm:$0x1]
      %v204 = vld [vmem:[%s115 + $0x140] sm:$0xf]
      %v205 = vld [vmem:[%s115 + $0x144] sm:$0x1]
      %v206 = vld [vmem:[%s115 + $0x148] sm:$0xf]
      %v207 = vld [vmem:[%s115 + $0x14c] sm:$0x1]
      %v208 = vld [vmem:[%s115 + $0x150] sm:$0xf]
      %v209 = vld [vmem:[%s115 + $0x154] sm:$0x1]
      %v210 = vld [vmem:[%s115 + $0x158] sm:$0xf]
      %v211 = vld [vmem:[%s115 + $0x15c] sm:$0x1]
      %v212 = vld [vmem:[%s115 + $0x160] sm:$0xf]
      %v213 = vld [vmem:[%s115 + $0x164] sm:$0x1]
      %v214 = vld [vmem:[%s115 + $0x168] sm:$0xf]
      %v215 = vld [vmem:[%s115 + $0x16c] sm:$0x1]
      %v216 = vld [vmem:[%s115 + $0x170] sm:$0xf]
      %v217 = vld [vmem:[%s115 + $0x174] sm:$0x1]
      %v218 = vld [vmem:[%s115 + $0x178] sm:$0xf]
      %v219 = vld [vmem:[%s115 + $0x17c] sm:$0x1]
      %v220 = vld [vmem:[%s115 + $0x180] sm:$0xf]
      %v221 = vld [vmem:[%s115 + $0x184] sm:$0x1]
      %v222 = vld [vmem:[%s115 + $0x188] sm:$0xf]
      %v223 = vld [vmem:[%s115 + $0x18c] sm:$0x1]
      %v224 = vld [vmem:[%s115 + $0x190] sm:$0xf]
      %v225 = vld [vmem:[%s115 + $0x194] sm:$0x1]
      %v226 = vld [vmem:[%s115 + $0x198] sm:$0xf]
      %v227 = vld [vmem:[%s115 + $0x19c] sm:$0x1]
      %v228 = vld [vmem:[%s115 + $0x1a0] sm:$0xf]
      %v229 = vld [vmem:[%s115 + $0x1a4] sm:$0x1]
      %v230 = vld [vmem:[%s115 + $0x1a8] sm:$0xf]
      %v231 = vld [vmem:[%s115 + $0x1ac] sm:$0x1]
      %v232 = vld [vmem:[%s115 + $0x1b0] sm:$0xf]
      %v233 = vld [vmem:[%s115 + $0x1b4] sm:$0x1]
      %v234 = vld [vmem:[%s115 + $0x1b8] sm:$0xf]
      %v235 = vld [vmem:[%s115 + $0x1bc] sm:$0x1]
      %v236 = vld [vmem:[%s115 + $0x1c0] sm:$0xf]
      %v237 = vld [vmem:[%s115 + $0x1c4] sm:$0x1]
      %v238 = vld [vmem:[%s115 + $0x1c8] sm:$0xf]
      %v239 = vld [vmem:[%s115 + $0x1cc] sm:$0x1]
      %v240 = vld [vmem:[%s115 + $0x1d0] sm:$0xf]
      %v241 = vld [vmem:[%s115 + $0x1d4] sm:$0x1]
      %v242 = vld [vmem:[%s115 + $0x1d8] sm:$0xf]
      %v243 = vld [vmem:[%s115 + $0x1dc] sm:$0x1]
      %v244 = vld [vmem:[%s115 + $0x1e0] sm:$0xf]
      %v245 = vld [vmem:[%s115 + $0x1e4] sm:$0x1]
      %v246 = vld [vmem:[%s115 + $0x1e8] sm:$0xf]
      %v247 = vld [vmem:[%s115 + $0x1ec] sm:$0x1]
      %v248 = vld [vmem:[%s115 + $0x1f0] sm:$0xf]
      %v249 = vld [vmem:[%s115 + $0x1f4] sm:$0x1]
      %v250 = vld [vmem:[%s115 + $0x1f8] sm:$0xf]
      %v251 = vld [vmem:[%s115 + $0x1fc] sm:$0x1]
      %v380 = vunpack.c.l.b16 %v124
      %v381 = vunpack.c.l.b16 %v125
      %v382 = vunpack.c.l.b16 %v126
      %v383 = vunpack.c.l.b16 %v127
      %v384 = vunpack.c.l.b16 %v128
      %v385 = vunpack.c.l.b16 %v129
      %v386 = vunpack.c.l.b16 %v130
      %v387 = vunpack.c.l.b16 %v131
      %v388 = vunpack.c.l.b16 %v132
      %v389 = vunpack.c.l.b16 %v133
      %v390 = vunpack.c.l.b16 %v134
      %v391 = vunpack.c.l.b16 %v135
      %v392 = vunpack.c.l.b16 %v136
      %v393 = vunpack.c.l.b16 %v137
      %v394 = vunpack.c.l.b16 %v138
      %v395 = vunpack.c.l.b16 %v139
      %v396 = vunpack.c.l.b16 %v140
      %v397 = vunpack.c.l.b16 %v141
      %v398 = vunpack.c.l.b16 %v142
      %v399 = vunpack.c.l.b16 %v143
      %v400 = vunpack.c.l.b16 %v144
      %v401 = vunpack.c.l.b16 %v145
      %v402 = vunpack.c.l.b16 %v146
      %v403 = vunpack.c.l.b16 %v147
      %v404 = vunpack.c.l.b16 %v148
      %v405 = vunpack.c.l.b16 %v149
      %v406 = vunpack.c.l.b16 %v150
      %v407 = vunpack.c.l.b16 %v151
      %v408 = vunpack.c.l.b16 %v152
      %v409 = vunpack.c.l.b16 %v153
      %v410 = vunpack.c.l.b16 %v154
      %v411 = vunpack.c.l.b16 %v155
      %v412 = vunpack.c.l.b16 %v156
      %v413 = vunpack.c.l.b16 %v157
      %v414 = vunpack.c.l.b16 %v158
      %v415 = vunpack.c.l.b16 %v159
      %v416 = vunpack.c.l.b16 %v160
      %v417 = vunpack.c.l.b16 %v161
      %v418 = vunpack.c.l.b16 %v162
      %v419 = vunpack.c.l.b16 %v163
      %v420 = vunpack.c.l.b16 %v164
      %v421 = vunpack.c.l.b16 %v165
      %v422 = vunpack.c.l.b16 %v166
      %v423 = vunpack.c.l.b16 %v167
      %v424 = vunpack.c.l.b16 %v168
      %v425 = vunpack.c.l.b16 %v169
      %v426 = vunpack.c.l.b16 %v170
      %v427 = vunpack.c.l.b16 %v171
      %v428 = vunpack.c.l.b16 %v172
      %v429 = vunpack.c.l.b16 %v173
      %v430 = vunpack.c.l.b16 %v174
      %v431 = vunpack.c.l.b16 %v175
      %v432 = vunpack.c.l.b16 %v176
      %v433 = vunpack.c.l.b16 %v177
      %v434 = vunpack.c.l.b16 %v178
      %v435 = vunpack.c.l.b16 %v179
      %v436 = vunpack.c.l.b16 %v180
      %v437 = vunpack.c.l.b16 %v181
      %v438 = vunpack.c.l.b16 %v182
      %v439 = vunpack.c.l.b16 %v183
      %v440 = vunpack.c.l.b16 %v184
      %v441 = vunpack.c.l.b16 %v185
      %v442 = vunpack.c.l.b16 %v186
      %v443 = vunpack.c.l.b16 %v187
      %v444 = vunpack.c.l.b16 %v188
      %v445 = vunpack.c.l.b16 %v189
      %v446 = vunpack.c.l.b16 %v190
      %v447 = vunpack.c.l.b16 %v191
      %v448 = vunpack.c.l.b16 %v192
      %v449 = vunpack.c.l.b16 %v193
      %v450 = vunpack.c.l.b16 %v194
      %v451 = vunpack.c.l.b16 %v195
      %v452 = vunpack.c.l.b16 %v196
      %v453 = vunpack.c.l.b16 %v197
      %v454 = vunpack.c.l.b16 %v198
      %v455 = vunpack.c.l.b16 %v199
      %v456 = vunpack.c.l.b16 %v200
      %v457 = vunpack.c.l.b16 %v201
      %v458 = vunpack.c.l.b16 %v202
      %v459 = vunpack.c.l.b16 %v203
      %v460 = vunpack.c.l.b16 %v204
      %v461 = vunpack.c.l.b16 %v205
      %v462 = vunpack.c.l.b16 %v206
      %v463 = vunpack.c.l.b16 %v207
      %v464 = vunpack.c.l.b16 %v208
      %v465 = vunpack.c.l.b16 %v209
      %v466 = vunpack.c.l.b16 %v210
      %v467 = vunpack.c.l.b16 %v211
      %v468 = vunpack.c.l.b16 %v212
      %v469 = vunpack.c.l.b16 %v213
      %v470 = vunpack.c.l.b16 %v214
      %v471 = vunpack.c.l.b16 %v215
      %v472 = vunpack.c.l.b16 %v216
      %v473 = vunpack.c.l.b16 %v217
      %v474 = vunpack.c.l.b16 %v218
      %v475 = vunpack.c.l.b16 %v219
      %v476 = vunpack.c.l.b16 %v220
      %v477 = vunpack.c.l.b16 %v221
      %v478 = vunpack.c.l.b16 %v222
      %v479 = vunpack.c.l.b16 %v223
      %v480 = vunpack.c.l.b16 %v224
      %v481 = vunpack.c.l.b16 %v225
      %v482 = vunpack.c.l.b16 %v226
      %v483 = vunpack.c.l.b16 %v227
      %v484 = vunpack.c.l.b16 %v228
      %v485 = vunpack.c.l.b16 %v229
      %v486 = vunpack.c.l.b16 %v230
      %v487 = vunpack.c.l.b16 %v231
      %v488 = vunpack.c.l.b16 %v232
      %v489 = vunpack.c.l.b16 %v233
      %v490 = vunpack.c.l.b16 %v234
      %v491 = vunpack.c.l.b16 %v235
      %v492 = vunpack.c.l.b16 %v236
      %v493 = vunpack.c.l.b16 %v237
      %v494 = vunpack.c.l.b16 %v238
      %v495 = vunpack.c.l.b16 %v239
      %v496 = vunpack.c.l.b16 %v240
      %v497 = vunpack.c.l.b16 %v241
      %v498 = vunpack.c.l.b16 %v242
      %v499 = vunpack.c.l.b16 %v243
      %v500 = vunpack.c.l.b16 %v244
      %v501 = vunpack.c.l.b16 %v245
      %v502 = vunpack.c.l.b16 %v246
      %v503 = vunpack.c.l.b16 %v247
      %v504 = vunpack.c.l.b16 %v248
      %v505 = vunpack.c.l.b16 %v249
      %v506 = vunpack.c.l.b16 %v250
      %v507 = vunpack.c.l.b16 %v251
      %v508 = vpack.c.b16 %v381, %v380
      %v509 = vpack.c.b16 %v383, %v382
      %v510 = vpack.c.b16 %v385, %v384
      %v511 = vpack.c.b16 %v387, %v386
      %v512 = vpack.c.b16 %v389, %v388
      %v513 = vpack.c.b16 %v391, %v390
      %v514 = vpack.c.b16 %v393, %v392
      %v515 = vpack.c.b16 %v395, %v394
      %v516 = vpack.c.b16 %v397, %v396
      %v517 = vpack.c.b16 %v399, %v398
      %v518 = vpack.c.b16 %v401, %v400
      %v519 = vpack.c.b16 %v403, %v402
      %v520 = vpack.c.b16 %v405, %v404
      %v521 = vpack.c.b16 %v407, %v406
      %v522 = vpack.c.b16 %v409, %v408
      %v523 = vpack.c.b16 %v411, %v410
      %v524 = vpack.c.b16 %v413, %v412
      %v525 = vpack.c.b16 %v415, %v414
      %v526 = vpack.c.b16 %v417, %v416
      %v527 = vpack.c.b16 %v419, %v418
      %v528 = vpack.c.b16 %v421, %v420
      %v529 = vpack.c.b16 %v423, %v422
      %v530 = vpack.c.b16 %v425, %v424
      %v531 = vpack.c.b16 %v427, %v426
      %v532 = vpack.c.b16 %v429, %v428
      %v533 = vpack.c.b16 %v431, %v430
      %v534 = vpack.c.b16 %v433, %v432
      %v535 = vpack.c.b16 %v435, %v434
      %v536 = vpack.c.b16 %v437, %v436
      %v537 = vpack.c.b16 %v439, %v438
      %v538 = vpack.c.b16 %v441, %v440
      %v539 = vpack.c.b16 %v443, %v442
      %v540 = vpack.c.b16 %v445, %v444
      %v541 = vpack.c.b16 %v447, %v446
      %v542 = vpack.c.b16 %v449, %v448
      %v543 = vpack.c.b16 %v451, %v450
      %v544 = vpack.c.b16 %v453, %v452
      %v545 = vpack.c.b16 %v455, %v454
      %v546 = vpack.c.b16 %v457, %v456
      %v547 = vpack.c.b16 %v459, %v458
      %v548 = vpack.c.b16 %v461, %v460
      %v549 = vpack.c.b16 %v463, %v462
      %v550 = vpack.c.b16 %v465, %v464
      %v551 = vpack.c.b16 %v467, %v466
      %v552 = vpack.c.b16 %v469, %v468
      %v553 = vpack.c.b16 %v471, %v470
      %v554 = vpack.c.b16 %v473, %v472
      %v555 = vpack.c.b16 %v475, %v474
      %v556 = vpack.c.b16 %v477, %v476
      %v557 = vpack.c.b16 %v479, %v478
      %v558 = vpack.c.b16 %v481, %v480
      %v559 = vpack.c.b16 %v483, %v482
      %v560 = vpack.c.b16 %v485, %v484
      %v561 = vpack.c.b16 %v487, %v486
      %v562 = vpack.c.b16 %v489, %v488
      %v563 = vpack.c.b16 %v491, %v490
      %v564 = vpack.c.b16 %v493, %v492
      %v565 = vpack.c.b16 %v495, %v494
      %v566 = vpack.c.b16 %v497, %v496
      %v567 = vpack.c.b16 %v499, %v498
      %v568 = vpack.c.b16 %v501, %v500
      %v569 = vpack.c.b16 %v503, %v502
      %v570 = vpack.c.b16 %v505, %v504
      %v571 = vpack.c.b16 %v507, %v506
      %vm636 = vcmask 1044480
      %vm637 = vsmask.f32 4352
      %vm638 = vmand %vm636, %vm637
      %v639 = vsel %vm638, %v508, 4286644096
      %v640 = vunpack.i.l.bf16 %v639
      %v641 = vunpack.i.h.bf16 %v639
      %v642 = vmax.f32 %v640, %v641
      %v643 = vrot.slane %v642, 4
      %v644 = vmax.f32 %v642, %v643
      %v645 = vrot.slane %v644, 2
      %v646 = vmax.f32 %v644, %v645
      %v647 = vrot.slane %v646, 1
      %v648 = vmax.f32 %v646, %v647
      %v649 = vpack.i.bf16 %v648, %v648
      %v650 = vsel %vm638, %v509, 4286644096
      %v651 = vunpack.i.l.bf16 %v650
      %v652 = vunpack.i.h.bf16 %v650
      %v653 = vmax.f32 %v651, %v652
      %v654 = vrot.slane %v653, 4
      %v655 = vmax.f32 %v653, %v654
      %v656 = vrot.slane %v655, 2
      %v657 = vmax.f32 %v655, %v656
      %v658 = vrot.slane %v657, 1
      %v659 = vmax.f32 %v657, %v658
      %v660 = vpack.i.bf16 %v659, %v659
      %v661 = vsel %vm638, %v510, 4286644096
      %v662 = vunpack.i.l.bf16 %v661
      %v663 = vunpack.i.h.bf16 %v661
      %v664 = vmax.f32 %v662, %v663
      %v665 = vrot.slane %v664, 4
      %v666 = vmax.f32 %v664, %v665
      %v667 = vrot.slane %v666, 2
      %v668 = vmax.f32 %v666, %v667
      %v669 = vrot.slane %v668, 1
      %v670 = vmax.f32 %v668, %v669
      %v671 = vpack.i.bf16 %v670, %v670
      %v672 = vsel %vm638, %v511, 4286644096
      %v673 = vunpack.i.l.bf16 %v672
      %v674 = vunpack.i.h.bf16 %v672
      %v675 = vmax.f32 %v673, %v674
      %v676 = vrot.slane %v675, 4
      %v677 = vmax.f32 %v675, %v676
      %v678 = vrot.slane %v677, 2
      %v679 = vmax.f32 %v677, %v678
      %v680 = vrot.slane %v679, 1
      %v681 = vmax.f32 %v679, %v680
      %v682 = vpack.i.bf16 %v681, %v681
      %v683 = vsel %vm638, %v512, 4286644096
      %v684 = vunpack.i.l.bf16 %v683
      %v685 = vunpack.i.h.bf16 %v683
      %v686 = vmax.f32 %v684, %v685
      %v687 = vrot.slane %v686, 4
      %v688 = vmax.f32 %v686, %v687
      %v689 = vrot.slane %v688, 2
      %v690 = vmax.f32 %v688, %v689
      %v691 = vrot.slane %v690, 1
      %v692 = vmax.f32 %v690, %v691
      %v693 = vpack.i.bf16 %v692, %v692
      %v694 = vsel %vm638, %v513, 4286644096
      %v695 = vunpack.i.l.bf16 %v694
      %v696 = vunpack.i.h.bf16 %v694
      %v697 = vmax.f32 %v695, %v696
      %v698 = vrot.slane %v697, 4
      %v699 = vmax.f32 %v697, %v698
      %v700 = vrot.slane %v699, 2
      %v701 = vmax.f32 %v699, %v700
      %v702 = vrot.slane %v701, 1
      %v703 = vmax.f32 %v701, %v702
      %v704 = vpack.i.bf16 %v703, %v703
      %v705 = vsel %vm638, %v514, 4286644096
      %v706 = vunpack.i.l.bf16 %v705
      %v707 = vunpack.i.h.bf16 %v705
      %v708 = vmax.f32 %v706, %v707
      %v709 = vrot.slane %v708, 4
      %v710 = vmax.f32 %v708, %v709
      %v711 = vrot.slane %v710, 2
      %v712 = vmax.f32 %v710, %v711
      %v713 = vrot.slane %v712, 1
      %v714 = vmax.f32 %v712, %v713
      %v715 = vpack.i.bf16 %v714, %v714
      %v716 = vsel %vm638, %v515, 4286644096
      %v717 = vunpack.i.l.bf16 %v716
      %v718 = vunpack.i.h.bf16 %v716
      %v719 = vmax.f32 %v717, %v718
      %v720 = vrot.slane %v719, 4
      %v721 = vmax.f32 %v719, %v720
      %v722 = vrot.slane %v721, 2
      %v723 = vmax.f32 %v721, %v722
      %v724 = vrot.slane %v723, 1
      %v725 = vmax.f32 %v723, %v724
      %v726 = vpack.i.bf16 %v725, %v725
      %v727 = vsel %vm638, %v516, 4286644096
      %v728 = vunpack.i.l.bf16 %v727
      %v729 = vunpack.i.h.bf16 %v727
      %v730 = vmax.f32 %v728, %v729
      %v731 = vrot.slane %v730, 4
      %v732 = vmax.f32 %v730, %v731
      %v733 = vrot.slane %v732, 2
      %v734 = vmax.f32 %v732, %v733
      %v735 = vrot.slane %v734, 1
      %v736 = vmax.f32 %v734, %v735
      %v737 = vpack.i.bf16 %v736, %v736
      %v738 = vsel %vm638, %v517, 4286644096
      %v739 = vunpack.i.l.bf16 %v738
      %v740 = vunpack.i.h.bf16 %v738
      %v741 = vmax.f32 %v739, %v740
      %v742 = vrot.slane %v741, 4
      %v743 = vmax.f32 %v741, %v742
      %v744 = vrot.slane %v743, 2
      %v745 = vmax.f32 %v743, %v744
      %v746 = vrot.slane %v745, 1
      %v747 = vmax.f32 %v745, %v746
      %v748 = vpack.i.bf16 %v747, %v747
      %v749 = vsel %vm638, %v518, 4286644096
      %v750 = vunpack.i.l.bf16 %v749
      %v751 = vunpack.i.h.bf16 %v749
      %v752 = vmax.f32 %v750, %v751
      %v753 = vrot.slane %v752, 4
      %v754 = vmax.f32 %v752, %v753
      %v755 = vrot.slane %v754, 2
      %v756 = vmax.f32 %v754, %v755
      %v757 = vrot.slane %v756, 1
      %v758 = vmax.f32 %v756, %v757
      %v759 = vpack.i.bf16 %v758, %v758
      %v760 = vsel %vm638, %v519, 4286644096
      %v761 = vunpack.i.l.bf16 %v760
      %v762 = vunpack.i.h.bf16 %v760
      %v763 = vmax.f32 %v761, %v762
      %v764 = vrot.slane %v763, 4
      %v765 = vmax.f32 %v763, %v764
      %v766 = vrot.slane %v765, 2
      %v767 = vmax.f32 %v765, %v766
      %v768 = vrot.slane %v767, 1
      %v769 = vmax.f32 %v767, %v768
      %v770 = vpack.i.bf16 %v769, %v769
      %v771 = vsel %vm638, %v520, 4286644096
      %v772 = vunpack.i.l.bf16 %v771
      %v773 = vunpack.i.h.bf16 %v771
      %v774 = vmax.f32 %v772, %v773
      %v775 = vrot.slane %v774, 4
      %v776 = vmax.f32 %v774, %v775
      %v777 = vrot.slane %v776, 2
      %v778 = vmax.f32 %v776, %v777
      %v779 = vrot.slane %v778, 1
      %v780 = vmax.f32 %v778, %v779
      %v781 = vpack.i.bf16 %v780, %v780
      %v782 = vsel %vm638, %v521, 4286644096
      %v783 = vunpack.i.l.bf16 %v782
      %v784 = vunpack.i.h.bf16 %v782
      %v785 = vmax.f32 %v783, %v784
      %v786 = vrot.slane %v785, 4
      %v787 = vmax.f32 %v785, %v786
      %v788 = vrot.slane %v787, 2
      %v789 = vmax.f32 %v787, %v788
      %v790 = vrot.slane %v789, 1
      %v791 = vmax.f32 %v789, %v790
      %v792 = vpack.i.bf16 %v791, %v791
      %v793 = vsel %vm638, %v522, 4286644096
      %v794 = vunpack.i.l.bf16 %v793
      %v795 = vunpack.i.h.bf16 %v793
      %v796 = vmax.f32 %v794, %v795
      %v797 = vrot.slane %v796, 4
      %v798 = vmax.f32 %v796, %v797
      %v799 = vrot.slane %v798, 2
      %v800 = vmax.f32 %v798, %v799
      %v801 = vrot.slane %v800, 1
      %v802 = vmax.f32 %v800, %v801
      %v803 = vpack.i.bf16 %v802, %v802
      %v804 = vsel %vm638, %v523, 4286644096
      %v805 = vunpack.i.l.bf16 %v804
      %v806 = vunpack.i.h.bf16 %v804
      %v807 = vmax.f32 %v805, %v806
      %v808 = vrot.slane %v807, 4
      %v809 = vmax.f32 %v807, %v808
      %v810 = vrot.slane %v809, 2
      %v811 = vmax.f32 %v809, %v810
      %v812 = vrot.slane %v811, 1
      %v813 = vmax.f32 %v811, %v812
      %v814 = vpack.i.bf16 %v813, %v813
      %v815 = vsel %vm638, %v524, 4286644096
      %v816 = vunpack.i.l.bf16 %v815
      %v817 = vunpack.i.h.bf16 %v815
      %v818 = vmax.f32 %v816, %v817
      %v819 = vrot.slane %v818, 4
      %v820 = vmax.f32 %v818, %v819
      %v821 = vrot.slane %v820, 2
      %v822 = vmax.f32 %v820, %v821
      %v823 = vrot.slane %v822, 1
      %v824 = vmax.f32 %v822, %v823
      %v825 = vpack.i.bf16 %v824, %v824
      %v826 = vsel %vm638, %v525, 4286644096
      %v827 = vunpack.i.l.bf16 %v826
      %v828 = vunpack.i.h.bf16 %v826
      %v829 = vmax.f32 %v827, %v828
      %v830 = vrot.slane %v829, 4
      %v831 = vmax.f32 %v829, %v830
      %v832 = vrot.slane %v831, 2
      %v833 = vmax.f32 %v831, %v832
      %v834 = vrot.slane %v833, 1
      %v835 = vmax.f32 %v833, %v834
      %v836 = vpack.i.bf16 %v835, %v835
      %v837 = vsel %vm638, %v526, 4286644096
      %v838 = vunpack.i.l.bf16 %v837
      %v839 = vunpack.i.h.bf16 %v837
      %v840 = vmax.f32 %v838, %v839
      %v841 = vrot.slane %v840, 4
      %v842 = vmax.f32 %v840, %v841
      %v843 = vrot.slane %v842, 2
      %v844 = vmax.f32 %v842, %v843
      %v845 = vrot.slane %v844, 1
      %v846 = vmax.f32 %v844, %v845
      %v847 = vpack.i.bf16 %v846, %v846
      %v848 = vsel %vm638, %v527, 4286644096
      %v849 = vunpack.i.l.bf16 %v848
      %v850 = vunpack.i.h.bf16 %v848
      %v851 = vmax.f32 %v849, %v850
      %v852 = vrot.slane %v851, 4
      %v853 = vmax.f32 %v851, %v852
      %v854 = vrot.slane %v853, 2
      %v855 = vmax.f32 %v853, %v854
      %v856 = vrot.slane %v855, 1
      %v857 = vmax.f32 %v855, %v856
      %v858 = vpack.i.bf16 %v857, %v857
      %v859 = vsel %vm638, %v528, 4286644096
      %v860 = vunpack.i.l.bf16 %v859
      %v861 = vunpack.i.h.bf16 %v859
      %v862 = vmax.f32 %v860, %v861
      %v863 = vrot.slane %v862, 4
      %v864 = vmax.f32 %v862, %v863
      %v865 = vrot.slane %v864, 2
      %v866 = vmax.f32 %v864, %v865
      %v867 = vrot.slane %v866, 1
      %v868 = vmax.f32 %v866, %v867
      %v869 = vpack.i.bf16 %v868, %v868
      %v870 = vsel %vm638, %v529, 4286644096
      %v871 = vunpack.i.l.bf16 %v870
      %v872 = vunpack.i.h.bf16 %v870
      %v873 = vmax.f32 %v871, %v872
      %v874 = vrot.slane %v873, 4
      %v875 = vmax.f32 %v873, %v874
      %v876 = vrot.slane %v875, 2
      %v877 = vmax.f32 %v875, %v876
      %v878 = vrot.slane %v877, 1
      %v879 = vmax.f32 %v877, %v878
      %v880 = vpack.i.bf16 %v879, %v879
      %v881 = vsel %vm638, %v530, 4286644096
      %v882 = vunpack.i.l.bf16 %v881
      %v883 = vunpack.i.h.bf16 %v881
      %v884 = vmax.f32 %v882, %v883
      %v885 = vrot.slane %v884, 4
      %v886 = vmax.f32 %v884, %v885
      %v887 = vrot.slane %v886, 2
      %v888 = vmax.f32 %v886, %v887
      %v889 = vrot.slane %v888, 1
      %v890 = vmax.f32 %v888, %v889
      %v891 = vpack.i.bf16 %v890, %v890
      %v892 = vsel %vm638, %v531, 4286644096
      %v893 = vunpack.i.l.bf16 %v892
      %v894 = vunpack.i.h.bf16 %v892
      %v895 = vmax.f32 %v893, %v894
      %v896 = vrot.slane %v895, 4
      %v897 = vmax.f32 %v895, %v896
      %v898 = vrot.slane %v897, 2
      %v899 = vmax.f32 %v897, %v898
      %v900 = vrot.slane %v899, 1
      %v901 = vmax.f32 %v899, %v900
      %v902 = vpack.i.bf16 %v901, %v901
      %v903 = vsel %vm638, %v532, 4286644096
      %v904 = vunpack.i.l.bf16 %v903
      %v905 = vunpack.i.h.bf16 %v903
      %v906 = vmax.f32 %v904, %v905
      %v907 = vrot.slane %v906, 4
      %v908 = vmax.f32 %v906, %v907
      %v909 = vrot.slane %v908, 2
      %v910 = vmax.f32 %v908, %v909
      %v911 = vrot.slane %v910, 1
      %v912 = vmax.f32 %v910, %v911
      %v913 = vpack.i.bf16 %v912, %v912
      %v914 = vsel %vm638, %v533, 4286644096
      %v915 = vunpack.i.l.bf16 %v914
      %v916 = vunpack.i.h.bf16 %v914
      %v917 = vmax.f32 %v915, %v916
      %v918 = vrot.slane %v917, 4
      %v919 = vmax.f32 %v917, %v918
      %v920 = vrot.slane %v919, 2
      %v921 = vmax.f32 %v919, %v920
      %v922 = vrot.slane %v921, 1
      %v923 = vmax.f32 %v921, %v922
      %v924 = vpack.i.bf16 %v923, %v923
      %v925 = vsel %vm638, %v534, 4286644096
      %v926 = vunpack.i.l.bf16 %v925
      %v927 = vunpack.i.h.bf16 %v925
      %v928 = vmax.f32 %v926, %v927
      %v929 = vrot.slane %v928, 4
      %v930 = vmax.f32 %v928, %v929
      %v931 = vrot.slane %v930, 2
      %v932 = vmax.f32 %v930, %v931
      %v933 = vrot.slane %v932, 1
      %v934 = vmax.f32 %v932, %v933
      %v935 = vpack.i.bf16 %v934, %v934
      %v936 = vsel %vm638, %v535, 4286644096
      %v937 = vunpack.i.l.bf16 %v936
      %v938 = vunpack.i.h.bf16 %v936
      %v939 = vmax.f32 %v937, %v938
      %v940 = vrot.slane %v939, 4
      %v941 = vmax.f32 %v939, %v940
      %v942 = vrot.slane %v941, 2
      %v943 = vmax.f32 %v941, %v942
      %v944 = vrot.slane %v943, 1
      %v945 = vmax.f32 %v943, %v944
      %v946 = vpack.i.bf16 %v945, %v945
      %v947 = vsel %vm638, %v536, 4286644096
      %v948 = vunpack.i.l.bf16 %v947
      %v949 = vunpack.i.h.bf16 %v947
      %v950 = vmax.f32 %v948, %v949
      %v951 = vrot.slane %v950, 4
      %v952 = vmax.f32 %v950, %v951
      %v953 = vrot.slane %v952, 2
      %v954 = vmax.f32 %v952, %v953
      %v955 = vrot.slane %v954, 1
      %v956 = vmax.f32 %v954, %v955
      %v957 = vpack.i.bf16 %v956, %v956
      %v958 = vsel %vm638, %v537, 4286644096
      %v959 = vunpack.i.l.bf16 %v958
      %v960 = vunpack.i.h.bf16 %v958
      %v961 = vmax.f32 %v959, %v960
      %v962 = vrot.slane %v961, 4
      %v963 = vmax.f32 %v961, %v962
      %v964 = vrot.slane %v963, 2
      %v965 = vmax.f32 %v963, %v964
      %v966 = vrot.slane %v965, 1
      %v967 = vmax.f32 %v965, %v966
      %v968 = vpack.i.bf16 %v967, %v967
      %v969 = vsel %vm638, %v538, 4286644096
      %v970 = vunpack.i.l.bf16 %v969
      %v971 = vunpack.i.h.bf16 %v969
      %v972 = vmax.f32 %v970, %v971
      %v973 = vrot.slane %v972, 4
      %v974 = vmax.f32 %v972, %v973
      %v975 = vrot.slane %v974, 2
      %v976 = vmax.f32 %v974, %v975
      %v977 = vrot.slane %v976, 1
      %v978 = vmax.f32 %v976, %v977
      %v979 = vpack.i.bf16 %v978, %v978
      %v980 = vsel %vm638, %v539, 4286644096
      %v981 = vunpack.i.l.bf16 %v980
      %v982 = vunpack.i.h.bf16 %v980
      %v983 = vmax.f32 %v981, %v982
      %v984 = vrot.slane %v983, 4
      %v985 = vmax.f32 %v983, %v984
      %v986 = vrot.slane %v985, 2
      %v987 = vmax.f32 %v985, %v986
      %v988 = vrot.slane %v987, 1
      %v989 = vmax.f32 %v987, %v988
      %v990 = vpack.i.bf16 %v989, %v989
      %v991 = vsel %vm638, %v540, 4286644096
      %v992 = vunpack.i.l.bf16 %v991
      %v993 = vunpack.i.h.bf16 %v991
      %v994 = vmax.f32 %v992, %v993
      %v995 = vrot.slane %v994, 4
      %v996 = vmax.f32 %v994, %v995
      %v997 = vrot.slane %v996, 2
      %v998 = vmax.f32 %v996, %v997
      %v999 = vrot.slane %v998, 1
      %v1000 = vmax.f32 %v998, %v999
      %v1001 = vpack.i.bf16 %v1000, %v1000
      %v1002 = vsel %vm638, %v541, 4286644096
      %v1003 = vunpack.i.l.bf16 %v1002
      %v1004 = vunpack.i.h.bf16 %v1002
      %v1005 = vmax.f32 %v1003, %v1004
      %v1006 = vrot.slane %v1005, 4
      %v1007 = vmax.f32 %v1005, %v1006
      %v1008 = vrot.slane %v1007, 2
      %v1009 = vmax.f32 %v1007, %v1008
      %v1010 = vrot.slane %v1009, 1
      %v1011 = vmax.f32 %v1009, %v1010
      %v1012 = vpack.i.bf16 %v1011, %v1011
      %v1013 = vsel %vm638, %v542, 4286644096
      %v1014 = vunpack.i.l.bf16 %v1013
      %v1015 = vunpack.i.h.bf16 %v1013
      %v1016 = vmax.f32 %v1014, %v1015
      %v1017 = vrot.slane %v1016, 4
      %v1018 = vmax.f32 %v1016, %v1017
      %v1019 = vrot.slane %v1018, 2
      %v1020 = vmax.f32 %v1018, %v1019
      %v1021 = vrot.slane %v1020, 1
      %v1022 = vmax.f32 %v1020, %v1021
      %v1023 = vpack.i.bf16 %v1022, %v1022
      %v1024 = vsel %vm638, %v543, 4286644096
      %v1025 = vunpack.i.l.bf16 %v1024
      %v1026 = vunpack.i.h.bf16 %v1024
      %v1027 = vmax.f32 %v1025, %v1026
      %v1028 = vrot.slane %v1027, 4
      %v1029 = vmax.f32 %v1027, %v1028
      %v1030 = vrot.slane %v1029, 2
      %v1031 = vmax.f32 %v1029, %v1030
      %v1032 = vrot.slane %v1031, 1
      %v1033 = vmax.f32 %v1031, %v1032
      %v1034 = vpack.i.bf16 %v1033, %v1033
      %v1035 = vsel %vm638, %v544, 4286644096
      %v1036 = vunpack.i.l.bf16 %v1035
      %v1037 = vunpack.i.h.bf16 %v1035
      %v1038 = vmax.f32 %v1036, %v1037
      %v1039 = vrot.slane %v1038, 4
      %v1040 = vmax.f32 %v1038, %v1039
      %v1041 = vrot.slane %v1040, 2
      %v1042 = vmax.f32 %v1040, %v1041
      %v1043 = vrot.slane %v1042, 1
      %v1044 = vmax.f32 %v1042, %v1043
      %v1045 = vpack.i.bf16 %v1044, %v1044
      %v1046 = vsel %vm638, %v545, 4286644096
      %v1047 = vunpack.i.l.bf16 %v1046
      %v1048 = vunpack.i.h.bf16 %v1046
      %v1049 = vmax.f32 %v1047, %v1048
      %v1050 = vrot.slane %v1049, 4
      %v1051 = vmax.f32 %v1049, %v1050
      %v1052 = vrot.slane %v1051, 2
      %v1053 = vmax.f32 %v1051, %v1052
      %v1054 = vrot.slane %v1053, 1
      %v1055 = vmax.f32 %v1053, %v1054
      %v1056 = vpack.i.bf16 %v1055, %v1055
      %v1057 = vsel %vm638, %v546, 4286644096
      %v1058 = vunpack.i.l.bf16 %v1057
      %v1059 = vunpack.i.h.bf16 %v1057
      %v1060 = vmax.f32 %v1058, %v1059
      %v1061 = vrot.slane %v1060, 4
      %v1062 = vmax.f32 %v1060, %v1061
      %v1063 = vrot.slane %v1062, 2
      %v1064 = vmax.f32 %v1062, %v1063
      %v1065 = vrot.slane %v1064, 1
      %v1066 = vmax.f32 %v1064, %v1065
      %v1067 = vpack.i.bf16 %v1066, %v1066
      %v1068 = vsel %vm638, %v547, 4286644096
      %v1069 = vunpack.i.l.bf16 %v1068
      %v1070 = vunpack.i.h.bf16 %v1068
      %v1071 = vmax.f32 %v1069, %v1070
      %v1072 = vrot.slane %v1071, 4
      %v1073 = vmax.f32 %v1071, %v1072
      %v1074 = vrot.slane %v1073, 2
      %v1075 = vmax.f32 %v1073, %v1074
      %v1076 = vrot.slane %v1075, 1
      %v1077 = vmax.f32 %v1075, %v1076
      %v1078 = vpack.i.bf16 %v1077, %v1077
      %v1079 = vsel %vm638, %v548, 4286644096
      %v1080 = vunpack.i.l.bf16 %v1079
      %v1081 = vunpack.i.h.bf16 %v1079
      %v1082 = vmax.f32 %v1080, %v1081
      %v1083 = vrot.slane %v1082, 4
      %v1084 = vmax.f32 %v1082, %v1083
      %v1085 = vrot.slane %v1084, 2
      %v1086 = vmax.f32 %v1084, %v1085
      %v1087 = vrot.slane %v1086, 1
      %v1088 = vmax.f32 %v1086, %v1087
      %v1089 = vpack.i.bf16 %v1088, %v1088
      %v1090 = vsel %vm638, %v549, 4286644096
      %v1091 = vunpack.i.l.bf16 %v1090
      %v1092 = vunpack.i.h.bf16 %v1090
      %v1093 = vmax.f32 %v1091, %v1092
      %v1094 = vrot.slane %v1093, 4
      %v1095 = vmax.f32 %v1093, %v1094
      %v1096 = vrot.slane %v1095, 2
      %v1097 = vmax.f32 %v1095, %v1096
      %v1098 = vrot.slane %v1097, 1
      %v1099 = vmax.f32 %v1097, %v1098
      %v1100 = vpack.i.bf16 %v1099, %v1099
      %v1101 = vsel %vm638, %v550, 4286644096
      %v1102 = vunpack.i.l.bf16 %v1101
      %v1103 = vunpack.i.h.bf16 %v1101
      %v1104 = vmax.f32 %v1102, %v1103
      %v1105 = vrot.slane %v1104, 4
      %v1106 = vmax.f32 %v1104, %v1105
      %v1107 = vrot.slane %v1106, 2
      %v1108 = vmax.f32 %v1106, %v1107
      %v1109 = vrot.slane %v1108, 1
      %v1110 = vmax.f32 %v1108, %v1109
      %v1111 = vpack.i.bf16 %v1110, %v1110
      %v1112 = vsel %vm638, %v551, 4286644096
      %v1113 = vunpack.i.l.bf16 %v1112
      %v1114 = vunpack.i.h.bf16 %v1112
      %v1115 = vmax.f32 %v1113, %v1114
      %v1116 = vrot.slane %v1115, 4
      %v1117 = vmax.f32 %v1115, %v1116
      %v1118 = vrot.slane %v1117, 2
      %v1119 = vmax.f32 %v1117, %v1118
      %v1120 = vrot.slane %v1119, 1
      %v1121 = vmax.f32 %v1119, %v1120
      %v1122 = vpack.i.bf16 %v1121, %v1121
      %v1123 = vsel %vm638, %v552, 4286644096
      %v1124 = vunpack.i.l.bf16 %v1123
      %v1125 = vunpack.i.h.bf16 %v1123
      %v1126 = vmax.f32 %v1124, %v1125
      %v1127 = vrot.slane %v1126, 4
      %v1128 = vmax.f32 %v1126, %v1127
      %v1129 = vrot.slane %v1128, 2
      %v1130 = vmax.f32 %v1128, %v1129
      %v1131 = vrot.slane %v1130, 1
      %v1132 = vmax.f32 %v1130, %v1131
      %v1133 = vpack.i.bf16 %v1132, %v1132
      %v1134 = vsel %vm638, %v553, 4286644096
      %v1135 = vunpack.i.l.bf16 %v1134
      %v1136 = vunpack.i.h.bf16 %v1134
      %v1137 = vmax.f32 %v1135, %v1136
      %v1138 = vrot.slane %v1137, 4
      %v1139 = vmax.f32 %v1137, %v1138
      %v1140 = vrot.slane %v1139, 2
      %v1141 = vmax.f32 %v1139, %v1140
      %v1142 = vrot.slane %v1141, 1
      %v1143 = vmax.f32 %v1141, %v1142
      %v1144 = vpack.i.bf16 %v1143, %v1143
      %v1145 = vsel %vm638, %v554, 4286644096
      %v1146 = vunpack.i.l.bf16 %v1145
      %v1147 = vunpack.i.h.bf16 %v1145
      %v1148 = vmax.f32 %v1146, %v1147
      %v1149 = vrot.slane %v1148, 4
      %v1150 = vmax.f32 %v1148, %v1149
      %v1151 = vrot.slane %v1150, 2
      %v1152 = vmax.f32 %v1150, %v1151
      %v1153 = vrot.slane %v1152, 1
      %v1154 = vmax.f32 %v1152, %v1153
      %v1155 = vpack.i.bf16 %v1154, %v1154
      %v1156 = vsel %vm638, %v555, 4286644096
      %v1157 = vunpack.i.l.bf16 %v1156
      %v1158 = vunpack.i.h.bf16 %v1156
      %v1159 = vmax.f32 %v1157, %v1158
      %v1160 = vrot.slane %v1159, 4
      %v1161 = vmax.f32 %v1159, %v1160
      %v1162 = vrot.slane %v1161, 2
      %v1163 = vmax.f32 %v1161, %v1162
      %v1164 = vrot.slane %v1163, 1
      %v1165 = vmax.f32 %v1163, %v1164
      %v1166 = vpack.i.bf16 %v1165, %v1165
      %v1167 = vsel %vm638, %v556, 4286644096
      %v1168 = vunpack.i.l.bf16 %v1167
      %v1169 = vunpack.i.h.bf16 %v1167
      %v1170 = vmax.f32 %v1168, %v1169
      %v1171 = vrot.slane %v1170, 4
      %v1172 = vmax.f32 %v1170, %v1171
      %v1173 = vrot.slane %v1172, 2
      %v1174 = vmax.f32 %v1172, %v1173
      %v1175 = vrot.slane %v1174, 1
      %v1176 = vmax.f32 %v1174, %v1175
      %v1177 = vpack.i.bf16 %v1176, %v1176
      %v1178 = vsel %vm638, %v557, 4286644096
      %v1179 = vunpack.i.l.bf16 %v1178
      %v1180 = vunpack.i.h.bf16 %v1178
      %v1181 = vmax.f32 %v1179, %v1180
      %v1182 = vrot.slane %v1181, 4
      %v1183 = vmax.f32 %v1181, %v1182
      %v1184 = vrot.slane %v1183, 2
      %v1185 = vmax.f32 %v1183, %v1184
      %v1186 = vrot.slane %v1185, 1
      %v1187 = vmax.f32 %v1185, %v1186
      %v1188 = vpack.i.bf16 %v1187, %v1187
      %v1189 = vsel %vm638, %v558, 4286644096
      %v1190 = vunpack.i.l.bf16 %v1189
      %v1191 = vunpack.i.h.bf16 %v1189
      %v1192 = vmax.f32 %v1190, %v1191
      %v1193 = vrot.slane %v1192, 4
      %v1194 = vmax.f32 %v1192, %v1193
      %v1195 = vrot.slane %v1194, 2
      %v1196 = vmax.f32 %v1194, %v1195
      %v1197 = vrot.slane %v1196, 1
      %v1198 = vmax.f32 %v1196, %v1197
      %v1199 = vpack.i.bf16 %v1198, %v1198
      %v1200 = vsel %vm638, %v559, 4286644096
      %v1201 = vunpack.i.l.bf16 %v1200
      %v1202 = vunpack.i.h.bf16 %v1200
      %v1203 = vmax.f32 %v1201, %v1202
      %v1204 = vrot.slane %v1203, 4
      %v1205 = vmax.f32 %v1203, %v1204
      %v1206 = vrot.slane %v1205, 2
      %v1207 = vmax.f32 %v1205, %v1206
      %v1208 = vrot.slane %v1207, 1
      %v1209 = vmax.f32 %v1207, %v1208
      %v1210 = vpack.i.bf16 %v1209, %v1209
      %v1211 = vsel %vm638, %v560, 4286644096
      %v1212 = vunpack.i.l.bf16 %v1211
      %v1213 = vunpack.i.h.bf16 %v1211
      %v1214 = vmax.f32 %v1212, %v1213
      %v1215 = vrot.slane %v1214, 4
      %v1216 = vmax.f32 %v1214, %v1215
      %v1217 = vrot.slane %v1216, 2
      %v1218 = vmax.f32 %v1216, %v1217
      %v1219 = vrot.slane %v1218, 1
      %v1220 = vmax.f32 %v1218, %v1219
      %v1221 = vpack.i.bf16 %v1220, %v1220
      %v1222 = vsel %vm638, %v561, 4286644096
      %v1223 = vunpack.i.l.bf16 %v1222
      %v1224 = vunpack.i.h.bf16 %v1222
      %v1225 = vmax.f32 %v1223, %v1224
      %v1226 = vrot.slane %v1225, 4
      %v1227 = vmax.f32 %v1225, %v1226
      %v1228 = vrot.slane %v1227, 2
      %v1229 = vmax.f32 %v1227, %v1228
      %v1230 = vrot.slane %v1229, 1
      %v1231 = vmax.f32 %v1229, %v1230
      %v1232 = vpack.i.bf16 %v1231, %v1231
      %v1233 = vsel %vm638, %v562, 4286644096
      %v1234 = vunpack.i.l.bf16 %v1233
      %v1235 = vunpack.i.h.bf16 %v1233
      %v1236 = vmax.f32 %v1234, %v1235
      %v1237 = vrot.slane %v1236, 4
      %v1238 = vmax.f32 %v1236, %v1237
      %v1239 = vrot.slane %v1238, 2
      %v1240 = vmax.f32 %v1238, %v1239
      %v1241 = vrot.slane %v1240, 1
      %v1242 = vmax.f32 %v1240, %v1241
      %v1243 = vpack.i.bf16 %v1242, %v1242
      %v1244 = vsel %vm638, %v563, 4286644096
      %v1245 = vunpack.i.l.bf16 %v1244
      %v1246 = vunpack.i.h.bf16 %v1244
      %v1247 = vmax.f32 %v1245, %v1246
      %v1248 = vrot.slane %v1247, 4
      %v1249 = vmax.f32 %v1247, %v1248
      %v1250 = vrot.slane %v1249, 2
      %v1251 = vmax.f32 %v1249, %v1250
      %v1252 = vrot.slane %v1251, 1
      %v1253 = vmax.f32 %v1251, %v1252
      %v1254 = vpack.i.bf16 %v1253, %v1253
      %v1255 = vsel %vm638, %v564, 4286644096
      %v1256 = vunpack.i.l.bf16 %v1255
      %v1257 = vunpack.i.h.bf16 %v1255
      %v1258 = vmax.f32 %v1256, %v1257
      %v1259 = vrot.slane %v1258, 4
      %v1260 = vmax.f32 %v1258, %v1259
      %v1261 = vrot.slane %v1260, 2
      %v1262 = vmax.f32 %v1260, %v1261
      %v1263 = vrot.slane %v1262, 1
      %v1264 = vmax.f32 %v1262, %v1263
      %v1265 = vpack.i.bf16 %v1264, %v1264
      %v1266 = vsel %vm638, %v565, 4286644096
      %v1267 = vunpack.i.l.bf16 %v1266
      %v1268 = vunpack.i.h.bf16 %v1266
      %v1269 = vmax.f32 %v1267, %v1268
      %v1270 = vrot.slane %v1269, 4
      %v1271 = vmax.f32 %v1269, %v1270
      %v1272 = vrot.slane %v1271, 2
      %v1273 = vmax.f32 %v1271, %v1272
      %v1274 = vrot.slane %v1273, 1
      %v1275 = vmax.f32 %v1273, %v1274
      %v1276 = vpack.i.bf16 %v1275, %v1275
      %v1277 = vsel %vm638, %v566, 4286644096
      %v1278 = vunpack.i.l.bf16 %v1277
      %v1279 = vunpack.i.h.bf16 %v1277
      %v1280 = vmax.f32 %v1278, %v1279
      %v1281 = vrot.slane %v1280, 4
      %v1282 = vmax.f32 %v1280, %v1281
      %v1283 = vrot.slane %v1282, 2
      %v1284 = vmax.f32 %v1282, %v1283
      %v1285 = vrot.slane %v1284, 1
      %v1286 = vmax.f32 %v1284, %v1285
      %v1287 = vpack.i.bf16 %v1286, %v1286
      %v1288 = vsel %vm638, %v567, 4286644096
      %v1289 = vunpack.i.l.bf16 %v1288
      %v1290 = vunpack.i.h.bf16 %v1288
      %v1291 = vmax.f32 %v1289, %v1290
      %v1292 = vrot.slane %v1291, 4
      %v1293 = vmax.f32 %v1291, %v1292
      %v1294 = vrot.slane %v1293, 2
      %v1295 = vmax.f32 %v1293, %v1294
      %v1296 = vrot.slane %v1295, 1
      %v1297 = vmax.f32 %v1295, %v1296
      %v1298 = vpack.i.bf16 %v1297, %v1297
      %v1299 = vsel %vm638, %v568, 4286644096
      %v1300 = vunpack.i.l.bf16 %v1299
      %v1301 = vunpack.i.h.bf16 %v1299
      %v1302 = vmax.f32 %v1300, %v1301
      %v1303 = vrot.slane %v1302, 4
      %v1304 = vmax.f32 %v1302, %v1303
      %v1305 = vrot.slane %v1304, 2
      %v1306 = vmax.f32 %v1304, %v1305
      %v1307 = vrot.slane %v1306, 1
      %v1308 = vmax.f32 %v1306, %v1307
      %v1309 = vpack.i.bf16 %v1308, %v1308
      %v1310 = vsel %vm638, %v569, 4286644096
      %v1311 = vunpack.i.l.bf16 %v1310
      %v1312 = vunpack.i.h.bf16 %v1310
      %v1313 = vmax.f32 %v1311, %v1312
      %v1314 = vrot.slane %v1313, 4
      %v1315 = vmax.f32 %v1313, %v1314
      %v1316 = vrot.slane %v1315, 2
      %v1317 = vmax.f32 %v1315, %v1316
      %v1318 = vrot.slane %v1317, 1
      %v1319 = vmax.f32 %v1317, %v1318
      %v1320 = vpack.i.bf16 %v1319, %v1319
      %v1321 = vsel %vm638, %v570, 4286644096
      %v1322 = vunpack.i.l.bf16 %v1321
      %v1323 = vunpack.i.h.bf16 %v1321
      %v1324 = vmax.f32 %v1322, %v1323
      %v1325 = vrot.slane %v1324, 4
      %v1326 = vmax.f32 %v1324, %v1325
      %v1327 = vrot.slane %v1326, 2
      %v1328 = vmax.f32 %v1326, %v1327
      %v1329 = vrot.slane %v1328, 1
      %v1330 = vmax.f32 %v1328, %v1329
      %v1331 = vpack.i.bf16 %v1330, %v1330
      %v1332 = vsel %vm638, %v571, 4286644096
      %v1333 = vunpack.i.l.bf16 %v1332
      %v1334 = vunpack.i.h.bf16 %v1332
      %v1335 = vmax.f32 %v1333, %v1334
      %v1336 = vrot.slane %v1335, 4
      %v1337 = vmax.f32 %v1335, %v1336
      %v1338 = vrot.slane %v1337, 2
      %v1339 = vmax.f32 %v1337, %v1338
      %v1340 = vrot.slane %v1339, 1
      %v1341 = vmax.f32 %v1339, %v1340
      %v1342 = vpack.i.bf16 %v1341, %v1341
      %v1407 = vunpack.c.l.b16 %v649
      %v1408 = vunpack.c.l.b16 %v660
      %v1409 = vunpack.c.l.b16 %v671
      %v1410 = vunpack.c.l.b16 %v682
      %v1411 = vunpack.c.l.b16 %v693
      %v1412 = vunpack.c.l.b16 %v704
      %v1413 = vunpack.c.l.b16 %v715
      %v1414 = vunpack.c.l.b16 %v726
      %v1415 = vunpack.c.l.b16 %v737
      %v1416 = vunpack.c.l.b16 %v748
      %v1417 = vunpack.c.l.b16 %v759
      %v1418 = vunpack.c.l.b16 %v770
      %v1419 = vunpack.c.l.b16 %v781
      %v1420 = vunpack.c.l.b16 %v792
      %v1421 = vunpack.c.l.b16 %v803
      %v1422 = vunpack.c.l.b16 %v814
      %v1423 = vunpack.c.l.b16 %v825
      %v1424 = vunpack.c.l.b16 %v836
      %v1425 = vunpack.c.l.b16 %v847
      %v1426 = vunpack.c.l.b16 %v858
      %v1427 = vunpack.c.l.b16 %v869
      %v1428 = vunpack.c.l.b16 %v880
      %v1429 = vunpack.c.l.b16 %v891
      %v1430 = vunpack.c.l.b16 %v902
      %v1431 = vunpack.c.l.b16 %v913
      %v1432 = vunpack.c.l.b16 %v924
      %v1433 = vunpack.c.l.b16 %v935
      %v1434 = vunpack.c.l.b16 %v946
      %v1435 = vunpack.c.l.b16 %v957
      %v1436 = vunpack.c.l.b16 %v968
      %v1437 = vunpack.c.l.b16 %v979
      %v1438 = vunpack.c.l.b16 %v990
      %v1439 = vunpack.c.l.b16 %v1001
      %v1440 = vunpack.c.l.b16 %v1012
      %v1441 = vunpack.c.l.b16 %v1023
      %v1442 = vunpack.c.l.b16 %v1034
      %v1443 = vunpack.c.l.b16 %v1045
      %v1444 = vunpack.c.l.b16 %v1056
      %v1445 = vunpack.c.l.b16 %v1067
      %v1446 = vunpack.c.l.b16 %v1078
      %v1447 = vunpack.c.l.b16 %v1089
      %v1448 = vunpack.c.l.b16 %v1100
      %v1449 = vunpack.c.l.b16 %v1111
      %v1450 = vunpack.c.l.b16 %v1122
      %v1451 = vunpack.c.l.b16 %v1133
      %v1452 = vunpack.c.l.b16 %v1144
      %v1453 = vunpack.c.l.b16 %v1155
      %v1454 = vunpack.c.l.b16 %v1166
      %v1455 = vunpack.c.l.b16 %v1177
      %v1456 = vunpack.c.l.b16 %v1188
      %v1457 = vunpack.c.l.b16 %v1199
      %v1458 = vunpack.c.l.b16 %v1210
      %v1459 = vunpack.c.l.b16 %v1221
      %v1460 = vunpack.c.l.b16 %v1232
      %v1461 = vunpack.c.l.b16 %v1243
      %v1462 = vunpack.c.l.b16 %v1254
      %v1463 = vunpack.c.l.b16 %v1265
      %v1464 = vunpack.c.l.b16 %v1276
      %v1465 = vunpack.c.l.b16 %v1287
      %v1466 = vunpack.c.l.b16 %v1298
      %v1467 = vunpack.c.l.b16 %v1309
      %v1468 = vunpack.c.l.b16 %v1320
      %v1469 = vunpack.c.l.b16 %v1331
      %v1470 = vunpack.c.l.b16 %v1342
      %v1471 = vpack.c.b16 %v1407, %v1407
      %v1472 = vpack.c.b16 %v1408, %v1408
      %v1473 = vpack.c.b16 %v1409, %v1409
      %v1474 = vpack.c.b16 %v1410, %v1410
      %v1475 = vpack.c.b16 %v1411, %v1411
      %v1476 = vpack.c.b16 %v1412, %v1412
      %v1477 = vpack.c.b16 %v1413, %v1413
      %v1478 = vpack.c.b16 %v1414, %v1414
      %v1479 = vpack.c.b16 %v1415, %v1415
      %v1480 = vpack.c.b16 %v1416, %v1416
      %v1481 = vpack.c.b16 %v1417, %v1417
      %v1482 = vpack.c.b16 %v1418, %v1418
      %v1483 = vpack.c.b16 %v1419, %v1419
      %v1484 = vpack.c.b16 %v1420, %v1420
      %v1485 = vpack.c.b16 %v1421, %v1421
      %v1486 = vpack.c.b16 %v1422, %v1422
      %v1487 = vpack.c.b16 %v1423, %v1423
      %v1488 = vpack.c.b16 %v1424, %v1424
      %v1489 = vpack.c.b16 %v1425, %v1425
      %v1490 = vpack.c.b16 %v1426, %v1426
      %v1491 = vpack.c.b16 %v1427, %v1427
      %v1492 = vpack.c.b16 %v1428, %v1428
      %v1493 = vpack.c.b16 %v1429, %v1429
      %v1494 = vpack.c.b16 %v1430, %v1430
      %v1495 = vpack.c.b16 %v1431, %v1431
      %v1496 = vpack.c.b16 %v1432, %v1432
      %v1497 = vpack.c.b16 %v1433, %v1433
      %v1498 = vpack.c.b16 %v1434, %v1434
      %v1499 = vpack.c.b16 %v1435, %v1435
      %v1500 = vpack.c.b16 %v1436, %v1436
      %v1501 = vpack.c.b16 %v1437, %v1437
      %v1502 = vpack.c.b16 %v1438, %v1438
      %v1503 = vpack.c.b16 %v1439, %v1439
      %v1504 = vpack.c.b16 %v1440, %v1440
      %v1505 = vpack.c.b16 %v1441, %v1441
      %v1506 = vpack.c.b16 %v1442, %v1442
      %v1507 = vpack.c.b16 %v1443, %v1443
      %v1508 = vpack.c.b16 %v1444, %v1444
      %v1509 = vpack.c.b16 %v1445, %v1445
      %v1510 = vpack.c.b16 %v1446, %v1446
      %v1511 = vpack.c.b16 %v1447, %v1447
      %v1512 = vpack.c.b16 %v1448, %v1448
      %v1513 = vpack.c.b16 %v1449, %v1449
      %v1514 = vpack.c.b16 %v1450, %v1450
      %v1515 = vpack.c.b16 %v1451, %v1451
      %v1516 = vpack.c.b16 %v1452, %v1452
      %v1517 = vpack.c.b16 %v1453, %v1453
      %v1518 = vpack.c.b16 %v1454, %v1454
      %v1519 = vpack.c.b16 %v1455, %v1455
      %v1520 = vpack.c.b16 %v1456, %v1456
      %v1521 = vpack.c.b16 %v1457, %v1457
      %v1522 = vpack.c.b16 %v1458, %v1458
      %v1523 = vpack.c.b16 %v1459, %v1459
      %v1524 = vpack.c.b16 %v1460, %v1460
      %v1525 = vpack.c.b16 %v1461, %v1461
      %v1526 = vpack.c.b16 %v1462, %v1462
      %v1527 = vpack.c.b16 %v1463, %v1463
      %v1528 = vpack.c.b16 %v1464, %v1464
      %v1529 = vpack.c.b16 %v1465, %v1465
      %v1530 = vpack.c.b16 %v1466, %v1466
      %v1531 = vpack.c.b16 %v1467, %v1467
      %v1532 = vpack.c.b16 %v1468, %v1468
      %v1533 = vpack.c.b16 %v1469, %v1469
      %v1534 = vpack.c.b16 %v1470, %v1470
      %v1535 = vunpack.c.l.b16 %v1471
      %v1536 = vunpack.c.l.b16 %v1472
      %v1537 = vunpack.c.l.b16 %v1473
      %v1538 = vunpack.c.l.b16 %v1474
      %v1539 = vunpack.c.l.b16 %v1475
      %v1540 = vunpack.c.l.b16 %v1476
      %v1541 = vunpack.c.l.b16 %v1477
      %v1542 = vunpack.c.l.b16 %v1478
      %v1543 = vunpack.c.l.b16 %v1479
      %v1544 = vunpack.c.l.b16 %v1480
      %v1545 = vunpack.c.l.b16 %v1481
      %v1546 = vunpack.c.l.b16 %v1482
      %v1547 = vunpack.c.l.b16 %v1483
      %v1548 = vunpack.c.l.b16 %v1484
      %v1549 = vunpack.c.l.b16 %v1485
      %v1550 = vunpack.c.l.b16 %v1486
      %v1551 = vunpack.c.l.b16 %v1487
      %v1552 = vunpack.c.l.b16 %v1488
      %v1553 = vunpack.c.l.b16 %v1489
      %v1554 = vunpack.c.l.b16 %v1490
      %v1555 = vunpack.c.l.b16 %v1491
      %v1556 = vunpack.c.l.b16 %v1492
      %v1557 = vunpack.c.l.b16 %v1493
      %v1558 = vunpack.c.l.b16 %v1494
      %v1559 = vunpack.c.l.b16 %v1495
      %v1560 = vunpack.c.l.b16 %v1496
      %v1561 = vunpack.c.l.b16 %v1497
      %v1562 = vunpack.c.l.b16 %v1498
      %v1563 = vunpack.c.l.b16 %v1499
      %v1564 = vunpack.c.l.b16 %v1500
      %v1565 = vunpack.c.l.b16 %v1501
      %v1566 = vunpack.c.l.b16 %v1502
      %v1567 = vunpack.c.l.b16 %v1503
      %v1568 = vunpack.c.l.b16 %v1504
      %v1569 = vunpack.c.l.b16 %v1505
      %v1570 = vunpack.c.l.b16 %v1506
      %v1571 = vunpack.c.l.b16 %v1507
      %v1572 = vunpack.c.l.b16 %v1508
      %v1573 = vunpack.c.l.b16 %v1509
      %v1574 = vunpack.c.l.b16 %v1510
      %v1575 = vunpack.c.l.b16 %v1511
      %v1576 = vunpack.c.l.b16 %v1512
      %v1577 = vunpack.c.l.b16 %v1513
      %v1578 = vunpack.c.l.b16 %v1514
      %v1579 = vunpack.c.l.b16 %v1515
      %v1580 = vunpack.c.l.b16 %v1516
      %v1581 = vunpack.c.l.b16 %v1517
      %v1582 = vunpack.c.l.b16 %v1518
      %v1583 = vunpack.c.l.b16 %v1519
      %v1584 = vunpack.c.l.b16 %v1520
      %v1585 = vunpack.c.l.b16 %v1521
      %v1586 = vunpack.c.l.b16 %v1522
      %v1587 = vunpack.c.l.b16 %v1523
      %v1588 = vunpack.c.l.b16 %v1524
      %v1589 = vunpack.c.l.b16 %v1525
      %v1590 = vunpack.c.l.b16 %v1526
      %v1591 = vunpack.c.l.b16 %v1527
      %v1592 = vunpack.c.l.b16 %v1528
      %v1593 = vunpack.c.l.b16 %v1529
      %v1594 = vunpack.c.l.b16 %v1530
      %v1595 = vunpack.c.l.b16 %v1531
      %v1596 = vunpack.c.l.b16 %v1532
      %v1597 = vunpack.c.l.b16 %v1533
      %v1598 = vunpack.c.l.b16 %v1534
      %vm1599 = vcmask 1041409
      %v1600 = vsel %vm1599, %v1536, %v1535
      %vm1601 = vcmask 1042434
      %v1602 = vsel %vm1601, %v1537, %v1600
      %vm1603 = vcmask 1043459
      %v1604 = vsel %vm1603, %v1538, %v1602
      %vm1605 = vcmask 1044484
      %v1606 = vsel %vm1605, %v1539, %v1604
      %vm1607 = vcmask 1045509
      %v1608 = vsel %vm1607, %v1540, %v1606
      %vm1609 = vcmask 1046534
      %v1610 = vsel %vm1609, %v1541, %v1608
      %vm1611 = vcmask 1047559
      %v1612 = vsel %vm1611, %v1542, %v1610
      %v1613 = vsel %vm1599, %v1544, %v1543
      %v1614 = vsel %vm1601, %v1545, %v1613
      %v1615 = vsel %vm1603, %v1546, %v1614
      %v1616 = vsel %vm1605, %v1547, %v1615
      %v1617 = vsel %vm1607, %v1548, %v1616
      %v1618 = vsel %vm1609, %v1549, %v1617
      %v1619 = vsel %vm1611, %v1550, %v1618
      %v1620 = vsel %vm1599, %v1552, %v1551
      %v1621 = vsel %vm1601, %v1553, %v1620
      %v1622 = vsel %vm1603, %v1554, %v1621
      %v1623 = vsel %vm1605, %v1555, %v1622
      %v1624 = vsel %vm1607, %v1556, %v1623
      %v1625 = vsel %vm1609, %v1557, %v1624
      %v1626 = vsel %vm1611, %v1558, %v1625
      %v1627 = vsel %vm1599, %v1560, %v1559
      %v1628 = vsel %vm1601, %v1561, %v1627
      %v1629 = vsel %vm1603, %v1562, %v1628
      %v1630 = vsel %vm1605, %v1563, %v1629
      %v1631 = vsel %vm1607, %v1564, %v1630
      %v1632 = vsel %vm1609, %v1565, %v1631
      %v1633 = vsel %vm1611, %v1566, %v1632
      %v1634 = vsel %vm1599, %v1568, %v1567
      %v1635 = vsel %vm1601, %v1569, %v1634
      %v1636 = vsel %vm1603, %v1570, %v1635
      %v1637 = vsel %vm1605, %v1571, %v1636
      %v1638 = vsel %vm1607, %v1572, %v1637
      %v1639 = vsel %vm1609, %v1573, %v1638
      %v1640 = vsel %vm1611, %v1574, %v1639
      %v1641 = vsel %vm1599, %v1576, %v1575
      %v1642 = vsel %vm1601, %v1577, %v1641
      %v1643 = vsel %vm1603, %v1578, %v1642
      %v1644 = vsel %vm1605, %v1579, %v1643
      %v1645 = vsel %vm1607, %v1580, %v1644
      %v1646 = vsel %vm1609, %v1581, %v1645
      %v1647 = vsel %vm1611, %v1582, %v1646
      %v1648 = vsel %vm1599, %v1584, %v1583
      %v1649 = vsel %vm1601, %v1585, %v1648
      %v1650 = vsel %vm1603, %v1586, %v1649
      %v1651 = vsel %vm1605, %v1587, %v1650
      %v1652 = vsel %vm1607, %v1588, %v1651
      %v1653 = vsel %vm1609, %v1589, %v1652
      %v1654 = vsel %vm1611, %v1590, %v1653
      %v1655 = vsel %vm1599, %v1592, %v1591
      %v1656 = vsel %vm1601, %v1593, %v1655
      %v1657 = vsel %vm1603, %v1594, %v1656
      %v1658 = vsel %vm1605, %v1595, %v1657
      %v1659 = vsel %vm1607, %v1596, %v1658
      %v1660 = vsel %vm1609, %v1597, %v1659
      %v1661 = vsel %vm1611, %v1598, %v1660
      %v1662 = vpack.c.b16 %v1612, %v1612
      %v1663 = vpack.c.b16 %v1619, %v1619
      %v1664 = vpack.c.b16 %v1626, %v1626
      %v1665 = vpack.c.b16 %v1633, %v1633
      %v1666 = vpack.c.b16 %v1640, %v1640
      %v1667 = vpack.c.b16 %v1647, %v1647
      %v1668 = vpack.c.b16 %v1654, %v1654
      %v1669 = vpack.c.b16 %v1661, %v1661
      %1678 = vst [vmem:[%s121] sm:$0xf] %v1662
      %1679 = vst [vmem:[%s121 + $0x4] sm:$0xf] %v1663
      %1680 = vst [vmem:[%s121 + $0x8] sm:$0xf] %v1664
      %1681 = vst [vmem:[%s121 + $0xc] sm:$0xf] %v1665
      %1682 = vst [vmem:[%s121 + $0x10] sm:$0xf] %v1666
      %1683 = vst [vmem:[%s121 + $0x14] sm:$0xf] %v1667
      %1684 = vst [vmem:[%s121 + $0x18] sm:$0xf] %v1668
      %1685 = vst [vmem:[%s121 + $0x1c] sm:$0xf] %v1669
      %s1686 = smul.u32 8, %s12
      %p1687 = scmp.lt.s32.totalorder %s1686, 15
      %s1688 = scalar_select %p1687, %s1686, 15
      %s1689 = smul.addr %s1688, 4
      %s1690 = scalar_lea.vmem %s1, %s1689
      // Predicated region
      $region25: #{forward.40} parent=23 // pred_check
        %p1691 = pneg %p56
      $region26: #{forward.40} parent=23 // pred_check_branch
        %1693 = sbr.rel (%p1691) target = $region28
      $region27: #{forward.40} parent=23 // pred_region
        %s1694 = smul.u32 8, %s12
      $region28: #{forward.40} parent=23 // pred_fallthru
        _
    $region24: #{forward.40} parent=5 // pred_fallthru
      _
    %p1695 = scmp.le.s32.totalorder 2, %s7
    // Predicated region
    $region29: #{forward.40} parent=5 // pred_check
      %p1696 = pneg %p1695
    $region30: #{forward.40} parent=5 // pred_check_branch
      %1698 = sbr.rel (%p1696) target = $region32
    $region31: #{forward.40} parent=5 // pred_region
      %s1699 = ssub.s32 %s7, 2
      // Predicated region
      $region33: #{forward.40} parent=31 // pred_check
        %p1700 = pneg %p62
      $region34: #{forward.40} parent=31 // pred_check_branch
        %1702 = sbr.rel (%p1700) target = $region36
      $region35: #{forward.40} parent=31 // pred_region
        %s1703 = smul.u32 8, %s13
        %p1704 = scmp.lt.s32.totalorder %s1703, 15
        %s1705 = scalar_select %p1704, %s1703, 15
        %s1706 = smul.addr %s1705, 4
        %s1707 = scalar_lea.vmem %s1, %s1706
      $region36: #{forward.40} parent=31 // pred_fallthru
        _
    $region32: #{forward.40} parent=5 // pred_fallthru
      _
  $region6: #{forward.40} parent=0 // loop_footer
    %s11 = sadd.s32 1, %s7
  $region7: #{forward.40} parent=0 // loop_footer_branch
    %6 = sbr.rel target = $region3
  $region8: #{forward.40} parent=0 // loop_exit
    _

// kernel: forward.42
$region0: #{forward.42}
  #allocation0 [shape = 'u32[]', space=smem, size = 0x4, offset = 0x4, fixed_abs, tag = 'smem constant byte address 0x4 - core index']
  #allocation1 [shape = 'u32[144,128]{1,0:T(1,128)}', space=vmem, size = 0x12000, scoped, tag = 'internal scratch']
  %s0 = inlined_call_operand.vmem [shape: bf16[128,128], index: 0, kind: input, shape index: {}]
  %s1 = inlined_call_operand.vmem [shape: bf16[128,128], index: 1, kind: input, shape index: {}]
  %s2 = inlined_call_operand.vmem [shape: f32[1,128], index: 2, kind: input, shape index: {}]
  %s3 = inlined_call_operand.vmem [shape: f32[1,128], index: 3, kind: input, shape index: {}]
  %s4 = inlined_call_operand.vmem [shape: bf16[128,128], index: 4, kind: output, shape index: {}]
  %s5 = sld [smem:[#allocation0]]
  $region49: #{forward.42} parent=0
    _
  %s7 = ssub.s32 1, %s5
  %s8 = scalar_select 0, %s7, %s5
  loop: start=0, step=1, limit=4
  $region2: #{forward.42} parent=0 // loop_pre_header
    _
  $region3: #{forward.42} parent=0 // loop_header
    %s10 = sphi 0, %s14
    %p11 = scmp.ge.s32.totalorder %s10, 4
    %s20 = sphi 0, %s22
    %s23 = sphi 0, %s20
    %s24 = sphi 0, %s23
    %s40 = sphi 0, %s24
    %s44 = sphi 0, %s44
    %s46 = sphi 0, %s44
    %s47 = sphi 0, %s46
    %s61 = sphi 0, %s47
    %s65 = sphi 0, %s65
    %s67 = sphi 0, %s65
    %s68 = sphi 0, %s67
    %s82 = sphi 0, %s68
    %s86 = sphi 0, %s86
    %s88 = sphi 0, %s86
    %s89 = sphi 0, %s88
    %s103 = sphi 0, %s89
    %s109 = sphi 0, %s111
    %s112 = sphi 0, %s109
    %s113 = sphi 0, %s112
    %s129 = sphi 0, %s113
  $region4: #{forward.42} parent=0 // loop_header_branch
    %13 = sbr.rel (%p11) target = $region8
  $region5: #{forward.42} parent=0 // loop_body
    %s15 = ssub.s32 %s10, 1
    %s16 = ssub.s32 %s10, 2
    %s17 = sadd.s32 %s10, 1
    %s18 = ssub.s32 %s10, %s17
    %p19 = scmp.eq.s32.totalorder %s18, 0
    %s21 = sadd.s32 %s20, 1
    %s22 = scalar_select %p19, %s20, %s21
    %p25 = pneg %p19
    %p26 = scmp.eq.s32.totalorder %s10, 1
    %p27 = por %p25, %p26
    %p28 = scmp.ne.s32.totalorder %s20, %s23
    %p29 = scmp.eq.s32.totalorder %s10, 0
    %p30 = por %p28, %p29
    %p31 = scmp.ne.s32.totalorder %s20, %s23
    %p32 = scmp.eq.s32.totalorder %s15, 1
    %p33 = por %p31, %p32
    %p34 = scmp.ne.s32.totalorder %s23, %s24
    %p35 = scmp.eq.s32.totalorder %s15, 0
    %p36 = por %p34, %p35
    %p37 = scmp.ne.s32.totalorder %s23, %s24
    %p38 = scmp.eq.s32.totalorder %s16, 1
    %p39 = por %p37, %p38
    %p41 = scmp.ne.s32.totalorder %s24, %s40
    %p42 = scmp.eq.s32.totalorder %s16, 0
    %p43 = por %p41, %p42
    %s45 = sadd.s32 %s44, 1
    %p48 = scmp.eq.s32.totalorder %s10, 1
    %p49 = scmp.ne.s32.totalorder %s44, %s46
    %p50 = scmp.eq.s32.totalorder %s10, 0
    %p51 = por %p49, %p50
    %p52 = scmp.ne.s32.totalorder %s44, %s46
    %p53 = scmp.eq.s32.totalorder %s15, 1
    %p54 = por %p52, %p53
    %p55 = scmp.ne.s32.totalorder %s46, %s47
    %p56 = scmp.eq.s32.totalorder %s15, 0
    %p57 = por %p55, %p56
    %p58 = scmp.ne.s32.totalorder %s46, %s47
    %p59 = scmp.eq.s32.totalorder %s16, 1
    %p60 = por %p58, %p59
    %p62 = scmp.ne.s32.totalorder %s47, %s61
    %p63 = scmp.eq.s32.totalorder %s16, 0
    %p64 = por %p62, %p63
    %s66 = sadd.s32 %s65, 1
    %p69 = scmp.eq.s32.totalorder %s10, 1
    %p70 = scmp.ne.s32.totalorder %s65, %s67
    %p71 = scmp.eq.s32.totalorder %s10, 0
    %p72 = por %p70, %p71
    %p73 = scmp.ne.s32.totalorder %s65, %s67
    %p74 = scmp.eq.s32.totalorder %s15, 1
    %p75 = por %p73, %p74
    %p76 = scmp.ne.s32.totalorder %s67, %s68
    %p77 = scmp.eq.s32.totalorder %s15, 0
    %p78 = por %p76, %p77
    %p79 = scmp.ne.s32.totalorder %s67, %s68
    %p80 = scmp.eq.s32.totalorder %s16, 1
    %p81 = por %p79, %p80
    %p83 = scmp.ne.s32.totalorder %s68, %s82
    %p84 = scmp.eq.s32.totalorder %s16, 0
    %p85 = por %p83, %p84
    %s87 = sadd.s32 %s86, 1
    %p90 = scmp.eq.s32.totalorder %s10, 1
    %p91 = scmp.ne.s32.totalorder %s86, %s88
    %p92 = scmp.eq.s32.totalorder %s10, 0
    %p93 = por %p91, %p92
    %p94 = scmp.ne.s32.totalorder %s86, %s88
    %p95 = scmp.eq.s32.totalorder %s15, 1
    %p96 = por %p94, %p95
    %p97 = scmp.ne.s32.totalorder %s88, %s89
    %p98 = scmp.eq.s32.totalorder %s15, 0
    %p99 = por %p97, %p98
    %p100 = scmp.ne.s32.totalorder %s88, %s89
    %p101 = scmp.eq.s32.totalorder %s16, 1
    %p102 = por %p100, %p101
    %p104 = scmp.ne.s32.totalorder %s89, %s103
    %p105 = scmp.eq.s32.totalorder %s16, 0
    %p106 = por %p104, %p105
    %s107 = ssub.s32 %s10, %s17
    %p108 = scmp.eq.s32.totalorder %s107, 0
    %s110 = sadd.s32 %s109, 1
    %s111 = scalar_select %p108, %s109, %s110
    %p114 = pneg %p108
    %p115 = scmp.eq.s32.totalorder %s10, 1
    %p116 = por %p114, %p115
    %p117 = scmp.ne.s32.totalorder %s109, %s112
    %p118 = scmp.eq.s32.totalorder %s10, 0
    %p119 = por %p117, %p118
    %p120 = scmp.ne.s32.totalorder %s109, %s112
    %p121 = scmp.eq.s32.totalorder %s15, 1
    %p122 = por %p120, %p121
    %p123 = scmp.ne.s32.totalorder %s112, %s113
    %p124 = scmp.eq.s32.totalorder %s15, 0
    %p125 = por %p123, %p124
    %p126 = scmp.ne.s32.totalorder %s112, %s113
    %p127 = scmp.eq.s32.totalorder %s16, 1
    %p128 = por %p126, %p127
    %p130 = scmp.ne.s32.totalorder %s113, %s129
    %p131 = scmp.eq.s32.totalorder %s16, 0
    %p132 = por %p130, %p131
    %p133 = scmp.le.s32.totalorder 1, %s10
    %p134 = scmp.lt.s32.totalorder %s10, 3
    %p135 = pnand %p133, %p134
    %p136 = pneg %p135
    // Predicated region
    $region9: #{forward.42} parent=5 // pred_check
      _
    $region10: #{forward.42} parent=5 // pred_check_branch
      %138 = sbr.rel (%p135) target = $region12
    $region11: #{forward.42} parent=5 // pred_region
      %s139 = ssub.s32 %s10, 1
      // Predicated region
      $region13: #{forward.42} parent=11 // pred_check
        %p140 = pneg %p57
      $region14: #{forward.42} parent=11 // pred_check_branch
        %142 = sbr.rel (%p140) target = $region16
      $region15: #{forward.42} parent=11 // pred_region
        _
      $region16: #{forward.42} parent=11 // pred_fallthru
        _
      // Predicated region
      $region17: #{forward.42} parent=11 // pred_check
        %p143 = pneg %p78
      $region18: #{forward.42} parent=11 // pred_check_branch
        %145 = sbr.rel (%p143) target = $region20
      $region19: #{forward.42} parent=11 // pred_region
        _
      $region20: #{forward.42} parent=11 // pred_fallthru
        _
      // Predicated region
      $region21: #{forward.42} parent=11 // pred_check
        %p146 = pneg %p99
      $region22: #{forward.42} parent=11 // pred_check_branch
        %148 = sbr.rel (%p146) target = $region24
      $region23: #{forward.42} parent=11 // pred_region
        _
      $region24: #{forward.42} parent=11 // pred_fallthru
        _
    $region12: #{forward.42} parent=5 // pred_fallthru
      _
    %p149 = scmp.lt.s32.totalorder %s10, 2
    // Predicated region
    $region25: #{forward.42} parent=5 // pred_check
      %p150 = pneg %p149
    $region26: #{forward.42} parent=5 // pred_check_branch
      %152 = sbr.rel (%p150) target = $region28
    $region27: #{forward.42} parent=5 // pred_region
      // Predicated region
      $region29: #{forward.42} parent=27 // pred_check
        %p153 = pneg %p30
      $region30: #{forward.42} parent=27 // pred_check_branch
        %155 = sbr.rel (%p153) target = $region32
      $region31: #{forward.42} parent=27 // pred_region
        %s156 = smul.u32 8, %s10
        %p157 = scmp.lt.s32.totalorder %s156, 15
        %s158 = scalar_select %p157, %s156, 15
        %s159 = smul.addr %s158, 4
        %s160 = scalar_lea.vmem %s0, %s159
        %s161 = smul.u32 8, %s10
      $region32: #{forward.42} parent=27 // pred_fallthru
        _
    $region28: #{forward.42} parent=5 // pred_fallthru
      _
    %p162 = scmp.le.s32.totalorder 1, %s10
    %p163 = scmp.lt.s32.totalorder %s10, 3
    %p164 = pnand %p162, %p163
    %p165 = pneg %p164
    // Predicated region
    $region33: #{forward.42} parent=5 // pred_check
      _
    $region34: #{forward.42} parent=5 // pred_check_branch
      %167 = sbr.rel (%p164) target = $region36
    $region35: #{forward.42} parent=5 // pred_region
      %s168 = ssub.s32 %s10, 1
      %s169 = smul.u32 8, %s15
      %p170 = scmp.lt.s32.totalorder %s169, 15
      %s171 = scalar_select %p170, %s169, 15
      %s172 = smul.addr %s171, 4
      %s173 = scalar_lea.vmem %s0, %s172
      %p174 = pneg %p36
      %p175 = pneg %p33
      %p176 = pneg %p57
      %p177 = pneg %p54
      %p178 = pneg %p78
      %p179 = pneg %p75
      %p180 = pneg %p99
      %p181 = pneg %p96
      %p182 = pneg %p125
      %p183 = pneg %p122
      %s184 = smul.u32 8, %s15
      %p185 = scmp.lt.s32.totalorder %s184, 15
      %s186 = scalar_select %p185, %s184, 15
      %s187 = smul.addr %s186, 4
      %s188 = scalar_lea.vmem %s4, %s187
      %s189 = smul.u32 8, %s15
      %p190 = scmp.lt.s32.totalorder %s189, 15
      %s191 = scalar_select %p190, %s189, 15
      %s192 = smul.addr %s191, 4
      %s193 = scalar_lea.vmem %s0, %s192
      %s194 = smul.u32 8, %s15
      %s195 = smul.u32 8, %s15
      %p196 = scmp.lt.s32.totalorder %s195, 15
      %s197 = scalar_select %p196, %s195, 15
      %s198 = smul.addr %s197, 4
      %s199 = scalar_lea.vmem %s4, %s198
      %s200 = smul.u32 8, %s15
      %v202 = vld [vmem:[%s193] sm:$0xf]
      %v203 = vld [vmem:[%s193 + $0x4] sm:$0xf]
      %v204 = vld [vmem:[%s193 + $0x8] sm:$0xf]
      %v205 = vld [vmem:[%s193 + $0xc] sm:$0xf]
      %v206 = vld [vmem:[%s193 + $0x10] sm:$0xf]
      %v207 = vld [vmem:[%s193 + $0x14] sm:$0xf]
      %v208 = vld [vmem:[%s193 + $0x18] sm:$0xf]
      %v209 = vld [vmem:[%s193 + $0x1c] sm:$0xf]
      %v210 = vld [vmem:[%s1] sm:$0xf]
      %v211 = vld [vmem:[%s1 + $0x4] sm:$0xf]
      %v212 = vld [vmem:[%s1 + $0x8] sm:$0xf]
      %v213 = vld [vmem:[%s1 + $0xc] sm:$0xf]
      %v214 = vld [vmem:[%s1 + $0x10] sm:$0xf]
      %v215 = vld [vmem:[%s1 + $0x14] sm:$0xf]
      %v216 = vld [vmem:[%s1 + $0x18] sm:$0xf]
      %v217 = vld [vmem:[%s1 + $0x1c] sm:$0xf]
      %v218 = vld [vmem:[%s1 + $0x20] sm:$0xf]
      %v219 = vld [vmem:[%s1 + $0x24] sm:$0xf]
      %v220 = vld [vmem:[%s1 + $0x28] sm:$0xf]
      %v221 = vld [vmem:[%s1 + $0x2c] sm:$0xf]
      %v222 = vld [vmem:[%s1 + $0x30] sm:$0xf]
      %v223 = vld [vmem:[%s1 + $0x34] sm:$0xf]
      %v224 = vld [vmem:[%s1 + $0x38] sm:$0xf]
      %v225 = vld [vmem:[%s1 + $0x3c] sm:$0xf]
      %v234 = vunpack.c.l.b16 %v202
      %v235 = vunpack.c.l.b16 %v203
      %v236 = vunpack.c.l.b16 %v204
      %v237 = vunpack.c.l.b16 %v205
      %v238 = vunpack.c.l.b16 %v206
      %v239 = vunpack.c.l.b16 %v207
      %v240 = vunpack.c.l.b16 %v208
      %v241 = vunpack.c.l.b16 %v209
      %v242 = vpack.c.b16 %v235, %v234
      %v243 = vpack.c.b16 %v237, %v236
      %v244 = vpack.c.b16 %v239, %v238
      %v245 = vpack.c.b16 %v241, %v240
      %v266 = vunpack.c.l.b16 %v210
      %v267 = vunpack.c.l.b16 %v211
      %v268 = vunpack.c.l.b16 %v212
      %v269 = vunpack.c.l.b16 %v213
      %v270 = vunpack.c.l.b16 %v214
      %v271 = vunpack.c.l.b16 %v215
      %v272 = vunpack.c.l.b16 %v216
      %v273 = vunpack.c.l.b16 %v217
      %v274 = vunpack.c.l.b16 %v218
      %v275 = vunpack.c.l.b16 %v219
      %v276 = vunpack.c.l.b16 %v220
      %v277 = vunpack.c.l.b16 %v221
      %v278 = vunpack.c.l.b16 %v222
      %v279 = vunpack.c.l.b16 %v223
      %v280 = vunpack.c.l.b16 %v224
      %v281 = vunpack.c.l.b16 %v225
      %v282 = vpack.c.b16 %v267, %v266
      %v283 = vpack.c.b16 %v269, %v268
      %v284 = vpack.c.b16 %v271, %v270
      %v285 = vpack.c.b16 %v273, %v272
      %v286 = vpack.c.b16 %v275, %v274
      %v287 = vpack.c.b16 %v277, %v276
      %v288 = vpack.c.b16 %v279, %v278
      %v289 = vpack.c.b16 %v281, %v280
      %298 = vmatprep.subr.bf16.mxu0 0
      %299 = vmatpush1.bf16.msra.mxu0 %v289
      %300 = vmatprep.subr.bf16.mxu0 0
      %301 = vmatpush1.bf16.msra.mxu0 %v288
      %302 = vmatprep.subr.bf16.mxu0 0
      %303 = vmatpush1.bf16.msra.mxu0 %v287
      %304 = vmatprep.subr.bf16.mxu0 0
      %305 = vmatpush1.bf16.msra.mxu0 %v286
      %306 = vmatprep.subr.bf16.mxu0 0
      %307 = vmatpush1.bf16.msra.mxu0 %v285
      %308 = vmatprep.subr.bf16.mxu0 0
      %309 = vmatpush1.bf16.msra.mxu0 %v284
      %310 = vmatprep.subr.bf16.mxu0 0
      %311 = vmatpush1.bf16.msra.mxu0 %v283
      %312 = vmatprep.subr.bf16.mxu0 0
      %313 = vmatpush1.bf16.msra.mxu0 %v282
      %314 = vmatprep.subr.bf16.mxu0 0
      %315 = vmatpush2.bf16.msra.mxu0 0
      %316 = vmatprep.subr.bf16.mxu0 0
      %317 = vmatpush2.bf16.msra.mxu0 0
      %318 = vmatprep.subr.bf16.mxu0 0
      %319 = vmatpush2.bf16.msra.mxu0 0
      %320 = vmatprep.subr.bf16.mxu0 0
      %321 = vmatpush2.bf16.msra.mxu0 0
      %322 = vmatprep.subr.bf16.mxu0 0
      %323 = vmatpush2.bf16.msra.mxu0 0
      %324 = vmatprep.subr.bf16.mxu0 0
      %325 = vmatpush2.bf16.msra.mxu0 0
      %326 = vmatprep.subr.bf16.mxu0 0
      %327 = vmatpush2.bf16.msra.mxu0 0
      %328 = vmatprep.subr.bf16.mxu0 0
      %329 = vmatpush2.bf16.msra.mxu0 0
      %330 = vmatprep.mubr.bf16.mxu0 0
      %331 = vmatmul.mubr.bf16.gmra.mxu0 %v242
      %v332 = vpop.f32.mrf.mxu0
      %v333 = vadd.f32 0.0, %v332
      %v334 = vpop.f32.mrf.mxu0
      %v335 = vpop.f32.mrf.mxu0
      %v336 = vadd.f32 0.0, %v335
      %v337 = vpop.f32.mrf.mxu0
      %338 = vmatprep.mubr.bf16.mxu0 0
      %339 = vmatmul.mubr.bf16.gmra.mxu0 %v243
      %v340 = vpop.f32.mrf.mxu0
      %v341 = vadd.f32 0.0, %v340
      %v342 = vpop.f32.mrf.mxu0
      %v343 = vpop.f32.mrf.mxu0
      %v344 = vadd.f32 0.0, %v343
      %v345 = vpop.f32.mrf.mxu0
      %346 = vmatprep.mubr.bf16.mxu0 0
      %347 = vmatmul.mubr.bf16.gmra.mxu0 %v244
      %v348 = vpop.f32.mrf.mxu0
      %v349 = vadd.f32 0.0, %v348
      %v350 = vpop.f32.mrf.mxu0
      %v351 = vpop.f32.mrf.mxu0
      %v352 = vadd.f32 0.0, %v351
      %v353 = vpop.f32.mrf.mxu0
      %354 = vmatprep.mubr.bf16.mxu0 0
      %355 = vmatmul.mubr.bf16.gmra.mxu0 %v245
      %v356 = vpop.f32.mrf.mxu0
      %v357 = vadd.f32 0.0, %v356
      %v358 = vpop.f32.mrf.mxu0
      %v359 = vpop.f32.mrf.mxu0
      %v360 = vadd.f32 0.0, %v359
      %v361 = vpop.f32.mrf.mxu0
      %362 = vdwg.mxu0
      %v363 = vld [vmem:[%s2] sm:$0x1]
      %v365 = vlaneseq
      %v366 = vshrl.u32 %v365, 7
      %v367 = vsub.s32 0, %v366
      %v368 = vrot.slane %v363, %v367
      %v370 = vmul.f32 %v333, %v368
      %v371 = vmul.f32 %v336, %v368
      %v372 = vmul.f32 %v341, %v368
      %v373 = vmul.f32 %v344, %v368
      %v374 = vmul.f32 %v349, %v368
      %v375 = vmul.f32 %v352, %v368
      %v376 = vmul.f32 %v357, %v368
      %v377 = vmul.f32 %v360, %v368
      %v378 = vld [vmem:[%s3] sm:$0x1]
      %v380 = vlaneseq
      %v381 = vshrl.u32 %v380, 7
      %v382 = vsub.s32 0, %v381
      %v383 = vrot.slane %v378, %v382
      %v385 = vadd.f32 %v370, %v383
      %v386 = vadd.f32 %v371, %v383
      %v387 = vadd.f32 %v372, %v383
      %v388 = vadd.f32 %v373, %v383
      %v389 = vadd.f32 %v374, %v383
      %v390 = vadd.f32 %v375, %v383
      %v391 = vadd.f32 %v376, %v383
      %v392 = vadd.f32 %v377, %v383
      %v393 = vpack.c.bf16 %v386, %v385
      %v394 = vpack.c.bf16 %v388, %v387
      %v395 = vpack.c.bf16 %v390, %v389
      %v396 = vpack.c.bf16 %v392, %v391
      %v401 = vunpack.c.l.b16 %v393
      %v402 = vunpack.c.h.b16 %v393
      %v403 = vunpack.c.l.b16 %v394
      %v404 = vunpack.c.h.b16 %v394
      %v405 = vunpack.c.l.b16 %v395
      %v406 = vunpack.c.h.b16 %v395
      %v407 = vunpack.c.l.b16 %v396
      %v408 = vunpack.c.h.b16 %v396
      %v409 = vpack.c.b16 %v401, %v401
      %v410 = vpack.c.b16 %v402, %v402
      %v411 = vpack.c.b16 %v403, %v403
      %v412 = vpack.c.b16 %v404, %v404
      %v413 = vpack.c.b16 %v405, %v405
      %v414 = vpack.c.b16 %v406, %v406
      %v415 = vpack.c.b16 %v407, %v407
      %v416 = vpack.c.b16 %v408, %v408
      %425 = vst [vmem:[%s199] sm:$0xf] %v409
      %426 = vst [vmem:[%s199 + $0x4] sm:$0xf] %v410
      %427 = vst [vmem:[%s199 + $0x8] sm:$0xf] %v411
      %428 = vst [vmem:[%s199 + $0xc] sm:$0xf] %v412
      %429 = vst [vmem:[%s199 + $0x10] sm:$0xf] %v413
      %430 = vst [vmem:[%s199 + $0x14] sm:$0xf] %v414
      %431 = vst [vmem:[%s199 + $0x18] sm:$0xf] %v415
      %432 = vst [vmem:[%s199 + $0x1c] sm:$0xf] %v416
      %s433 = smul.u32 8, %s15
      %p434 = scmp.lt.s32.totalorder %s433, 15
      %s435 = scalar_select %p434, %s433, 15
      %s436 = smul.addr %s435, 4
      %s437 = scalar_lea.vmem %s4, %s436
      // Predicated region
      $region37: #{forward.42} parent=35 // pred_check
        %p438 = pneg %p122
      $region38: #{forward.42} parent=35 // pred_check_branch
        %440 = sbr.rel (%p438) target = $region40
      $region39: #{forward.42} parent=35 // pred_region
        %s441 = smul.u32 8, %s15
      $region40: #{forward.42} parent=35 // pred_fallthru
        _
    $region36: #{forward.42} parent=5 // pred_fallthru
      _
    %p442 = scmp.le.s32.totalorder 2, %s10
    // Predicated region
    $region41: #{forward.42} parent=5 // pred_check
      %p443 = pneg %p442
    $region42: #{forward.42} parent=5 // pred_check_branch
      %445 = sbr.rel (%p443) target = $region44
    $region43: #{forward.42} parent=5 // pred_region
      %s446 = ssub.s32 %s10, 2
      // Predicated region
      $region45: #{forward.42} parent=43 // pred_check
        %p447 = pneg %p128
      $region46: #{forward.42} parent=43 // pred_check_branch
        %449 = sbr.rel (%p447) target = $region48
      $region47: #{forward.42} parent=43 // pred_region
        %s450 = smul.u32 8, %s16
        %p451 = scmp.lt.s32.totalorder %s450, 15
        %s452 = scalar_select %p451, %s450, 15
        %s453 = smul.addr %s452, 4
        %s454 = scalar_lea.vmem %s4, %s453
      $region48: #{forward.42} parent=43 // pred_fallthru
        _
    $region44: #{forward.42} parent=5 // pred_fallthru
      _
  $region6: #{forward.42} parent=0 // loop_footer
    %s14 = sadd.s32 1, %s10
  $region7: #{forward.42} parent=0 // loop_footer_branch
    %9 = sbr.rel target = $region3
  $region8: #{forward.42} parent=0 // loop_exit
    _

// kernel: forward.43
$region0: #{forward.43}
  #allocation0 [shape = 'u32[]', space=smem, size = 0x4, offset = 0x4, fixed_abs, tag = 'smem constant byte address 0x4 - core index']
  #allocation1 [shape = 'u32[144,128]{1,0:T(1,128)}', space=vmem, size = 0x12000, scoped, tag = 'internal scratch']
  %s0 = inlined_call_operand.vmem [shape: bf16[128,1152], index: 0, kind: input, shape index: {}]
  %s1 = inlined_call_operand.vmem [shape: bf16[1152,128], index: 1, kind: input, shape index: {}]
  %s2 = inlined_call_operand.vmem [shape: f32[1,128], index: 2, kind: input, shape index: {}]
  %s3 = inlined_call_operand.vmem [shape: f32[1,128], index: 3, kind: input, shape index: {}]
  %s4 = inlined_call_operand.vmem [shape: bf16[128,128], index: 4, kind: input, shape index: {}]
  %s5 = inlined_call_operand.vmem [shape: f32[1,128], index: 5, kind: input, shape index: {}]
  %s6 = inlined_call_operand.vmem [shape: f32[1,128], index: 6, kind: input, shape index: {}]
  %s7 = inlined_call_operand.vmem [shape: bf16[128,128], index: 7, kind: input, shape index: {}]
  %s8 = inlined_call_operand.vmem [shape: bf16[128,128], index: 8, kind: output, shape index: {}]
  %s9 = sld [smem:[#allocation0]]
  $region65: #{forward.43} parent=0
    _
  %s11 = ssub.s32 1, %s9
  %s12 = scalar_select 0, %s11, %s9
  loop: start=0, step=1, limit=4
  $region2: #{forward.43} parent=0 // loop_pre_header
    _
  $region3: #{forward.43} parent=0 // loop_header
    %s14 = sphi 0, %s18
    %p15 = scmp.ge.s32.totalorder %s14, 4
    %s24 = sphi 0, %s26
    %s27 = sphi 0, %s24
    %s28 = sphi 0, %s27
    %s44 = sphi 0, %s28
    %s48 = sphi 0, %s48
    %s50 = sphi 0, %s48
    %s51 = sphi 0, %s50
    %s65 = sphi 0, %s51
    %s69 = sphi 0, %s69
    %s71 = sphi 0, %s69
    %s72 = sphi 0, %s71
    %s86 = sphi 0, %s72
    %s90 = sphi 0, %s90
    %s92 = sphi 0, %s90
    %s93 = sphi 0, %s92
    %s107 = sphi 0, %s93
    %s111 = sphi 0, %s111
    %s113 = sphi 0, %s111
    %s114 = sphi 0, %s113
    %s128 = sphi 0, %s114
    %s132 = sphi 0, %s132
    %s134 = sphi 0, %s132
    %s135 = sphi 0, %s134
    %s149 = sphi 0, %s135
    %s153 = sphi 0, %s153
    %s155 = sphi 0, %s153
    %s156 = sphi 0, %s155
    %s170 = sphi 0, %s156
    %s176 = sphi 0, %s178
    %s179 = sphi 0, %s176
    %s180 = sphi 0, %s179
    %s196 = sphi 0, %s180
    %s202 = sphi 0, %s204
    %s205 = sphi 0, %s202
    %s206 = sphi 0, %s205
    %s222 = sphi 0, %s206
  $region4: #{forward.43} parent=0 // loop_header_branch
    %17 = sbr.rel (%p15) target = $region8
  $region5: #{forward.43} parent=0 // loop_body
    %s19 = ssub.s32 %s14, 1
    %s20 = ssub.s32 %s14, 2
    %s21 = sadd.s32 %s14, 1
    %s22 = ssub.s32 %s14, %s21
    %p23 = scmp.eq.s32.totalorder %s22, 0
    %s25 = sadd.s32 %s24, 1
    %s26 = scalar_select %p23, %s24, %s25
    %p29 = pneg %p23
    %p30 = scmp.eq.s32.totalorder %s14, 1
    %p31 = por %p29, %p30
    %p32 = scmp.ne.s32.totalorder %s24, %s27
    %p33 = scmp.eq.s32.totalorder %s14, 0
    %p34 = por %p32, %p33
    %p35 = scmp.ne.s32.totalorder %s24, %s27
    %p36 = scmp.eq.s32.totalorder %s19, 1
    %p37 = por %p35, %p36
    %p38 = scmp.ne.s32.totalorder %s27, %s28
    %p39 = scmp.eq.s32.totalorder %s19, 0
    %p40 = por %p38, %p39
    %p41 = scmp.ne.s32.totalorder %s27, %s28
    %p42 = scmp.eq.s32.totalorder %s20, 1
    %p43 = por %p41, %p42
    %p45 = scmp.ne.s32.totalorder %s28, %s44
    %p46 = scmp.eq.s32.totalorder %s20, 0
    %p47 = por %p45, %p46
    %s49 = sadd.s32 %s48, 1
    %p52 = scmp.eq.s32.totalorder %s14, 1
    %p53 = scmp.ne.s32.totalorder %s48, %s50
    %p54 = scmp.eq.s32.totalorder %s14, 0
    %p55 = por %p53, %p54
    %p56 = scmp.ne.s32.totalorder %s48, %s50
    %p57 = scmp.eq.s32.totalorder %s19, 1
    %p58 = por %p56, %p57
    %p59 = scmp.ne.s32.totalorder %s50, %s51
    %p60 = scmp.eq.s32.totalorder %s19, 0
    %p61 = por %p59, %p60
    %p62 = scmp.ne.s32.totalorder %s50, %s51
    %p63 = scmp.eq.s32.totalorder %s20, 1
    %p64 = por %p62, %p63
    %p66 = scmp.ne.s32.totalorder %s51, %s65
    %p67 = scmp.eq.s32.totalorder %s20, 0
    %p68 = por %p66, %p67
    %s70 = sadd.s32 %s69, 1
    %p73 = scmp.eq.s32.totalorder %s14, 1
    %p74 = scmp.ne.s32.totalorder %s69, %s71
    %p75 = scmp.eq.s32.totalorder %s14, 0
    %p76 = por %p74, %p75
    %p77 = scmp.ne.s32.totalorder %s69, %s71
    %p78 = scmp.eq.s32.totalorder %s19, 1
    %p79 = por %p77, %p78
    %p80 = scmp.ne.s32.totalorder %s71, %s72
    %p81 = scmp.eq.s32.totalorder %s19, 0
    %p82 = por %p80, %p81
    %p83 = scmp.ne.s32.totalorder %s71, %s72
    %p84 = scmp.eq.s32.totalorder %s20, 1
    %p85 = por %p83, %p84
    %p87 = scmp.ne.s32.totalorder %s72, %s86
    %p88 = scmp.eq.s32.totalorder %s20, 0
    %p89 = por %p87, %p88
    %s91 = sadd.s32 %s90, 1
    %p94 = scmp.eq.s32.totalorder %s14, 1
    %p95 = scmp.ne.s32.totalorder %s90, %s92
    %p96 = scmp.eq.s32.totalorder %s14, 0
    %p97 = por %p95, %p96
    %p98 = scmp.ne.s32.totalorder %s90, %s92
    %p99 = scmp.eq.s32.totalorder %s19, 1
    %p100 = por %p98, %p99
    %p101 = scmp.ne.s32.totalorder %s92, %s93
    %p102 = scmp.eq.s32.totalorder %s19, 0
    %p103 = por %p101, %p102
    %p104 = scmp.ne.s32.totalorder %s92, %s93
    %p105 = scmp.eq.s32.totalorder %s20, 1
    %p106 = por %p104, %p105
    %p108 = scmp.ne.s32.totalorder %s93, %s107
    %p109 = scmp.eq.s32.totalorder %s20, 0
    %p110 = por %p108, %p109
    %s112 = sadd.s32 %s111, 1
    %p115 = scmp.eq.s32.totalorder %s14, 1
    %p116 = scmp.ne.s32.totalorder %s111, %s113
    %p117 = scmp.eq.s32.totalorder %s14, 0
    %p118 = por %p116, %p117
    %p119 = scmp.ne.s32.totalorder %s111, %s113
    %p120 = scmp.eq.s32.totalorder %s19, 1
    %p121 = por %p119, %p120
    %p122 = scmp.ne.s32.totalorder %s113, %s114
    %p123 = scmp.eq.s32.totalorder %s19, 0
    %p124 = por %p122, %p123
    %p125 = scmp.ne.s32.totalorder %s113, %s114
    %p126 = scmp.eq.s32.totalorder %s20, 1
    %p127 = por %p125, %p126
    %p129 = scmp.ne.s32.totalorder %s114, %s128
    %p130 = scmp.eq.s32.totalorder %s20, 0
    %p131 = por %p129, %p130
    %s133 = sadd.s32 %s132, 1
    %p136 = scmp.eq.s32.totalorder %s14, 1
    %p137 = scmp.ne.s32.totalorder %s132, %s134
    %p138 = scmp.eq.s32.totalorder %s14, 0
    %p139 = por %p137, %p138
    %p140 = scmp.ne.s32.totalorder %s132, %s134
    %p141 = scmp.eq.s32.totalorder %s19, 1
    %p142 = por %p140, %p141
    %p143 = scmp.ne.s32.totalorder %s134, %s135
    %p144 = scmp.eq.s32.totalorder %s19, 0
    %p145 = por %p143, %p144
    %p146 = scmp.ne.s32.totalorder %s134, %s135
    %p147 = scmp.eq.s32.totalorder %s20, 1
    %p148 = por %p146, %p147
    %p150 = scmp.ne.s32.totalorder %s135, %s149
    %p151 = scmp.eq.s32.totalorder %s20, 0
    %p152 = por %p150, %p151
    %s154 = sadd.s32 %s153, 1
    %p157 = scmp.eq.s32.totalorder %s14, 1
    %p158 = scmp.ne.s32.totalorder %s153, %s155
    %p159 = scmp.eq.s32.totalorder %s14, 0
    %p160 = por %p158, %p159
    %p161 = scmp.ne.s32.totalorder %s153, %s155
    %p162 = scmp.eq.s32.totalorder %s19, 1
    %p163 = por %p161, %p162
    %p164 = scmp.ne.s32.totalorder %s155, %s156
    %p165 = scmp.eq.s32.totalorder %s19, 0
    %p166 = por %p164, %p165
    %p167 = scmp.ne.s32.totalorder %s155, %s156
    %p168 = scmp.eq.s32.totalorder %s20, 1
    %p169 = por %p167, %p168
    %p171 = scmp.ne.s32.totalorder %s156, %s170
    %p172 = scmp.eq.s32.totalorder %s20, 0
    %p173 = por %p171, %p172
    %s174 = ssub.s32 %s14, %s21
    %p175 = scmp.eq.s32.totalorder %s174, 0
    %s177 = sadd.s32 %s176, 1
    %s178 = scalar_select %p175, %s176, %s177
    %p181 = pneg %p175
    %p182 = scmp.eq.s32.totalorder %s14, 1
    %p183 = por %p181, %p182
    %p184 = scmp.ne.s32.totalorder %s176, %s179
    %p185 = scmp.eq.s32.totalorder %s14, 0
    %p186 = por %p184, %p185
    %p187 = scmp.ne.s32.totalorder %s176, %s179
    %p188 = scmp.eq.s32.totalorder %s19, 1
    %p189 = por %p187, %p188
    %p190 = scmp.ne.s32.totalorder %s179, %s180
    %p191 = scmp.eq.s32.totalorder %s19, 0
    %p192 = por %p190, %p191
    %p193 = scmp.ne.s32.totalorder %s179, %s180
    %p194 = scmp.eq.s32.totalorder %s20, 1
    %p195 = por %p193, %p194
    %p197 = scmp.ne.s32.totalorder %s180, %s196
    %p198 = scmp.eq.s32.totalorder %s20, 0
    %p199 = por %p197, %p198
    %s200 = ssub.s32 %s14, %s21
    %p201 = scmp.eq.s32.totalorder %s200, 0
    %s203 = sadd.s32 %s202, 1
    %s204 = scalar_select %p201, %s202, %s203
    %p207 = pneg %p201
    %p208 = scmp.eq.s32.totalorder %s14, 1
    %p209 = por %p207, %p208
    %p210 = scmp.ne.s32.totalorder %s202, %s205
    %p211 = scmp.eq.s32.totalorder %s14, 0
    %p212 = por %p210, %p211
    %p213 = scmp.ne.s32.totalorder %s202, %s205
    %p214 = scmp.eq.s32.totalorder %s19, 1
    %p215 = por %p213, %p214
    %p216 = scmp.ne.s32.totalorder %s205, %s206
    %p217 = scmp.eq.s32.totalorder %s19, 0
    %p218 = por %p216, %p217
    %p219 = scmp.ne.s32.totalorder %s205, %s206
    %p220 = scmp.eq.s32.totalorder %s20, 1
    %p221 = por %p219, %p220
    %p223 = scmp.ne.s32.totalorder %s206, %s222
    %p224 = scmp.eq.s32.totalorder %s20, 0
    %p225 = por %p223, %p224
    %p226 = scmp.le.s32.totalorder 1, %s14
    %p227 = scmp.lt.s32.totalorder %s14, 3
    %p228 = pnand %p226, %p227
    %p229 = pneg %p228
    // Predicated region
    $region9: #{forward.43} parent=5 // pred_check
      _
    $region10: #{forward.43} parent=5 // pred_check_branch
      %231 = sbr.rel (%p228) target = $region12
    $region11: #{forward.43} parent=5 // pred_region
      %s232 = ssub.s32 %s14, 1
      // Predicated region
      $region13: #{forward.43} parent=11 // pred_check
        %p233 = pneg %p61
      $region14: #{forward.43} parent=11 // pred_check_branch
        %235 = sbr.rel (%p233) target = $region16
      $region15: #{forward.43} parent=11 // pred_region
        _
      $region16: #{forward.43} parent=11 // pred_fallthru
        _
      // Predicated region
      $region17: #{forward.43} parent=11 // pred_check
        %p236 = pneg %p82
      $region18: #{forward.43} parent=11 // pred_check_branch
        %238 = sbr.rel (%p236) target = $region20
      $region19: #{forward.43} parent=11 // pred_region
        _
      $region20: #{forward.43} parent=11 // pred_fallthru
        _
      // Predicated region
      $region21: #{forward.43} parent=11 // pred_check
        %p239 = pneg %p103
      $region22: #{forward.43} parent=11 // pred_check_branch
        %241 = sbr.rel (%p239) target = $region24
      $region23: #{forward.43} parent=11 // pred_region
        _
      $region24: #{forward.43} parent=11 // pred_fallthru
        _
      // Predicated region
      $region25: #{forward.43} parent=11 // pred_check
        %p242 = pneg %p124
      $region26: #{forward.43} parent=11 // pred_check_branch
        %244 = sbr.rel (%p242) target = $region28
      $region27: #{forward.43} parent=11 // pred_region
        _
      $region28: #{forward.43} parent=11 // pred_fallthru
        _
      // Predicated region
      $region29: #{forward.43} parent=11 // pred_check
        %p245 = pneg %p145
      $region30: #{forward.43} parent=11 // pred_check_branch
        %247 = sbr.rel (%p245) target = $region32
      $region31: #{forward.43} parent=11 // pred_region
        _
      $region32: #{forward.43} parent=11 // pred_fallthru
        _
      // Predicated region
      $region33: #{forward.43} parent=11 // pred_check
        %p248 = pneg %p166
      $region34: #{forward.43} parent=11 // pred_check_branch
        %250 = sbr.rel (%p248) target = $region36
      $region35: #{forward.43} parent=11 // pred_region
        _
      $region36: #{forward.43} parent=11 // pred_fallthru
        _
    $region12: #{forward.43} parent=5 // pred_fallthru
      _
    %p251 = scmp.lt.s32.totalorder %s14, 2
    // Predicated region
    $region37: #{forward.43} parent=5 // pred_check
      %p252 = pneg %p251
    $region38: #{forward.43} parent=5 // pred_check_branch
      %254 = sbr.rel (%p252) target = $region40
    $region39: #{forward.43} parent=5 // pred_region
      // Predicated region
      $region41: #{forward.43} parent=39 // pred_check
        %p255 = pneg %p34
      $region42: #{forward.43} parent=39 // pred_check_branch
        %257 = sbr.rel (%p255) target = $region44
      $region43: #{forward.43} parent=39 // pred_region
        %s258 = smul.u32 8, %s14
        %p259 = scmp.lt.s32.totalorder %s258, 15
        %s260 = scalar_select %p259, %s258, 15
        %s261 = smul.addr %s260, 9
        %s262 = smul.addr %s261, 4
        %s263 = scalar_lea.vmem %s0, %s262
        %s264 = smul.u32 8, %s14
      $region44: #{forward.43} parent=39 // pred_fallthru
        _
      // Predicated region
      $region45: #{forward.43} parent=39 // pred_check
        %p265 = pneg %p186
      $region46: #{forward.43} parent=39 // pred_check_branch
        %267 = sbr.rel (%p265) target = $region48
      $region47: #{forward.43} parent=39 // pred_region
        %s268 = smul.u32 8, %s14
        %p269 = scmp.lt.s32.totalorder %s268, 15
        %s270 = scalar_select %p269, %s268, 15
        %s271 = smul.addr %s270, 4
        %s272 = scalar_lea.vmem %s7, %s271
        %s273 = smul.u32 8, %s14
      $region48: #{forward.43} parent=39 // pred_fallthru
        _
    $region40: #{forward.43} parent=5 // pred_fallthru
      _
    %p274 = scmp.le.s32.totalorder 1, %s14
    %p275 = scmp.lt.s32.totalorder %s14, 3
    %p276 = pnand %p274, %p275
    %p277 = pneg %p276
    // Predicated region
    $region49: #{forward.43} parent=5 // pred_check
      _
    $region50: #{forward.43} parent=5 // pred_check_branch
      %279 = sbr.rel (%p276) target = $region52
    $region51: #{forward.43} parent=5 // pred_region
      %s280 = ssub.s32 %s14, 1
      %s281 = smul.u32 8, %s19
      %p282 = scmp.lt.s32.totalorder %s281, 15
      %s283 = scalar_select %p282, %s281, 15
      %s284 = smul.addr %s283, 9
      %s285 = smul.addr %s284, 4
      %s286 = scalar_lea.vmem %s0, %s285
      %p287 = pneg %p40
      %p288 = pneg %p37
      %p289 = pneg %p61
      %p290 = pneg %p58
      %p291 = pneg %p82
      %p292 = pneg %p79
      %p293 = pneg %p103
      %p294 = pneg %p100
      %p295 = pneg %p124
      %p296 = pneg %p121
      %p297 = pneg %p145
      %p298 = pneg %p142
      %p299 = pneg %p166
      %p300 = pneg %p163
      %s301 = smul.u32 8, %s19
      %p302 = scmp.lt.s32.totalorder %s301, 15
      %s303 = scalar_select %p302, %s301, 15
      %s304 = smul.addr %s303, 4
      %s305 = scalar_lea.vmem %s7, %s304
      %p306 = pneg %p192
      %p307 = pneg %p189
      %p308 = pneg %p218
      %p309 = pneg %p215
      %s310 = smul.u32 8, %s19
      %p311 = scmp.lt.s32.totalorder %s310, 15
      %s312 = scalar_select %p311, %s310, 15
      %s313 = smul.addr %s312, 4
      %s314 = scalar_lea.vmem %s8, %s313
      %s315 = smul.u32 8, %s19
      %p316 = scmp.lt.s32.totalorder %s315, 15
      %s317 = scalar_select %p316, %s315, 15
      %s318 = smul.addr %s317, 9
      %s319 = smul.addr %s318, 4
      %s320 = scalar_lea.vmem %s0, %s319
      %s321 = smul.u32 8, %s19
      %s322 = smul.u32 8, %s19
      %p323 = scmp.lt.s32.totalorder %s322, 15
      %s324 = scalar_select %p323, %s322, 15
      %s325 = smul.addr %s324, 4
      %s326 = scalar_lea.vmem %s7, %s325
      %s327 = smul.u32 8, %s19
      %s328 = smul.u32 8, %s19
      %p329 = scmp.lt.s32.totalorder %s328, 15
      %s330 = scalar_select %p329, %s328, 15
      %s331 = smul.addr %s330, 4
      %s332 = scalar_lea.vmem %s8, %s331
      %s333 = smul.u32 8, %s19
      %v335 = vld [vmem:[%s320] sm:$0xff]
      %v336 = vld [vmem:[%s320 + $0x8] sm:$0xff]
      %v337 = vld [vmem:[%s320 + $0x10] sm:$0xff]
      %v338 = vld [vmem:[%s320 + $0x18] sm:$0xff]
      %v339 = vld [vmem:[%s320 + $0x20] sm:$0xf]
      %v340 = vld [vmem:[%s320 + $0x24] sm:$0xff]
      %v341 = vld [vmem:[%s320 + $0x2c] sm:$0xff]
      %v342 = vld [vmem:[%s320 + $0x34] sm:$0xff]
      %v343 = vld [vmem:[%s320 + $0x3c] sm:$0xff]
      %v344 = vld [vmem:[%s320 + $0x44] sm:$0xf]
      %v345 = vld [vmem:[%s320 + $0x48] sm:$0xff]
      %v346 = vld [vmem:[%s320 + $0x50] sm:$0xff]
      %v347 = vld [vmem:[%s320 + $0x58] sm:$0xff]
      %v348 = vld [vmem:[%s320 + $0x60] sm:$0xff]
      %v349 = vld [vmem:[%s320 + $0x68] sm:$0xf]
      %v350 = vld [vmem:[%s320 + $0x6c] sm:$0xff]
      %v351 = vld [vmem:[%s320 + $0x74] sm:$0xff]
      %v352 = vld [vmem:[%s320 + $0x7c] sm:$0xff]
      %v353 = vld [vmem:[%s320 + $0x84] sm:$0xff]
      %v354 = vld [vmem:[%s320 + $0x8c] sm:$0xf]
      %v355 = vld [vmem:[%s320 + $0x90] sm:$0xff]
      %v356 = vld [vmem:[%s320 + $0x98] sm:$0xff]
      %v357 = vld [vmem:[%s320 + $0xa0] sm:$0xff]
      %v358 = vld [vmem:[%s320 + $0xa8] sm:$0xff]
      %v359 = vld [vmem:[%s320 + $0xb0] sm:$0xf]
      %v360 = vld [vmem:[%s320 + $0xb4] sm:$0xff]
      %v361 = vld [vmem:[%s320 + $0xbc] sm:$0xff]
      %v362 = vld [vmem:[%s320 + $0xc4] sm:$0xff]
      %v363 = vld [vmem:[%s320 + $0xcc] sm:$0xff]
      %v364 = vld [vmem:[%s320 + $0xd4] sm:$0xf]
      %v365 = vld [vmem:[%s320 + $0xd8] sm:$0xff]
      %v366 = vld [vmem:[%s320 + $0xe0] sm:$0xff]
      %v367 = vld [vmem:[%s320 + $0xe8] sm:$0xff]
      %v368 = vld [vmem:[%s320 + $0xf0] sm:$0xff]
      %v369 = vld [vmem:[%s320 + $0xf8] sm:$0xf]
      %v370 = vld [vmem:[%s320 + $0xfc] sm:$0xff]
      %v371 = vld [vmem:[%s320 + $0x104] sm:$0xff]
      %v372 = vld [vmem:[%s320 + $0x10c] sm:$0xff]
      %v373 = vld [vmem:[%s320 + $0x114] sm:$0xff]
      %v374 = vld [vmem:[%s320 + $0x11c] sm:$0xf]
      %v375 = vld [vmem:[%s1] sm:$0xf]
      %v376 = vld [vmem:[%s1 + $0x4] sm:$0xf]
      %v377 = vld [vmem:[%s1 + $0x8] sm:$0xf]
      %v378 = vld [vmem:[%s1 + $0xc] sm:$0xf]
      %v379 = vld [vmem:[%s1 + $0x10] sm:$0xf]
      %v380 = vld [vmem:[%s1 + $0x14] sm:$0xf]
      %v381 = vld [vmem:[%s1 + $0x18] sm:$0xf]
      %v382 = vld [vmem:[%s1 + $0x1c] sm:$0xf]
      %v383 = vld [vmem:[%s1 + $0x20] sm:$0xf]
      %v384 = vld [vmem:[%s1 + $0x24] sm:$0xf]
      %v385 = vld [vmem:[%s1 + $0x28] sm:$0xf]
      %v386 = vld [vmem:[%s1 + $0x2c] sm:$0xf]
      %v387 = vld [vmem:[%s1 + $0x30] sm:$0xf]
      %v388 = vld [vmem:[%s1 + $0x34] sm:$0xf]
      %v389 = vld [vmem:[%s1 + $0x38] sm:$0xf]
      %v390 = vld [vmem:[%s1 + $0x3c] sm:$0xf]
      %v391 = vld [vmem:[%s1 + $0x40] sm:$0xf]
      %v392 = vld [vmem:[%s1 + $0x44] sm:$0xf]
      %v393 = vld [vmem:[%s1 + $0x48] sm:$0xf]
      %v394 = vld [vmem:[%s1 + $0x4c] sm:$0xf]
      %v395 = vld [vmem:[%s1 + $0x50] sm:$0xf]
      %v396 = vld [vmem:[%s1 + $0x54] sm:$0xf]
      %v397 = vld [vmem:[%s1 + $0x58] sm:$0xf]
      %v398 = vld [vmem:[%s1 + $0x5c] sm:$0xf]
      %v399 = vld [vmem:[%s1 + $0x60] sm:$0xf]
      %v400 = vld [vmem:[%s1 + $0x64] sm:$0xf]
      %v401 = vld [vmem:[%s1 + $0x68] sm:$0xf]
      %v402 = vld [vmem:[%s1 + $0x6c] sm:$0xf]
      %v403 = vld [vmem:[%s1 + $0x70] sm:$0xf]
      %v404 = vld [vmem:[%s1 + $0x74] sm:$0xf]
      %v405 = vld [vmem:[%s1 + $0x78] sm:$0xf]
      %v406 = vld [vmem:[%s1 + $0x7c] sm:$0xf]
      %v407 = vld [vmem:[%s1 + $0x80] sm:$0xf]
      %v408 = vld [vmem:[%s1 + $0x84] sm:$0xf]
      %v409 = vld [vmem:[%s1 + $0x88] sm:$0xf]
      %v410 = vld [vmem:[%s1 + $0x8c] sm:$0xf]
      %v411 = vld [vmem:[%s1 + $0x90] sm:$0xf]
      %v412 = vld [vmem:[%s1 + $0x94] sm:$0xf]
      %v413 = vld [vmem:[%s1 + $0x98] sm:$0xf]
      %v414 = vld [vmem:[%s1 + $0x9c] sm:$0xf]
      %v415 = vld [vmem:[%s1 + $0xa0] sm:$0xf]
      %v416 = vld [vmem:[%s1 + $0xa4] sm:$0xf]
      %v417 = vld [vmem:[%s1 + $0xa8] sm:$0xf]
      %v418 = vld [vmem:[%s1 + $0xac] sm:$0xf]
      %v419 = vld [vmem:[%s1 + $0xb0] sm:$0xf]
      %v420 = vld [vmem:[%s1 + $0xb4] sm:$0xf]
      %v421 = vld [vmem:[%s1 + $0xb8] sm:$0xf]
      %v422 = vld [vmem:[%s1 + $0xbc] sm:$0xf]
      %v423 = vld [vmem:[%s1 + $0xc0] sm:$0xf]
      %v424 = vld [vmem:[%s1 + $0xc4] sm:$0xf]
      %v425 = vld [vmem:[%s1 + $0xc8] sm:$0xf]
      %v426 = vld [vmem:[%s1 + $0xcc] sm:$0xf]
      %v427 = vld [vmem:[%s1 + $0xd0] sm:$0xf]
      %v428 = vld [vmem:[%s1 + $0xd4] sm:$0xf]
      %v429 = vld [vmem:[%s1 + $0xd8] sm:$0xf]
      %v430 = vld [vmem:[%s1 + $0xdc] sm:$0xf]
      %v431 = vld [vmem:[%s1 + $0xe0] sm:$0xf]
      %v432 = vld [vmem:[%s1 + $0xe4] sm:$0xf]
      %v433 = vld [vmem:[%s1 + $0xe8] sm:$0xf]
      %v434 = vld [vmem:[%s1 + $0xec] sm:$0xf]
      %v435 = vld [vmem:[%s1 + $0xf0] sm:$0xf]
      %v436 = vld [vmem:[%s1 + $0xf4] sm:$0xf]
      %v437 = vld [vmem:[%s1 + $0xf8] sm:$0xf]
      %v438 = vld [vmem:[%s1 + $0xfc] sm:$0xf]
      %v439 = vld [vmem:[%s1 + $0x100] sm:$0xf]
      %v440 = vld [vmem:[%s1 + $0x104] sm:$0xf]
      %v441 = vld [vmem:[%s1 + $0x108] sm:$0xf]
      %v442 = vld [vmem:[%s1 + $0x10c] sm:$0xf]
      %v443 = vld [vmem:[%s1 + $0x110] sm:$0xf]
      %v444 = vld [vmem:[%s1 + $0x114] sm:$0xf]
      %v445 = vld [vmem:[%s1 + $0x118] sm:$0xf]
      %v446 = vld [vmem:[%s1 + $0x11c] sm:$0xf]
      %v447 = vld [vmem:[%s1 + $0x120] sm:$0xf]
      %v448 = vld [vmem:[%s1 + $0x124] sm:$0xf]
      %v449 = vld [vmem:[%s1 + $0x128] sm:$0xf]
      %v450 = vld [vmem:[%s1 + $0x12c] sm:$0xf]
      %v451 = vld [vmem:[%s1 + $0x130] sm:$0xf]
      %v452 = vld [vmem:[%s1 + $0x134] sm:$0xf]
      %v453 = vld [vmem:[%s1 + $0x138] sm:$0xf]
      %v454 = vld [vmem:[%s1 + $0x13c] sm:$0xf]
      %v455 = vld [vmem:[%s1 + $0x140] sm:$0xf]
      %v456 = vld [vmem:[%s1 + $0x144] sm:$0xf]
      %v457 = vld [vmem:[%s1 + $0x148] sm:$0xf]
      %v458 = vld [vmem:[%s1 + $0x14c] sm:$0xf]
      %v459 = vld [vmem:[%s1 + $0x150] sm:$0xf]
      %v460 = vld [vmem:[%s1 + $0x154] sm:$0xf]
      %v461 = vld [vmem:[%s1 + $0x158] sm:$0xf]
      %v462 = vld [vmem:[%s1 + $0x15c] sm:$0xf]
      %v463 = vld [vmem:[%s1 + $0x160] sm:$0xf]
      %v464 = vld [vmem:[%s1 + $0x164] sm:$0xf]
      %v465 = vld [vmem:[%s1 + $0x168] sm:$0xf]
      %v466 = vld [vmem:[%s1 + $0x16c] sm:$0xf]
      %v467 = vld [vmem:[%s1 + $0x170] sm:$0xf]
      %v468 = vld [vmem:[%s1 + $0x174] sm:$0xf]
      %v469 = vld [vmem:[%s1 + $0x178] sm:$0xf]
      %v470 = vld [vmem:[%s1 + $0x17c] sm:$0xf]
      %v471 = vld [vmem:[%s1 + $0x180] sm:$0xf]
      %v472 = vld [vmem:[%s1 + $0x184] sm:$0xf]
      %v473 = vld [vmem:[%s1 + $0x188] sm:$0xf]
      %v474 = vld [vmem:[%s1 + $0x18c] sm:$0xf]
      %v475 = vld [vmem:[%s1 + $0x190] sm:$0xf]
      %v476 = vld [vmem:[%s1 + $0x194] sm:$0xf]
      %v477 = vld [vmem:[%s1 + $0x198] sm:$0xf]
      %v478 = vld [vmem:[%s1 + $0x19c] sm:$0xf]
      %v479 = vld [vmem:[%s1 + $0x1a0] sm:$0xf]
      %v480 = vld [vmem:[%s1 + $0x1a4] sm:$0xf]
      %v481 = vld [vmem:[%s1 + $0x1a8] sm:$0xf]
      %v482 = vld [vmem:[%s1 + $0x1ac] sm:$0xf]
      %v483 = vld [vmem:[%s1 + $0x1b0] sm:$0xf]
      %v484 = vld [vmem:[%s1 + $0x1b4] sm:$0xf]
      %v485 = vld [vmem:[%s1 + $0x1b8] sm:$0xf]
      %v486 = vld [vmem:[%s1 + $0x1bc] sm:$0xf]
      %v487 = vld [vmem:[%s1 + $0x1c0] sm:$0xf]
      %v488 = vld [vmem:[%s1 + $0x1c4] sm:$0xf]
      %v489 = vld [vmem:[%s1 + $0x1c8] sm:$0xf]
      %v490 = vld [vmem:[%s1 + $0x1cc] sm:$0xf]
      %v491 = vld [vmem:[%s1 + $0x1d0] sm:$0xf]
      %v492 = vld [vmem:[%s1 + $0x1d4] sm:$0xf]
      %v493 = vld [vmem:[%s1 + $0x1d8] sm:$0xf]
      %v494 = vld [vmem:[%s1 + $0x1dc] sm:$0xf]
      %v495 = vld [vmem:[%s1 + $0x1e0] sm:$0xf]
      %v496 = vld [vmem:[%s1 + $0x1e4] sm:$0xf]
      %v497 = vld [vmem:[%s1 + $0x1e8] sm:$0xf]
      %v498 = vld [vmem:[%s1 + $0x1ec] sm:$0xf]
      %v499 = vld [vmem:[%s1 + $0x1f0] sm:$0xf]
      %v500 = vld [vmem:[%s1 + $0x1f4] sm:$0xf]
      %v501 = vld [vmem:[%s1 + $0x1f8] sm:$0xf]
      %v502 = vld [vmem:[%s1 + $0x1fc] sm:$0xf]
      %v503 = vld [vmem:[%s1 + $0x200] sm:$0xf]
      %v504 = vld [vmem:[%s1 + $0x204] sm:$0xf]
      %v505 = vld [vmem:[%s1 + $0x208] sm:$0xf]
      %v506 = vld [vmem:[%s1 + $0x20c] sm:$0xf]
      %v507 = vld [vmem:[%s1 + $0x210] sm:$0xf]
      %v508 = vld [vmem:[%s1 + $0x214] sm:$0xf]
      %v509 = vld [vmem:[%s1 + $0x218] sm:$0xf]
      %v510 = vld [vmem:[%s1 + $0x21c] sm:$0xf]
      %v511 = vld [vmem:[%s1 + $0x220] sm:$0xf]
      %v512 = vld [vmem:[%s1 + $0x224] sm:$0xf]
      %v513 = vld [vmem:[%s1 + $0x228] sm:$0xf]
      %v514 = vld [vmem:[%s1 + $0x22c] sm:$0xf]
      %v515 = vld [vmem:[%s1 + $0x230] sm:$0xf]
      %v516 = vld [vmem:[%s1 + $0x234] sm:$0xf]
      %v517 = vld [vmem:[%s1 + $0x238] sm:$0xf]
      %v518 = vld [vmem:[%s1 + $0x23c] sm:$0xf]
      %v559 = vunpack.c.l.b16 %v335
      %v560 = vunpack.c.h.b16 %v335
      %v561 = vunpack.c.l.b16 %v336
      %v562 = vunpack.c.h.b16 %v336
      %v563 = vunpack.c.l.b16 %v337
      %v564 = vunpack.c.h.b16 %v337
      %v565 = vunpack.c.l.b16 %v338
      %v566 = vunpack.c.h.b16 %v338
      %v567 = vunpack.c.l.b16 %v339
      %v568 = vunpack.c.l.b16 %v340
      %v569 = vunpack.c.h.b16 %v340
      %v570 = vunpack.c.l.b16 %v341
      %v571 = vunpack.c.h.b16 %v341
      %v572 = vunpack.c.l.b16 %v342
      %v573 = vunpack.c.h.b16 %v342
      %v574 = vunpack.c.l.b16 %v343
      %v575 = vunpack.c.h.b16 %v343
      %v576 = vunpack.c.l.b16 %v344
      %v577 = vunpack.c.l.b16 %v345
      %v578 = vunpack.c.h.b16 %v345
      %v579 = vunpack.c.l.b16 %v346
      %v580 = vunpack.c.h.b16 %v346
      %v581 = vunpack.c.l.b16 %v347
      %v582 = vunpack.c.h.b16 %v347
      %v583 = vunpack.c.l.b16 %v348
      %v584 = vunpack.c.h.b16 %v348
      %v585 = vunpack.c.l.b16 %v349
      %v586 = vunpack.c.l.b16 %v350
      %v587 = vunpack.c.h.b16 %v350
      %v588 = vunpack.c.l.b16 %v351
      %v589 = vunpack.c.h.b16 %v351
      %v590 = vunpack.c.l.b16 %v352
      %v591 = vunpack.c.h.b16 %v352
      %v592 = vunpack.c.l.b16 %v353
      %v593 = vunpack.c.h.b16 %v353
      %v594 = vunpack.c.l.b16 %v354
      %v595 = vunpack.c.l.b16 %v355
      %v596 = vunpack.c.h.b16 %v355
      %v597 = vunpack.c.l.b16 %v356
      %v598 = vunpack.c.h.b16 %v356
      %v599 = vunpack.c.l.b16 %v357
      %v600 = vunpack.c.h.b16 %v357
      %v601 = vunpack.c.l.b16 %v358
      %v602 = vunpack.c.h.b16 %v358
      %v603 = vunpack.c.l.b16 %v359
      %v604 = vunpack.c.l.b16 %v360
      %v605 = vunpack.c.h.b16 %v360
      %v606 = vunpack.c.l.b16 %v361
      %v607 = vunpack.c.h.b16 %v361
      %v608 = vunpack.c.l.b16 %v362
      %v609 = vunpack.c.h.b16 %v362
      %v610 = vunpack.c.l.b16 %v363
      %v611 = vunpack.c.h.b16 %v363
      %v612 = vunpack.c.l.b16 %v364
      %v613 = vunpack.c.l.b16 %v365
      %v614 = vunpack.c.h.b16 %v365
      %v615 = vunpack.c.l.b16 %v366
      %v616 = vunpack.c.h.b16 %v366
      %v617 = vunpack.c.l.b16 %v367
      %v618 = vunpack.c.h.b16 %v367
      %v619 = vunpack.c.l.b16 %v368
      %v620 = vunpack.c.h.b16 %v368
      %v621 = vunpack.c.l.b16 %v369
      %v622 = vunpack.c.l.b16 %v370
      %v623 = vunpack.c.h.b16 %v370
      %v624 = vunpack.c.l.b16 %v371
      %v625 = vunpack.c.h.b16 %v371
      %v626 = vunpack.c.l.b16 %v372
      %v627 = vunpack.c.h.b16 %v372
      %v628 = vunpack.c.l.b16 %v373
      %v629 = vunpack.c.h.b16 %v373
      %v630 = vunpack.c.l.b16 %v374
      %v631 = vpack.c.b16 %v568, %v559
      %v632 = vpack.c.b16 %v569, %v560
      %v633 = vpack.c.b16 %v570, %v561
      %v634 = vpack.c.b16 %v571, %v562
      %v635 = vpack.c.b16 %v572, %v563
      %v636 = vpack.c.b16 %v573, %v564
      %v637 = vpack.c.b16 %v574, %v565
      %v638 = vpack.c.b16 %v575, %v566
      %v639 = vpack.c.b16 %v576, %v567
      %v640 = vpack.c.b16 %v586, %v577
      %v641 = vpack.c.b16 %v587, %v578
      %v642 = vpack.c.b16 %v588, %v579
      %v643 = vpack.c.b16 %v589, %v580
      %v644 = vpack.c.b16 %v590, %v581
      %v645 = vpack.c.b16 %v591, %v582
      %v646 = vpack.c.b16 %v592, %v583
      %v647 = vpack.c.b16 %v593, %v584
      %v648 = vpack.c.b16 %v594, %v585
      %v649 = vpack.c.b16 %v604, %v595
      %v650 = vpack.c.b16 %v605, %v596
      %v651 = vpack.c.b16 %v606, %v597
      %v652 = vpack.c.b16 %v607, %v598
      %v653 = vpack.c.b16 %v608, %v599
      %v654 = vpack.c.b16 %v609, %v600
      %v655 = vpack.c.b16 %v610, %v601
      %v656 = vpack.c.b16 %v611, %v602
      %v657 = vpack.c.b16 %v612, %v603
      %v658 = vpack.c.b16 %v622, %v613
      %v659 = vpack.c.b16 %v623, %v614
      %v660 = vpack.c.b16 %v624, %v615
      %v661 = vpack.c.b16 %v625, %v616
      %v662 = vpack.c.b16 %v626, %v617
      %v663 = vpack.c.b16 %v627, %v618
      %v664 = vpack.c.b16 %v628, %v619
      %v665 = vpack.c.b16 %v629, %v620
      %v666 = vpack.c.b16 %v630, %v621
      %v847 = vunpack.c.l.b16 %v375
      %v848 = vunpack.c.l.b16 %v376
      %v849 = vunpack.c.l.b16 %v377
      %v850 = vunpack.c.l.b16 %v378
      %v851 = vunpack.c.l.b16 %v379
      %v852 = vunpack.c.l.b16 %v380
      %v853 = vunpack.c.l.b16 %v381
      %v854 = vunpack.c.l.b16 %v382
      %v855 = vunpack.c.l.b16 %v383
      %v856 = vunpack.c.l.b16 %v384
      %v857 = vunpack.c.l.b16 %v385
      %v858 = vunpack.c.l.b16 %v386
      %v859 = vunpack.c.l.b16 %v387
      %v860 = vunpack.c.l.b16 %v388
      %v861 = vunpack.c.l.b16 %v389
      %v862 = vunpack.c.l.b16 %v390
      %v863 = vunpack.c.l.b16 %v391
      %v864 = vunpack.c.l.b16 %v392
      %v865 = vunpack.c.l.b16 %v393
      %v866 = vunpack.c.l.b16 %v394
      %v867 = vunpack.c.l.b16 %v395
      %v868 = vunpack.c.l.b16 %v396
      %v869 = vunpack.c.l.b16 %v397
      %v870 = vunpack.c.l.b16 %v398
      %v871 = vunpack.c.l.b16 %v399
      %v872 = vunpack.c.l.b16 %v400
      %v873 = vunpack.c.l.b16 %v401
      %v874 = vunpack.c.l.b16 %v402
      %v875 = vunpack.c.l.b16 %v403
      %v876 = vunpack.c.l.b16 %v404
      %v877 = vunpack.c.l.b16 %v405
      %v878 = vunpack.c.l.b16 %v406
      %v879 = vunpack.c.l.b16 %v407
      %v880 = vunpack.c.l.b16 %v408
      %v881 = vunpack.c.l.b16 %v409
      %v882 = vunpack.c.l.b16 %v410
      %v883 = vunpack.c.l.b16 %v411
      %v884 = vunpack.c.l.b16 %v412
      %v885 = vunpack.c.l.b16 %v413
      %v886 = vunpack.c.l.b16 %v414
      %v887 = vunpack.c.l.b16 %v415
      %v888 = vunpack.c.l.b16 %v416
      %v889 = vunpack.c.l.b16 %v417
      %v890 = vunpack.c.l.b16 %v418
      %v891 = vunpack.c.l.b16 %v419
      %v892 = vunpack.c.l.b16 %v420
      %v893 = vunpack.c.l.b16 %v421
      %v894 = vunpack.c.l.b16 %v422
      %v895 = vunpack.c.l.b16 %v423
      %v896 = vunpack.c.l.b16 %v424
      %v897 = vunpack.c.l.b16 %v425
      %v898 = vunpack.c.l.b16 %v426
      %v899 = vunpack.c.l.b16 %v427
      %v900 = vunpack.c.l.b16 %v428
      %v901 = vunpack.c.l.b16 %v429
      %v902 = vunpack.c.l.b16 %v430
      %v903 = vunpack.c.l.b16 %v431
      %v904 = vunpack.c.l.b16 %v432
      %v905 = vunpack.c.l.b16 %v433
      %v906 = vunpack.c.l.b16 %v434
      %v907 = vunpack.c.l.b16 %v435
      %v908 = vunpack.c.l.b16 %v436
      %v909 = vunpack.c.l.b16 %v437
      %v910 = vunpack.c.l.b16 %v438
      %v911 = vunpack.c.l.b16 %v439
      %v912 = vunpack.c.l.b16 %v440
      %v913 = vunpack.c.l.b16 %v441
      %v914 = vunpack.c.l.b16 %v442
      %v915 = vunpack.c.l.b16 %v443
      %v916 = vunpack.c.l.b16 %v444
      %v917 = vunpack.c.l.b16 %v445
      %v918 = vunpack.c.l.b16 %v446
      %v919 = vunpack.c.l.b16 %v447
      %v920 = vunpack.c.l.b16 %v448
      %v921 = vunpack.c.l.b16 %v449
      %v922 = vunpack.c.l.b16 %v450
      %v923 = vunpack.c.l.b16 %v451
      %v924 = vunpack.c.l.b16 %v452
      %v925 = vunpack.c.l.b16 %v453
      %v926 = vunpack.c.l.b16 %v454
      %v927 = vunpack.c.l.b16 %v455
      %v928 = vunpack.c.l.b16 %v456
      %v929 = vunpack.c.l.b16 %v457
      %v930 = vunpack.c.l.b16 %v458
      %v931 = vunpack.c.l.b16 %v459
      %v932 = vunpack.c.l.b16 %v460
      %v933 = vunpack.c.l.b16 %v461
      %v934 = vunpack.c.l.b16 %v462
      %v935 = vunpack.c.l.b16 %v463
      %v936 = vunpack.c.l.b16 %v464
      %v937 = vunpack.c.l.b16 %v465
      %v938 = vunpack.c.l.b16 %v466
      %v939 = vunpack.c.l.b16 %v467
      %v940 = vunpack.c.l.b16 %v468
      %v941 = vunpack.c.l.b16 %v469
      %v942 = vunpack.c.l.b16 %v470
      %v943 = vunpack.c.l.b16 %v471
      %v944 = vunpack.c.l.b16 %v472
      %v945 = vunpack.c.l.b16 %v473
      %v946 = vunpack.c.l.b16 %v474
      %v947 = vunpack.c.l.b16 %v475
      %v948 = vunpack.c.l.b16 %v476
      %v949 = vunpack.c.l.b16 %v477
      %v950 = vunpack.c.l.b16 %v478
      %v951 = vunpack.c.l.b16 %v479
      %v952 = vunpack.c.l.b16 %v480
      %v953 = vunpack.c.l.b16 %v481
      %v954 = vunpack.c.l.b16 %v482
      %v955 = vunpack.c.l.b16 %v483
      %v956 = vunpack.c.l.b16 %v484
      %v957 = vunpack.c.l.b16 %v485
      %v958 = vunpack.c.l.b16 %v486
      %v959 = vunpack.c.l.b16 %v487
      %v960 = vunpack.c.l.b16 %v488
      %v961 = vunpack.c.l.b16 %v489
      %v962 = vunpack.c.l.b16 %v490
      %v963 = vunpack.c.l.b16 %v491
      %v964 = vunpack.c.l.b16 %v492
      %v965 = vunpack.c.l.b16 %v493
      %v966 = vunpack.c.l.b16 %v494
      %v967 = vunpack.c.l.b16 %v495
      %v968 = vunpack.c.l.b16 %v496
      %v969 = vunpack.c.l.b16 %v497
      %v970 = vunpack.c.l.b16 %v498
      %v971 = vunpack.c.l.b16 %v499
      %v972 = vunpack.c.l.b16 %v500
      %v973 = vunpack.c.l.b16 %v501
      %v974 = vunpack.c.l.b16 %v502
      %v975 = vunpack.c.l.b16 %v503
      %v976 = vunpack.c.l.b16 %v504
      %v977 = vunpack.c.l.b16 %v505
      %v978 = vunpack.c.l.b16 %v506
      %v979 = vunpack.c.l.b16 %v507
      %v980 = vunpack.c.l.b16 %v508
      %v981 = vunpack.c.l.b16 %v509
      %v982 = vunpack.c.l.b16 %v510
      %v983 = vunpack.c.l.b16 %v511
      %v984 = vunpack.c.l.b16 %v512
      %v985 = vunpack.c.l.b16 %v513
      %v986 = vunpack.c.l.b16 %v514
      %v987 = vunpack.c.l.b16 %v515
      %v988 = vunpack.c.l.b16 %v516
      %v989 = vunpack.c.l.b16 %v517
      %v990 = vunpack.c.l.b16 %v518
      %v991 = vpack.c.b16 %v848, %v847
      %v992 = vpack.c.b16 %v850, %v849
      %v993 = vpack.c.b16 %v852, %v851
      %v994 = vpack.c.b16 %v854, %v853
      %v995 = vpack.c.b16 %v856, %v855
      %v996 = vpack.c.b16 %v858, %v857
      %v997 = vpack.c.b16 %v860, %v859
      %v998 = vpack.c.b16 %v862, %v861
      %v999 = vpack.c.b16 %v864, %v863
      %v1000 = vpack.c.b16 %v866, %v865
      %v1001 = vpack.c.b16 %v868, %v867
      %v1002 = vpack.c.b16 %v870, %v869
      %v1003 = vpack.c.b16 %v872, %v871
      %v1004 = vpack.c.b16 %v874, %v873
      %v1005 = vpack.c.b16 %v876, %v875
      %v1006 = vpack.c.b16 %v878, %v877
      %v1007 = vpack.c.b16 %v880, %v879
      %v1008 = vpack.c.b16 %v882, %v881
      %v1009 = vpack.c.b16 %v884, %v883
      %v1010 = vpack.c.b16 %v886, %v885
      %v1011 = vpack.c.b16 %v888, %v887
      %v1012 = vpack.c.b16 %v890, %v889
      %v1013 = vpack.c.b16 %v892, %v891
      %v1014 = vpack.c.b16 %v894, %v893
      %v1015 = vpack.c.b16 %v896, %v895
      %v1016 = vpack.c.b16 %v898, %v897
      %v1017 = vpack.c.b16 %v900, %v899
      %v1018 = vpack.c.b16 %v902, %v901
      %v1019 = vpack.c.b16 %v904, %v903
      %v1020 = vpack.c.b16 %v906, %v905
      %v1021 = vpack.c.b16 %v908, %v907
      %v1022 = vpack.c.b16 %v910, %v909
      %v1023 = vpack.c.b16 %v912, %v911
      %v1024 = vpack.c.b16 %v914, %v913
      %v1025 = vpack.c.b16 %v916, %v915
      %v1026 = vpack.c.b16 %v918, %v917
      %v1027 = vpack.c.b16 %v920, %v919
      %v1028 = vpack.c.b16 %v922, %v921
      %v1029 = vpack.c.b16 %v924, %v923
      %v1030 = vpack.c.b16 %v926, %v925
      %v1031 = vpack.c.b16 %v928, %v927
      %v1032 = vpack.c.b16 %v930, %v929
      %v1033 = vpack.c.b16 %v932, %v931
      %v1034 = vpack.c.b16 %v934, %v933
      %v1035 = vpack.c.b16 %v936, %v935
      %v1036 = vpack.c.b16 %v938, %v937
      %v1037 = vpack.c.b16 %v940, %v939
      %v1038 = vpack.c.b16 %v942, %v941
      %v1039 = vpack.c.b16 %v944, %v943
      %v1040 = vpack.c.b16 %v946, %v945
      %v1041 = vpack.c.b16 %v948, %v947
      %v1042 = vpack.c.b16 %v950, %v949
      %v1043 = vpack.c.b16 %v952, %v951
      %v1044 = vpack.c.b16 %v954, %v953
      %v1045 = vpack.c.b16 %v956, %v955
      %v1046 = vpack.c.b16 %v958, %v957
      %v1047 = vpack.c.b16 %v960, %v959
      %v1048 = vpack.c.b16 %v962, %v961
      %v1049 = vpack.c.b16 %v964, %v963
      %v1050 = vpack.c.b16 %v966, %v965
      %v1051 = vpack.c.b16 %v968, %v967
      %v1052 = vpack.c.b16 %v970, %v969
      %v1053 = vpack.c.b16 %v972, %v971
      %v1054 = vpack.c.b16 %v974, %v973
      %v1055 = vpack.c.b16 %v976, %v975
      %v1056 = vpack.c.b16 %v978, %v977
      %v1057 = vpack.c.b16 %v980, %v979
      %v1058 = vpack.c.b16 %v982, %v981
      %v1059 = vpack.c.b16 %v984, %v983
      %v1060 = vpack.c.b16 %v986, %v985
      %v1061 = vpack.c.b16 %v988, %v987
      %v1062 = vpack.c.b16 %v990, %v989
      %1135 = vmatprep.subr.bf16.mxu0 0
      %1136 = vmatpush1.bf16.msra.mxu0 %v998
      %1137 = vmatprep.subr.bf16.mxu0 0
      %1138 = vmatpush1.bf16.msra.mxu0 %v997
      %1139 = vmatprep.subr.bf16.mxu0 0
      %1140 = vmatpush1.bf16.msra.mxu0 %v996
      %1141 = vmatprep.subr.bf16.mxu0 0
      %1142 = vmatpush1.bf16.msra.mxu0 %v995
      %1143 = vmatprep.subr.bf16.mxu0 0
      %1144 = vmatpush1.bf16.msra.mxu0 %v994
      %1145 = vmatprep.subr.bf16.mxu0 0
      %1146 = vmatpush1.bf16.msra.mxu0 %v993
      %1147 = vmatprep.subr.bf16.mxu0 0
      %1148 = vmatpush1.bf16.msra.mxu0 %v992
      %1149 = vmatprep.subr.bf16.mxu0 0
      %1150 = vmatpush1.bf16.msra.mxu0 %v991
      %1151 = vmatprep.subr.bf16.mxu0 0
      %1152 = vmatpush2.bf16.msra.mxu0 %v1006
      %1153 = vmatprep.subr.bf16.mxu0 0
      %1154 = vmatpush2.bf16.msra.mxu0 %v1005
      %1155 = vmatprep.subr.bf16.mxu0 0
      %1156 = vmatpush2.bf16.msra.mxu0 %v1004
      %1157 = vmatprep.subr.bf16.mxu0 0
      %1158 = vmatpush2.bf16.msra.mxu0 %v1003
      %1159 = vmatprep.subr.bf16.mxu0 0
      %1160 = vmatpush2.bf16.msra.mxu0 %v1002
      %1161 = vmatprep.subr.bf16.mxu0 0
      %1162 = vmatpush2.bf16.msra.mxu0 %v1001
      %1163 = vmatprep.subr.bf16.mxu0 0
      %1164 = vmatpush2.bf16.msra.mxu0 %v1000
      %1165 = vmatprep.subr.bf16.mxu0 0
      %1166 = vmatpush2.bf16.msra.mxu0 %v999
      %1167 = vmatprep.mubr.bf16.mxu0 %v632
      %1168 = vmatmul.mubr.bf16.gmra.mxu0 %v631
      %v1169 = vpop.f32.mrf.mxu0
      %v1170 = vadd.f32 0.0, %v1169
      %v1171 = vpop.f32.mrf.mxu0
      %v1172 = vpop.f32.mrf.mxu0
      %v1173 = vadd.f32 0.0, %v1172
      %v1174 = vpop.f32.mrf.mxu0
      %1175 = vmatprep.mubr.bf16.mxu0 %v641
      %1176 = vmatmul.mubr.bf16.gmra.mxu0 %v640
      %v1177 = vpop.f32.mrf.mxu0
      %v1178 = vadd.f32 0.0, %v1177
      %v1179 = vpop.f32.mrf.mxu0
      %v1180 = vpop.f32.mrf.mxu0
      %v1181 = vadd.f32 0.0, %v1180
      %v1182 = vpop.f32.mrf.mxu0
      %1183 = vmatprep.mubr.bf16.mxu0 %v650
      %1184 = vmatmul.mubr.bf16.gmra.mxu0 %v649
      %v1185 = vpop.f32.mrf.mxu0
      %v1186 = vadd.f32 0.0, %v1185
      %v1187 = vpop.f32.mrf.mxu0
      %v1188 = vpop.f32.mrf.mxu0
      %v1189 = vadd.f32 0.0, %v1188
      %v1190 = vpop.f32.mrf.mxu0
      %1191 = vmatprep.mubr.bf16.mxu0 %v659
      %1192 = vmatmul.mubr.bf16.gmra.mxu0 %v658
      %v1193 = vpop.f32.mrf.mxu0
      %v1194 = vadd.f32 0.0, %v1193
      %v1195 = vpop.f32.mrf.mxu0
      %v1196 = vpop.f32.mrf.mxu0
      %v1197 = vadd.f32 0.0, %v1196
      %v1198 = vpop.f32.mrf.mxu0
      %1199 = vdwg.mxu0
      %1200 = vmatprep.subr.bf16.mxu0 0
      %1201 = vmatpush1.bf16.msra.mxu0 %v1014
      %1202 = vmatprep.subr.bf16.mxu0 0
      %1203 = vmatpush1.bf16.msra.mxu0 %v1013
      %1204 = vmatprep.subr.bf16.mxu0 0
      %1205 = vmatpush1.bf16.msra.mxu0 %v1012
      %1206 = vmatprep.subr.bf16.mxu0 0
      %1207 = vmatpush1.bf16.msra.mxu0 %v1011
      %1208 = vmatprep.subr.bf16.mxu0 0
      %1209 = vmatpush1.bf16.msra.mxu0 %v1010
      %1210 = vmatprep.subr.bf16.mxu0 0
      %1211 = vmatpush1.bf16.msra.mxu0 %v1009
      %1212 = vmatprep.subr.bf16.mxu0 0
      %1213 = vmatpush1.bf16.msra.mxu0 %v1008
      %1214 = vmatprep.subr.bf16.mxu0 0
      %1215 = vmatpush1.bf16.msra.mxu0 %v1007
      %1216 = vmatprep.subr.bf16.mxu0 0
      %1217 = vmatpush2.bf16.msra.mxu0 %v1022
      %1218 = vmatprep.subr.bf16.mxu0 0
      %1219 = vmatpush2.bf16.msra.mxu0 %v1021
      %1220 = vmatprep.subr.bf16.mxu0 0
      %1221 = vmatpush2.bf16.msra.mxu0 %v1020
      %1222 = vmatprep.subr.bf16.mxu0 0
      %1223 = vmatpush2.bf16.msra.mxu0 %v1019
      %1224 = vmatprep.subr.bf16.mxu0 0
      %1225 = vmatpush2.bf16.msra.mxu0 %v1018
      %1226 = vmatprep.subr.bf16.mxu0 0
      %1227 = vmatpush2.bf16.msra.mxu0 %v1017
      %1228 = vmatprep.subr.bf16.mxu0 0
      %1229 = vmatpush2.bf16.msra.mxu0 %v1016
      %1230 = vmatprep.subr.bf16.mxu0 0
      %1231 = vmatpush2.bf16.msra.mxu0 %v1015
      %1232 = vmatprep.mubr.bf16.mxu0 %v634
      %1233 = vmatmul.mubr.bf16.gmra.mxu0 %v633
      %v1234 = vpop.f32.mrf.mxu0
      %v1235 = vadd.f32 %v1170, %v1234
      %v1236 = vpop.f32.mrf.mxu0
      %v1237 = vpop.f32.mrf.mxu0
      %v1238 = vadd.f32 %v1173, %v1237
      %v1239 = vpop.f32.mrf.mxu0
      %1240 = vmatprep.mubr.bf16.mxu0 %v643
      %1241 = vmatmul.mubr.bf16.gmra.mxu0 %v642
      %v1242 = vpop.f32.mrf.mxu0
      %v1243 = vadd.f32 %v1178, %v1242
      %v1244 = vpop.f32.mrf.mxu0
      %v1245 = vpop.f32.mrf.mxu0
      %v1246 = vadd.f32 %v1181, %v1245
      %v1247 = vpop.f32.mrf.mxu0
      %1248 = vmatprep.mubr.bf16.mxu0 %v652
      %1249 = vmatmul.mubr.bf16.gmra.mxu0 %v651
      %v1250 = vpop.f32.mrf.mxu0
      %v1251 = vadd.f32 %v1186, %v1250
      %v1252 = vpop.f32.mrf.mxu0
      %v1253 = vpop.f32.mrf.mxu0
      %v1254 = vadd.f32 %v1189, %v1253
      %v1255 = vpop.f32.mrf.mxu0
      %1256 = vmatprep.mubr.bf16.mxu0 %v661
      %1257 = vmatmul.mubr.bf16.gmra.mxu0 %v660
      %v1258 = vpop.f32.mrf.mxu0
      %v1259 = vadd.f32 %v1194, %v1258
      %v1260 = vpop.f32.mrf.mxu0
      %v1261 = vpop.f32.mrf.mxu0
      %v1262 = vadd.f32 %v1197, %v1261
      %v1263 = vpop.f32.mrf.mxu0
      %1264 = vdwg.mxu0
      %1265 = vmatprep.subr.bf16.mxu0 0
      %1266 = vmatpush1.bf16.msra.mxu0 %v1030
      %1267 = vmatprep.subr.bf16.mxu0 0
      %1268 = vmatpush1.bf16.msra.mxu0 %v1029
      %1269 = vmatprep.subr.bf16.mxu0 0
      %1270 = vmatpush1.bf16.msra.mxu0 %v1028
      %1271 = vmatprep.subr.bf16.mxu0 0
      %1272 = vmatpush1.bf16.msra.mxu0 %v1027
      %1273 = vmatprep.subr.bf16.mxu0 0
      %1274 = vmatpush1.bf16.msra.mxu0 %v1026
      %1275 = vmatprep.subr.bf16.mxu0 0
      %1276 = vmatpush1.bf16.msra.mxu0 %v1025
      %1277 = vmatprep.subr.bf16.mxu0 0
      %1278 = vmatpush1.bf16.msra.mxu0 %v1024
      %1279 = vmatprep.subr.bf16.mxu0 0
      %1280 = vmatpush1.bf16.msra.mxu0 %v1023
      %1281 = vmatprep.subr.bf16.mxu0 0
      %1282 = vmatpush2.bf16.msra.mxu0 %v1038
      %1283 = vmatprep.subr.bf16.mxu0 0
      %1284 = vmatpush2.bf16.msra.mxu0 %v1037
      %1285 = vmatprep.subr.bf16.mxu0 0
      %1286 = vmatpush2.bf16.msra.mxu0 %v1036
      %1287 = vmatprep.subr.bf16.mxu0 0
      %1288 = vmatpush2.bf16.msra.mxu0 %v1035
      %1289 = vmatprep.subr.bf16.mxu0 0
      %1290 = vmatpush2.bf16.msra.mxu0 %v1034
      %1291 = vmatprep.subr.bf16.mxu0 0
      %1292 = vmatpush2.bf16.msra.mxu0 %v1033
      %1293 = vmatprep.subr.bf16.mxu0 0
      %1294 = vmatpush2.bf16.msra.mxu0 %v1032
      %1295 = vmatprep.subr.bf16.mxu0 0
      %1296 = vmatpush2.bf16.msra.mxu0 %v1031
      %1297 = vmatprep.mubr.bf16.mxu0 %v636
      %1298 = vmatmul.mubr.bf16.gmra.mxu0 %v635
      %v1299 = vpop.f32.mrf.mxu0
      %v1300 = vadd.f32 %v1235, %v1299
      %v1301 = vpop.f32.mrf.mxu0
      %v1302 = vpop.f32.mrf.mxu0
      %v1303 = vadd.f32 %v1238, %v1302
      %v1304 = vpop.f32.mrf.mxu0
      %1305 = vmatprep.mubr.bf16.mxu0 %v645
      %1306 = vmatmul.mubr.bf16.gmra.mxu0 %v644
      %v1307 = vpop.f32.mrf.mxu0
      %v1308 = vadd.f32 %v1243, %v1307
      %v1309 = vpop.f32.mrf.mxu0
      %v1310 = vpop.f32.mrf.mxu0
      %v1311 = vadd.f32 %v1246, %v1310
      %v1312 = vpop.f32.mrf.mxu0
      %1313 = vmatprep.mubr.bf16.mxu0 %v654
      %1314 = vmatmul.mubr.bf16.gmra.mxu0 %v653
      %v1315 = vpop.f32.mrf.mxu0
      %v1316 = vadd.f32 %v1251, %v1315
      %v1317 = vpop.f32.mrf.mxu0
      %v1318 = vpop.f32.mrf.mxu0
      %v1319 = vadd.f32 %v1254, %v1318
      %v1320 = vpop.f32.mrf.mxu0
      %1321 = vmatprep.mubr.bf16.mxu0 %v663
      %1322 = vmatmul.mubr.bf16.gmra.mxu0 %v662
      %v1323 = vpop.f32.mrf.mxu0
      %v1324 = vadd.f32 %v1259, %v1323
      %v1325 = vpop.f32.mrf.mxu0
      %v1326 = vpop.f32.mrf.mxu0
      %v1327 = vadd.f32 %v1262, %v1326
      %v1328 = vpop.f32.mrf.mxu0
      %1329 = vdwg.mxu0
      %1330 = vmatprep.subr.bf16.mxu0 0
      %1331 = vmatpush1.bf16.msra.mxu0 %v1046
      %1332 = vmatprep.subr.bf16.mxu0 0
      %1333 = vmatpush1.bf16.msra.mxu0 %v1045
      %1334 = vmatprep.subr.bf16.mxu0 0
      %1335 = vmatpush1.bf16.msra.mxu0 %v1044
      %1336 = vmatprep.subr.bf16.mxu0 0
      %1337 = vmatpush1.bf16.msra.mxu0 %v1043
      %1338 = vmatprep.subr.bf16.mxu0 0
      %1339 = vmatpush1.bf16.msra.mxu0 %v1042
      %1340 = vmatprep.subr.bf16.mxu0 0
      %1341 = vmatpush1.bf16.msra.mxu0 %v1041
      %1342 = vmatprep.subr.bf16.mxu0 0
      %1343 = vmatpush1.bf16.msra.mxu0 %v1040
      %1344 = vmatprep.subr.bf16.mxu0 0
      %1345 = vmatpush1.bf16.msra.mxu0 %v1039
      %1346 = vmatprep.subr.bf16.mxu0 0
      %1347 = vmatpush2.bf16.msra.mxu0 %v1054
      %1348 = vmatprep.subr.bf16.mxu0 0
      %1349 = vmatpush2.bf16.msra.mxu0 %v1053
      %1350 = vmatprep.subr.bf16.mxu0 0
      %1351 = vmatpush2.bf16.msra.mxu0 %v1052
      %1352 = vmatprep.subr.bf16.mxu0 0
      %1353 = vmatpush2.bf16.msra.mxu0 %v1051
      %1354 = vmatprep.subr.bf16.mxu0 0
      %1355 = vmatpush2.bf16.msra.mxu0 %v1050
      %1356 = vmatprep.subr.bf16.mxu0 0
      %1357 = vmatpush2.bf16.msra.mxu0 %v1049
      %1358 = vmatprep.subr.bf16.mxu0 0
      %1359 = vmatpush2.bf16.msra.mxu0 %v1048
      %1360 = vmatprep.subr.bf16.mxu0 0
      %1361 = vmatpush2.bf16.msra.mxu0 %v1047
      %1362 = vmatprep.mubr.bf16.mxu0 %v638
      %1363 = vmatmul.mubr.bf16.gmra.mxu0 %v637
      %v1364 = vpop.f32.mrf.mxu0
      %v1365 = vadd.f32 %v1300, %v1364
      %v1366 = vpop.f32.mrf.mxu0
      %v1367 = vpop.f32.mrf.mxu0
      %v1368 = vadd.f32 %v1303, %v1367
      %v1369 = vpop.f32.mrf.mxu0
      %1370 = vmatprep.mubr.bf16.mxu0 %v647
      %1371 = vmatmul.mubr.bf16.gmra.mxu0 %v646
      %v1372 = vpop.f32.mrf.mxu0
      %v1373 = vadd.f32 %v1308, %v1372
      %v1374 = vpop.f32.mrf.mxu0
      %v1375 = vpop.f32.mrf.mxu0
      %v1376 = vadd.f32 %v1311, %v1375
      %v1377 = vpop.f32.mrf.mxu0
      %1378 = vmatprep.mubr.bf16.mxu0 %v656
      %1379 = vmatmul.mubr.bf16.gmra.mxu0 %v655
      %v1380 = vpop.f32.mrf.mxu0
      %v1381 = vadd.f32 %v1316, %v1380
      %v1382 = vpop.f32.mrf.mxu0
      %v1383 = vpop.f32.mrf.mxu0
      %v1384 = vadd.f32 %v1319, %v1383
      %v1385 = vpop.f32.mrf.mxu0
      %1386 = vmatprep.mubr.bf16.mxu0 %v665
      %1387 = vmatmul.mubr.bf16.gmra.mxu0 %v664
      %v1388 = vpop.f32.mrf.mxu0
      %v1389 = vadd.f32 %v1324, %v1388
      %v1390 = vpop.f32.mrf.mxu0
      %v1391 = vpop.f32.mrf.mxu0
      %v1392 = vadd.f32 %v1327, %v1391
      %v1393 = vpop.f32.mrf.mxu0
      %1394 = vdwg.mxu0
      %1395 = vmatprep.subr.bf16.mxu0 0
      %1396 = vmatpush1.bf16.msra.mxu0 %v1062
      %1397 = vmatprep.subr.bf16.mxu0 0
      %1398 = vmatpush1.bf16.msra.mxu0 %v1061
      %1399 = vmatprep.subr.bf16.mxu0 0
      %1400 = vmatpush1.bf16.msra.mxu0 %v1060
      %1401 = vmatprep.subr.bf16.mxu0 0
      %1402 = vmatpush1.bf16.msra.mxu0 %v1059
      %1403 = vmatprep.subr.bf16.mxu0 0
      %1404 = vmatpush1.bf16.msra.mxu0 %v1058
      %1405 = vmatprep.subr.bf16.mxu0 0
      %1406 = vmatpush1.bf16.msra.mxu0 %v1057
      %1407 = vmatprep.subr.bf16.mxu0 0
      %1408 = vmatpush1.bf16.msra.mxu0 %v1056
      %1409 = vmatprep.subr.bf16.mxu0 0
      %1410 = vmatpush1.bf16.msra.mxu0 %v1055
      %1411 = vmatprep.subr.bf16.mxu0 0
      %1412 = vmatpush2.bf16.msra.mxu0 0
      %1413 = vmatprep.subr.bf16.mxu0 0
      %1414 = vmatpush2.bf16.msra.mxu0 0
      %1415 = vmatprep.subr.bf16.mxu0 0
      %1416 = vmatpush2.bf16.msra.mxu0 0
      %1417 = vmatprep.subr.bf16.mxu0 0
      %1418 = vmatpush2.bf16.msra.mxu0 0
      %1419 = vmatprep.subr.bf16.mxu0 0
      %1420 = vmatpush2.bf16.msra.mxu0 0
      %1421 = vmatprep.subr.bf16.mxu0 0
      %1422 = vmatpush2.bf16.msra.mxu0 0
      %1423 = vmatprep.subr.bf16.mxu0 0
      %1424 = vmatpush2.bf16.msra.mxu0 0
      %1425 = vmatprep.subr.bf16.mxu0 0
      %1426 = vmatpush2.bf16.msra.mxu0 0
      %1427 = vmatprep.mubr.bf16.mxu0 0
      %1428 = vmatmul.mubr.bf16.gmra.mxu0 %v639
      %v1429 = vpop.f32.mrf.mxu0
      %v1430 = vadd.f32 %v1365, %v1429
      %v1431 = vpop.f32.mrf.mxu0
      %v1432 = vpop.f32.mrf.mxu0
      %v1433 = vadd.f32 %v1368, %v1432
      %v1434 = vpop.f32.mrf.mxu0
      %1435 = vmatprep.mubr.bf16.mxu0 0
      %1436 = vmatmul.mubr.bf16.gmra.mxu0 %v648
      %v1437 = vpop.f32.mrf.mxu0
      %v1438 = vadd.f32 %v1373, %v1437
      %v1439 = vpop.f32.mrf.mxu0
      %v1440 = vpop.f32.mrf.mxu0
      %v1441 = vadd.f32 %v1376, %v1440
      %v1442 = vpop.f32.mrf.mxu0
      %1443 = vmatprep.mubr.bf16.mxu0 0
      %1444 = vmatmul.mubr.bf16.gmra.mxu0 %v657
      %v1445 = vpop.f32.mrf.mxu0
      %v1446 = vadd.f32 %v1381, %v1445
      %v1447 = vpop.f32.mrf.mxu0
      %v1448 = vpop.f32.mrf.mxu0
      %v1449 = vadd.f32 %v1384, %v1448
      %v1450 = vpop.f32.mrf.mxu0
      %1451 = vmatprep.mubr.bf16.mxu0 0
      %1452 = vmatmul.mubr.bf16.gmra.mxu0 %v666
      %v1453 = vpop.f32.mrf.mxu0
      %v1454 = vadd.f32 %v1389, %v1453
      %v1455 = vpop.f32.mrf.mxu0
      %v1456 = vpop.f32.mrf.mxu0
      %v1457 = vadd.f32 %v1392, %v1456
      %v1458 = vpop.f32.mrf.mxu0
      %1459 = vdwg.mxu0
      %v1460 = vld [vmem:[%s2] sm:$0x1]
      %v1462 = vlaneseq
      %v1463 = vshrl.u32 %v1462, 7
      %v1464 = vsub.s32 0, %v1463
      %v1465 = vrot.slane %v1460, %v1464
      %v1467 = vmul.f32 %v1430, %v1465
      %v1468 = vmul.f32 %v1433, %v1465
      %v1469 = vmul.f32 %v1438, %v1465
      %v1470 = vmul.f32 %v1441, %v1465
      %v1471 = vmul.f32 %v1446, %v1465
      %v1472 = vmul.f32 %v1449, %v1465
      %v1473 = vmul.f32 %v1454, %v1465
      %v1474 = vmul.f32 %v1457, %v1465
      %v1475 = vld [vmem:[%s3] sm:$0x1]
      %v1477 = vlaneseq
      %v1478 = vshrl.u32 %v1477, 7
      %v1479 = vsub.s32 0, %v1478
      %v1480 = vrot.slane %v1475, %v1479
      %v1482 = vadd.f32 %v1467, %v1480
      %v1483 = vadd.f32 %v1468, %v1480
      %v1484 = vadd.f32 %v1469, %v1480
      %v1485 = vadd.f32 %v1470, %v1480
      %v1486 = vadd.f32 %v1471, %v1480
      %v1487 = vadd.f32 %v1472, %v1480
      %v1488 = vadd.f32 %v1473, %v1480
      %v1489 = vadd.f32 %v1474, %v1480
      %v1490 = vmax.f32 %v1482, 0.0
      %v1491 = vmax.f32 %v1483, 0.0
      %v1492 = vmax.f32 %v1484, 0.0
      %v1493 = vmax.f32 %v1485, 0.0
      %v1494 = vmax.f32 %v1486, 0.0
      %v1495 = vmax.f32 %v1487, 0.0
      %v1496 = vmax.f32 %v1488, 0.0
      %v1497 = vmax.f32 %v1489, 0.0
      %v1498 = vpack.c.bf16 %v1491, %v1490
      %v1499 = vpack.c.bf16 %v1493, %v1492
      %v1500 = vpack.c.bf16 %v1495, %v1494
      %v1501 = vpack.c.bf16 %v1497, %v1496
      %v1502 = vld [vmem:[%s4] sm:$0xf]
      %v1503 = vld [vmem:[%s4 + $0x4] sm:$0xf]
      %v1504 = vld [vmem:[%s4 + $0x8] sm:$0xf]
      %v1505 = vld [vmem:[%s4 + $0xc] sm:$0xf]
      %v1506 = vld [vmem:[%s4 + $0x10] sm:$0xf]
      %v1507 = vld [vmem:[%s4 + $0x14] sm:$0xf]
      %v1508 = vld [vmem:[%s4 + $0x18] sm:$0xf]
      %v1509 = vld [vmem:[%s4 + $0x1c] sm:$0xf]
      %v1510 = vld [vmem:[%s4 + $0x20] sm:$0xf]
      %v1511 = vld [vmem:[%s4 + $0x24] sm:$0xf]
      %v1512 = vld [vmem:[%s4 + $0x28] sm:$0xf]
      %v1513 = vld [vmem:[%s4 + $0x2c] sm:$0xf]
      %v1514 = vld [vmem:[%s4 + $0x30] sm:$0xf]
      %v1515 = vld [vmem:[%s4 + $0x34] sm:$0xf]
      %v1516 = vld [vmem:[%s4 + $0x38] sm:$0xf]
      %v1517 = vld [vmem:[%s4 + $0x3c] sm:$0xf]
      %v1534 = vunpack.c.l.b16 %v1502
      %v1535 = vunpack.c.l.b16 %v1503
      %v1536 = vunpack.c.l.b16 %v1504
      %v1537 = vunpack.c.l.b16 %v1505
      %v1538 = vunpack.c.l.b16 %v1506
      %v1539 = vunpack.c.l.b16 %v1507
      %v1540 = vunpack.c.l.b16 %v1508
      %v1541 = vunpack.c.l.b16 %v1509
      %v1542 = vunpack.c.l.b16 %v1510
      %v1543 = vunpack.c.l.b16 %v1511
      %v1544 = vunpack.c.l.b16 %v1512
      %v1545 = vunpack.c.l.b16 %v1513
      %v1546 = vunpack.c.l.b16 %v1514
      %v1547 = vunpack.c.l.b16 %v1515
      %v1548 = vunpack.c.l.b16 %v1516
      %v1549 = vunpack.c.l.b16 %v1517
      %v1550 = vpack.c.b16 %v1535, %v1534
      %v1551 = vpack.c.b16 %v1537, %v1536
      %v1552 = vpack.c.b16 %v1539, %v1538
      %v1553 = vpack.c.b16 %v1541, %v1540
      %v1554 = vpack.c.b16 %v1543, %v1542
      %v1555 = vpack.c.b16 %v1545, %v1544
      %v1556 = vpack.c.b16 %v1547, %v1546
      %v1557 = vpack.c.b16 %v1549, %v1548
      %1566 = vmatprep.subr.bf16.mxu0 0
      %1567 = vmatpush1.bf16.msra.mxu0 %v1557
      %1568 = vmatprep.subr.bf16.mxu0 0
      %1569 = vmatpush1.bf16.msra.mxu0 %v1556
      %1570 = vmatprep.subr.bf16.mxu0 0
      %1571 = vmatpush1.bf16.msra.mxu0 %v1555
      %1572 = vmatprep.subr.bf16.mxu0 0
      %1573 = vmatpush1.bf16.msra.mxu0 %v1554
      %1574 = vmatprep.subr.bf16.mxu0 0
      %1575 = vmatpush1.bf16.msra.mxu0 %v1553
      %1576 = vmatprep.subr.bf16.mxu0 0
      %1577 = vmatpush1.bf16.msra.mxu0 %v1552
      %1578 = vmatprep.subr.bf16.mxu0 0
      %1579 = vmatpush1.bf16.msra.mxu0 %v1551
      %1580 = vmatprep.subr.bf16.mxu0 0
      %1581 = vmatpush1.bf16.msra.mxu0 %v1550
      %1582 = vmatprep.subr.bf16.mxu0 0
      %1583 = vmatpush2.bf16.msra.mxu0 0
      %1584 = vmatprep.subr.bf16.mxu0 0
      %1585 = vmatpush2.bf16.msra.mxu0 0
      %1586 = vmatprep.subr.bf16.mxu0 0
      %1587 = vmatpush2.bf16.msra.mxu0 0
      %1588 = vmatprep.subr.bf16.mxu0 0
      %1589 = vmatpush2.bf16.msra.mxu0 0
      %1590 = vmatprep.subr.bf16.mxu0 0
      %1591 = vmatpush2.bf16.msra.mxu0 0
      %1592 = vmatprep.subr.bf16.mxu0 0
      %1593 = vmatpush2.bf16.msra.mxu0 0
      %1594 = vmatprep.subr.bf16.mxu0 0
      %1595 = vmatpush2.bf16.msra.mxu0 0
      %1596 = vmatprep.subr.bf16.mxu0 0
      %1597 = vmatpush2.bf16.msra.mxu0 0
      %1598 = vmatprep.mubr.bf16.mxu0 0
      %1599 = vmatmul.mubr.bf16.gmra.mxu0 %v1498
      %v1600 = vpop.f32.mrf.mxu0
      %v1601 = vadd.f32 0.0, %v1600
      %v1602 = vpop.f32.mrf.mxu0
      %v1603 = vpop.f32.mrf.mxu0
      %v1604 = vadd.f32 0.0, %v1603
      %v1605 = vpop.f32.mrf.mxu0
      %1606 = vmatprep.mubr.bf16.mxu0 0
      %1607 = vmatmul.mubr.bf16.gmra.mxu0 %v1499
      %v1608 = vpop.f32.mrf.mxu0
      %v1609 = vadd.f32 0.0, %v1608
      %v1610 = vpop.f32.mrf.mxu0
      %v1611 = vpop.f32.mrf.mxu0
      %v1612 = vadd.f32 0.0, %v1611
      %v1613 = vpop.f32.mrf.mxu0
      %1614 = vmatprep.mubr.bf16.mxu0 0
      %1615 = vmatmul.mubr.bf16.gmra.mxu0 %v1500
      %v1616 = vpop.f32.mrf.mxu0
      %v1617 = vadd.f32 0.0, %v1616
      %v1618 = vpop.f32.mrf.mxu0
      %v1619 = vpop.f32.mrf.mxu0
      %v1620 = vadd.f32 0.0, %v1619
      %v1621 = vpop.f32.mrf.mxu0
      %1622 = vmatprep.mubr.bf16.mxu0 0
      %1623 = vmatmul.mubr.bf16.gmra.mxu0 %v1501
      %v1624 = vpop.f32.mrf.mxu0
      %v1625 = vadd.f32 0.0, %v1624
      %v1626 = vpop.f32.mrf.mxu0
      %v1627 = vpop.f32.mrf.mxu0
      %v1628 = vadd.f32 0.0, %v1627
      %v1629 = vpop.f32.mrf.mxu0
      %1630 = vdwg.mxu0
      %v1631 = vld [vmem:[%s5] sm:$0x1]
      %v1633 = vlaneseq
      %v1634 = vshrl.u32 %v1633, 7
      %v1635 = vsub.s32 0, %v1634
      %v1636 = vrot.slane %v1631, %v1635
      %v1638 = vmul.f32 %v1601, %v1636
      %v1639 = vmul.f32 %v1604, %v1636
      %v1640 = vmul.f32 %v1609, %v1636
      %v1641 = vmul.f32 %v1612, %v1636
      %v1642 = vmul.f32 %v1617, %v1636
      %v1643 = vmul.f32 %v1620, %v1636
      %v1644 = vmul.f32 %v1625, %v1636
      %v1645 = vmul.f32 %v1628, %v1636
      %v1646 = vld [vmem:[%s6] sm:$0x1]
      %v1648 = vlaneseq
      %v1649 = vshrl.u32 %v1648, 7
      %v1650 = vsub.s32 0, %v1649
      %v1651 = vrot.slane %v1646, %v1650
      %v1653 = vadd.f32 %v1638, %v1651
      %v1654 = vadd.f32 %v1639, %v1651
      %v1655 = vadd.f32 %v1640, %v1651
      %v1656 = vadd.f32 %v1641, %v1651
      %v1657 = vadd.f32 %v1642, %v1651
      %v1658 = vadd.f32 %v1643, %v1651
      %v1659 = vadd.f32 %v1644, %v1651
      %v1660 = vadd.f32 %v1645, %v1651
      %v1661 = vld [vmem:[%s326] sm:$0xf]
      %v1662 = vld [vmem:[%s326 + $0x4] sm:$0xf]
      %v1663 = vld [vmem:[%s326 + $0x8] sm:$0xf]
      %v1664 = vld [vmem:[%s326 + $0xc] sm:$0xf]
      %v1665 = vld [vmem:[%s326 + $0x10] sm:$0xf]
      %v1666 = vld [vmem:[%s326 + $0x14] sm:$0xf]
      %v1667 = vld [vmem:[%s326 + $0x18] sm:$0xf]
      %v1668 = vld [vmem:[%s326 + $0x1c] sm:$0xf]
      %v1669 = vunpack.c.l.bf16 %v1661
      %v1670 = vunpack.c.l.bf16 %v1662
      %v1671 = vunpack.c.l.bf16 %v1663
      %v1672 = vunpack.c.l.bf16 %v1664
      %v1673 = vunpack.c.l.bf16 %v1665
      %v1674 = vunpack.c.l.bf16 %v1666
      %v1675 = vunpack.c.l.bf16 %v1667
      %v1676 = vunpack.c.l.bf16 %v1668
      %v1677 = vadd.f32 %v1653, %v1669
      %v1678 = vadd.f32 %v1654, %v1670
      %v1679 = vadd.f32 %v1655, %v1671
      %v1680 = vadd.f32 %v1656, %v1672
      %v1681 = vadd.f32 %v1657, %v1673
      %v1682 = vadd.f32 %v1658, %v1674
      %v1683 = vadd.f32 %v1659, %v1675
      %v1684 = vadd.f32 %v1660, %v1676
      %v1685 = vmax.f32 %v1677, 0.0
      %v1686 = vmax.f32 %v1678, 0.0
      %v1687 = vmax.f32 %v1679, 0.0
      %v1688 = vmax.f32 %v1680, 0.0
      %v1689 = vmax.f32 %v1681, 0.0
      %v1690 = vmax.f32 %v1682, 0.0
      %v1691 = vmax.f32 %v1683, 0.0
      %v1692 = vmax.f32 %v1684, 0.0
      %v1693 = vpack.c.bf16 %v1686, %v1685
      %v1694 = vpack.c.bf16 %v1688, %v1687
      %v1695 = vpack.c.bf16 %v1690, %v1689
      %v1696 = vpack.c.bf16 %v1692, %v1691
      %v1701 = vunpack.c.l.b16 %v1693
      %v1702 = vunpack.c.h.b16 %v1693
      %v1703 = vunpack.c.l.b16 %v1694
      %v1704 = vunpack.c.h.b16 %v1694
      %v1705 = vunpack.c.l.b16 %v1695
      %v1706 = vunpack.c.h.b16 %v1695
      %v1707 = vunpack.c.l.b16 %v1696
      %v1708 = vunpack.c.h.b16 %v1696
      %v1709 = vpack.c.b16 %v1701, %v1701
      %v1710 = vpack.c.b16 %v1702, %v1702
      %v1711 = vpack.c.b16 %v1703, %v1703
      %v1712 = vpack.c.b16 %v1704, %v1704
      %v1713 = vpack.c.b16 %v1705, %v1705
      %v1714 = vpack.c.b16 %v1706, %v1706
      %v1715 = vpack.c.b16 %v1707, %v1707
      %v1716 = vpack.c.b16 %v1708, %v1708
      %1725 = vst [vmem:[%s332] sm:$0xf] %v1709
      %1726 = vst [vmem:[%s332 + $0x4] sm:$0xf] %v1710
      %1727 = vst [vmem:[%s332 + $0x8] sm:$0xf] %v1711
      %1728 = vst [vmem:[%s332 + $0xc] sm:$0xf] %v1712
      %1729 = vst [vmem:[%s332 + $0x10] sm:$0xf] %v1713
      %1730 = vst [vmem:[%s332 + $0x14] sm:$0xf] %v1714
      %1731 = vst [vmem:[%s332 + $0x18] sm:$0xf] %v1715
      %1732 = vst [vmem:[%s332 + $0x1c] sm:$0xf] %v1716
      %s1733 = smul.u32 8, %s19
      %p1734 = scmp.lt.s32.totalorder %s1733, 15
      %s1735 = scalar_select %p1734, %s1733, 15
      %s1736 = smul.addr %s1735, 4
      %s1737 = scalar_lea.vmem %s8, %s1736
      // Predicated region
      $region53: #{forward.43} parent=51 // pred_check
        %p1738 = pneg %p215
      $region54: #{forward.43} parent=51 // pred_check_branch
        %1740 = sbr.rel (%p1738) target = $region56
      $region55: #{forward.43} parent=51 // pred_region
        %s1741 = smul.u32 8, %s19
      $region56: #{forward.43} parent=51 // pred_fallthru
        _
    $region52: #{forward.43} parent=5 // pred_fallthru
      _
    %p1742 = scmp.le.s32.totalorder 2, %s14
    // Predicated region
    $region57: #{forward.43} parent=5 // pred_check
      %p1743 = pneg %p1742
    $region58: #{forward.43} parent=5 // pred_check_branch
      %1745 = sbr.rel (%p1743) target = $region60
    $region59: #{forward.43} parent=5 // pred_region
      %s1746 = ssub.s32 %s14, 2
      // Predicated region
      $region61: #{forward.43} parent=59 // pred_check
        %p1747 = pneg %p221
      $region62: #{forward.43} parent=59 // pred_check_branch
        %1749 = sbr.rel (%p1747) target = $region64
      $region63: #{forward.43} parent=59 // pred_region
        %s1750 = smul.u32 8, %s20
        %p1751 = scmp.lt.s32.totalorder %s1750, 15
        %s1752 = scalar_select %p1751, %s1750, 15
        %s1753 = smul.addr %s1752, 4
        %s1754 = scalar_lea.vmem %s8, %s1753
      $region64: #{forward.43} parent=59 // pred_fallthru
        _
    $region60: #{forward.43} parent=5 // pred_fallthru
      _
  $region6: #{forward.43} parent=0 // loop_footer
    %s18 = sadd.s32 1, %s14
  $region7: #{forward.43} parent=0 // loop_footer_branch
    %13 = sbr.rel target = $region3
  $region8: #{forward.43} parent=0 // loop_exit
    _

// kernel: forward.49
$region0: #{forward.49}
  #allocation0 [shape = 'u32[]', space=smem, size = 0x4, offset = 0x4, fixed_abs, tag = 'smem constant byte address 0x4 - core index']
  #allocation1 [shape = 'u32[144,128]{1,0:T(1,128)}', space=vmem, size = 0x12000, scoped, tag = 'internal scratch']
  %s0 = inlined_call_operand.vmem [shape: bf16[32,128], index: 0, kind: input, shape index: {}]
  %s1 = inlined_call_operand.vmem [shape: bf16[128,128], index: 1, kind: input, shape index: {}]
  %s2 = inlined_call_operand.vmem [shape: f32[1,128], index: 2, kind: input, shape index: {}]
  %s3 = inlined_call_operand.vmem [shape: f32[1,128], index: 3, kind: input, shape index: {}]
  %s4 = inlined_call_operand.vmem [shape: bf16[32,128], index: 4, kind: output, shape index: {}]
  %s5 = sld [smem:[#allocation0]]
  $region49: #{forward.49} parent=0
    _
  %s7 = ssub.s32 1, %s5
  %s8 = scalar_select 0, %s7, %s5
  loop: start=0, step=1, limit=4
  $region2: #{forward.49} parent=0 // loop_pre_header
    _
  $region3: #{forward.49} parent=0 // loop_header
    %s10 = sphi 0, %s14
    %p11 = scmp.ge.s32.totalorder %s10, 4
    %s20 = sphi 0, %s22
    %s23 = sphi 0, %s20
    %s24 = sphi 0, %s23
    %s40 = sphi 0, %s24
    %s44 = sphi 0, %s44
    %s46 = sphi 0, %s44
    %s47 = sphi 0, %s46
    %s61 = sphi 0, %s47
    %s65 = sphi 0, %s65
    %s67 = sphi 0, %s65
    %s68 = sphi 0, %s67
    %s82 = sphi 0, %s68
    %s86 = sphi 0, %s86
    %s88 = sphi 0, %s86
    %s89 = sphi 0, %s88
    %s103 = sphi 0, %s89
    %s109 = sphi 0, %s111
    %s112 = sphi 0, %s109
    %s113 = sphi 0, %s112
    %s129 = sphi 0, %s113
  $region4: #{forward.49} parent=0 // loop_header_branch
    %13 = sbr.rel (%p11) target = $region8
  $region5: #{forward.49} parent=0 // loop_body
    %s15 = ssub.s32 %s10, 1
    %s16 = ssub.s32 %s10, 2
    %s17 = sadd.s32 %s10, 1
    %s18 = ssub.s32 %s10, %s17
    %p19 = scmp.eq.s32.totalorder %s18, 0
    %s21 = sadd.s32 %s20, 1
    %s22 = scalar_select %p19, %s20, %s21
    %p25 = pneg %p19
    %p26 = scmp.eq.s32.totalorder %s10, 1
    %p27 = por %p25, %p26
    %p28 = scmp.ne.s32.totalorder %s20, %s23
    %p29 = scmp.eq.s32.totalorder %s10, 0
    %p30 = por %p28, %p29
    %p31 = scmp.ne.s32.totalorder %s20, %s23
    %p32 = scmp.eq.s32.totalorder %s15, 1
    %p33 = por %p31, %p32
    %p34 = scmp.ne.s32.totalorder %s23, %s24
    %p35 = scmp.eq.s32.totalorder %s15, 0
    %p36 = por %p34, %p35
    %p37 = scmp.ne.s32.totalorder %s23, %s24
    %p38 = scmp.eq.s32.totalorder %s16, 1
    %p39 = por %p37, %p38
    %p41 = scmp.ne.s32.totalorder %s24, %s40
    %p42 = scmp.eq.s32.totalorder %s16, 0
    %p43 = por %p41, %p42
    %s45 = sadd.s32 %s44, 1
    %p48 = scmp.eq.s32.totalorder %s10, 1
    %p49 = scmp.ne.s32.totalorder %s44, %s46
    %p50 = scmp.eq.s32.totalorder %s10, 0
    %p51 = por %p49, %p50
    %p52 = scmp.ne.s32.totalorder %s44, %s46
    %p53 = scmp.eq.s32.totalorder %s15, 1
    %p54 = por %p52, %p53
    %p55 = scmp.ne.s32.totalorder %s46, %s47
    %p56 = scmp.eq.s32.totalorder %s15, 0
    %p57 = por %p55, %p56
    %p58 = scmp.ne.s32.totalorder %s46, %s47
    %p59 = scmp.eq.s32.totalorder %s16, 1
    %p60 = por %p58, %p59
    %p62 = scmp.ne.s32.totalorder %s47, %s61
    %p63 = scmp.eq.s32.totalorder %s16, 0
    %p64 = por %p62, %p63
    %s66 = sadd.s32 %s65, 1
    %p69 = scmp.eq.s32.totalorder %s10, 1
    %p70 = scmp.ne.s32.totalorder %s65, %s67
    %p71 = scmp.eq.s32.totalorder %s10, 0
    %p72 = por %p70, %p71
    %p73 = scmp.ne.s32.totalorder %s65, %s67
    %p74 = scmp.eq.s32.totalorder %s15, 1
    %p75 = por %p73, %p74
    %p76 = scmp.ne.s32.totalorder %s67, %s68
    %p77 = scmp.eq.s32.totalorder %s15, 0
    %p78 = por %p76, %p77
    %p79 = scmp.ne.s32.totalorder %s67, %s68
    %p80 = scmp.eq.s32.totalorder %s16, 1
    %p81 = por %p79, %p80
    %p83 = scmp.ne.s32.totalorder %s68, %s82
    %p84 = scmp.eq.s32.totalorder %s16, 0
    %p85 = por %p83, %p84
    %s87 = sadd.s32 %s86, 1
    %p90 = scmp.eq.s32.totalorder %s10, 1
    %p91 = scmp.ne.s32.totalorder %s86, %s88
    %p92 = scmp.eq.s32.totalorder %s10, 0
    %p93 = por %p91, %p92
    %p94 = scmp.ne.s32.totalorder %s86, %s88
    %p95 = scmp.eq.s32.totalorder %s15, 1
    %p96 = por %p94, %p95
    %p97 = scmp.ne.s32.totalorder %s88, %s89
    %p98 = scmp.eq.s32.totalorder %s15, 0
    %p99 = por %p97, %p98
    %p100 = scmp.ne.s32.totalorder %s88, %s89
    %p101 = scmp.eq.s32.totalorder %s16, 1
    %p102 = por %p100, %p101
    %p104 = scmp.ne.s32.totalorder %s89, %s103
    %p105 = scmp.eq.s32.totalorder %s16, 0
    %p106 = por %p104, %p105
    %s107 = ssub.s32 %s10, %s17
    %p108 = scmp.eq.s32.totalorder %s107, 0
    %s110 = sadd.s32 %s109, 1
    %s111 = scalar_select %p108, %s109, %s110
    %p114 = pneg %p108
    %p115 = scmp.eq.s32.totalorder %s10, 1
    %p116 = por %p114, %p115
    %p117 = scmp.ne.s32.totalorder %s109, %s112
    %p118 = scmp.eq.s32.totalorder %s10, 0
    %p119 = por %p117, %p118
    %p120 = scmp.ne.s32.totalorder %s109, %s112
    %p121 = scmp.eq.s32.totalorder %s15, 1
    %p122 = por %p120, %p121
    %p123 = scmp.ne.s32.totalorder %s112, %s113
    %p124 = scmp.eq.s32.totalorder %s15, 0
    %p125 = por %p123, %p124
    %p126 = scmp.ne.s32.totalorder %s112, %s113
    %p127 = scmp.eq.s32.totalorder %s16, 1
    %p128 = por %p126, %p127
    %p130 = scmp.ne.s32.totalorder %s113, %s129
    %p131 = scmp.eq.s32.totalorder %s16, 0
    %p132 = por %p130, %p131
    %p133 = scmp.le.s32.totalorder 1, %s10
    %p134 = scmp.lt.s32.totalorder %s10, 3
    %p135 = pnand %p133, %p134
    %p136 = pneg %p135
    // Predicated region
    $region9: #{forward.49} parent=5 // pred_check
      _
    $region10: #{forward.49} parent=5 // pred_check_branch
      %138 = sbr.rel (%p135) target = $region12
    $region11: #{forward.49} parent=5 // pred_region
      %s139 = ssub.s32 %s10, 1
      // Predicated region
      $region13: #{forward.49} parent=11 // pred_check
        %p140 = pneg %p57
      $region14: #{forward.49} parent=11 // pred_check_branch
        %142 = sbr.rel (%p140) target = $region16
      $region15: #{forward.49} parent=11 // pred_region
        _
      $region16: #{forward.49} parent=11 // pred_fallthru
        _
      // Predicated region
      $region17: #{forward.49} parent=11 // pred_check
        %p143 = pneg %p78
      $region18: #{forward.49} parent=11 // pred_check_branch
        %145 = sbr.rel (%p143) target = $region20
      $region19: #{forward.49} parent=11 // pred_region
        _
      $region20: #{forward.49} parent=11 // pred_fallthru
        _
      // Predicated region
      $region21: #{forward.49} parent=11 // pred_check
        %p146 = pneg %p99
      $region22: #{forward.49} parent=11 // pred_check_branch
        %148 = sbr.rel (%p146) target = $region24
      $region23: #{forward.49} parent=11 // pred_region
        _
      $region24: #{forward.49} parent=11 // pred_fallthru
        _
    $region12: #{forward.49} parent=5 // pred_fallthru
      _
    %p149 = scmp.lt.s32.totalorder %s10, 2
    // Predicated region
    $region25: #{forward.49} parent=5 // pred_check
      %p150 = pneg %p149
    $region26: #{forward.49} parent=5 // pred_check_branch
      %152 = sbr.rel (%p150) target = $region28
    $region27: #{forward.49} parent=5 // pred_region
      // Predicated region
      $region29: #{forward.49} parent=27 // pred_check
        %p153 = pneg %p30
      $region30: #{forward.49} parent=27 // pred_check_branch
        %155 = sbr.rel (%p153) target = $region32
      $region31: #{forward.49} parent=27 // pred_region
        %s156 = smul.u32 2, %s10
        %p157 = scmp.lt.s32.totalorder %s156, 3
        %s158 = scalar_select %p157, %s156, 3
        %s159 = smul.addr %s158, 4
        %s160 = scalar_lea.vmem %s0, %s159
        %s161 = smul.u32 2, %s10
      $region32: #{forward.49} parent=27 // pred_fallthru
        _
    $region28: #{forward.49} parent=5 // pred_fallthru
      _
    %p162 = scmp.le.s32.totalorder 1, %s10
    %p163 = scmp.lt.s32.totalorder %s10, 3
    %p164 = pnand %p162, %p163
    %p165 = pneg %p164
    // Predicated region
    $region33: #{forward.49} parent=5 // pred_check
      _
    $region34: #{forward.49} parent=5 // pred_check_branch
      %167 = sbr.rel (%p164) target = $region36
    $region35: #{forward.49} parent=5 // pred_region
      %s168 = ssub.s32 %s10, 1
      %s169 = smul.u32 2, %s15
      %p170 = scmp.lt.s32.totalorder %s169, 3
      %s171 = scalar_select %p170, %s169, 3
      %s172 = smul.addr %s171, 4
      %s173 = scalar_lea.vmem %s0, %s172
      %p174 = pneg %p36
      %p175 = pneg %p33
      %p176 = pneg %p57
      %p177 = pneg %p54
      %p178 = pneg %p78
      %p179 = pneg %p75
      %p180 = pneg %p99
      %p181 = pneg %p96
      %p182 = pneg %p125
      %p183 = pneg %p122
      %s184 = smul.u32 2, %s15
      %p185 = scmp.lt.s32.totalorder %s184, 3
      %s186 = scalar_select %p185, %s184, 3
      %s187 = smul.addr %s186, 4
      %s188 = scalar_lea.vmem %s4, %s187
      %s189 = smul.u32 2, %s15
      %p190 = scmp.lt.s32.totalorder %s189, 3
      %s191 = scalar_select %p190, %s189, 3
      %s192 = smul.addr %s191, 4
      %s193 = scalar_lea.vmem %s0, %s192
      %s194 = smul.u32 2, %s15
      %s195 = smul.u32 2, %s15
      %p196 = scmp.lt.s32.totalorder %s195, 3
      %s197 = scalar_select %p196, %s195, 3
      %s198 = smul.addr %s197, 4
      %s199 = scalar_lea.vmem %s4, %s198
      %s200 = smul.u32 2, %s15
      %v202 = vld [vmem:[%s193] sm:$0xf]
      %v203 = vld [vmem:[%s193 + $0x4] sm:$0xf]
      %v204 = vld [vmem:[%s1] sm:$0xf]
      %v205 = vld [vmem:[%s1 + $0x4] sm:$0xf]
      %v206 = vld [vmem:[%s1 + $0x8] sm:$0xf]
      %v207 = vld [vmem:[%s1 + $0xc] sm:$0xf]
      %v208 = vld [vmem:[%s1 + $0x10] sm:$0xf]
      %v209 = vld [vmem:[%s1 + $0x14] sm:$0xf]
      %v210 = vld [vmem:[%s1 + $0x18] sm:$0xf]
      %v211 = vld [vmem:[%s1 + $0x1c] sm:$0xf]
      %v212 = vld [vmem:[%s1 + $0x20] sm:$0xf]
      %v213 = vld [vmem:[%s1 + $0x24] sm:$0xf]
      %v214 = vld [vmem:[%s1 + $0x28] sm:$0xf]
      %v215 = vld [vmem:[%s1 + $0x2c] sm:$0xf]
      %v216 = vld [vmem:[%s1 + $0x30] sm:$0xf]
      %v217 = vld [vmem:[%s1 + $0x34] sm:$0xf]
      %v218 = vld [vmem:[%s1 + $0x38] sm:$0xf]
      %v219 = vld [vmem:[%s1 + $0x3c] sm:$0xf]
      %v222 = vunpack.c.l.b16 %v202
      %v223 = vunpack.c.l.b16 %v203
      %v224 = vpack.c.b16 %v223, %v222
      %v242 = vunpack.c.l.b16 %v204
      %v243 = vunpack.c.l.b16 %v205
      %v244 = vunpack.c.l.b16 %v206
      %v245 = vunpack.c.l.b16 %v207
      %v246 = vunpack.c.l.b16 %v208
      %v247 = vunpack.c.l.b16 %v209
      %v248 = vunpack.c.l.b16 %v210
      %v249 = vunpack.c.l.b16 %v211
      %v250 = vunpack.c.l.b16 %v212
      %v251 = vunpack.c.l.b16 %v213
      %v252 = vunpack.c.l.b16 %v214
      %v253 = vunpack.c.l.b16 %v215
      %v254 = vunpack.c.l.b16 %v216
      %v255 = vunpack.c.l.b16 %v217
      %v256 = vunpack.c.l.b16 %v218
      %v257 = vunpack.c.l.b16 %v219
      %v258 = vpack.c.b16 %v243, %v242
      %v259 = vpack.c.b16 %v245, %v244
      %v260 = vpack.c.b16 %v247, %v246
      %v261 = vpack.c.b16 %v249, %v248
      %v262 = vpack.c.b16 %v251, %v250
      %v263 = vpack.c.b16 %v253, %v252
      %v264 = vpack.c.b16 %v255, %v254
      %v265 = vpack.c.b16 %v257, %v256
      %274 = vmatprep.subr.bf16.mxu0 0
      %275 = vmatpush1.bf16.msra.mxu0 %v265
      %276 = vmatprep.subr.bf16.mxu0 0
      %277 = vmatpush1.bf16.msra.mxu0 %v264
      %278 = vmatprep.subr.bf16.mxu0 0
      %279 = vmatpush1.bf16.msra.mxu0 %v263
      %280 = vmatprep.subr.bf16.mxu0 0
      %281 = vmatpush1.bf16.msra.mxu0 %v262
      %282 = vmatprep.subr.bf16.mxu0 0
      %283 = vmatpush1.bf16.msra.mxu0 %v261
      %284 = vmatprep.subr.bf16.mxu0 0
      %285 = vmatpush1.bf16.msra.mxu0 %v260
      %286 = vmatprep.subr.bf16.mxu0 0
      %287 = vmatpush1.bf16.msra.mxu0 %v259
      %288 = vmatprep.subr.bf16.mxu0 0
      %289 = vmatpush1.bf16.msra.mxu0 %v258
      %290 = vmatprep.subr.bf16.mxu0 0
      %291 = vmatpush2.bf16.msra.mxu0 0
      %292 = vmatprep.subr.bf16.mxu0 0
      %293 = vmatpush2.bf16.msra.mxu0 0
      %294 = vmatprep.subr.bf16.mxu0 0
      %295 = vmatpush2.bf16.msra.mxu0 0
      %296 = vmatprep.subr.bf16.mxu0 0
      %297 = vmatpush2.bf16.msra.mxu0 0
      %298 = vmatprep.subr.bf16.mxu0 0
      %299 = vmatpush2.bf16.msra.mxu0 0
      %300 = vmatprep.subr.bf16.mxu0 0
      %301 = vmatpush2.bf16.msra.mxu0 0
      %302 = vmatprep.subr.bf16.mxu0 0
      %303 = vmatpush2.bf16.msra.mxu0 0
      %304 = vmatprep.subr.bf16.mxu0 0
      %305 = vmatpush2.bf16.msra.mxu0 0
      %306 = vmatprep.mubr.bf16.mxu0 0
      %307 = vmatmul.mubr.bf16.gmra.mxu0 %v224
      %v308 = vpop.f32.mrf.mxu0
      %v309 = vadd.f32 0.0, %v308
      %v310 = vpop.f32.mrf.mxu0
      %v311 = vpop.f32.mrf.mxu0
      %v312 = vadd.f32 0.0, %v311
      %v313 = vpop.f32.mrf.mxu0
      %314 = vdwg.mxu0
      %v315 = vld [vmem:[%s2] sm:$0x1]
      %v317 = vlaneseq
      %v318 = vshrl.u32 %v317, 7
      %v319 = vsub.s32 0, %v318
      %v320 = vrot.slane %v315, %v319
      %v322 = vmul.f32 %v309, %v320
      %v323 = vmul.f32 %v312, %v320
      %v324 = vld [vmem:[%s3] sm:$0x1]
      %v326 = vlaneseq
      %v327 = vshrl.u32 %v326, 7
      %v328 = vsub.s32 0, %v327
      %v329 = vrot.slane %v324, %v328
      %v331 = vadd.f32 %v322, %v329
      %v332 = vadd.f32 %v323, %v329
      %v333 = vpack.c.bf16 %v332, %v331
      %v335 = vunpack.c.l.b16 %v333
      %v336 = vunpack.c.h.b16 %v333
      %v337 = vpack.c.b16 %v335, %v335
      %v338 = vpack.c.b16 %v336, %v336
      %341 = vst [vmem:[%s199] sm:$0xf] %v337
      %342 = vst [vmem:[%s199 + $0x4] sm:$0xf] %v338
      %s343 = smul.u32 2, %s15
      %p344 = scmp.lt.s32.totalorder %s343, 3
      %s345 = scalar_select %p344, %s343, 3
      %s346 = smul.addr %s345, 4
      %s347 = scalar_lea.vmem %s4, %s346
      // Predicated region
      $region37: #{forward.49} parent=35 // pred_check
        %p348 = pneg %p122
      $region38: #{forward.49} parent=35 // pred_check_branch
        %350 = sbr.rel (%p348) target = $region40
      $region39: #{forward.49} parent=35 // pred_region
        %s351 = smul.u32 2, %s15
      $region40: #{forward.49} parent=35 // pred_fallthru
        _
    $region36: #{forward.49} parent=5 // pred_fallthru
      _
    %p352 = scmp.le.s32.totalorder 2, %s10
    // Predicated region
    $region41: #{forward.49} parent=5 // pred_check
      %p353 = pneg %p352
    $region42: #{forward.49} parent=5 // pred_check_branch
      %355 = sbr.rel (%p353) target = $region44
    $region43: #{forward.49} parent=5 // pred_region
      %s356 = ssub.s32 %s10, 2
      // Predicated region
      $region45: #{forward.49} parent=43 // pred_check
        %p357 = pneg %p128
      $region46: #{forward.49} parent=43 // pred_check_branch
        %359 = sbr.rel (%p357) target = $region48
      $region47: #{forward.49} parent=43 // pred_region
        %s360 = smul.u32 2, %s16
        %p361 = scmp.lt.s32.totalorder %s360, 3
        %s362 = scalar_select %p361, %s360, 3
        %s363 = smul.addr %s362, 4
        %s364 = scalar_lea.vmem %s4, %s363
      $region48: #{forward.49} parent=43 // pred_fallthru
        _
    $region44: #{forward.49} parent=5 // pred_fallthru
      _
  $region6: #{forward.49} parent=0 // loop_footer
    %s14 = sadd.s32 1, %s10
  $region7: #{forward.49} parent=0 // loop_footer_branch
    %9 = sbr.rel target = $region3
  $region8: #{forward.49} parent=0 // loop_exit
    _

// kernel: forward.51
$region0: #{forward.51}
  #allocation0 [shape = 'u32[]', space=smem, size = 0x4, offset = 0x4, fixed_abs, tag = 'smem constant byte address 0x4 - core index']
  #allocation1 [shape = 'u32[144,128]{1,0:T(1,128)}', space=vmem, size = 0x12000, scoped, tag = 'internal scratch']
  %s0 = inlined_call_operand.vmem [shape: bf16[32,128], index: 0, kind: input, shape index: {}]
  %s1 = inlined_call_operand.vmem [shape: bf16[128,128], index: 1, kind: input, shape index: {}]
  %s2 = inlined_call_operand.vmem [shape: f32[1,128], index: 2, kind: input, shape index: {}]
  %s3 = inlined_call_operand.vmem [shape: f32[1,128], index: 3, kind: input, shape index: {}]
  %s4 = inlined_call_operand.vmem [shape: bf16[32,128], index: 4, kind: output, shape index: {}]
  %s5 = sld [smem:[#allocation0]]
  $region49: #{forward.51} parent=0
    _
  %s7 = ssub.s32 1, %s5
  %s8 = scalar_select 0, %s7, %s5
  loop: start=0, step=1, limit=4
  $region2: #{forward.51} parent=0 // loop_pre_header
    _
  $region3: #{forward.51} parent=0 // loop_header
    %s10 = sphi 0, %s14
    %p11 = scmp.ge.s32.totalorder %s10, 4
    %s20 = sphi 0, %s22
    %s23 = sphi 0, %s20
    %s24 = sphi 0, %s23
    %s40 = sphi 0, %s24
    %s44 = sphi 0, %s44
    %s46 = sphi 0, %s44
    %s47 = sphi 0, %s46
    %s61 = sphi 0, %s47
    %s65 = sphi 0, %s65
    %s67 = sphi 0, %s65
    %s68 = sphi 0, %s67
    %s82 = sphi 0, %s68
    %s86 = sphi 0, %s86
    %s88 = sphi 0, %s86
    %s89 = sphi 0, %s88
    %s103 = sphi 0, %s89
    %s109 = sphi 0, %s111
    %s112 = sphi 0, %s109
    %s113 = sphi 0, %s112
    %s129 = sphi 0, %s113
  $region4: #{forward.51} parent=0 // loop_header_branch
    %13 = sbr.rel (%p11) target = $region8
  $region5: #{forward.51} parent=0 // loop_body
    %s15 = ssub.s32 %s10, 1
    %s16 = ssub.s32 %s10, 2
    %s17 = sadd.s32 %s10, 1
    %s18 = ssub.s32 %s10, %s17
    %p19 = scmp.eq.s32.totalorder %s18, 0
    %s21 = sadd.s32 %s20, 1
    %s22 = scalar_select %p19, %s20, %s21
    %p25 = pneg %p19
    %p26 = scmp.eq.s32.totalorder %s10, 1
    %p27 = por %p25, %p26
    %p28 = scmp.ne.s32.totalorder %s20, %s23
    %p29 = scmp.eq.s32.totalorder %s10, 0
    %p30 = por %p28, %p29
    %p31 = scmp.ne.s32.totalorder %s20, %s23
    %p32 = scmp.eq.s32.totalorder %s15, 1
    %p33 = por %p31, %p32
    %p34 = scmp.ne.s32.totalorder %s23, %s24
    %p35 = scmp.eq.s32.totalorder %s15, 0
    %p36 = por %p34, %p35
    %p37 = scmp.ne.s32.totalorder %s23, %s24
    %p38 = scmp.eq.s32.totalorder %s16, 1
    %p39 = por %p37, %p38
    %p41 = scmp.ne.s32.totalorder %s24, %s40
    %p42 = scmp.eq.s32.totalorder %s16, 0
    %p43 = por %p41, %p42
    %s45 = sadd.s32 %s44, 1
    %p48 = scmp.eq.s32.totalorder %s10, 1
    %p49 = scmp.ne.s32.totalorder %s44, %s46
    %p50 = scmp.eq.s32.totalorder %s10, 0
    %p51 = por %p49, %p50
    %p52 = scmp.ne.s32.totalorder %s44, %s46
    %p53 = scmp.eq.s32.totalorder %s15, 1
    %p54 = por %p52, %p53
    %p55 = scmp.ne.s32.totalorder %s46, %s47
    %p56 = scmp.eq.s32.totalorder %s15, 0
    %p57 = por %p55, %p56
    %p58 = scmp.ne.s32.totalorder %s46, %s47
    %p59 = scmp.eq.s32.totalorder %s16, 1
    %p60 = por %p58, %p59
    %p62 = scmp.ne.s32.totalorder %s47, %s61
    %p63 = scmp.eq.s32.totalorder %s16, 0
    %p64 = por %p62, %p63
    %s66 = sadd.s32 %s65, 1
    %p69 = scmp.eq.s32.totalorder %s10, 1
    %p70 = scmp.ne.s32.totalorder %s65, %s67
    %p71 = scmp.eq.s32.totalorder %s10, 0
    %p72 = por %p70, %p71
    %p73 = scmp.ne.s32.totalorder %s65, %s67
    %p74 = scmp.eq.s32.totalorder %s15, 1
    %p75 = por %p73, %p74
    %p76 = scmp.ne.s32.totalorder %s67, %s68
    %p77 = scmp.eq.s32.totalorder %s15, 0
    %p78 = por %p76, %p77
    %p79 = scmp.ne.s32.totalorder %s67, %s68
    %p80 = scmp.eq.s32.totalorder %s16, 1
    %p81 = por %p79, %p80
    %p83 = scmp.ne.s32.totalorder %s68, %s82
    %p84 = scmp.eq.s32.totalorder %s16, 0
    %p85 = por %p83, %p84
    %s87 = sadd.s32 %s86, 1
    %p90 = scmp.eq.s32.totalorder %s10, 1
    %p91 = scmp.ne.s32.totalorder %s86, %s88
    %p92 = scmp.eq.s32.totalorder %s10, 0
    %p93 = por %p91, %p92
    %p94 = scmp.ne.s32.totalorder %s86, %s88
    %p95 = scmp.eq.s32.totalorder %s15, 1
    %p96 = por %p94, %p95
    %p97 = scmp.ne.s32.totalorder %s88, %s89
    %p98 = scmp.eq.s32.totalorder %s15, 0
    %p99 = por %p97, %p98
    %p100 = scmp.ne.s32.totalorder %s88, %s89
    %p101 = scmp.eq.s32.totalorder %s16, 1
    %p102 = por %p100, %p101
    %p104 = scmp.ne.s32.totalorder %s89, %s103
    %p105 = scmp.eq.s32.totalorder %s16, 0
    %p106 = por %p104, %p105
    %s107 = ssub.s32 %s10, %s17
    %p108 = scmp.eq.s32.totalorder %s107, 0
    %s110 = sadd.s32 %s109, 1
    %s111 = scalar_select %p108, %s109, %s110
    %p114 = pneg %p108
    %p115 = scmp.eq.s32.totalorder %s10, 1
    %p116 = por %p114, %p115
    %p117 = scmp.ne.s32.totalorder %s109, %s112
    %p118 = scmp.eq.s32.totalorder %s10, 0
    %p119 = por %p117, %p118
    %p120 = scmp.ne.s32.totalorder %s109, %s112
    %p121 = scmp.eq.s32.totalorder %s15, 1
    %p122 = por %p120, %p121
    %p123 = scmp.ne.s32.totalorder %s112, %s113
    %p124 = scmp.eq.s32.totalorder %s15, 0
    %p125 = por %p123, %p124
    %p126 = scmp.ne.s32.totalorder %s112, %s113
    %p127 = scmp.eq.s32.totalorder %s16, 1
    %p128 = por %p126, %p127
    %p130 = scmp.ne.s32.totalorder %s113, %s129
    %p131 = scmp.eq.s32.totalorder %s16, 0
    %p132 = por %p130, %p131
    %p133 = scmp.le.s32.totalorder 1, %s10
    %p134 = scmp.lt.s32.totalorder %s10, 3
    %p135 = pnand %p133, %p134
    %p136 = pneg %p135
    // Predicated region
    $region9: #{forward.51} parent=5 // pred_check
      _
    $region10: #{forward.51} parent=5 // pred_check_branch
      %138 = sbr.rel (%p135) target = $region12
    $region11: #{forward.51} parent=5 // pred_region
      %s139 = ssub.s32 %s10, 1
      // Predicated region
      $region13: #{forward.51} parent=11 // pred_check
        %p140 = pneg %p57
      $region14: #{forward.51} parent=11 // pred_check_branch
        %142 = sbr.rel (%p140) target = $region16
      $region15: #{forward.51} parent=11 // pred_region
        _
      $region16: #{forward.51} parent=11 // pred_fallthru
        _
      // Predicated region
      $region17: #{forward.51} parent=11 // pred_check
        %p143 = pneg %p78
      $region18: #{forward.51} parent=11 // pred_check_branch
        %145 = sbr.rel (%p143) target = $region20
      $region19: #{forward.51} parent=11 // pred_region
        _
      $region20: #{forward.51} parent=11 // pred_fallthru
        _
      // Predicated region
      $region21: #{forward.51} parent=11 // pred_check
        %p146 = pneg %p99
      $region22: #{forward.51} parent=11 // pred_check_branch
        %148 = sbr.rel (%p146) target = $region24
      $region23: #{forward.51} parent=11 // pred_region
        _
      $region24: #{forward.51} parent=11 // pred_fallthru
        _
    $region12: #{forward.51} parent=5 // pred_fallthru
      _
    %p149 = scmp.lt.s32.totalorder %s10, 2
    // Predicated region
    $region25: #{forward.51} parent=5 // pred_check
      %p150 = pneg %p149
    $region26: #{forward.51} parent=5 // pred_check_branch
      %152 = sbr.rel (%p150) target = $region28
    $region27: #{forward.51} parent=5 // pred_region
      // Predicated region
      $region29: #{forward.51} parent=27 // pred_check
        %p153 = pneg %p30
      $region30: #{forward.51} parent=27 // pred_check_branch
        %155 = sbr.rel (%p153) target = $region32
      $region31: #{forward.51} parent=27 // pred_region
        %s156 = smul.u32 2, %s10
        %p157 = scmp.lt.s32.totalorder %s156, 3
        %s158 = scalar_select %p157, %s156, 3
        %s159 = smul.addr %s158, 4
        %s160 = scalar_lea.vmem %s0, %s159
        %s161 = smul.u32 2, %s10
      $region32: #{forward.51} parent=27 // pred_fallthru
        _
    $region28: #{forward.51} parent=5 // pred_fallthru
      _
    %p162 = scmp.le.s32.totalorder 1, %s10
    %p163 = scmp.lt.s32.totalorder %s10, 3
    %p164 = pnand %p162, %p163
    %p165 = pneg %p164
    // Predicated region
    $region33: #{forward.51} parent=5 // pred_check
      _
    $region34: #{forward.51} parent=5 // pred_check_branch
      %167 = sbr.rel (%p164) target = $region36
    $region35: #{forward.51} parent=5 // pred_region
      %s168 = ssub.s32 %s10, 1
      %s169 = smul.u32 2, %s15
      %p170 = scmp.lt.s32.totalorder %s169, 3
      %s171 = scalar_select %p170, %s169, 3
      %s172 = smul.addr %s171, 4
      %s173 = scalar_lea.vmem %s0, %s172
      %p174 = pneg %p36
      %p175 = pneg %p33
      %p176 = pneg %p57
      %p177 = pneg %p54
      %p178 = pneg %p78
      %p179 = pneg %p75
      %p180 = pneg %p99
      %p181 = pneg %p96
      %p182 = pneg %p125
      %p183 = pneg %p122
      %s184 = smul.u32 2, %s15
      %p185 = scmp.lt.s32.totalorder %s184, 3
      %s186 = scalar_select %p185, %s184, 3
      %s187 = smul.addr %s186, 4
      %s188 = scalar_lea.vmem %s4, %s187
      %s189 = smul.u32 2, %s15
      %p190 = scmp.lt.s32.totalorder %s189, 3
      %s191 = scalar_select %p190, %s189, 3
      %s192 = smul.addr %s191, 4
      %s193 = scalar_lea.vmem %s0, %s192
      %s194 = smul.u32 2, %s15
      %s195 = smul.u32 2, %s15
      %p196 = scmp.lt.s32.totalorder %s195, 3
      %s197 = scalar_select %p196, %s195, 3
      %s198 = smul.addr %s197, 4
      %s199 = scalar_lea.vmem %s4, %s198
      %s200 = smul.u32 2, %s15
      %v202 = vld [vmem:[%s193] sm:$0xf]
      %v203 = vld [vmem:[%s193 + $0x4] sm:$0xf]
      %v204 = vld [vmem:[%s1] sm:$0xf]
      %v205 = vld [vmem:[%s1 + $0x4] sm:$0xf]
      %v206 = vld [vmem:[%s1 + $0x8] sm:$0xf]
      %v207 = vld [vmem:[%s1 + $0xc] sm:$0xf]
      %v208 = vld [vmem:[%s1 + $0x10] sm:$0xf]
      %v209 = vld [vmem:[%s1 + $0x14] sm:$0xf]
      %v210 = vld [vmem:[%s1 + $0x18] sm:$0xf]
      %v211 = vld [vmem:[%s1 + $0x1c] sm:$0xf]
      %v212 = vld [vmem:[%s1 + $0x20] sm:$0xf]
      %v213 = vld [vmem:[%s1 + $0x24] sm:$0xf]
      %v214 = vld [vmem:[%s1 + $0x28] sm:$0xf]
      %v215 = vld [vmem:[%s1 + $0x2c] sm:$0xf]
      %v216 = vld [vmem:[%s1 + $0x30] sm:$0xf]
      %v217 = vld [vmem:[%s1 + $0x34] sm:$0xf]
      %v218 = vld [vmem:[%s1 + $0x38] sm:$0xf]
      %v219 = vld [vmem:[%s1 + $0x3c] sm:$0xf]
      %v222 = vunpack.c.l.b16 %v202
      %v223 = vunpack.c.l.b16 %v203
      %v224 = vpack.c.b16 %v223, %v222
      %v242 = vunpack.c.l.b16 %v204
      %v243 = vunpack.c.l.b16 %v205
      %v244 = vunpack.c.l.b16 %v206
      %v245 = vunpack.c.l.b16 %v207
      %v246 = vunpack.c.l.b16 %v208
      %v247 = vunpack.c.l.b16 %v209
      %v248 = vunpack.c.l.b16 %v210
      %v249 = vunpack.c.l.b16 %v211
      %v250 = vunpack.c.l.b16 %v212
      %v251 = vunpack.c.l.b16 %v213
      %v252 = vunpack.c.l.b16 %v214
      %v253 = vunpack.c.l.b16 %v215
      %v254 = vunpack.c.l.b16 %v216
      %v255 = vunpack.c.l.b16 %v217
      %v256 = vunpack.c.l.b16 %v218
      %v257 = vunpack.c.l.b16 %v219
      %v258 = vpack.c.b16 %v243, %v242
      %v259 = vpack.c.b16 %v245, %v244
      %v260 = vpack.c.b16 %v247, %v246
      %v261 = vpack.c.b16 %v249, %v248
      %v262 = vpack.c.b16 %v251, %v250
      %v263 = vpack.c.b16 %v253, %v252
      %v264 = vpack.c.b16 %v255, %v254
      %v265 = vpack.c.b16 %v257, %v256
      %274 = vmatprep.subr.bf16.mxu0 0
      %275 = vmatpush1.bf16.msra.mxu0 %v265
      %276 = vmatprep.subr.bf16.mxu0 0
      %277 = vmatpush1.bf16.msra.mxu0 %v264
      %278 = vmatprep.subr.bf16.mxu0 0
      %279 = vmatpush1.bf16.msra.mxu0 %v263
      %280 = vmatprep.subr.bf16.mxu0 0
      %281 = vmatpush1.bf16.msra.mxu0 %v262
      %282 = vmatprep.subr.bf16.mxu0 0
      %283 = vmatpush1.bf16.msra.mxu0 %v261
      %284 = vmatprep.subr.bf16.mxu0 0
      %285 = vmatpush1.bf16.msra.mxu0 %v260
      %286 = vmatprep.subr.bf16.mxu0 0
      %287 = vmatpush1.bf16.msra.mxu0 %v259
      %288 = vmatprep.subr.bf16.mxu0 0
      %289 = vmatpush1.bf16.msra.mxu0 %v258
      %290 = vmatprep.subr.bf16.mxu0 0
      %291 = vmatpush2.bf16.msra.mxu0 0
      %292 = vmatprep.subr.bf16.mxu0 0
      %293 = vmatpush2.bf16.msra.mxu0 0
      %294 = vmatprep.subr.bf16.mxu0 0
      %295 = vmatpush2.bf16.msra.mxu0 0
      %296 = vmatprep.subr.bf16.mxu0 0
      %297 = vmatpush2.bf16.msra.mxu0 0
      %298 = vmatprep.subr.bf16.mxu0 0
      %299 = vmatpush2.bf16.msra.mxu0 0
      %300 = vmatprep.subr.bf16.mxu0 0
      %301 = vmatpush2.bf16.msra.mxu0 0
      %302 = vmatprep.subr.bf16.mxu0 0
      %303 = vmatpush2.bf16.msra.mxu0 0
      %304 = vmatprep.subr.bf16.mxu0 0
      %305 = vmatpush2.bf16.msra.mxu0 0
      %306 = vmatprep.mubr.bf16.mxu0 0
      %307 = vmatmul.mubr.bf16.gmra.mxu0 %v224
      %v308 = vpop.f32.mrf.mxu0
      %v309 = vadd.f32 0.0, %v308
      %v310 = vpop.f32.mrf.mxu0
      %v311 = vpop.f32.mrf.mxu0
      %v312 = vadd.f32 0.0, %v311
      %v313 = vpop.f32.mrf.mxu0
      %314 = vdwg.mxu0
      %v315 = vld [vmem:[%s2] sm:$0x1]
      %v317 = vlaneseq
      %v318 = vshrl.u32 %v317, 7
      %v319 = vsub.s32 0, %v318
      %v320 = vrot.slane %v315, %v319
      %v322 = vmul.f32 %v309, %v320
      %v323 = vmul.f32 %v312, %v320
      %v324 = vld [vmem:[%s3] sm:$0x1]
      %v326 = vlaneseq
      %v327 = vshrl.u32 %v326, 7
      %v328 = vsub.s32 0, %v327
      %v329 = vrot.slane %v324, %v328
      %v331 = vadd.f32 %v322, %v329
      %v332 = vadd.f32 %v323, %v329
      %v333 = vmax.f32 %v331, 0.0
      %v334 = vmax.f32 %v332, 0.0
      %v335 = vpack.c.bf16 %v334, %v333
      %v337 = vunpack.c.l.b16 %v335
      %v338 = vunpack.c.h.b16 %v335
      %v339 = vpack.c.b16 %v337, %v337
      %v340 = vpack.c.b16 %v338, %v338
      %343 = vst [vmem:[%s199] sm:$0xf] %v339
      %344 = vst [vmem:[%s199 + $0x4] sm:$0xf] %v340
      %s345 = smul.u32 2, %s15
      %p346 = scmp.lt.s32.totalorder %s345, 3
      %s347 = scalar_select %p346, %s345, 3
      %s348 = smul.addr %s347, 4
      %s349 = scalar_lea.vmem %s4, %s348
      // Predicated region
      $region37: #{forward.51} parent=35 // pred_check
        %p350 = pneg %p122
      $region38: #{forward.51} parent=35 // pred_check_branch
        %352 = sbr.rel (%p350) target = $region40
      $region39: #{forward.51} parent=35 // pred_region
        %s353 = smul.u32 2, %s15
      $region40: #{forward.51} parent=35 // pred_fallthru
        _
    $region36: #{forward.51} parent=5 // pred_fallthru
      _
    %p354 = scmp.le.s32.totalorder 2, %s10
    // Predicated region
    $region41: #{forward.51} parent=5 // pred_check
      %p355 = pneg %p354
    $region42: #{forward.51} parent=5 // pred_check_branch
      %357 = sbr.rel (%p355) target = $region44
    $region43: #{forward.51} parent=5 // pred_region
      %s358 = ssub.s32 %s10, 2
      // Predicated region
      $region45: #{forward.51} parent=43 // pred_check
        %p359 = pneg %p128
      $region46: #{forward.51} parent=43 // pred_check_branch
        %361 = sbr.rel (%p359) target = $region48
      $region47: #{forward.51} parent=43 // pred_region
        %s362 = smul.u32 2, %s16
        %p363 = scmp.lt.s32.totalorder %s362, 3
        %s364 = scalar_select %p363, %s362, 3
        %s365 = smul.addr %s364, 4
        %s366 = scalar_lea.vmem %s4, %s365
      $region48: #{forward.51} parent=43 // pred_fallthru
        _
    $region44: #{forward.51} parent=5 // pred_fallthru
      _
  $region6: #{forward.51} parent=0 // loop_footer
    %s14 = sadd.s32 1, %s10
  $region7: #{forward.51} parent=0 // loop_footer_branch
    %9 = sbr.rel target = $region3
  $region8: #{forward.51} parent=0 // loop_exit
    _

// kernel: forward.50
$region0: #{forward.50}
  #allocation0 [shape = 'u32[]', space=smem, size = 0x4, offset = 0x4, fixed_abs, tag = 'smem constant byte address 0x4 - core index']
  #allocation1 [shape = 'u32[144,128]{1,0:T(1,128)}', space=vmem, size = 0x12000, scoped, tag = 'internal scratch']
  %s0 = inlined_call_operand.vmem [shape: bf16[32,1152], index: 0, kind: input, shape index: {}]
  %s1 = inlined_call_operand.vmem [shape: bf16[1152,128], index: 1, kind: input, shape index: {}]
  %s2 = inlined_call_operand.vmem [shape: f32[1,128], index: 2, kind: input, shape index: {}]
  %s3 = inlined_call_operand.vmem [shape: f32[1,128], index: 3, kind: input, shape index: {}]
  %s4 = inlined_call_operand.vmem [shape: bf16[128,128], index: 4, kind: input, shape index: {}]
  %s5 = inlined_call_operand.vmem [shape: f32[1,128], index: 5, kind: input, shape index: {}]
  %s6 = inlined_call_operand.vmem [shape: f32[1,128], index: 6, kind: input, shape index: {}]
  %s7 = inlined_call_operand.vmem [shape: bf16[32,128], index: 7, kind: input, shape index: {}]
  %s8 = inlined_call_operand.vmem [shape: bf16[32,128], index: 8, kind: output, shape index: {}]
  %s9 = sld [smem:[#allocation0]]
  $region65: #{forward.50} parent=0
    _
  %s11 = ssub.s32 1, %s9
  %s12 = scalar_select 0, %s11, %s9
  loop: start=0, step=1, limit=4
  $region2: #{forward.50} parent=0 // loop_pre_header
    _
  $region3: #{forward.50} parent=0 // loop_header
    %s14 = sphi 0, %s18
    %p15 = scmp.ge.s32.totalorder %s14, 4
    %s24 = sphi 0, %s26
    %s27 = sphi 0, %s24
    %s28 = sphi 0, %s27
    %s44 = sphi 0, %s28
    %s48 = sphi 0, %s48
    %s50 = sphi 0, %s48
    %s51 = sphi 0, %s50
    %s65 = sphi 0, %s51
    %s69 = sphi 0, %s69
    %s71 = sphi 0, %s69
    %s72 = sphi 0, %s71
    %s86 = sphi 0, %s72
    %s90 = sphi 0, %s90
    %s92 = sphi 0, %s90
    %s93 = sphi 0, %s92
    %s107 = sphi 0, %s93
    %s111 = sphi 0, %s111
    %s113 = sphi 0, %s111
    %s114 = sphi 0, %s113
    %s128 = sphi 0, %s114
    %s132 = sphi 0, %s132
    %s134 = sphi 0, %s132
    %s135 = sphi 0, %s134
    %s149 = sphi 0, %s135
    %s153 = sphi 0, %s153
    %s155 = sphi 0, %s153
    %s156 = sphi 0, %s155
    %s170 = sphi 0, %s156
    %s176 = sphi 0, %s178
    %s179 = sphi 0, %s176
    %s180 = sphi 0, %s179
    %s196 = sphi 0, %s180
    %s202 = sphi 0, %s204
    %s205 = sphi 0, %s202
    %s206 = sphi 0, %s205
    %s222 = sphi 0, %s206
  $region4: #{forward.50} parent=0 // loop_header_branch
    %17 = sbr.rel (%p15) target = $region8
  $region5: #{forward.50} parent=0 // loop_body
    %s19 = ssub.s32 %s14, 1
    %s20 = ssub.s32 %s14, 2
    %s21 = sadd.s32 %s14, 1
    %s22 = ssub.s32 %s14, %s21
    %p23 = scmp.eq.s32.totalorder %s22, 0
    %s25 = sadd.s32 %s24, 1
    %s26 = scalar_select %p23, %s24, %s25
    %p29 = pneg %p23
    %p30 = scmp.eq.s32.totalorder %s14, 1
    %p31 = por %p29, %p30
    %p32 = scmp.ne.s32.totalorder %s24, %s27
    %p33 = scmp.eq.s32.totalorder %s14, 0
    %p34 = por %p32, %p33
    %p35 = scmp.ne.s32.totalorder %s24, %s27
    %p36 = scmp.eq.s32.totalorder %s19, 1
    %p37 = por %p35, %p36
    %p38 = scmp.ne.s32.totalorder %s27, %s28
    %p39 = scmp.eq.s32.totalorder %s19, 0
    %p40 = por %p38, %p39
    %p41 = scmp.ne.s32.totalorder %s27, %s28
    %p42 = scmp.eq.s32.totalorder %s20, 1
    %p43 = por %p41, %p42
    %p45 = scmp.ne.s32.totalorder %s28, %s44
    %p46 = scmp.eq.s32.totalorder %s20, 0
    %p47 = por %p45, %p46
    %s49 = sadd.s32 %s48, 1
    %p52 = scmp.eq.s32.totalorder %s14, 1
    %p53 = scmp.ne.s32.totalorder %s48, %s50
    %p54 = scmp.eq.s32.totalorder %s14, 0
    %p55 = por %p53, %p54
    %p56 = scmp.ne.s32.totalorder %s48, %s50
    %p57 = scmp.eq.s32.totalorder %s19, 1
    %p58 = por %p56, %p57
    %p59 = scmp.ne.s32.totalorder %s50, %s51
    %p60 = scmp.eq.s32.totalorder %s19, 0
    %p61 = por %p59, %p60
    %p62 = scmp.ne.s32.totalorder %s50, %s51
    %p63 = scmp.eq.s32.totalorder %s20, 1
    %p64 = por %p62, %p63
    %p66 = scmp.ne.s32.totalorder %s51, %s65
    %p67 = scmp.eq.s32.totalorder %s20, 0
    %p68 = por %p66, %p67
    %s70 = sadd.s32 %s69, 1
    %p73 = scmp.eq.s32.totalorder %s14, 1
    %p74 = scmp.ne.s32.totalorder %s69, %s71
    %p75 = scmp.eq.s32.totalorder %s14, 0
    %p76 = por %p74, %p75
    %p77 = scmp.ne.s32.totalorder %s69, %s71
    %p78 = scmp.eq.s32.totalorder %s19, 1
    %p79 = por %p77, %p78
    %p80 = scmp.ne.s32.totalorder %s71, %s72
    %p81 = scmp.eq.s32.totalorder %s19, 0
    %p82 = por %p80, %p81
    %p83 = scmp.ne.s32.totalorder %s71, %s72
    %p84 = scmp.eq.s32.totalorder %s20, 1
    %p85 = por %p83, %p84
    %p87 = scmp.ne.s32.totalorder %s72, %s86
    %p88 = scmp.eq.s32.totalorder %s20, 0
    %p89 = por %p87, %p88
    %s91 = sadd.s32 %s90, 1
    %p94 = scmp.eq.s32.totalorder %s14, 1
    %p95 = scmp.ne.s32.totalorder %s90, %s92
    %p96 = scmp.eq.s32.totalorder %s14, 0
    %p97 = por %p95, %p96
    %p98 = scmp.ne.s32.totalorder %s90, %s92
    %p99 = scmp.eq.s32.totalorder %s19, 1
    %p100 = por %p98, %p99
    %p101 = scmp.ne.s32.totalorder %s92, %s93
    %p102 = scmp.eq.s32.totalorder %s19, 0
    %p103 = por %p101, %p102
    %p104 = scmp.ne.s32.totalorder %s92, %s93
    %p105 = scmp.eq.s32.totalorder %s20, 1
    %p106 = por %p104, %p105
    %p108 = scmp.ne.s32.totalorder %s93, %s107
    %p109 = scmp.eq.s32.totalorder %s20, 0
    %p110 = por %p108, %p109
    %s112 = sadd.s32 %s111, 1
    %p115 = scmp.eq.s32.totalorder %s14, 1
    %p116 = scmp.ne.s32.totalorder %s111, %s113
    %p117 = scmp.eq.s32.totalorder %s14, 0
    %p118 = por %p116, %p117
    %p119 = scmp.ne.s32.totalorder %s111, %s113
    %p120 = scmp.eq.s32.totalorder %s19, 1
    %p121 = por %p119, %p120
    %p122 = scmp.ne.s32.totalorder %s113, %s114
    %p123 = scmp.eq.s32.totalorder %s19, 0
    %p124 = por %p122, %p123
    %p125 = scmp.ne.s32.totalorder %s113, %s114
    %p126 = scmp.eq.s32.totalorder %s20, 1
    %p127 = por %p125, %p126
    %p129 = scmp.ne.s32.totalorder %s114, %s128
    %p130 = scmp.eq.s32.totalorder %s20, 0
    %p131 = por %p129, %p130
    %s133 = sadd.s32 %s132, 1
    %p136 = scmp.eq.s32.totalorder %s14, 1
    %p137 = scmp.ne.s32.totalorder %s132, %s134
    %p138 = scmp.eq.s32.totalorder %s14, 0
    %p139 = por %p137, %p138
    %p140 = scmp.ne.s32.totalorder %s132, %s134
    %p141 = scmp.eq.s32.totalorder %s19, 1
    %p142 = por %p140, %p141
    %p143 = scmp.ne.s32.totalorder %s134, %s135
    %p144 = scmp.eq.s32.totalorder %s19, 0
    %p145 = por %p143, %p144
    %p146 = scmp.ne.s32.totalorder %s134, %s135
    %p147 = scmp.eq.s32.totalorder %s20, 1
    %p148 = por %p146, %p147
    %p150 = scmp.ne.s32.totalorder %s135, %s149
    %p151 = scmp.eq.s32.totalorder %s20, 0
    %p152 = por %p150, %p151
    %s154 = sadd.s32 %s153, 1
    %p157 = scmp.eq.s32.totalorder %s14, 1
    %p158 = scmp.ne.s32.totalorder %s153, %s155
    %p159 = scmp.eq.s32.totalorder %s14, 0
    %p160 = por %p158, %p159
    %p161 = scmp.ne.s32.totalorder %s153, %s155
    %p162 = scmp.eq.s32.totalorder %s19, 1
    %p163 = por %p161, %p162
    %p164 = scmp.ne.s32.totalorder %s155, %s156
    %p165 = scmp.eq.s32.totalorder %s19, 0
    %p166 = por %p164, %p165
    %p167 = scmp.ne.s32.totalorder %s155, %s156
    %p168 = scmp.eq.s32.totalorder %s20, 1
    %p169 = por %p167, %p168
    %p171 = scmp.ne.s32.totalorder %s156, %s170
    %p172 = scmp.eq.s32.totalorder %s20, 0
    %p173 = por %p171, %p172
    %s174 = ssub.s32 %s14, %s21
    %p175 = scmp.eq.s32.totalorder %s174, 0
    %s177 = sadd.s32 %s176, 1
    %s178 = scalar_select %p175, %s176, %s177
    %p181 = pneg %p175
    %p182 = scmp.eq.s32.totalorder %s14, 1
    %p183 = por %p181, %p182
    %p184 = scmp.ne.s32.totalorder %s176, %s179
    %p185 = scmp.eq.s32.totalorder %s14, 0
    %p186 = por %p184, %p185
    %p187 = scmp.ne.s32.totalorder %s176, %s179
    %p188 = scmp.eq.s32.totalorder %s19, 1
    %p189 = por %p187, %p188
    %p190 = scmp.ne.s32.totalorder %s179, %s180
    %p191 = scmp.eq.s32.totalorder %s19, 0
    %p192 = por %p190, %p191
    %p193 = scmp.ne.s32.totalorder %s179, %s180
    %p194 = scmp.eq.s32.totalorder %s20, 1
    %p195 = por %p193, %p194
    %p197 = scmp.ne.s32.totalorder %s180, %s196
    %p198 = scmp.eq.s32.totalorder %s20, 0
    %p199 = por %p197, %p198
    %s200 = ssub.s32 %s14, %s21
    %p201 = scmp.eq.s32.totalorder %s200, 0
    %s203 = sadd.s32 %s202, 1
    %s204 = scalar_select %p201, %s202, %s203
    %p207 = pneg %p201
    %p208 = scmp.eq.s32.totalorder %s14, 1
    %p209 = por %p207, %p208
    %p210 = scmp.ne.s32.totalorder %s202, %s205
    %p211 = scmp.eq.s32.totalorder %s14, 0
    %p212 = por %p210, %p211
    %p213 = scmp.ne.s32.totalorder %s202, %s205
    %p214 = scmp.eq.s32.totalorder %s19, 1
    %p215 = por %p213, %p214
    %p216 = scmp.ne.s32.totalorder %s205, %s206
    %p217 = scmp.eq.s32.totalorder %s19, 0
    %p218 = por %p216, %p217
    %p219 = scmp.ne.s32.totalorder %s205, %s206
    %p220 = scmp.eq.s32.totalorder %s20, 1
    %p221 = por %p219, %p220
    %p223 = scmp.ne.s32.totalorder %s206, %s222
    %p224 = scmp.eq.s32.totalorder %s20, 0
    %p225 = por %p223, %p224
    %p226 = scmp.le.s32.totalorder 1, %s14
    %p227 = scmp.lt.s32.totalorder %s14, 3
    %p228 = pnand %p226, %p227
    %p229 = pneg %p228
    // Predicated region
    $region9: #{forward.50} parent=5 // pred_check
      _
    $region10: #{forward.50} parent=5 // pred_check_branch
      %231 = sbr.rel (%p228) target = $region12
    $region11: #{forward.50} parent=5 // pred_region
      %s232 = ssub.s32 %s14, 1
      // Predicated region
      $region13: #{forward.50} parent=11 // pred_check
        %p233 = pneg %p61
      $region14: #{forward.50} parent=11 // pred_check_branch
        %235 = sbr.rel (%p233) target = $region16
      $region15: #{forward.50} parent=11 // pred_region
        _
      $region16: #{forward.50} parent=11 // pred_fallthru
        _
      // Predicated region
      $region17: #{forward.50} parent=11 // pred_check
        %p236 = pneg %p82
      $region18: #{forward.50} parent=11 // pred_check_branch
        %238 = sbr.rel (%p236) target = $region20
      $region19: #{forward.50} parent=11 // pred_region
        _
      $region20: #{forward.50} parent=11 // pred_fallthru
        _
      // Predicated region
      $region21: #{forward.50} parent=11 // pred_check
        %p239 = pneg %p103
      $region22: #{forward.50} parent=11 // pred_check_branch
        %241 = sbr.rel (%p239) target = $region24
      $region23: #{forward.50} parent=11 // pred_region
        _
      $region24: #{forward.50} parent=11 // pred_fallthru
        _
      // Predicated region
      $region25: #{forward.50} parent=11 // pred_check
        %p242 = pneg %p124
      $region26: #{forward.50} parent=11 // pred_check_branch
        %244 = sbr.rel (%p242) target = $region28
      $region27: #{forward.50} parent=11 // pred_region
        _
      $region28: #{forward.50} parent=11 // pred_fallthru
        _
      // Predicated region
      $region29: #{forward.50} parent=11 // pred_check
        %p245 = pneg %p145
      $region30: #{forward.50} parent=11 // pred_check_branch
        %247 = sbr.rel (%p245) target = $region32
      $region31: #{forward.50} parent=11 // pred_region
        _
      $region32: #{forward.50} parent=11 // pred_fallthru
        _
      // Predicated region
      $region33: #{forward.50} parent=11 // pred_check
        %p248 = pneg %p166
      $region34: #{forward.50} parent=11 // pred_check_branch
        %250 = sbr.rel (%p248) target = $region36
      $region35: #{forward.50} parent=11 // pred_region
        _
      $region36: #{forward.50} parent=11 // pred_fallthru
        _
    $region12: #{forward.50} parent=5 // pred_fallthru
      _
    %p251 = scmp.lt.s32.totalorder %s14, 2
    // Predicated region
    $region37: #{forward.50} parent=5 // pred_check
      %p252 = pneg %p251
    $region38: #{forward.50} parent=5 // pred_check_branch
      %254 = sbr.rel (%p252) target = $region40
    $region39: #{forward.50} parent=5 // pred_region
      // Predicated region
      $region41: #{forward.50} parent=39 // pred_check
        %p255 = pneg %p34
      $region42: #{forward.50} parent=39 // pred_check_branch
        %257 = sbr.rel (%p255) target = $region44
      $region43: #{forward.50} parent=39 // pred_region
        %s258 = smul.u32 2, %s14
        %p259 = scmp.lt.s32.totalorder %s258, 3
        %s260 = scalar_select %p259, %s258, 3
        %s261 = smul.addr %s260, 9
        %s262 = smul.addr %s261, 4
        %s263 = scalar_lea.vmem %s0, %s262
        %s264 = smul.u32 2, %s14
      $region44: #{forward.50} parent=39 // pred_fallthru
        _
      // Predicated region
      $region45: #{forward.50} parent=39 // pred_check
        %p265 = pneg %p186
      $region46: #{forward.50} parent=39 // pred_check_branch
        %267 = sbr.rel (%p265) target = $region48
      $region47: #{forward.50} parent=39 // pred_region
        %s268 = smul.u32 2, %s14
        %p269 = scmp.lt.s32.totalorder %s268, 3
        %s270 = scalar_select %p269, %s268, 3
        %s271 = smul.addr %s270, 4
        %s272 = scalar_lea.vmem %s7, %s271
        %s273 = smul.u32 2, %s14
      $region48: #{forward.50} parent=39 // pred_fallthru
        _
    $region40: #{forward.50} parent=5 // pred_fallthru
      _
    %p274 = scmp.le.s32.totalorder 1, %s14
    %p275 = scmp.lt.s32.totalorder %s14, 3
    %p276 = pnand %p274, %p275
    %p277 = pneg %p276
    // Predicated region
    $region49: #{forward.50} parent=5 // pred_check
      _
    $region50: #{forward.50} parent=5 // pred_check_branch
      %279 = sbr.rel (%p276) target = $region52
    $region51: #{forward.50} parent=5 // pred_region
      %s280 = ssub.s32 %s14, 1
      %s281 = smul.u32 2, %s19
      %p282 = scmp.lt.s32.totalorder %s281, 3
      %s283 = scalar_select %p282, %s281, 3
      %s284 = smul.addr %s283, 9
      %s285 = smul.addr %s284, 4
      %s286 = scalar_lea.vmem %s0, %s285
      %p287 = pneg %p40
      %p288 = pneg %p37
      %p289 = pneg %p61
      %p290 = pneg %p58
      %p291 = pneg %p82
      %p292 = pneg %p79
      %p293 = pneg %p103
      %p294 = pneg %p100
      %p295 = pneg %p124
      %p296 = pneg %p121
      %p297 = pneg %p145
      %p298 = pneg %p142
      %p299 = pneg %p166
      %p300 = pneg %p163
      %s301 = smul.u32 2, %s19
      %p302 = scmp.lt.s32.totalorder %s301, 3
      %s303 = scalar_select %p302, %s301, 3
      %s304 = smul.addr %s303, 4
      %s305 = scalar_lea.vmem %s7, %s304
      %p306 = pneg %p192
      %p307 = pneg %p189
      %p308 = pneg %p218
      %p309 = pneg %p215
      %s310 = smul.u32 2, %s19
      %p311 = scmp.lt.s32.totalorder %s310, 3
      %s312 = scalar_select %p311, %s310, 3
      %s313 = smul.addr %s312, 4
      %s314 = scalar_lea.vmem %s8, %s313
      %s315 = smul.u32 2, %s19
      %p316 = scmp.lt.s32.totalorder %s315, 3
      %s317 = scalar_select %p316, %s315, 3
      %s318 = smul.addr %s317, 9
      %s319 = smul.addr %s318, 4
      %s320 = scalar_lea.vmem %s0, %s319
      %s321 = smul.u32 2, %s19
      %s322 = smul.u32 2, %s19
      %p323 = scmp.lt.s32.totalorder %s322, 3
      %s324 = scalar_select %p323, %s322, 3
      %s325 = smul.addr %s324, 4
      %s326 = scalar_lea.vmem %s7, %s325
      %s327 = smul.u32 2, %s19
      %s328 = smul.u32 2, %s19
      %p329 = scmp.lt.s32.totalorder %s328, 3
      %s330 = scalar_select %p329, %s328, 3
      %s331 = smul.addr %s330, 4
      %s332 = scalar_lea.vmem %s8, %s331
      %s333 = smul.u32 2, %s19
      %v335 = vld [vmem:[%s320] sm:$0xff]
      %v336 = vld [vmem:[%s320 + $0x8] sm:$0xff]
      %v337 = vld [vmem:[%s320 + $0x10] sm:$0xff]
      %v338 = vld [vmem:[%s320 + $0x18] sm:$0xff]
      %v339 = vld [vmem:[%s320 + $0x20] sm:$0xf]
      %v340 = vld [vmem:[%s320 + $0x24] sm:$0xff]
      %v341 = vld [vmem:[%s320 + $0x2c] sm:$0xff]
      %v342 = vld [vmem:[%s320 + $0x34] sm:$0xff]
      %v343 = vld [vmem:[%s320 + $0x3c] sm:$0xff]
      %v344 = vld [vmem:[%s320 + $0x44] sm:$0xf]
      %v345 = vld [vmem:[%s1] sm:$0xf]
      %v346 = vld [vmem:[%s1 + $0x4] sm:$0xf]
      %v347 = vld [vmem:[%s1 + $0x8] sm:$0xf]
      %v348 = vld [vmem:[%s1 + $0xc] sm:$0xf]
      %v349 = vld [vmem:[%s1 + $0x10] sm:$0xf]
      %v350 = vld [vmem:[%s1 + $0x14] sm:$0xf]
      %v351 = vld [vmem:[%s1 + $0x18] sm:$0xf]
      %v352 = vld [vmem:[%s1 + $0x1c] sm:$0xf]
      %v353 = vld [vmem:[%s1 + $0x20] sm:$0xf]
      %v354 = vld [vmem:[%s1 + $0x24] sm:$0xf]
      %v355 = vld [vmem:[%s1 + $0x28] sm:$0xf]
      %v356 = vld [vmem:[%s1 + $0x2c] sm:$0xf]
      %v357 = vld [vmem:[%s1 + $0x30] sm:$0xf]
      %v358 = vld [vmem:[%s1 + $0x34] sm:$0xf]
      %v359 = vld [vmem:[%s1 + $0x38] sm:$0xf]
      %v360 = vld [vmem:[%s1 + $0x3c] sm:$0xf]
      %v361 = vld [vmem:[%s1 + $0x40] sm:$0xf]
      %v362 = vld [vmem:[%s1 + $0x44] sm:$0xf]
      %v363 = vld [vmem:[%s1 + $0x48] sm:$0xf]
      %v364 = vld [vmem:[%s1 + $0x4c] sm:$0xf]
      %v365 = vld [vmem:[%s1 + $0x50] sm:$0xf]
      %v366 = vld [vmem:[%s1 + $0x54] sm:$0xf]
      %v367 = vld [vmem:[%s1 + $0x58] sm:$0xf]
      %v368 = vld [vmem:[%s1 + $0x5c] sm:$0xf]
      %v369 = vld [vmem:[%s1 + $0x60] sm:$0xf]
      %v370 = vld [vmem:[%s1 + $0x64] sm:$0xf]
      %v371 = vld [vmem:[%s1 + $0x68] sm:$0xf]
      %v372 = vld [vmem:[%s1 + $0x6c] sm:$0xf]
      %v373 = vld [vmem:[%s1 + $0x70] sm:$0xf]
      %v374 = vld [vmem:[%s1 + $0x74] sm:$0xf]
      %v375 = vld [vmem:[%s1 + $0x78] sm:$0xf]
      %v376 = vld [vmem:[%s1 + $0x7c] sm:$0xf]
      %v377 = vld [vmem:[%s1 + $0x80] sm:$0xf]
      %v378 = vld [vmem:[%s1 + $0x84] sm:$0xf]
      %v379 = vld [vmem:[%s1 + $0x88] sm:$0xf]
      %v380 = vld [vmem:[%s1 + $0x8c] sm:$0xf]
      %v381 = vld [vmem:[%s1 + $0x90] sm:$0xf]
      %v382 = vld [vmem:[%s1 + $0x94] sm:$0xf]
      %v383 = vld [vmem:[%s1 + $0x98] sm:$0xf]
      %v384 = vld [vmem:[%s1 + $0x9c] sm:$0xf]
      %v385 = vld [vmem:[%s1 + $0xa0] sm:$0xf]
      %v386 = vld [vmem:[%s1 + $0xa4] sm:$0xf]
      %v387 = vld [vmem:[%s1 + $0xa8] sm:$0xf]
      %v388 = vld [vmem:[%s1 + $0xac] sm:$0xf]
      %v389 = vld [vmem:[%s1 + $0xb0] sm:$0xf]
      %v390 = vld [vmem:[%s1 + $0xb4] sm:$0xf]
      %v391 = vld [vmem:[%s1 + $0xb8] sm:$0xf]
      %v392 = vld [vmem:[%s1 + $0xbc] sm:$0xf]
      %v393 = vld [vmem:[%s1 + $0xc0] sm:$0xf]
      %v394 = vld [vmem:[%s1 + $0xc4] sm:$0xf]
      %v395 = vld [vmem:[%s1 + $0xc8] sm:$0xf]
      %v396 = vld [vmem:[%s1 + $0xcc] sm:$0xf]
      %v397 = vld [vmem:[%s1 + $0xd0] sm:$0xf]
      %v398 = vld [vmem:[%s1 + $0xd4] sm:$0xf]
      %v399 = vld [vmem:[%s1 + $0xd8] sm:$0xf]
      %v400 = vld [vmem:[%s1 + $0xdc] sm:$0xf]
      %v401 = vld [vmem:[%s1 + $0xe0] sm:$0xf]
      %v402 = vld [vmem:[%s1 + $0xe4] sm:$0xf]
      %v403 = vld [vmem:[%s1 + $0xe8] sm:$0xf]
      %v404 = vld [vmem:[%s1 + $0xec] sm:$0xf]
      %v405 = vld [vmem:[%s1 + $0xf0] sm:$0xf]
      %v406 = vld [vmem:[%s1 + $0xf4] sm:$0xf]
      %v407 = vld [vmem:[%s1 + $0xf8] sm:$0xf]
      %v408 = vld [vmem:[%s1 + $0xfc] sm:$0xf]
      %v409 = vld [vmem:[%s1 + $0x100] sm:$0xf]
      %v410 = vld [vmem:[%s1 + $0x104] sm:$0xf]
      %v411 = vld [vmem:[%s1 + $0x108] sm:$0xf]
      %v412 = vld [vmem:[%s1 + $0x10c] sm:$0xf]
      %v413 = vld [vmem:[%s1 + $0x110] sm:$0xf]
      %v414 = vld [vmem:[%s1 + $0x114] sm:$0xf]
      %v415 = vld [vmem:[%s1 + $0x118] sm:$0xf]
      %v416 = vld [vmem:[%s1 + $0x11c] sm:$0xf]
      %v417 = vld [vmem:[%s1 + $0x120] sm:$0xf]
      %v418 = vld [vmem:[%s1 + $0x124] sm:$0xf]
      %v419 = vld [vmem:[%s1 + $0x128] sm:$0xf]
      %v420 = vld [vmem:[%s1 + $0x12c] sm:$0xf]
      %v421 = vld [vmem:[%s1 + $0x130] sm:$0xf]
      %v422 = vld [vmem:[%s1 + $0x134] sm:$0xf]
      %v423 = vld [vmem:[%s1 + $0x138] sm:$0xf]
      %v424 = vld [vmem:[%s1 + $0x13c] sm:$0xf]
      %v425 = vld [vmem:[%s1 + $0x140] sm:$0xf]
      %v426 = vld [vmem:[%s1 + $0x144] sm:$0xf]
      %v427 = vld [vmem:[%s1 + $0x148] sm:$0xf]
      %v428 = vld [vmem:[%s1 + $0x14c] sm:$0xf]
      %v429 = vld [vmem:[%s1 + $0x150] sm:$0xf]
      %v430 = vld [vmem:[%s1 + $0x154] sm:$0xf]
      %v431 = vld [vmem:[%s1 + $0x158] sm:$0xf]
      %v432 = vld [vmem:[%s1 + $0x15c] sm:$0xf]
      %v433 = vld [vmem:[%s1 + $0x160] sm:$0xf]
      %v434 = vld [vmem:[%s1 + $0x164] sm:$0xf]
      %v435 = vld [vmem:[%s1 + $0x168] sm:$0xf]
      %v436 = vld [vmem:[%s1 + $0x16c] sm:$0xf]
      %v437 = vld [vmem:[%s1 + $0x170] sm:$0xf]
      %v438 = vld [vmem:[%s1 + $0x174] sm:$0xf]
      %v439 = vld [vmem:[%s1 + $0x178] sm:$0xf]
      %v440 = vld [vmem:[%s1 + $0x17c] sm:$0xf]
      %v441 = vld [vmem:[%s1 + $0x180] sm:$0xf]
      %v442 = vld [vmem:[%s1 + $0x184] sm:$0xf]
      %v443 = vld [vmem:[%s1 + $0x188] sm:$0xf]
      %v444 = vld [vmem:[%s1 + $0x18c] sm:$0xf]
      %v445 = vld [vmem:[%s1 + $0x190] sm:$0xf]
      %v446 = vld [vmem:[%s1 + $0x194] sm:$0xf]
      %v447 = vld [vmem:[%s1 + $0x198] sm:$0xf]
      %v448 = vld [vmem:[%s1 + $0x19c] sm:$0xf]
      %v449 = vld [vmem:[%s1 + $0x1a0] sm:$0xf]
      %v450 = vld [vmem:[%s1 + $0x1a4] sm:$0xf]
      %v451 = vld [vmem:[%s1 + $0x1a8] sm:$0xf]
      %v452 = vld [vmem:[%s1 + $0x1ac] sm:$0xf]
      %v453 = vld [vmem:[%s1 + $0x1b0] sm:$0xf]
      %v454 = vld [vmem:[%s1 + $0x1b4] sm:$0xf]
      %v455 = vld [vmem:[%s1 + $0x1b8] sm:$0xf]
      %v456 = vld [vmem:[%s1 + $0x1bc] sm:$0xf]
      %v457 = vld [vmem:[%s1 + $0x1c0] sm:$0xf]
      %v458 = vld [vmem:[%s1 + $0x1c4] sm:$0xf]
      %v459 = vld [vmem:[%s1 + $0x1c8] sm:$0xf]
      %v460 = vld [vmem:[%s1 + $0x1cc] sm:$0xf]
      %v461 = vld [vmem:[%s1 + $0x1d0] sm:$0xf]
      %v462 = vld [vmem:[%s1 + $0x1d4] sm:$0xf]
      %v463 = vld [vmem:[%s1 + $0x1d8] sm:$0xf]
      %v464 = vld [vmem:[%s1 + $0x1dc] sm:$0xf]
      %v465 = vld [vmem:[%s1 + $0x1e0] sm:$0xf]
      %v466 = vld [vmem:[%s1 + $0x1e4] sm:$0xf]
      %v467 = vld [vmem:[%s1 + $0x1e8] sm:$0xf]
      %v468 = vld [vmem:[%s1 + $0x1ec] sm:$0xf]
      %v469 = vld [vmem:[%s1 + $0x1f0] sm:$0xf]
      %v470 = vld [vmem:[%s1 + $0x1f4] sm:$0xf]
      %v471 = vld [vmem:[%s1 + $0x1f8] sm:$0xf]
      %v472 = vld [vmem:[%s1 + $0x1fc] sm:$0xf]
      %v473 = vld [vmem:[%s1 + $0x200] sm:$0xf]
      %v474 = vld [vmem:[%s1 + $0x204] sm:$0xf]
      %v475 = vld [vmem:[%s1 + $0x208] sm:$0xf]
      %v476 = vld [vmem:[%s1 + $0x20c] sm:$0xf]
      %v477 = vld [vmem:[%s1 + $0x210] sm:$0xf]
      %v478 = vld [vmem:[%s1 + $0x214] sm:$0xf]
      %v479 = vld [vmem:[%s1 + $0x218] sm:$0xf]
      %v480 = vld [vmem:[%s1 + $0x21c] sm:$0xf]
      %v481 = vld [vmem:[%s1 + $0x220] sm:$0xf]
      %v482 = vld [vmem:[%s1 + $0x224] sm:$0xf]
      %v483 = vld [vmem:[%s1 + $0x228] sm:$0xf]
      %v484 = vld [vmem:[%s1 + $0x22c] sm:$0xf]
      %v485 = vld [vmem:[%s1 + $0x230] sm:$0xf]
      %v486 = vld [vmem:[%s1 + $0x234] sm:$0xf]
      %v487 = vld [vmem:[%s1 + $0x238] sm:$0xf]
      %v488 = vld [vmem:[%s1 + $0x23c] sm:$0xf]
      %v499 = vunpack.c.l.b16 %v335
      %v500 = vunpack.c.h.b16 %v335
      %v501 = vunpack.c.l.b16 %v336
      %v502 = vunpack.c.h.b16 %v336
      %v503 = vunpack.c.l.b16 %v337
      %v504 = vunpack.c.h.b16 %v337
      %v505 = vunpack.c.l.b16 %v338
      %v506 = vunpack.c.h.b16 %v338
      %v507 = vunpack.c.l.b16 %v339
      %v508 = vunpack.c.l.b16 %v340
      %v509 = vunpack.c.h.b16 %v340
      %v510 = vunpack.c.l.b16 %v341
      %v511 = vunpack.c.h.b16 %v341
      %v512 = vunpack.c.l.b16 %v342
      %v513 = vunpack.c.h.b16 %v342
      %v514 = vunpack.c.l.b16 %v343
      %v515 = vunpack.c.h.b16 %v343
      %v516 = vunpack.c.l.b16 %v344
      %v517 = vpack.c.b16 %v508, %v499
      %v518 = vpack.c.b16 %v509, %v500
      %v519 = vpack.c.b16 %v510, %v501
      %v520 = vpack.c.b16 %v511, %v502
      %v521 = vpack.c.b16 %v512, %v503
      %v522 = vpack.c.b16 %v513, %v504
      %v523 = vpack.c.b16 %v514, %v505
      %v524 = vpack.c.b16 %v515, %v506
      %v525 = vpack.c.b16 %v516, %v507
      %v679 = vunpack.c.l.b16 %v345
      %v680 = vunpack.c.l.b16 %v346
      %v681 = vunpack.c.l.b16 %v347
      %v682 = vunpack.c.l.b16 %v348
      %v683 = vunpack.c.l.b16 %v349
      %v684 = vunpack.c.l.b16 %v350
      %v685 = vunpack.c.l.b16 %v351
      %v686 = vunpack.c.l.b16 %v352
      %v687 = vunpack.c.l.b16 %v353
      %v688 = vunpack.c.l.b16 %v354
      %v689 = vunpack.c.l.b16 %v355
      %v690 = vunpack.c.l.b16 %v356
      %v691 = vunpack.c.l.b16 %v357
      %v692 = vunpack.c.l.b16 %v358
      %v693 = vunpack.c.l.b16 %v359
      %v694 = vunpack.c.l.b16 %v360
      %v695 = vunpack.c.l.b16 %v361
      %v696 = vunpack.c.l.b16 %v362
      %v697 = vunpack.c.l.b16 %v363
      %v698 = vunpack.c.l.b16 %v364
      %v699 = vunpack.c.l.b16 %v365
      %v700 = vunpack.c.l.b16 %v366
      %v701 = vunpack.c.l.b16 %v367
      %v702 = vunpack.c.l.b16 %v368
      %v703 = vunpack.c.l.b16 %v369
      %v704 = vunpack.c.l.b16 %v370
      %v705 = vunpack.c.l.b16 %v371
      %v706 = vunpack.c.l.b16 %v372
      %v707 = vunpack.c.l.b16 %v373
      %v708 = vunpack.c.l.b16 %v374
      %v709 = vunpack.c.l.b16 %v375
      %v710 = vunpack.c.l.b16 %v376
      %v711 = vunpack.c.l.b16 %v377
      %v712 = vunpack.c.l.b16 %v378
      %v713 = vunpack.c.l.b16 %v379
      %v714 = vunpack.c.l.b16 %v380
      %v715 = vunpack.c.l.b16 %v381
      %v716 = vunpack.c.l.b16 %v382
      %v717 = vunpack.c.l.b16 %v383
      %v718 = vunpack.c.l.b16 %v384
      %v719 = vunpack.c.l.b16 %v385
      %v720 = vunpack.c.l.b16 %v386
      %v721 = vunpack.c.l.b16 %v387
      %v722 = vunpack.c.l.b16 %v388
      %v723 = vunpack.c.l.b16 %v389
      %v724 = vunpack.c.l.b16 %v390
      %v725 = vunpack.c.l.b16 %v391
      %v726 = vunpack.c.l.b16 %v392
      %v727 = vunpack.c.l.b16 %v393
      %v728 = vunpack.c.l.b16 %v394
      %v729 = vunpack.c.l.b16 %v395
      %v730 = vunpack.c.l.b16 %v396
      %v731 = vunpack.c.l.b16 %v397
      %v732 = vunpack.c.l.b16 %v398
      %v733 = vunpack.c.l.b16 %v399
      %v734 = vunpack.c.l.b16 %v400
      %v735 = vunpack.c.l.b16 %v401
      %v736 = vunpack.c.l.b16 %v402
      %v737 = vunpack.c.l.b16 %v403
      %v738 = vunpack.c.l.b16 %v404
      %v739 = vunpack.c.l.b16 %v405
      %v740 = vunpack.c.l.b16 %v406
      %v741 = vunpack.c.l.b16 %v407
      %v742 = vunpack.c.l.b16 %v408
      %v743 = vunpack.c.l.b16 %v409
      %v744 = vunpack.c.l.b16 %v410
      %v745 = vunpack.c.l.b16 %v411
      %v746 = vunpack.c.l.b16 %v412
      %v747 = vunpack.c.l.b16 %v413
      %v748 = vunpack.c.l.b16 %v414
      %v749 = vunpack.c.l.b16 %v415
      %v750 = vunpack.c.l.b16 %v416
      %v751 = vunpack.c.l.b16 %v417
      %v752 = vunpack.c.l.b16 %v418
      %v753 = vunpack.c.l.b16 %v419
      %v754 = vunpack.c.l.b16 %v420
      %v755 = vunpack.c.l.b16 %v421
      %v756 = vunpack.c.l.b16 %v422
      %v757 = vunpack.c.l.b16 %v423
      %v758 = vunpack.c.l.b16 %v424
      %v759 = vunpack.c.l.b16 %v425
      %v760 = vunpack.c.l.b16 %v426
      %v761 = vunpack.c.l.b16 %v427
      %v762 = vunpack.c.l.b16 %v428
      %v763 = vunpack.c.l.b16 %v429
      %v764 = vunpack.c.l.b16 %v430
      %v765 = vunpack.c.l.b16 %v431
      %v766 = vunpack.c.l.b16 %v432
      %v767 = vunpack.c.l.b16 %v433
      %v768 = vunpack.c.l.b16 %v434
      %v769 = vunpack.c.l.b16 %v435
      %v770 = vunpack.c.l.b16 %v436
      %v771 = vunpack.c.l.b16 %v437
      %v772 = vunpack.c.l.b16 %v438
      %v773 = vunpack.c.l.b16 %v439
      %v774 = vunpack.c.l.b16 %v440
      %v775 = vunpack.c.l.b16 %v441
      %v776 = vunpack.c.l.b16 %v442
      %v777 = vunpack.c.l.b16 %v443
      %v778 = vunpack.c.l.b16 %v444
      %v779 = vunpack.c.l.b16 %v445
      %v780 = vunpack.c.l.b16 %v446
      %v781 = vunpack.c.l.b16 %v447
      %v782 = vunpack.c.l.b16 %v448
      %v783 = vunpack.c.l.b16 %v449
      %v784 = vunpack.c.l.b16 %v450
      %v785 = vunpack.c.l.b16 %v451
      %v786 = vunpack.c.l.b16 %v452
      %v787 = vunpack.c.l.b16 %v453
      %v788 = vunpack.c.l.b16 %v454
      %v789 = vunpack.c.l.b16 %v455
      %v790 = vunpack.c.l.b16 %v456
      %v791 = vunpack.c.l.b16 %v457
      %v792 = vunpack.c.l.b16 %v458
      %v793 = vunpack.c.l.b16 %v459
      %v794 = vunpack.c.l.b16 %v460
      %v795 = vunpack.c.l.b16 %v461
      %v796 = vunpack.c.l.b16 %v462
      %v797 = vunpack.c.l.b16 %v463
      %v798 = vunpack.c.l.b16 %v464
      %v799 = vunpack.c.l.b16 %v465
      %v800 = vunpack.c.l.b16 %v466
      %v801 = vunpack.c.l.b16 %v467
      %v802 = vunpack.c.l.b16 %v468
      %v803 = vunpack.c.l.b16 %v469
      %v804 = vunpack.c.l.b16 %v470
      %v805 = vunpack.c.l.b16 %v471
      %v806 = vunpack.c.l.b16 %v472
      %v807 = vunpack.c.l.b16 %v473
      %v808 = vunpack.c.l.b16 %v474
      %v809 = vunpack.c.l.b16 %v475
      %v810 = vunpack.c.l.b16 %v476
      %v811 = vunpack.c.l.b16 %v477
      %v812 = vunpack.c.l.b16 %v478
      %v813 = vunpack.c.l.b16 %v479
      %v814 = vunpack.c.l.b16 %v480
      %v815 = vunpack.c.l.b16 %v481
      %v816 = vunpack.c.l.b16 %v482
      %v817 = vunpack.c.l.b16 %v483
      %v818 = vunpack.c.l.b16 %v484
      %v819 = vunpack.c.l.b16 %v485
      %v820 = vunpack.c.l.b16 %v486
      %v821 = vunpack.c.l.b16 %v487
      %v822 = vunpack.c.l.b16 %v488
      %v823 = vpack.c.b16 %v680, %v679
      %v824 = vpack.c.b16 %v682, %v681
      %v825 = vpack.c.b16 %v684, %v683
      %v826 = vpack.c.b16 %v686, %v685
      %v827 = vpack.c.b16 %v688, %v687
      %v828 = vpack.c.b16 %v690, %v689
      %v829 = vpack.c.b16 %v692, %v691
      %v830 = vpack.c.b16 %v694, %v693
      %v831 = vpack.c.b16 %v696, %v695
      %v832 = vpack.c.b16 %v698, %v697
      %v833 = vpack.c.b16 %v700, %v699
      %v834 = vpack.c.b16 %v702, %v701
      %v835 = vpack.c.b16 %v704, %v703
      %v836 = vpack.c.b16 %v706, %v705
      %v837 = vpack.c.b16 %v708, %v707
      %v838 = vpack.c.b16 %v710, %v709
      %v839 = vpack.c.b16 %v712, %v711
      %v840 = vpack.c.b16 %v714, %v713
      %v841 = vpack.c.b16 %v716, %v715
      %v842 = vpack.c.b16 %v718, %v717
      %v843 = vpack.c.b16 %v720, %v719
      %v844 = vpack.c.b16 %v722, %v721
      %v845 = vpack.c.b16 %v724, %v723
      %v846 = vpack.c.b16 %v726, %v725
      %v847 = vpack.c.b16 %v728, %v727
      %v848 = vpack.c.b16 %v730, %v729
      %v849 = vpack.c.b16 %v732, %v731
      %v850 = vpack.c.b16 %v734, %v733
      %v851 = vpack.c.b16 %v736, %v735
      %v852 = vpack.c.b16 %v738, %v737
      %v853 = vpack.c.b16 %v740, %v739
      %v854 = vpack.c.b16 %v742, %v741
      %v855 = vpack.c.b16 %v744, %v743
      %v856 = vpack.c.b16 %v746, %v745
      %v857 = vpack.c.b16 %v748, %v747
      %v858 = vpack.c.b16 %v750, %v749
      %v859 = vpack.c.b16 %v752, %v751
      %v860 = vpack.c.b16 %v754, %v753
      %v861 = vpack.c.b16 %v756, %v755
      %v862 = vpack.c.b16 %v758, %v757
      %v863 = vpack.c.b16 %v760, %v759
      %v864 = vpack.c.b16 %v762, %v761
      %v865 = vpack.c.b16 %v764, %v763
      %v866 = vpack.c.b16 %v766, %v765
      %v867 = vpack.c.b16 %v768, %v767
      %v868 = vpack.c.b16 %v770, %v769
      %v869 = vpack.c.b16 %v772, %v771
      %v870 = vpack.c.b16 %v774, %v773
      %v871 = vpack.c.b16 %v776, %v775
      %v872 = vpack.c.b16 %v778, %v777
      %v873 = vpack.c.b16 %v780, %v779
      %v874 = vpack.c.b16 %v782, %v781
      %v875 = vpack.c.b16 %v784, %v783
      %v876 = vpack.c.b16 %v786, %v785
      %v877 = vpack.c.b16 %v788, %v787
      %v878 = vpack.c.b16 %v790, %v789
      %v879 = vpack.c.b16 %v792, %v791
      %v880 = vpack.c.b16 %v794, %v793
      %v881 = vpack.c.b16 %v796, %v795
      %v882 = vpack.c.b16 %v798, %v797
      %v883 = vpack.c.b16 %v800, %v799
      %v884 = vpack.c.b16 %v802, %v801
      %v885 = vpack.c.b16 %v804, %v803
      %v886 = vpack.c.b16 %v806, %v805
      %v887 = vpack.c.b16 %v808, %v807
      %v888 = vpack.c.b16 %v810, %v809
      %v889 = vpack.c.b16 %v812, %v811
      %v890 = vpack.c.b16 %v814, %v813
      %v891 = vpack.c.b16 %v816, %v815
      %v892 = vpack.c.b16 %v818, %v817
      %v893 = vpack.c.b16 %v820, %v819
      %v894 = vpack.c.b16 %v822, %v821
      %967 = vmatprep.subr.bf16.mxu0 0
      %968 = vmatpush1.bf16.msra.mxu0 %v830
      %969 = vmatprep.subr.bf16.mxu0 0
      %970 = vmatpush1.bf16.msra.mxu0 %v829
      %971 = vmatprep.subr.bf16.mxu0 0
      %972 = vmatpush1.bf16.msra.mxu0 %v828
      %973 = vmatprep.subr.bf16.mxu0 0
      %974 = vmatpush1.bf16.msra.mxu0 %v827
      %975 = vmatprep.subr.bf16.mxu0 0
      %976 = vmatpush1.bf16.msra.mxu0 %v826
      %977 = vmatprep.subr.bf16.mxu0 0
      %978 = vmatpush1.bf16.msra.mxu0 %v825
      %979 = vmatprep.subr.bf16.mxu0 0
      %980 = vmatpush1.bf16.msra.mxu0 %v824
      %981 = vmatprep.subr.bf16.mxu0 0
      %982 = vmatpush1.bf16.msra.mxu0 %v823
      %983 = vmatprep.subr.bf16.mxu0 0
      %984 = vmatpush2.bf16.msra.mxu0 %v838
      %985 = vmatprep.subr.bf16.mxu0 0
      %986 = vmatpush2.bf16.msra.mxu0 %v837
      %987 = vmatprep.subr.bf16.mxu0 0
      %988 = vmatpush2.bf16.msra.mxu0 %v836
      %989 = vmatprep.subr.bf16.mxu0 0
      %990 = vmatpush2.bf16.msra.mxu0 %v835
      %991 = vmatprep.subr.bf16.mxu0 0
      %992 = vmatpush2.bf16.msra.mxu0 %v834
      %993 = vmatprep.subr.bf16.mxu0 0
      %994 = vmatpush2.bf16.msra.mxu0 %v833
      %995 = vmatprep.subr.bf16.mxu0 0
      %996 = vmatpush2.bf16.msra.mxu0 %v832
      %997 = vmatprep.subr.bf16.mxu0 0
      %998 = vmatpush2.bf16.msra.mxu0 %v831
      %999 = vmatprep.mubr.bf16.mxu0 %v518
      %1000 = vmatmul.mubr.bf16.gmra.mxu0 %v517
      %v1001 = vpop.f32.mrf.mxu0
      %v1002 = vadd.f32 0.0, %v1001
      %v1003 = vpop.f32.mrf.mxu0
      %v1004 = vpop.f32.mrf.mxu0
      %v1005 = vadd.f32 0.0, %v1004
      %v1006 = vpop.f32.mrf.mxu0
      %1007 = vdwg.mxu0
      %1008 = vmatprep.subr.bf16.mxu0 0
      %1009 = vmatpush1.bf16.msra.mxu0 %v846
      %1010 = vmatprep.subr.bf16.mxu0 0
      %1011 = vmatpush1.bf16.msra.mxu0 %v845
      %1012 = vmatprep.subr.bf16.mxu0 0
      %1013 = vmatpush1.bf16.msra.mxu0 %v844
      %1014 = vmatprep.subr.bf16.mxu0 0
      %1015 = vmatpush1.bf16.msra.mxu0 %v843
      %1016 = vmatprep.subr.bf16.mxu0 0
      %1017 = vmatpush1.bf16.msra.mxu0 %v842
      %1018 = vmatprep.subr.bf16.mxu0 0
      %1019 = vmatpush1.bf16.msra.mxu0 %v841
      %1020 = vmatprep.subr.bf16.mxu0 0
      %1021 = vmatpush1.bf16.msra.mxu0 %v840
      %1022 = vmatprep.subr.bf16.mxu0 0
      %1023 = vmatpush1.bf16.msra.mxu0 %v839
      %1024 = vmatprep.subr.bf16.mxu0 0
      %1025 = vmatpush2.bf16.msra.mxu0 %v854
      %1026 = vmatprep.subr.bf16.mxu0 0
      %1027 = vmatpush2.bf16.msra.mxu0 %v853
      %1028 = vmatprep.subr.bf16.mxu0 0
      %1029 = vmatpush2.bf16.msra.mxu0 %v852
      %1030 = vmatprep.subr.bf16.mxu0 0
      %1031 = vmatpush2.bf16.msra.mxu0 %v851
      %1032 = vmatprep.subr.bf16.mxu0 0
      %1033 = vmatpush2.bf16.msra.mxu0 %v850
      %1034 = vmatprep.subr.bf16.mxu0 0
      %1035 = vmatpush2.bf16.msra.mxu0 %v849
      %1036 = vmatprep.subr.bf16.mxu0 0
      %1037 = vmatpush2.bf16.msra.mxu0 %v848
      %1038 = vmatprep.subr.bf16.mxu0 0
      %1039 = vmatpush2.bf16.msra.mxu0 %v847
      %1040 = vmatprep.mubr.bf16.mxu0 %v520
      %1041 = vmatmul.mubr.bf16.gmra.mxu0 %v519
      %v1042 = vpop.f32.mrf.mxu0
      %v1043 = vadd.f32 %v1002, %v1042
      %v1044 = vpop.f32.mrf.mxu0
      %v1045 = vpop.f32.mrf.mxu0
      %v1046 = vadd.f32 %v1005, %v1045
      %v1047 = vpop.f32.mrf.mxu0
      %1048 = vdwg.mxu0
      %1049 = vmatprep.subr.bf16.mxu0 0
      %1050 = vmatpush1.bf16.msra.mxu0 %v862
      %1051 = vmatprep.subr.bf16.mxu0 0
      %1052 = vmatpush1.bf16.msra.mxu0 %v861
      %1053 = vmatprep.subr.bf16.mxu0 0
      %1054 = vmatpush1.bf16.msra.mxu0 %v860
      %1055 = vmatprep.subr.bf16.mxu0 0
      %1056 = vmatpush1.bf16.msra.mxu0 %v859
      %1057 = vmatprep.subr.bf16.mxu0 0
      %1058 = vmatpush1.bf16.msra.mxu0 %v858
      %1059 = vmatprep.subr.bf16.mxu0 0
      %1060 = vmatpush1.bf16.msra.mxu0 %v857
      %1061 = vmatprep.subr.bf16.mxu0 0
      %1062 = vmatpush1.bf16.msra.mxu0 %v856
      %1063 = vmatprep.subr.bf16.mxu0 0
      %1064 = vmatpush1.bf16.msra.mxu0 %v855
      %1065 = vmatprep.subr.bf16.mxu0 0
      %1066 = vmatpush2.bf16.msra.mxu0 %v870
      %1067 = vmatprep.subr.bf16.mxu0 0
      %1068 = vmatpush2.bf16.msra.mxu0 %v869
      %1069 = vmatprep.subr.bf16.mxu0 0
      %1070 = vmatpush2.bf16.msra.mxu0 %v868
      %1071 = vmatprep.subr.bf16.mxu0 0
      %1072 = vmatpush2.bf16.msra.mxu0 %v867
      %1073 = vmatprep.subr.bf16.mxu0 0
      %1074 = vmatpush2.bf16.msra.mxu0 %v866
      %1075 = vmatprep.subr.bf16.mxu0 0
      %1076 = vmatpush2.bf16.msra.mxu0 %v865
      %1077 = vmatprep.subr.bf16.mxu0 0
      %1078 = vmatpush2.bf16.msra.mxu0 %v864
      %1079 = vmatprep.subr.bf16.mxu0 0
      %1080 = vmatpush2.bf16.msra.mxu0 %v863
      %1081 = vmatprep.mubr.bf16.mxu0 %v522
      %1082 = vmatmul.mubr.bf16.gmra.mxu0 %v521
      %v1083 = vpop.f32.mrf.mxu0
      %v1084 = vadd.f32 %v1043, %v1083
      %v1085 = vpop.f32.mrf.mxu0
      %v1086 = vpop.f32.mrf.mxu0
      %v1087 = vadd.f32 %v1046, %v1086
      %v1088 = vpop.f32.mrf.mxu0
      %1089 = vdwg.mxu0
      %1090 = vmatprep.subr.bf16.mxu0 0
      %1091 = vmatpush1.bf16.msra.mxu0 %v878
      %1092 = vmatprep.subr.bf16.mxu0 0
      %1093 = vmatpush1.bf16.msra.mxu0 %v877
      %1094 = vmatprep.subr.bf16.mxu0 0
      %1095 = vmatpush1.bf16.msra.mxu0 %v876
      %1096 = vmatprep.subr.bf16.mxu0 0
      %1097 = vmatpush1.bf16.msra.mxu0 %v875
      %1098 = vmatprep.subr.bf16.mxu0 0
      %1099 = vmatpush1.bf16.msra.mxu0 %v874
      %1100 = vmatprep.subr.bf16.mxu0 0
      %1101 = vmatpush1.bf16.msra.mxu0 %v873
      %1102 = vmatprep.subr.bf16.mxu0 0
      %1103 = vmatpush1.bf16.msra.mxu0 %v872
      %1104 = vmatprep.subr.bf16.mxu0 0
      %1105 = vmatpush1.bf16.msra.mxu0 %v871
      %1106 = vmatprep.subr.bf16.mxu0 0
      %1107 = vmatpush2.bf16.msra.mxu0 %v886
      %1108 = vmatprep.subr.bf16.mxu0 0
      %1109 = vmatpush2.bf16.msra.mxu0 %v885
      %1110 = vmatprep.subr.bf16.mxu0 0
      %1111 = vmatpush2.bf16.msra.mxu0 %v884
      %1112 = vmatprep.subr.bf16.mxu0 0
      %1113 = vmatpush2.bf16.msra.mxu0 %v883
      %1114 = vmatprep.subr.bf16.mxu0 0
      %1115 = vmatpush2.bf16.msra.mxu0 %v882
      %1116 = vmatprep.subr.bf16.mxu0 0
      %1117 = vmatpush2.bf16.msra.mxu0 %v881
      %1118 = vmatprep.subr.bf16.mxu0 0
      %1119 = vmatpush2.bf16.msra.mxu0 %v880
      %1120 = vmatprep.subr.bf16.mxu0 0
      %1121 = vmatpush2.bf16.msra.mxu0 %v879
      %1122 = vmatprep.mubr.bf16.mxu0 %v524
      %1123 = vmatmul.mubr.bf16.gmra.mxu0 %v523
      %v1124 = vpop.f32.mrf.mxu0
      %v1125 = vadd.f32 %v1084, %v1124
      %v1126 = vpop.f32.mrf.mxu0
      %v1127 = vpop.f32.mrf.mxu0
      %v1128 = vadd.f32 %v1087, %v1127
      %v1129 = vpop.f32.mrf.mxu0
      %1130 = vdwg.mxu0
      %1131 = vmatprep.subr.bf16.mxu0 0
      %1132 = vmatpush1.bf16.msra.mxu0 %v894
      %1133 = vmatprep.subr.bf16.mxu0 0
      %1134 = vmatpush1.bf16.msra.mxu0 %v893
      %1135 = vmatprep.subr.bf16.mxu0 0
      %1136 = vmatpush1.bf16.msra.mxu0 %v892
      %1137 = vmatprep.subr.bf16.mxu0 0
      %1138 = vmatpush1.bf16.msra.mxu0 %v891
      %1139 = vmatprep.subr.bf16.mxu0 0
      %1140 = vmatpush1.bf16.msra.mxu0 %v890
      %1141 = vmatprep.subr.bf16.mxu0 0
      %1142 = vmatpush1.bf16.msra.mxu0 %v889
      %1143 = vmatprep.subr.bf16.mxu0 0
      %1144 = vmatpush1.bf16.msra.mxu0 %v888
      %1145 = vmatprep.subr.bf16.mxu0 0
      %1146 = vmatpush1.bf16.msra.mxu0 %v887
      %1147 = vmatprep.subr.bf16.mxu0 0
      %1148 = vmatpush2.bf16.msra.mxu0 0
      %1149 = vmatprep.subr.bf16.mxu0 0
      %1150 = vmatpush2.bf16.msra.mxu0 0
      %1151 = vmatprep.subr.bf16.mxu0 0
      %1152 = vmatpush2.bf16.msra.mxu0 0
      %1153 = vmatprep.subr.bf16.mxu0 0
      %1154 = vmatpush2.bf16.msra.mxu0 0
      %1155 = vmatprep.subr.bf16.mxu0 0
      %1156 = vmatpush2.bf16.msra.mxu0 0
      %1157 = vmatprep.subr.bf16.mxu0 0
      %1158 = vmatpush2.bf16.msra.mxu0 0
      %1159 = vmatprep.subr.bf16.mxu0 0
      %1160 = vmatpush2.bf16.msra.mxu0 0
      %1161 = vmatprep.subr.bf16.mxu0 0
      %1162 = vmatpush2.bf16.msra.mxu0 0
      %1163 = vmatprep.mubr.bf16.mxu0 0
      %1164 = vmatmul.mubr.bf16.gmra.mxu0 %v525
      %v1165 = vpop.f32.mrf.mxu0
      %v1166 = vadd.f32 %v1125, %v1165
      %v1167 = vpop.f32.mrf.mxu0
      %v1168 = vpop.f32.mrf.mxu0
      %v1169 = vadd.f32 %v1128, %v1168
      %v1170 = vpop.f32.mrf.mxu0
      %1171 = vdwg.mxu0
      %v1172 = vld [vmem:[%s2] sm:$0x1]
      %v1174 = vlaneseq
      %v1175 = vshrl.u32 %v1174, 7
      %v1176 = vsub.s32 0, %v1175
      %v1177 = vrot.slane %v1172, %v1176
      %v1179 = vmul.f32 %v1166, %v1177
      %v1180 = vmul.f32 %v1169, %v1177
      %v1181 = vld [vmem:[%s3] sm:$0x1]
      %v1183 = vlaneseq
      %v1184 = vshrl.u32 %v1183, 7
      %v1185 = vsub.s32 0, %v1184
      %v1186 = vrot.slane %v1181, %v1185
      %v1188 = vadd.f32 %v1179, %v1186
      %v1189 = vadd.f32 %v1180, %v1186
      %v1190 = vmax.f32 %v1188, 0.0
      %v1191 = vmax.f32 %v1189, 0.0
      %v1192 = vpack.c.bf16 %v1191, %v1190
      %v1193 = vld [vmem:[%s4] sm:$0xf]
      %v1194 = vld [vmem:[%s4 + $0x4] sm:$0xf]
      %v1195 = vld [vmem:[%s4 + $0x8] sm:$0xf]
      %v1196 = vld [vmem:[%s4 + $0xc] sm:$0xf]
      %v1197 = vld [vmem:[%s4 + $0x10] sm:$0xf]
      %v1198 = vld [vmem:[%s4 + $0x14] sm:$0xf]
      %v1199 = vld [vmem:[%s4 + $0x18] sm:$0xf]
      %v1200 = vld [vmem:[%s4 + $0x1c] sm:$0xf]
      %v1201 = vld [vmem:[%s4 + $0x20] sm:$0xf]
      %v1202 = vld [vmem:[%s4 + $0x24] sm:$0xf]
      %v1203 = vld [vmem:[%s4 + $0x28] sm:$0xf]
      %v1204 = vld [vmem:[%s4 + $0x2c] sm:$0xf]
      %v1205 = vld [vmem:[%s4 + $0x30] sm:$0xf]
      %v1206 = vld [vmem:[%s4 + $0x34] sm:$0xf]
      %v1207 = vld [vmem:[%s4 + $0x38] sm:$0xf]
      %v1208 = vld [vmem:[%s4 + $0x3c] sm:$0xf]
      %v1225 = vunpack.c.l.b16 %v1193
      %v1226 = vunpack.c.l.b16 %v1194
      %v1227 = vunpack.c.l.b16 %v1195
      %v1228 = vunpack.c.l.b16 %v1196
      %v1229 = vunpack.c.l.b16 %v1197
      %v1230 = vunpack.c.l.b16 %v1198
      %v1231 = vunpack.c.l.b16 %v1199
      %v1232 = vunpack.c.l.b16 %v1200
      %v1233 = vunpack.c.l.b16 %v1201
      %v1234 = vunpack.c.l.b16 %v1202
      %v1235 = vunpack.c.l.b16 %v1203
      %v1236 = vunpack.c.l.b16 %v1204
      %v1237 = vunpack.c.l.b16 %v1205
      %v1238 = vunpack.c.l.b16 %v1206
      %v1239 = vunpack.c.l.b16 %v1207
      %v1240 = vunpack.c.l.b16 %v1208
      %v1241 = vpack.c.b16 %v1226, %v1225
      %v1242 = vpack.c.b16 %v1228, %v1227
      %v1243 = vpack.c.b16 %v1230, %v1229
      %v1244 = vpack.c.b16 %v1232, %v1231
      %v1245 = vpack.c.b16 %v1234, %v1233
      %v1246 = vpack.c.b16 %v1236, %v1235
      %v1247 = vpack.c.b16 %v1238, %v1237
      %v1248 = vpack.c.b16 %v1240, %v1239
      %1257 = vmatprep.subr.bf16.mxu0 0
      %1258 = vmatpush1.bf16.msra.mxu0 %v1248
      %1259 = vmatprep.subr.bf16.mxu0 0
      %1260 = vmatpush1.bf16.msra.mxu0 %v1247
      %1261 = vmatprep.subr.bf16.mxu0 0
      %1262 = vmatpush1.bf16.msra.mxu0 %v1246
      %1263 = vmatprep.subr.bf16.mxu0 0
      %1264 = vmatpush1.bf16.msra.mxu0 %v1245
      %1265 = vmatprep.subr.bf16.mxu0 0
      %1266 = vmatpush1.bf16.msra.mxu0 %v1244
      %1267 = vmatprep.subr.bf16.mxu0 0
      %1268 = vmatpush1.bf16.msra.mxu0 %v1243
      %1269 = vmatprep.subr.bf16.mxu0 0
      %1270 = vmatpush1.bf16.msra.mxu0 %v1242
      %1271 = vmatprep.subr.bf16.mxu0 0
      %1272 = vmatpush1.bf16.msra.mxu0 %v1241
      %1273 = vmatprep.subr.bf16.mxu0 0
      %1274 = vmatpush2.bf16.msra.mxu0 0
      %1275 = vmatprep.subr.bf16.mxu0 0
      %1276 = vmatpush2.bf16.msra.mxu0 0
      %1277 = vmatprep.subr.bf16.mxu0 0
      %1278 = vmatpush2.bf16.msra.mxu0 0
      %1279 = vmatprep.subr.bf16.mxu0 0
      %1280 = vmatpush2.bf16.msra.mxu0 0
      %1281 = vmatprep.subr.bf16.mxu0 0
      %1282 = vmatpush2.bf16.msra.mxu0 0
      %1283 = vmatprep.subr.bf16.mxu0 0
      %1284 = vmatpush2.bf16.msra.mxu0 0
      %1285 = vmatprep.subr.bf16.mxu0 0
      %1286 = vmatpush2.bf16.msra.mxu0 0
      %1287 = vmatprep.subr.bf16.mxu0 0
      %1288 = vmatpush2.bf16.msra.mxu0 0
      %1289 = vmatprep.mubr.bf16.mxu0 0
      %1290 = vmatmul.mubr.bf16.gmra.mxu0 %v1192
      %v1291 = vpop.f32.mrf.mxu0
      %v1292 = vadd.f32 0.0, %v1291
      %v1293 = vpop.f32.mrf.mxu0
      %v1294 = vpop.f32.mrf.mxu0
      %v1295 = vadd.f32 0.0, %v1294
      %v1296 = vpop.f32.mrf.mxu0
      %1297 = vdwg.mxu0
      %v1298 = vld [vmem:[%s5] sm:$0x1]
      %v1300 = vlaneseq
      %v1301 = vshrl.u32 %v1300, 7
      %v1302 = vsub.s32 0, %v1301
      %v1303 = vrot.slane %v1298, %v1302
      %v1305 = vmul.f32 %v1292, %v1303
      %v1306 = vmul.f32 %v1295, %v1303
      %v1307 = vld [vmem:[%s6] sm:$0x1]
      %v1309 = vlaneseq
      %v1310 = vshrl.u32 %v1309, 7
      %v1311 = vsub.s32 0, %v1310
      %v1312 = vrot.slane %v1307, %v1311
      %v1314 = vadd.f32 %v1305, %v1312
      %v1315 = vadd.f32 %v1306, %v1312
      %v1316 = vld [vmem:[%s326] sm:$0xf]
      %v1317 = vld [vmem:[%s326 + $0x4] sm:$0xf]
      %v1318 = vunpack.c.l.bf16 %v1316
      %v1319 = vunpack.c.l.bf16 %v1317
      %v1320 = vadd.f32 %v1314, %v1318
      %v1321 = vadd.f32 %v1315, %v1319
      %v1322 = vmax.f32 %v1320, 0.0
      %v1323 = vmax.f32 %v1321, 0.0
      %v1324 = vpack.c.bf16 %v1323, %v1322
      %v1326 = vunpack.c.l.b16 %v1324
      %v1327 = vunpack.c.h.b16 %v1324
      %v1328 = vpack.c.b16 %v1326, %v1326
      %v1329 = vpack.c.b16 %v1327, %v1327
      %1332 = vst [vmem:[%s332] sm:$0xf] %v1328
      %1333 = vst [vmem:[%s332 + $0x4] sm:$0xf] %v1329
      %s1334 = smul.u32 2, %s19
      %p1335 = scmp.lt.s32.totalorder %s1334, 3
      %s1336 = scalar_select %p1335, %s1334, 3
      %s1337 = smul.addr %s1336, 4
      %s1338 = scalar_lea.vmem %s8, %s1337
      // Predicated region
      $region53: #{forward.50} parent=51 // pred_check
        %p1339 = pneg %p215
      $region54: #{forward.50} parent=51 // pred_check_branch
        %1341 = sbr.rel (%p1339) target = $region56
      $region55: #{forward.50} parent=51 // pred_region
        %s1342 = smul.u32 2, %s19
      $region56: #{forward.50} parent=51 // pred_fallthru
        _
    $region52: #{forward.50} parent=5 // pred_fallthru
      _
    %p1343 = scmp.le.s32.totalorder 2, %s14
    // Predicated region
    $region57: #{forward.50} parent=5 // pred_check
      %p1344 = pneg %p1343
    $region58: #{forward.50} parent=5 // pred_check_branch
      %1346 = sbr.rel (%p1344) target = $region60
    $region59: #{forward.50} parent=5 // pred_region
      %s1347 = ssub.s32 %s14, 2
      // Predicated region
      $region61: #{forward.50} parent=59 // pred_check
        %p1348 = pneg %p221
      $region62: #{forward.50} parent=59 // pred_check_branch
        %1350 = sbr.rel (%p1348) target = $region64
      $region63: #{forward.50} parent=59 // pred_region
        %s1351 = smul.u32 2, %s20
        %p1352 = scmp.lt.s32.totalorder %s1351, 3
        %s1353 = scalar_select %p1352, %s1351, 3
        %s1354 = smul.addr %s1353, 4
        %s1355 = scalar_lea.vmem %s8, %s1354
      $region64: #{forward.50} parent=59 // pred_fallthru
        _
    $region60: #{forward.50} parent=5 // pred_fallthru
      _
  $region6: #{forward.50} parent=0 // loop_footer
    %s18 = sadd.s32 1, %s14
  $region7: #{forward.50} parent=0 // loop_footer_branch
    %13 = sbr.rel target = $region3
  $region8: #{forward.50} parent=0 // loop_exit
    _

// kernel: forward.60
$region0: #{forward.60}
  #allocation0 [shape = 'u32[]', space=smem, size = 0x4, offset = 0x4, fixed_abs, tag = 'smem constant byte address 0x4 - core index']
  #allocation1 [shape = 'u32[144,128]{1,0:T(1,128)}', space=vmem, size = 0x12000, scoped, tag = 'internal scratch']
  %s0 = inlined_call_operand.vmem [shape: bf16[8,256], index: 0, kind: input, shape index: {}]
  %s1 = inlined_call_operand.vmem [shape: bf16[256,128], index: 1, kind: input, shape index: {}]
  %s2 = inlined_call_operand.vmem [shape: f32[1,128], index: 2, kind: input, shape index: {}]
  %s3 = inlined_call_operand.vmem [shape: f32[1,128], index: 3, kind: input, shape index: {}]
  %s4 = inlined_call_operand.vmem [shape: bf16[8,128], index: 4, kind: output, shape index: {}]
  %s5 = sld [smem:[#allocation0]]
  $region26: #{forward.60} parent=0
    _
  %s7 = ssub.s32 1, %s5
  %s8 = scalar_select 0, %s7, %s5
  // Predicated region
  $region2: #{forward.60} parent=0 // pred_check
    _
  $region3: #{forward.60} parent=0 // pred_check_branch
    %10 = sbr.rel (0) target = $region5
  $region4: #{forward.60} parent=0 // pred_region
    _
  $region5: #{forward.60} parent=0 // pred_fallthru
    _
  // Predicated region
  $region6: #{forward.60} parent=0 // pred_check
    _
  $region7: #{forward.60} parent=0 // pred_check_branch
    %12 = sbr.rel (0) target = $region9
  $region8: #{forward.60} parent=0 // pred_region
    _
  $region9: #{forward.60} parent=0 // pred_fallthru
    _
  // Predicated region
  $region10: #{forward.60} parent=0 // pred_check
    _
  $region11: #{forward.60} parent=0 // pred_check_branch
    %14 = sbr.rel (0) target = $region13
  $region12: #{forward.60} parent=0 // pred_region
    _
  $region13: #{forward.60} parent=0 // pred_fallthru
    _
  // Predicated region
  $region14: #{forward.60} parent=0 // pred_check
    _
  $region15: #{forward.60} parent=0 // pred_check_branch
    %16 = sbr.rel (0) target = $region17
  $region16: #{forward.60} parent=0 // pred_region
    _
  $region17: #{forward.60} parent=0 // pred_fallthru
    _
  %v18 = vld [vmem:[%s0] sm:$0xff]
  %v19 = vld [vmem:[%s1] sm:$0xf]
  %v20 = vld [vmem:[%s1 + $0x4] sm:$0xf]
  %v21 = vld [vmem:[%s1 + $0x8] sm:$0xf]
  %v22 = vld [vmem:[%s1 + $0xc] sm:$0xf]
  %v23 = vld [vmem:[%s1 + $0x10] sm:$0xf]
  %v24 = vld [vmem:[%s1 + $0x14] sm:$0xf]
  %v25 = vld [vmem:[%s1 + $0x18] sm:$0xf]
  %v26 = vld [vmem:[%s1 + $0x1c] sm:$0xf]
  %v27 = vld [vmem:[%s1 + $0x20] sm:$0xf]
  %v28 = vld [vmem:[%s1 + $0x24] sm:$0xf]
  %v29 = vld [vmem:[%s1 + $0x28] sm:$0xf]
  %v30 = vld [vmem:[%s1 + $0x2c] sm:$0xf]
  %v31 = vld [vmem:[%s1 + $0x30] sm:$0xf]
  %v32 = vld [vmem:[%s1 + $0x34] sm:$0xf]
  %v33 = vld [vmem:[%s1 + $0x38] sm:$0xf]
  %v34 = vld [vmem:[%s1 + $0x3c] sm:$0xf]
  %v35 = vld [vmem:[%s1 + $0x40] sm:$0xf]
  %v36 = vld [vmem:[%s1 + $0x44] sm:$0xf]
  %v37 = vld [vmem:[%s1 + $0x48] sm:$0xf]
  %v38 = vld [vmem:[%s1 + $0x4c] sm:$0xf]
  %v39 = vld [vmem:[%s1 + $0x50] sm:$0xf]
  %v40 = vld [vmem:[%s1 + $0x54] sm:$0xf]
  %v41 = vld [vmem:[%s1 + $0x58] sm:$0xf]
  %v42 = vld [vmem:[%s1 + $0x5c] sm:$0xf]
  %v43 = vld [vmem:[%s1 + $0x60] sm:$0xf]
  %v44 = vld [vmem:[%s1 + $0x64] sm:$0xf]
  %v45 = vld [vmem:[%s1 + $0x68] sm:$0xf]
  %v46 = vld [vmem:[%s1 + $0x6c] sm:$0xf]
  %v47 = vld [vmem:[%s1 + $0x70] sm:$0xf]
  %v48 = vld [vmem:[%s1 + $0x74] sm:$0xf]
  %v49 = vld [vmem:[%s1 + $0x78] sm:$0xf]
  %v50 = vld [vmem:[%s1 + $0x7c] sm:$0xf]
  %v52 = vunpack.c.l.b16 %v18
  %v53 = vunpack.c.h.b16 %v18
  %v54 = vpack.c.b16 %v52, %v52
  %v55 = vpack.c.b16 %v53, %v53
  %v90 = vunpack.c.l.b16 %v19
  %v91 = vunpack.c.l.b16 %v20
  %v92 = vunpack.c.l.b16 %v21
  %v93 = vunpack.c.l.b16 %v22
  %v94 = vunpack.c.l.b16 %v23
  %v95 = vunpack.c.l.b16 %v24
  %v96 = vunpack.c.l.b16 %v25
  %v97 = vunpack.c.l.b16 %v26
  %v98 = vunpack.c.l.b16 %v27
  %v99 = vunpack.c.l.b16 %v28
  %v100 = vunpack.c.l.b16 %v29
  %v101 = vunpack.c.l.b16 %v30
  %v102 = vunpack.c.l.b16 %v31
  %v103 = vunpack.c.l.b16 %v32
  %v104 = vunpack.c.l.b16 %v33
  %v105 = vunpack.c.l.b16 %v34
  %v106 = vunpack.c.l.b16 %v35
  %v107 = vunpack.c.l.b16 %v36
  %v108 = vunpack.c.l.b16 %v37
  %v109 = vunpack.c.l.b16 %v38
  %v110 = vunpack.c.l.b16 %v39
  %v111 = vunpack.c.l.b16 %v40
  %v112 = vunpack.c.l.b16 %v41
  %v113 = vunpack.c.l.b16 %v42
  %v114 = vunpack.c.l.b16 %v43
  %v115 = vunpack.c.l.b16 %v44
  %v116 = vunpack.c.l.b16 %v45
  %v117 = vunpack.c.l.b16 %v46
  %v118 = vunpack.c.l.b16 %v47
  %v119 = vunpack.c.l.b16 %v48
  %v120 = vunpack.c.l.b16 %v49
  %v121 = vunpack.c.l.b16 %v50
  %v122 = vpack.c.b16 %v91, %v90
  %v123 = vpack.c.b16 %v93, %v92
  %v124 = vpack.c.b16 %v95, %v94
  %v125 = vpack.c.b16 %v97, %v96
  %v126 = vpack.c.b16 %v99, %v98
  %v127 = vpack.c.b16 %v101, %v100
  %v128 = vpack.c.b16 %v103, %v102
  %v129 = vpack.c.b16 %v105, %v104
  %v130 = vpack.c.b16 %v107, %v106
  %v131 = vpack.c.b16 %v109, %v108
  %v132 = vpack.c.b16 %v111, %v110
  %v133 = vpack.c.b16 %v113, %v112
  %v134 = vpack.c.b16 %v115, %v114
  %v135 = vpack.c.b16 %v117, %v116
  %v136 = vpack.c.b16 %v119, %v118
  %v137 = vpack.c.b16 %v121, %v120
  %154 = vmatprep.subr.bf16.mxu0 0
  %155 = vmatpush1.bf16.msra.mxu0 %v129
  %156 = vmatprep.subr.bf16.mxu0 0
  %157 = vmatpush1.bf16.msra.mxu0 %v128
  %158 = vmatprep.subr.bf16.mxu0 0
  %159 = vmatpush1.bf16.msra.mxu0 %v127
  %160 = vmatprep.subr.bf16.mxu0 0
  %161 = vmatpush1.bf16.msra.mxu0 %v126
  %162 = vmatprep.subr.bf16.mxu0 0
  %163 = vmatpush1.bf16.msra.mxu0 %v125
  %164 = vmatprep.subr.bf16.mxu0 0
  %165 = vmatpush1.bf16.msra.mxu0 %v124
  %166 = vmatprep.subr.bf16.mxu0 0
  %167 = vmatpush1.bf16.msra.mxu0 %v123
  %168 = vmatprep.subr.bf16.mxu0 0
  %169 = vmatpush1.bf16.msra.mxu0 %v122
  %170 = vmatprep.subr.bf16.mxu0 0
  %171 = vmatpush2.bf16.msra.mxu0 %v137
  %172 = vmatprep.subr.bf16.mxu0 0
  %173 = vmatpush2.bf16.msra.mxu0 %v136
  %174 = vmatprep.subr.bf16.mxu0 0
  %175 = vmatpush2.bf16.msra.mxu0 %v135
  %176 = vmatprep.subr.bf16.mxu0 0
  %177 = vmatpush2.bf16.msra.mxu0 %v134
  %178 = vmatprep.subr.bf16.mxu0 0
  %179 = vmatpush2.bf16.msra.mxu0 %v133
  %180 = vmatprep.subr.bf16.mxu0 0
  %181 = vmatpush2.bf16.msra.mxu0 %v132
  %182 = vmatprep.subr.bf16.mxu0 0
  %183 = vmatpush2.bf16.msra.mxu0 %v131
  %184 = vmatprep.subr.bf16.mxu0 0
  %185 = vmatpush2.bf16.msra.mxu0 %v130
  %186 = vmatprep.mubr.bf16.mxu0 %v55
  %187 = vmatmul.mubr.bf16.gmra.mxu0 %v54
  %v188 = vpop.f32.mrf.mxu0
  %v189 = vadd.f32 0.0, %v188
  %v190 = vpop.f32.mrf.mxu0
  %v191 = vpop.f32.mrf.mxu0
  %v192 = vpop.f32.mrf.mxu0
  %193 = vdwg.mxu0
  %v194 = vld [vmem:[%s2] sm:$0x1]
  %v196 = vlaneseq
  %v197 = vshrl.u32 %v196, 7
  %v198 = vsub.s32 0, %v197
  %v199 = vrot.slane %v194, %v198
  %v201 = vmul.f32 %v189, %v199
  %v202 = vld [vmem:[%s3] sm:$0x1]
  %v204 = vlaneseq
  %v205 = vshrl.u32 %v204, 7
  %v206 = vsub.s32 0, %v205
  %v207 = vrot.slane %v202, %v206
  %v209 = vadd.f32 %v201, %v207
  %v210 = vmax.f32 %v209, 0.0
  %v211 = vpack.c.bf16 %v210, %v210
  %212 = vst [vmem:[%s4] sm:$0xf] %v211
  // Predicated region
  $region18: #{forward.60} parent=0 // pred_check
    _
  $region19: #{forward.60} parent=0 // pred_check_branch
    %214 = sbr.rel (0) target = $region21
  $region20: #{forward.60} parent=0 // pred_region
    _
  $region21: #{forward.60} parent=0 // pred_fallthru
    _
  // Predicated region
  $region22: #{forward.60} parent=0 // pred_check
    _
  $region23: #{forward.60} parent=0 // pred_check_branch
    %216 = sbr.rel (0) target = $region25
  $region24: #{forward.60} parent=0 // pred_region
    _
  $region25: #{forward.60} parent=0 // pred_fallthru
    _

// kernel: forward.58
$region0: #{forward.58}
  #allocation0 [shape = 'u32[]', space=smem, size = 0x4, offset = 0x4, fixed_abs, tag = 'smem constant byte address 0x4 - core index']
  #allocation1 [shape = 'u32[144,128]{1,0:T(1,128)}', space=vmem, size = 0x12000, scoped, tag = 'internal scratch']
  %s0 = inlined_call_operand.vmem [shape: bf16[8,128], index: 0, kind: input, shape index: {}]
  %s1 = inlined_call_operand.vmem [shape: bf16[128,256], index: 1, kind: input, shape index: {}]
  %s2 = inlined_call_operand.vmem [shape: f32[1,256], index: 2, kind: input, shape index: {}]
  %s3 = inlined_call_operand.vmem [shape: f32[1,256], index: 3, kind: input, shape index: {}]
  %s4 = inlined_call_operand.vmem [shape: bf16[8,256], index: 4, kind: output, shape index: {}]
  %s5 = sld [smem:[#allocation0]]
  $region26: #{forward.58} parent=0
    _
  %s7 = ssub.s32 1, %s5
  %s8 = scalar_select 0, %s7, %s5
  // Predicated region
  $region2: #{forward.58} parent=0 // pred_check
    _
  $region3: #{forward.58} parent=0 // pred_check_branch
    %10 = sbr.rel (0) target = $region5
  $region4: #{forward.58} parent=0 // pred_region
    _
  $region5: #{forward.58} parent=0 // pred_fallthru
    _
  // Predicated region
  $region6: #{forward.58} parent=0 // pred_check
    _
  $region7: #{forward.58} parent=0 // pred_check_branch
    %12 = sbr.rel (0) target = $region9
  $region8: #{forward.58} parent=0 // pred_region
    _
  $region9: #{forward.58} parent=0 // pred_fallthru
    _
  // Predicated region
  $region10: #{forward.58} parent=0 // pred_check
    _
  $region11: #{forward.58} parent=0 // pred_check_branch
    %14 = sbr.rel (0) target = $region13
  $region12: #{forward.58} parent=0 // pred_region
    _
  $region13: #{forward.58} parent=0 // pred_fallthru
    _
  // Predicated region
  $region14: #{forward.58} parent=0 // pred_check
    _
  $region15: #{forward.58} parent=0 // pred_check_branch
    %16 = sbr.rel (0) target = $region17
  $region16: #{forward.58} parent=0 // pred_region
    _
  $region17: #{forward.58} parent=0 // pred_fallthru
    _
  %v18 = vld [vmem:[%s0] sm:$0xf]
  %v19 = vld [vmem:[%s1] sm:$0xff]
  %v20 = vld [vmem:[%s1 + $0x8] sm:$0xff]
  %v21 = vld [vmem:[%s1 + $0x10] sm:$0xff]
  %v22 = vld [vmem:[%s1 + $0x18] sm:$0xff]
  %v23 = vld [vmem:[%s1 + $0x20] sm:$0xff]
  %v24 = vld [vmem:[%s1 + $0x28] sm:$0xff]
  %v25 = vld [vmem:[%s1 + $0x30] sm:$0xff]
  %v26 = vld [vmem:[%s1 + $0x38] sm:$0xff]
  %v27 = vld [vmem:[%s1 + $0x40] sm:$0xff]
  %v28 = vld [vmem:[%s1 + $0x48] sm:$0xff]
  %v29 = vld [vmem:[%s1 + $0x50] sm:$0xff]
  %v30 = vld [vmem:[%s1 + $0x58] sm:$0xff]
  %v31 = vld [vmem:[%s1 + $0x60] sm:$0xff]
  %v32 = vld [vmem:[%s1 + $0x68] sm:$0xff]
  %v33 = vld [vmem:[%s1 + $0x70] sm:$0xff]
  %v34 = vld [vmem:[%s1 + $0x78] sm:$0xff]
  %v51 = vunpack.c.l.b16 %v19
  %v52 = vunpack.c.h.b16 %v19
  %v53 = vunpack.c.l.b16 %v20
  %v54 = vunpack.c.h.b16 %v20
  %v55 = vunpack.c.l.b16 %v21
  %v56 = vunpack.c.h.b16 %v21
  %v57 = vunpack.c.l.b16 %v22
  %v58 = vunpack.c.h.b16 %v22
  %v59 = vunpack.c.l.b16 %v23
  %v60 = vunpack.c.h.b16 %v23
  %v61 = vunpack.c.l.b16 %v24
  %v62 = vunpack.c.h.b16 %v24
  %v63 = vunpack.c.l.b16 %v25
  %v64 = vunpack.c.h.b16 %v25
  %v65 = vunpack.c.l.b16 %v26
  %v66 = vunpack.c.h.b16 %v26
  %v67 = vunpack.c.l.b16 %v27
  %v68 = vunpack.c.h.b16 %v27
  %v69 = vunpack.c.l.b16 %v28
  %v70 = vunpack.c.h.b16 %v28
  %v71 = vunpack.c.l.b16 %v29
  %v72 = vunpack.c.h.b16 %v29
  %v73 = vunpack.c.l.b16 %v30
  %v74 = vunpack.c.h.b16 %v30
  %v75 = vunpack.c.l.b16 %v31
  %v76 = vunpack.c.h.b16 %v31
  %v77 = vunpack.c.l.b16 %v32
  %v78 = vunpack.c.h.b16 %v32
  %v79 = vunpack.c.l.b16 %v33
  %v80 = vunpack.c.h.b16 %v33
  %v81 = vunpack.c.l.b16 %v34
  %v82 = vunpack.c.h.b16 %v34
  %v83 = vpack.c.b16 %v53, %v51
  %v84 = vpack.c.b16 %v54, %v52
  %v85 = vpack.c.b16 %v57, %v55
  %v86 = vpack.c.b16 %v58, %v56
  %v87 = vpack.c.b16 %v61, %v59
  %v88 = vpack.c.b16 %v62, %v60
  %v89 = vpack.c.b16 %v65, %v63
  %v90 = vpack.c.b16 %v66, %v64
  %v91 = vpack.c.b16 %v69, %v67
  %v92 = vpack.c.b16 %v70, %v68
  %v93 = vpack.c.b16 %v73, %v71
  %v94 = vpack.c.b16 %v74, %v72
  %v95 = vpack.c.b16 %v77, %v75
  %v96 = vpack.c.b16 %v78, %v76
  %v97 = vpack.c.b16 %v81, %v79
  %v98 = vpack.c.b16 %v82, %v80
  %115 = vmatprep.subr.bf16.mxu0 %v98
  %116 = vmatpush1.bf16.msra.mxu0 %v97
  %117 = vmatprep.subr.bf16.mxu0 %v96
  %118 = vmatpush1.bf16.msra.mxu0 %v95
  %119 = vmatprep.subr.bf16.mxu0 %v94
  %120 = vmatpush1.bf16.msra.mxu0 %v93
  %121 = vmatprep.subr.bf16.mxu0 %v92
  %122 = vmatpush1.bf16.msra.mxu0 %v91
  %123 = vmatprep.subr.bf16.mxu0 %v90
  %124 = vmatpush1.bf16.msra.mxu0 %v89
  %125 = vmatprep.subr.bf16.mxu0 %v88
  %126 = vmatpush1.bf16.msra.mxu0 %v87
  %127 = vmatprep.subr.bf16.mxu0 %v86
  %128 = vmatpush1.bf16.msra.mxu0 %v85
  %129 = vmatprep.subr.bf16.mxu0 %v84
  %130 = vmatpush1.bf16.msra.mxu0 %v83
  %131 = vmatprep.subr.bf16.mxu0 0
  %132 = vmatpush2.bf16.msra.mxu0 0
  %133 = vmatprep.subr.bf16.mxu0 0
  %134 = vmatpush2.bf16.msra.mxu0 0
  %135 = vmatprep.subr.bf16.mxu0 0
  %136 = vmatpush2.bf16.msra.mxu0 0
  %137 = vmatprep.subr.bf16.mxu0 0
  %138 = vmatpush2.bf16.msra.mxu0 0
  %139 = vmatprep.subr.bf16.mxu0 0
  %140 = vmatpush2.bf16.msra.mxu0 0
  %141 = vmatprep.subr.bf16.mxu0 0
  %142 = vmatpush2.bf16.msra.mxu0 0
  %143 = vmatprep.subr.bf16.mxu0 0
  %144 = vmatpush2.bf16.msra.mxu0 0
  %145 = vmatprep.subr.bf16.mxu0 0
  %146 = vmatpush2.bf16.msra.mxu0 0
  %147 = vmatprep.mubr.bf16.mxu0 0
  %148 = vmatmul.mubr.bf16.gmra.mxu0 %v18
  %v149 = vpop.f32.mrf.mxu0
  %v150 = vadd.f32 0.0, %v149
  %v151 = vpop.f32.mrf.mxu0
  %v152 = vadd.f32 0.0, %v151
  %v153 = vpop.f32.mrf.mxu0
  %v154 = vpop.f32.mrf.mxu0
  %155 = vdwg.mxu0
  %v156 = vld [vmem:[%s2] sm:$0x3]
  %v158 = vlaneseq
  %v159 = vshrl.u32 %v158, 7
  %v160 = vsub.s32 0, %v159
  %v161 = vrot.slane %v156, %v160
  %v162 = vlaneseq
  %v163 = vshrl.u32 %v162, 7
  %v164 = vsub.s32 1, %v163
  %v165 = vrot.slane %v156, %v164
  %v168 = vmul.f32 %v150, %v161
  %v169 = vmul.f32 %v152, %v165
  %v170 = vld [vmem:[%s3] sm:$0x3]
  %v172 = vlaneseq
  %v173 = vshrl.u32 %v172, 7
  %v174 = vsub.s32 0, %v173
  %v175 = vrot.slane %v170, %v174
  %v176 = vlaneseq
  %v177 = vshrl.u32 %v176, 7
  %v178 = vsub.s32 1, %v177
  %v179 = vrot.slane %v170, %v178
  %v182 = vadd.f32 %v168, %v175
  %v183 = vadd.f32 %v169, %v179
  %v184 = vpack.c.bf16 %v182, %v182
  %v185 = vpack.c.bf16 %v183, %v183
  %v188 = vunpack.c.l.b16 %v184
  %v189 = vunpack.c.l.b16 %v185
  %v190 = vpack.c.b16 %v189, %v188
  %192 = vst [vmem:[%s4] sm:$0xff] %v190
  // Predicated region
  $region18: #{forward.58} parent=0 // pred_check
    _
  $region19: #{forward.58} parent=0 // pred_check_branch
    %194 = sbr.rel (0) target = $region21
  $region20: #{forward.58} parent=0 // pred_region
    _
  $region21: #{forward.58} parent=0 // pred_fallthru
    _
  // Predicated region
  $region22: #{forward.58} parent=0 // pred_check
    _
  $region23: #{forward.58} parent=0 // pred_check_branch
    %196 = sbr.rel (0) target = $region25
  $region24: #{forward.58} parent=0 // pred_region
    _
  $region25: #{forward.58} parent=0 // pred_fallthru
    _

// kernel: forward.59
$region0: #{forward.59}
  #allocation0 [shape = 'u32[]', space=smem, size = 0x4, offset = 0x4, fixed_abs, tag = 'smem constant byte address 0x4 - core index']
  #allocation1 [shape = 'u32[144,128]{1,0:T(1,128)}', space=vmem, size = 0x12000, scoped, tag = 'internal scratch']
  %s0 = inlined_call_operand.vmem [shape: bf16[8,1152], index: 0, kind: input, shape index: {}]
  %s1 = inlined_call_operand.vmem [shape: bf16[1152,128], index: 1, kind: input, shape index: {}]
  %s2 = inlined_call_operand.vmem [shape: f32[1,128], index: 2, kind: input, shape index: {}]
  %s3 = inlined_call_operand.vmem [shape: f32[1,128], index: 3, kind: input, shape index: {}]
  %s4 = inlined_call_operand.vmem [shape: bf16[128,256], index: 4, kind: input, shape index: {}]
  %s5 = inlined_call_operand.vmem [shape: f32[1,256], index: 5, kind: input, shape index: {}]
  %s6 = inlined_call_operand.vmem [shape: f32[1,256], index: 6, kind: input, shape index: {}]
  %s7 = inlined_call_operand.vmem [shape: bf16[8,256], index: 7, kind: input, shape index: {}]
  %s8 = inlined_call_operand.vmem [shape: bf16[8,256], index: 8, kind: output, shape index: {}]
  %s9 = sld [smem:[#allocation0]]
  $region42: #{forward.59} parent=0
    _
  %s11 = ssub.s32 1, %s9
  %s12 = scalar_select 0, %s11, %s9
  // Predicated region
  $region2: #{forward.59} parent=0 // pred_check
    _
  $region3: #{forward.59} parent=0 // pred_check_branch
    %14 = sbr.rel (0) target = $region5
  $region4: #{forward.59} parent=0 // pred_region
    _
  $region5: #{forward.59} parent=0 // pred_fallthru
    _
  // Predicated region
  $region6: #{forward.59} parent=0 // pred_check
    _
  $region7: #{forward.59} parent=0 // pred_check_branch
    %16 = sbr.rel (0) target = $region9
  $region8: #{forward.59} parent=0 // pred_region
    _
  $region9: #{forward.59} parent=0 // pred_fallthru
    _
  // Predicated region
  $region10: #{forward.59} parent=0 // pred_check
    _
  $region11: #{forward.59} parent=0 // pred_check_branch
    %18 = sbr.rel (0) target = $region13
  $region12: #{forward.59} parent=0 // pred_region
    _
  $region13: #{forward.59} parent=0 // pred_fallthru
    _
  // Predicated region
  $region14: #{forward.59} parent=0 // pred_check
    _
  $region15: #{forward.59} parent=0 // pred_check_branch
    %20 = sbr.rel (0) target = $region17
  $region16: #{forward.59} parent=0 // pred_region
    _
  $region17: #{forward.59} parent=0 // pred_fallthru
    _
  // Predicated region
  $region18: #{forward.59} parent=0 // pred_check
    _
  $region19: #{forward.59} parent=0 // pred_check_branch
    %22 = sbr.rel (0) target = $region21
  $region20: #{forward.59} parent=0 // pred_region
    _
  $region21: #{forward.59} parent=0 // pred_fallthru
    _
  // Predicated region
  $region22: #{forward.59} parent=0 // pred_check
    _
  $region23: #{forward.59} parent=0 // pred_check_branch
    %24 = sbr.rel (0) target = $region25
  $region24: #{forward.59} parent=0 // pred_region
    _
  $region25: #{forward.59} parent=0 // pred_fallthru
    _
  // Predicated region
  $region26: #{forward.59} parent=0 // pred_check
    _
  $region27: #{forward.59} parent=0 // pred_check_branch
    %26 = sbr.rel (0) target = $region29
  $region28: #{forward.59} parent=0 // pred_region
    _
  $region29: #{forward.59} parent=0 // pred_fallthru
    _
  // Predicated region
  $region30: #{forward.59} parent=0 // pred_check
    _
  $region31: #{forward.59} parent=0 // pred_check_branch
    %28 = sbr.rel (0) target = $region33
  $region32: #{forward.59} parent=0 // pred_region
    _
  $region33: #{forward.59} parent=0 // pred_fallthru
    _
  %v30 = vld [vmem:[%s0] sm:$0xff]
  %v31 = vld [vmem:[%s0 + $0x8] sm:$0xff]
  %v32 = vld [vmem:[%s0 + $0x10] sm:$0xff]
  %v33 = vld [vmem:[%s0 + $0x18] sm:$0xff]
  %v34 = vld [vmem:[%s0 + $0x20] sm:$0xf]
  %v35 = vld [vmem:[%s1] sm:$0xf]
  %v36 = vld [vmem:[%s1 + $0x4] sm:$0xf]
  %v37 = vld [vmem:[%s1 + $0x8] sm:$0xf]
  %v38 = vld [vmem:[%s1 + $0xc] sm:$0xf]
  %v39 = vld [vmem:[%s1 + $0x10] sm:$0xf]
  %v40 = vld [vmem:[%s1 + $0x14] sm:$0xf]
  %v41 = vld [vmem:[%s1 + $0x18] sm:$0xf]
  %v42 = vld [vmem:[%s1 + $0x1c] sm:$0xf]
  %v43 = vld [vmem:[%s1 + $0x20] sm:$0xf]
  %v44 = vld [vmem:[%s1 + $0x24] sm:$0xf]
  %v45 = vld [vmem:[%s1 + $0x28] sm:$0xf]
  %v46 = vld [vmem:[%s1 + $0x2c] sm:$0xf]
  %v47 = vld [vmem:[%s1 + $0x30] sm:$0xf]
  %v48 = vld [vmem:[%s1 + $0x34] sm:$0xf]
  %v49 = vld [vmem:[%s1 + $0x38] sm:$0xf]
  %v50 = vld [vmem:[%s1 + $0x3c] sm:$0xf]
  %v51 = vld [vmem:[%s1 + $0x40] sm:$0xf]
  %v52 = vld [vmem:[%s1 + $0x44] sm:$0xf]
  %v53 = vld [vmem:[%s1 + $0x48] sm:$0xf]
  %v54 = vld [vmem:[%s1 + $0x4c] sm:$0xf]
  %v55 = vld [vmem:[%s1 + $0x50] sm:$0xf]
  %v56 = vld [vmem:[%s1 + $0x54] sm:$0xf]
  %v57 = vld [vmem:[%s1 + $0x58] sm:$0xf]
  %v58 = vld [vmem:[%s1 + $0x5c] sm:$0xf]
  %v59 = vld [vmem:[%s1 + $0x60] sm:$0xf]
  %v60 = vld [vmem:[%s1 + $0x64] sm:$0xf]
  %v61 = vld [vmem:[%s1 + $0x68] sm:$0xf]
  %v62 = vld [vmem:[%s1 + $0x6c] sm:$0xf]
  %v63 = vld [vmem:[%s1 + $0x70] sm:$0xf]
  %v64 = vld [vmem:[%s1 + $0x74] sm:$0xf]
  %v65 = vld [vmem:[%s1 + $0x78] sm:$0xf]
  %v66 = vld [vmem:[%s1 + $0x7c] sm:$0xf]
  %v67 = vld [vmem:[%s1 + $0x80] sm:$0xf]
  %v68 = vld [vmem:[%s1 + $0x84] sm:$0xf]
  %v69 = vld [vmem:[%s1 + $0x88] sm:$0xf]
  %v70 = vld [vmem:[%s1 + $0x8c] sm:$0xf]
  %v71 = vld [vmem:[%s1 + $0x90] sm:$0xf]
  %v72 = vld [vmem:[%s1 + $0x94] sm:$0xf]
  %v73 = vld [vmem:[%s1 + $0x98] sm:$0xf]
  %v74 = vld [vmem:[%s1 + $0x9c] sm:$0xf]
  %v75 = vld [vmem:[%s1 + $0xa0] sm:$0xf]
  %v76 = vld [vmem:[%s1 + $0xa4] sm:$0xf]
  %v77 = vld [vmem:[%s1 + $0xa8] sm:$0xf]
  %v78 = vld [vmem:[%s1 + $0xac] sm:$0xf]
  %v79 = vld [vmem:[%s1 + $0xb0] sm:$0xf]
  %v80 = vld [vmem:[%s1 + $0xb4] sm:$0xf]
  %v81 = vld [vmem:[%s1 + $0xb8] sm:$0xf]
  %v82 = vld [vmem:[%s1 + $0xbc] sm:$0xf]
  %v83 = vld [vmem:[%s1 + $0xc0] sm:$0xf]
  %v84 = vld [vmem:[%s1 + $0xc4] sm:$0xf]
  %v85 = vld [vmem:[%s1 + $0xc8] sm:$0xf]
  %v86 = vld [vmem:[%s1 + $0xcc] sm:$0xf]
  %v87 = vld [vmem:[%s1 + $0xd0] sm:$0xf]
  %v88 = vld [vmem:[%s1 + $0xd4] sm:$0xf]
  %v89 = vld [vmem:[%s1 + $0xd8] sm:$0xf]
  %v90 = vld [vmem:[%s1 + $0xdc] sm:$0xf]
  %v91 = vld [vmem:[%s1 + $0xe0] sm:$0xf]
  %v92 = vld [vmem:[%s1 + $0xe4] sm:$0xf]
  %v93 = vld [vmem:[%s1 + $0xe8] sm:$0xf]
  %v94 = vld [vmem:[%s1 + $0xec] sm:$0xf]
  %v95 = vld [vmem:[%s1 + $0xf0] sm:$0xf]
  %v96 = vld [vmem:[%s1 + $0xf4] sm:$0xf]
  %v97 = vld [vmem:[%s1 + $0xf8] sm:$0xf]
  %v98 = vld [vmem:[%s1 + $0xfc] sm:$0xf]
  %v99 = vld [vmem:[%s1 + $0x100] sm:$0xf]
  %v100 = vld [vmem:[%s1 + $0x104] sm:$0xf]
  %v101 = vld [vmem:[%s1 + $0x108] sm:$0xf]
  %v102 = vld [vmem:[%s1 + $0x10c] sm:$0xf]
  %v103 = vld [vmem:[%s1 + $0x110] sm:$0xf]
  %v104 = vld [vmem:[%s1 + $0x114] sm:$0xf]
  %v105 = vld [vmem:[%s1 + $0x118] sm:$0xf]
  %v106 = vld [vmem:[%s1 + $0x11c] sm:$0xf]
  %v107 = vld [vmem:[%s1 + $0x120] sm:$0xf]
  %v108 = vld [vmem:[%s1 + $0x124] sm:$0xf]
  %v109 = vld [vmem:[%s1 + $0x128] sm:$0xf]
  %v110 = vld [vmem:[%s1 + $0x12c] sm:$0xf]
  %v111 = vld [vmem:[%s1 + $0x130] sm:$0xf]
  %v112 = vld [vmem:[%s1 + $0x134] sm:$0xf]
  %v113 = vld [vmem:[%s1 + $0x138] sm:$0xf]
  %v114 = vld [vmem:[%s1 + $0x13c] sm:$0xf]
  %v115 = vld [vmem:[%s1 + $0x140] sm:$0xf]
  %v116 = vld [vmem:[%s1 + $0x144] sm:$0xf]
  %v117 = vld [vmem:[%s1 + $0x148] sm:$0xf]
  %v118 = vld [vmem:[%s1 + $0x14c] sm:$0xf]
  %v119 = vld [vmem:[%s1 + $0x150] sm:$0xf]
  %v120 = vld [vmem:[%s1 + $0x154] sm:$0xf]
  %v121 = vld [vmem:[%s1 + $0x158] sm:$0xf]
  %v122 = vld [vmem:[%s1 + $0x15c] sm:$0xf]
  %v123 = vld [vmem:[%s1 + $0x160] sm:$0xf]
  %v124 = vld [vmem:[%s1 + $0x164] sm:$0xf]
  %v125 = vld [vmem:[%s1 + $0x168] sm:$0xf]
  %v126 = vld [vmem:[%s1 + $0x16c] sm:$0xf]
  %v127 = vld [vmem:[%s1 + $0x170] sm:$0xf]
  %v128 = vld [vmem:[%s1 + $0x174] sm:$0xf]
  %v129 = vld [vmem:[%s1 + $0x178] sm:$0xf]
  %v130 = vld [vmem:[%s1 + $0x17c] sm:$0xf]
  %v131 = vld [vmem:[%s1 + $0x180] sm:$0xf]
  %v132 = vld [vmem:[%s1 + $0x184] sm:$0xf]
  %v133 = vld [vmem:[%s1 + $0x188] sm:$0xf]
  %v134 = vld [vmem:[%s1 + $0x18c] sm:$0xf]
  %v135 = vld [vmem:[%s1 + $0x190] sm:$0xf]
  %v136 = vld [vmem:[%s1 + $0x194] sm:$0xf]
  %v137 = vld [vmem:[%s1 + $0x198] sm:$0xf]
  %v138 = vld [vmem:[%s1 + $0x19c] sm:$0xf]
  %v139 = vld [vmem:[%s1 + $0x1a0] sm:$0xf]
  %v140 = vld [vmem:[%s1 + $0x1a4] sm:$0xf]
  %v141 = vld [vmem:[%s1 + $0x1a8] sm:$0xf]
  %v142 = vld [vmem:[%s1 + $0x1ac] sm:$0xf]
  %v143 = vld [vmem:[%s1 + $0x1b0] sm:$0xf]
  %v144 = vld [vmem:[%s1 + $0x1b4] sm:$0xf]
  %v145 = vld [vmem:[%s1 + $0x1b8] sm:$0xf]
  %v146 = vld [vmem:[%s1 + $0x1bc] sm:$0xf]
  %v147 = vld [vmem:[%s1 + $0x1c0] sm:$0xf]
  %v148 = vld [vmem:[%s1 + $0x1c4] sm:$0xf]
  %v149 = vld [vmem:[%s1 + $0x1c8] sm:$0xf]
  %v150 = vld [vmem:[%s1 + $0x1cc] sm:$0xf]
  %v151 = vld [vmem:[%s1 + $0x1d0] sm:$0xf]
  %v152 = vld [vmem:[%s1 + $0x1d4] sm:$0xf]
  %v153 = vld [vmem:[%s1 + $0x1d8] sm:$0xf]
  %v154 = vld [vmem:[%s1 + $0x1dc] sm:$0xf]
  %v155 = vld [vmem:[%s1 + $0x1e0] sm:$0xf]
  %v156 = vld [vmem:[%s1 + $0x1e4] sm:$0xf]
  %v157 = vld [vmem:[%s1 + $0x1e8] sm:$0xf]
  %v158 = vld [vmem:[%s1 + $0x1ec] sm:$0xf]
  %v159 = vld [vmem:[%s1 + $0x1f0] sm:$0xf]
  %v160 = vld [vmem:[%s1 + $0x1f4] sm:$0xf]
  %v161 = vld [vmem:[%s1 + $0x1f8] sm:$0xf]
  %v162 = vld [vmem:[%s1 + $0x1fc] sm:$0xf]
  %v163 = vld [vmem:[%s1 + $0x200] sm:$0xf]
  %v164 = vld [vmem:[%s1 + $0x204] sm:$0xf]
  %v165 = vld [vmem:[%s1 + $0x208] sm:$0xf]
  %v166 = vld [vmem:[%s1 + $0x20c] sm:$0xf]
  %v167 = vld [vmem:[%s1 + $0x210] sm:$0xf]
  %v168 = vld [vmem:[%s1 + $0x214] sm:$0xf]
  %v169 = vld [vmem:[%s1 + $0x218] sm:$0xf]
  %v170 = vld [vmem:[%s1 + $0x21c] sm:$0xf]
  %v171 = vld [vmem:[%s1 + $0x220] sm:$0xf]
  %v172 = vld [vmem:[%s1 + $0x224] sm:$0xf]
  %v173 = vld [vmem:[%s1 + $0x228] sm:$0xf]
  %v174 = vld [vmem:[%s1 + $0x22c] sm:$0xf]
  %v175 = vld [vmem:[%s1 + $0x230] sm:$0xf]
  %v176 = vld [vmem:[%s1 + $0x234] sm:$0xf]
  %v177 = vld [vmem:[%s1 + $0x238] sm:$0xf]
  %v178 = vld [vmem:[%s1 + $0x23c] sm:$0xf]
  %v184 = vunpack.c.l.b16 %v30
  %v185 = vunpack.c.h.b16 %v30
  %v186 = vunpack.c.l.b16 %v31
  %v187 = vunpack.c.h.b16 %v31
  %v188 = vunpack.c.l.b16 %v32
  %v189 = vunpack.c.h.b16 %v32
  %v190 = vunpack.c.l.b16 %v33
  %v191 = vunpack.c.h.b16 %v33
  %v192 = vunpack.c.l.b16 %v34
  %v193 = vpack.c.b16 %v184, %v184
  %v194 = vpack.c.b16 %v185, %v185
  %v195 = vpack.c.b16 %v186, %v186
  %v196 = vpack.c.b16 %v187, %v187
  %v197 = vpack.c.b16 %v188, %v188
  %v198 = vpack.c.b16 %v189, %v189
  %v199 = vpack.c.b16 %v190, %v190
  %v200 = vpack.c.b16 %v191, %v191
  %v201 = vpack.c.b16 %v192, %v192
  %v355 = vunpack.c.l.b16 %v35
  %v356 = vunpack.c.l.b16 %v36
  %v357 = vunpack.c.l.b16 %v37
  %v358 = vunpack.c.l.b16 %v38
  %v359 = vunpack.c.l.b16 %v39
  %v360 = vunpack.c.l.b16 %v40
  %v361 = vunpack.c.l.b16 %v41
  %v362 = vunpack.c.l.b16 %v42
  %v363 = vunpack.c.l.b16 %v43
  %v364 = vunpack.c.l.b16 %v44
  %v365 = vunpack.c.l.b16 %v45
  %v366 = vunpack.c.l.b16 %v46
  %v367 = vunpack.c.l.b16 %v47
  %v368 = vunpack.c.l.b16 %v48
  %v369 = vunpack.c.l.b16 %v49
  %v370 = vunpack.c.l.b16 %v50
  %v371 = vunpack.c.l.b16 %v51
  %v372 = vunpack.c.l.b16 %v52
  %v373 = vunpack.c.l.b16 %v53
  %v374 = vunpack.c.l.b16 %v54
  %v375 = vunpack.c.l.b16 %v55
  %v376 = vunpack.c.l.b16 %v56
  %v377 = vunpack.c.l.b16 %v57
  %v378 = vunpack.c.l.b16 %v58
  %v379 = vunpack.c.l.b16 %v59
  %v380 = vunpack.c.l.b16 %v60
  %v381 = vunpack.c.l.b16 %v61
  %v382 = vunpack.c.l.b16 %v62
  %v383 = vunpack.c.l.b16 %v63
  %v384 = vunpack.c.l.b16 %v64
  %v385 = vunpack.c.l.b16 %v65
  %v386 = vunpack.c.l.b16 %v66
  %v387 = vunpack.c.l.b16 %v67
  %v388 = vunpack.c.l.b16 %v68
  %v389 = vunpack.c.l.b16 %v69
  %v390 = vunpack.c.l.b16 %v70
  %v391 = vunpack.c.l.b16 %v71
  %v392 = vunpack.c.l.b16 %v72
  %v393 = vunpack.c.l.b16 %v73
  %v394 = vunpack.c.l.b16 %v74
  %v395 = vunpack.c.l.b16 %v75
  %v396 = vunpack.c.l.b16 %v76
  %v397 = vunpack.c.l.b16 %v77
  %v398 = vunpack.c.l.b16 %v78
  %v399 = vunpack.c.l.b16 %v79
  %v400 = vunpack.c.l.b16 %v80
  %v401 = vunpack.c.l.b16 %v81
  %v402 = vunpack.c.l.b16 %v82
  %v403 = vunpack.c.l.b16 %v83
  %v404 = vunpack.c.l.b16 %v84
  %v405 = vunpack.c.l.b16 %v85
  %v406 = vunpack.c.l.b16 %v86
  %v407 = vunpack.c.l.b16 %v87
  %v408 = vunpack.c.l.b16 %v88
  %v409 = vunpack.c.l.b16 %v89
  %v410 = vunpack.c.l.b16 %v90
  %v411 = vunpack.c.l.b16 %v91
  %v412 = vunpack.c.l.b16 %v92
  %v413 = vunpack.c.l.b16 %v93
  %v414 = vunpack.c.l.b16 %v94
  %v415 = vunpack.c.l.b16 %v95
  %v416 = vunpack.c.l.b16 %v96
  %v417 = vunpack.c.l.b16 %v97
  %v418 = vunpack.c.l.b16 %v98
  %v419 = vunpack.c.l.b16 %v99
  %v420 = vunpack.c.l.b16 %v100
  %v421 = vunpack.c.l.b16 %v101
  %v422 = vunpack.c.l.b16 %v102
  %v423 = vunpack.c.l.b16 %v103
  %v424 = vunpack.c.l.b16 %v104
  %v425 = vunpack.c.l.b16 %v105
  %v426 = vunpack.c.l.b16 %v106
  %v427 = vunpack.c.l.b16 %v107
  %v428 = vunpack.c.l.b16 %v108
  %v429 = vunpack.c.l.b16 %v109
  %v430 = vunpack.c.l.b16 %v110
  %v431 = vunpack.c.l.b16 %v111
  %v432 = vunpack.c.l.b16 %v112
  %v433 = vunpack.c.l.b16 %v113
  %v434 = vunpack.c.l.b16 %v114
  %v435 = vunpack.c.l.b16 %v115
  %v436 = vunpack.c.l.b16 %v116
  %v437 = vunpack.c.l.b16 %v117
  %v438 = vunpack.c.l.b16 %v118
  %v439 = vunpack.c.l.b16 %v119
  %v440 = vunpack.c.l.b16 %v120
  %v441 = vunpack.c.l.b16 %v121
  %v442 = vunpack.c.l.b16 %v122
  %v443 = vunpack.c.l.b16 %v123
  %v444 = vunpack.c.l.b16 %v124
  %v445 = vunpack.c.l.b16 %v125
  %v446 = vunpack.c.l.b16 %v126
  %v447 = vunpack.c.l.b16 %v127
  %v448 = vunpack.c.l.b16 %v128
  %v449 = vunpack.c.l.b16 %v129
  %v450 = vunpack.c.l.b16 %v130
  %v451 = vunpack.c.l.b16 %v131
  %v452 = vunpack.c.l.b16 %v132
  %v453 = vunpack.c.l.b16 %v133
  %v454 = vunpack.c.l.b16 %v134
  %v455 = vunpack.c.l.b16 %v135
  %v456 = vunpack.c.l.b16 %v136
  %v457 = vunpack.c.l.b16 %v137
  %v458 = vunpack.c.l.b16 %v138
  %v459 = vunpack.c.l.b16 %v139
  %v460 = vunpack.c.l.b16 %v140
  %v461 = vunpack.c.l.b16 %v141
  %v462 = vunpack.c.l.b16 %v142
  %v463 = vunpack.c.l.b16 %v143
  %v464 = vunpack.c.l.b16 %v144
  %v465 = vunpack.c.l.b16 %v145
  %v466 = vunpack.c.l.b16 %v146
  %v467 = vunpack.c.l.b16 %v147
  %v468 = vunpack.c.l.b16 %v148
  %v469 = vunpack.c.l.b16 %v149
  %v470 = vunpack.c.l.b16 %v150
  %v471 = vunpack.c.l.b16 %v151
  %v472 = vunpack.c.l.b16 %v152
  %v473 = vunpack.c.l.b16 %v153
  %v474 = vunpack.c.l.b16 %v154
  %v475 = vunpack.c.l.b16 %v155
  %v476 = vunpack.c.l.b16 %v156
  %v477 = vunpack.c.l.b16 %v157
  %v478 = vunpack.c.l.b16 %v158
  %v479 = vunpack.c.l.b16 %v159
  %v480 = vunpack.c.l.b16 %v160
  %v481 = vunpack.c.l.b16 %v161
  %v482 = vunpack.c.l.b16 %v162
  %v483 = vunpack.c.l.b16 %v163
  %v484 = vunpack.c.l.b16 %v164
  %v485 = vunpack.c.l.b16 %v165
  %v486 = vunpack.c.l.b16 %v166
  %v487 = vunpack.c.l.b16 %v167
  %v488 = vunpack.c.l.b16 %v168
  %v489 = vunpack.c.l.b16 %v169
  %v490 = vunpack.c.l.b16 %v170
  %v491 = vunpack.c.l.b16 %v171
  %v492 = vunpack.c.l.b16 %v172
  %v493 = vunpack.c.l.b16 %v173
  %v494 = vunpack.c.l.b16 %v174
  %v495 = vunpack.c.l.b16 %v175
  %v496 = vunpack.c.l.b16 %v176
  %v497 = vunpack.c.l.b16 %v177
  %v498 = vunpack.c.l.b16 %v178
  %v499 = vpack.c.b16 %v356, %v355
  %v500 = vpack.c.b16 %v358, %v357
  %v501 = vpack.c.b16 %v360, %v359
  %v502 = vpack.c.b16 %v362, %v361
  %v503 = vpack.c.b16 %v364, %v363
  %v504 = vpack.c.b16 %v366, %v365
  %v505 = vpack.c.b16 %v368, %v367
  %v506 = vpack.c.b16 %v370, %v369
  %v507 = vpack.c.b16 %v372, %v371
  %v508 = vpack.c.b16 %v374, %v373
  %v509 = vpack.c.b16 %v376, %v375
  %v510 = vpack.c.b16 %v378, %v377
  %v511 = vpack.c.b16 %v380, %v379
  %v512 = vpack.c.b16 %v382, %v381
  %v513 = vpack.c.b16 %v384, %v383
  %v514 = vpack.c.b16 %v386, %v385
  %v515 = vpack.c.b16 %v388, %v387
  %v516 = vpack.c.b16 %v390, %v389
  %v517 = vpack.c.b16 %v392, %v391
  %v518 = vpack.c.b16 %v394, %v393
  %v519 = vpack.c.b16 %v396, %v395
  %v520 = vpack.c.b16 %v398, %v397
  %v521 = vpack.c.b16 %v400, %v399
  %v522 = vpack.c.b16 %v402, %v401
  %v523 = vpack.c.b16 %v404, %v403
  %v524 = vpack.c.b16 %v406, %v405
  %v525 = vpack.c.b16 %v408, %v407
  %v526 = vpack.c.b16 %v410, %v409
  %v527 = vpack.c.b16 %v412, %v411
  %v528 = vpack.c.b16 %v414, %v413
  %v529 = vpack.c.b16 %v416, %v415
  %v530 = vpack.c.b16 %v418, %v417
  %v531 = vpack.c.b16 %v420, %v419
  %v532 = vpack.c.b16 %v422, %v421
  %v533 = vpack.c.b16 %v424, %v423
  %v534 = vpack.c.b16 %v426, %v425
  %v535 = vpack.c.b16 %v428, %v427
  %v536 = vpack.c.b16 %v430, %v429
  %v537 = vpack.c.b16 %v432, %v431
  %v538 = vpack.c.b16 %v434, %v433
  %v539 = vpack.c.b16 %v436, %v435
  %v540 = vpack.c.b16 %v438, %v437
  %v541 = vpack.c.b16 %v440, %v439
  %v542 = vpack.c.b16 %v442, %v441
  %v543 = vpack.c.b16 %v444, %v443
  %v544 = vpack.c.b16 %v446, %v445
  %v545 = vpack.c.b16 %v448, %v447
  %v546 = vpack.c.b16 %v450, %v449
  %v547 = vpack.c.b16 %v452, %v451
  %v548 = vpack.c.b16 %v454, %v453
  %v549 = vpack.c.b16 %v456, %v455
  %v550 = vpack.c.b16 %v458, %v457
  %v551 = vpack.c.b16 %v460, %v459
  %v552 = vpack.c.b16 %v462, %v461
  %v553 = vpack.c.b16 %v464, %v463
  %v554 = vpack.c.b16 %v466, %v465
  %v555 = vpack.c.b16 %v468, %v467
  %v556 = vpack.c.b16 %v470, %v469
  %v557 = vpack.c.b16 %v472, %v471
  %v558 = vpack.c.b16 %v474, %v473
  %v559 = vpack.c.b16 %v476, %v475
  %v560 = vpack.c.b16 %v478, %v477
  %v561 = vpack.c.b16 %v480, %v479
  %v562 = vpack.c.b16 %v482, %v481
  %v563 = vpack.c.b16 %v484, %v483
  %v564 = vpack.c.b16 %v486, %v485
  %v565 = vpack.c.b16 %v488, %v487
  %v566 = vpack.c.b16 %v490, %v489
  %v567 = vpack.c.b16 %v492, %v491
  %v568 = vpack.c.b16 %v494, %v493
  %v569 = vpack.c.b16 %v496, %v495
  %v570 = vpack.c.b16 %v498, %v497
  %643 = vmatprep.subr.bf16.mxu0 0
  %644 = vmatpush1.bf16.msra.mxu0 %v506
  %645 = vmatprep.subr.bf16.mxu0 0
  %646 = vmatpush1.bf16.msra.mxu0 %v505
  %647 = vmatprep.subr.bf16.mxu0 0
  %648 = vmatpush1.bf16.msra.mxu0 %v504
  %649 = vmatprep.subr.bf16.mxu0 0
  %650 = vmatpush1.bf16.msra.mxu0 %v503
  %651 = vmatprep.subr.bf16.mxu0 0
  %652 = vmatpush1.bf16.msra.mxu0 %v502
  %653 = vmatprep.subr.bf16.mxu0 0
  %654 = vmatpush1.bf16.msra.mxu0 %v501
  %655 = vmatprep.subr.bf16.mxu0 0
  %656 = vmatpush1.bf16.msra.mxu0 %v500
  %657 = vmatprep.subr.bf16.mxu0 0
  %658 = vmatpush1.bf16.msra.mxu0 %v499
  %659 = vmatprep.subr.bf16.mxu0 0
  %660 = vmatpush2.bf16.msra.mxu0 %v514
  %661 = vmatprep.subr.bf16.mxu0 0
  %662 = vmatpush2.bf16.msra.mxu0 %v513
  %663 = vmatprep.subr.bf16.mxu0 0
  %664 = vmatpush2.bf16.msra.mxu0 %v512
  %665 = vmatprep.subr.bf16.mxu0 0
  %666 = vmatpush2.bf16.msra.mxu0 %v511
  %667 = vmatprep.subr.bf16.mxu0 0
  %668 = vmatpush2.bf16.msra.mxu0 %v510
  %669 = vmatprep.subr.bf16.mxu0 0
  %670 = vmatpush2.bf16.msra.mxu0 %v509
  %671 = vmatprep.subr.bf16.mxu0 0
  %672 = vmatpush2.bf16.msra.mxu0 %v508
  %673 = vmatprep.subr.bf16.mxu0 0
  %674 = vmatpush2.bf16.msra.mxu0 %v507
  %675 = vmatprep.mubr.bf16.mxu0 %v194
  %676 = vmatmul.mubr.bf16.gmra.mxu0 %v193
  %v677 = vpop.f32.mrf.mxu0
  %v678 = vadd.f32 0.0, %v677
  %v679 = vpop.f32.mrf.mxu0
  %v680 = vpop.f32.mrf.mxu0
  %v681 = vpop.f32.mrf.mxu0
  %682 = vdwg.mxu0
  %683 = vmatprep.subr.bf16.mxu0 0
  %684 = vmatpush1.bf16.msra.mxu0 %v522
  %685 = vmatprep.subr.bf16.mxu0 0
  %686 = vmatpush1.bf16.msra.mxu0 %v521
  %687 = vmatprep.subr.bf16.mxu0 0
  %688 = vmatpush1.bf16.msra.mxu0 %v520
  %689 = vmatprep.subr.bf16.mxu0 0
  %690 = vmatpush1.bf16.msra.mxu0 %v519
  %691 = vmatprep.subr.bf16.mxu0 0
  %692 = vmatpush1.bf16.msra.mxu0 %v518
  %693 = vmatprep.subr.bf16.mxu0 0
  %694 = vmatpush1.bf16.msra.mxu0 %v517
  %695 = vmatprep.subr.bf16.mxu0 0
  %696 = vmatpush1.bf16.msra.mxu0 %v516
  %697 = vmatprep.subr.bf16.mxu0 0
  %698 = vmatpush1.bf16.msra.mxu0 %v515
  %699 = vmatprep.subr.bf16.mxu0 0
  %700 = vmatpush2.bf16.msra.mxu0 %v530
  %701 = vmatprep.subr.bf16.mxu0 0
  %702 = vmatpush2.bf16.msra.mxu0 %v529
  %703 = vmatprep.subr.bf16.mxu0 0
  %704 = vmatpush2.bf16.msra.mxu0 %v528
  %705 = vmatprep.subr.bf16.mxu0 0
  %706 = vmatpush2.bf16.msra.mxu0 %v527
  %707 = vmatprep.subr.bf16.mxu0 0
  %708 = vmatpush2.bf16.msra.mxu0 %v526
  %709 = vmatprep.subr.bf16.mxu0 0
  %710 = vmatpush2.bf16.msra.mxu0 %v525
  %711 = vmatprep.subr.bf16.mxu0 0
  %712 = vmatpush2.bf16.msra.mxu0 %v524
  %713 = vmatprep.subr.bf16.mxu0 0
  %714 = vmatpush2.bf16.msra.mxu0 %v523
  %715 = vmatprep.mubr.bf16.mxu0 %v196
  %716 = vmatmul.mubr.bf16.gmra.mxu0 %v195
  %v717 = vpop.f32.mrf.mxu0
  %v718 = vadd.f32 %v678, %v717
  %v719 = vpop.f32.mrf.mxu0
  %v720 = vpop.f32.mrf.mxu0
  %v721 = vpop.f32.mrf.mxu0
  %722 = vdwg.mxu0
  %723 = vmatprep.subr.bf16.mxu0 0
  %724 = vmatpush1.bf16.msra.mxu0 %v538
  %725 = vmatprep.subr.bf16.mxu0 0
  %726 = vmatpush1.bf16.msra.mxu0 %v537
  %727 = vmatprep.subr.bf16.mxu0 0
  %728 = vmatpush1.bf16.msra.mxu0 %v536
  %729 = vmatprep.subr.bf16.mxu0 0
  %730 = vmatpush1.bf16.msra.mxu0 %v535
  %731 = vmatprep.subr.bf16.mxu0 0
  %732 = vmatpush1.bf16.msra.mxu0 %v534
  %733 = vmatprep.subr.bf16.mxu0 0
  %734 = vmatpush1.bf16.msra.mxu0 %v533
  %735 = vmatprep.subr.bf16.mxu0 0
  %736 = vmatpush1.bf16.msra.mxu0 %v532
  %737 = vmatprep.subr.bf16.mxu0 0
  %738 = vmatpush1.bf16.msra.mxu0 %v531
  %739 = vmatprep.subr.bf16.mxu0 0
  %740 = vmatpush2.bf16.msra.mxu0 %v546
  %741 = vmatprep.subr.bf16.mxu0 0
  %742 = vmatpush2.bf16.msra.mxu0 %v545
  %743 = vmatprep.subr.bf16.mxu0 0
  %744 = vmatpush2.bf16.msra.mxu0 %v544
  %745 = vmatprep.subr.bf16.mxu0 0
  %746 = vmatpush2.bf16.msra.mxu0 %v543
  %747 = vmatprep.subr.bf16.mxu0 0
  %748 = vmatpush2.bf16.msra.mxu0 %v542
  %749 = vmatprep.subr.bf16.mxu0 0
  %750 = vmatpush2.bf16.msra.mxu0 %v541
  %751 = vmatprep.subr.bf16.mxu0 0
  %752 = vmatpush2.bf16.msra.mxu0 %v540
  %753 = vmatprep.subr.bf16.mxu0 0
  %754 = vmatpush2.bf16.msra.mxu0 %v539
  %755 = vmatprep.mubr.bf16.mxu0 %v198
  %756 = vmatmul.mubr.bf16.gmra.mxu0 %v197
  %v757 = vpop.f32.mrf.mxu0
  %v758 = vadd.f32 %v718, %v757
  %v759 = vpop.f32.mrf.mxu0
  %v760 = vpop.f32.mrf.mxu0
  %v761 = vpop.f32.mrf.mxu0
  %762 = vdwg.mxu0
  %763 = vmatprep.subr.bf16.mxu0 0
  %764 = vmatpush1.bf16.msra.mxu0 %v554
  %765 = vmatprep.subr.bf16.mxu0 0
  %766 = vmatpush1.bf16.msra.mxu0 %v553
  %767 = vmatprep.subr.bf16.mxu0 0
  %768 = vmatpush1.bf16.msra.mxu0 %v552
  %769 = vmatprep.subr.bf16.mxu0 0
  %770 = vmatpush1.bf16.msra.mxu0 %v551
  %771 = vmatprep.subr.bf16.mxu0 0
  %772 = vmatpush1.bf16.msra.mxu0 %v550
  %773 = vmatprep.subr.bf16.mxu0 0
  %774 = vmatpush1.bf16.msra.mxu0 %v549
  %775 = vmatprep.subr.bf16.mxu0 0
  %776 = vmatpush1.bf16.msra.mxu0 %v548
  %777 = vmatprep.subr.bf16.mxu0 0
  %778 = vmatpush1.bf16.msra.mxu0 %v547
  %779 = vmatprep.subr.bf16.mxu0 0
  %780 = vmatpush2.bf16.msra.mxu0 %v562
  %781 = vmatprep.subr.bf16.mxu0 0
  %782 = vmatpush2.bf16.msra.mxu0 %v561
  %783 = vmatprep.subr.bf16.mxu0 0
  %784 = vmatpush2.bf16.msra.mxu0 %v560
  %785 = vmatprep.subr.bf16.mxu0 0
  %786 = vmatpush2.bf16.msra.mxu0 %v559
  %787 = vmatprep.subr.bf16.mxu0 0
  %788 = vmatpush2.bf16.msra.mxu0 %v558
  %789 = vmatprep.subr.bf16.mxu0 0
  %790 = vmatpush2.bf16.msra.mxu0 %v557
  %791 = vmatprep.subr.bf16.mxu0 0
  %792 = vmatpush2.bf16.msra.mxu0 %v556
  %793 = vmatprep.subr.bf16.mxu0 0
  %794 = vmatpush2.bf16.msra.mxu0 %v555
  %795 = vmatprep.mubr.bf16.mxu0 %v200
  %796 = vmatmul.mubr.bf16.gmra.mxu0 %v199
  %v797 = vpop.f32.mrf.mxu0
  %v798 = vadd.f32 %v758, %v797
  %v799 = vpop.f32.mrf.mxu0
  %v800 = vpop.f32.mrf.mxu0
  %v801 = vpop.f32.mrf.mxu0
  %802 = vdwg.mxu0
  %803 = vmatprep.subr.bf16.mxu0 0
  %804 = vmatpush1.bf16.msra.mxu0 %v570
  %805 = vmatprep.subr.bf16.mxu0 0
  %806 = vmatpush1.bf16.msra.mxu0 %v569
  %807 = vmatprep.subr.bf16.mxu0 0
  %808 = vmatpush1.bf16.msra.mxu0 %v568
  %809 = vmatprep.subr.bf16.mxu0 0
  %810 = vmatpush1.bf16.msra.mxu0 %v567
  %811 = vmatprep.subr.bf16.mxu0 0
  %812 = vmatpush1.bf16.msra.mxu0 %v566
  %813 = vmatprep.subr.bf16.mxu0 0
  %814 = vmatpush1.bf16.msra.mxu0 %v565
  %815 = vmatprep.subr.bf16.mxu0 0
  %816 = vmatpush1.bf16.msra.mxu0 %v564
  %817 = vmatprep.subr.bf16.mxu0 0
  %818 = vmatpush1.bf16.msra.mxu0 %v563
  %819 = vmatprep.subr.bf16.mxu0 0
  %820 = vmatpush2.bf16.msra.mxu0 0
  %821 = vmatprep.subr.bf16.mxu0 0
  %822 = vmatpush2.bf16.msra.mxu0 0
  %823 = vmatprep.subr.bf16.mxu0 0
  %824 = vmatpush2.bf16.msra.mxu0 0
  %825 = vmatprep.subr.bf16.mxu0 0
  %826 = vmatpush2.bf16.msra.mxu0 0
  %827 = vmatprep.subr.bf16.mxu0 0
  %828 = vmatpush2.bf16.msra.mxu0 0
  %829 = vmatprep.subr.bf16.mxu0 0
  %830 = vmatpush2.bf16.msra.mxu0 0
  %831 = vmatprep.subr.bf16.mxu0 0
  %832 = vmatpush2.bf16.msra.mxu0 0
  %833 = vmatprep.subr.bf16.mxu0 0
  %834 = vmatpush2.bf16.msra.mxu0 0
  %835 = vmatprep.mubr.bf16.mxu0 0
  %836 = vmatmul.mubr.bf16.gmra.mxu0 %v201
  %v837 = vpop.f32.mrf.mxu0
  %v838 = vadd.f32 %v798, %v837
  %v839 = vpop.f32.mrf.mxu0
  %v840 = vpop.f32.mrf.mxu0
  %v841 = vpop.f32.mrf.mxu0
  %842 = vdwg.mxu0
  %v843 = vld [vmem:[%s2] sm:$0x1]
  %v845 = vlaneseq
  %v846 = vshrl.u32 %v845, 7
  %v847 = vsub.s32 0, %v846
  %v848 = vrot.slane %v843, %v847
  %v850 = vmul.f32 %v838, %v848
  %v851 = vld [vmem:[%s3] sm:$0x1]
  %v853 = vlaneseq
  %v854 = vshrl.u32 %v853, 7
  %v855 = vsub.s32 0, %v854
  %v856 = vrot.slane %v851, %v855
  %v858 = vadd.f32 %v850, %v856
  %v859 = vmax.f32 %v858, 0.0
  %v860 = vpack.c.bf16 %v859, %v859
  %v861 = vld [vmem:[%s4] sm:$0xff]
  %v862 = vld [vmem:[%s4 + $0x8] sm:$0xff]
  %v863 = vld [vmem:[%s4 + $0x10] sm:$0xff]
  %v864 = vld [vmem:[%s4 + $0x18] sm:$0xff]
  %v865 = vld [vmem:[%s4 + $0x20] sm:$0xff]
  %v866 = vld [vmem:[%s4 + $0x28] sm:$0xff]
  %v867 = vld [vmem:[%s4 + $0x30] sm:$0xff]
  %v868 = vld [vmem:[%s4 + $0x38] sm:$0xff]
  %v869 = vld [vmem:[%s4 + $0x40] sm:$0xff]
  %v870 = vld [vmem:[%s4 + $0x48] sm:$0xff]
  %v871 = vld [vmem:[%s4 + $0x50] sm:$0xff]
  %v872 = vld [vmem:[%s4 + $0x58] sm:$0xff]
  %v873 = vld [vmem:[%s4 + $0x60] sm:$0xff]
  %v874 = vld [vmem:[%s4 + $0x68] sm:$0xff]
  %v875 = vld [vmem:[%s4 + $0x70] sm:$0xff]
  %v876 = vld [vmem:[%s4 + $0x78] sm:$0xff]
  %v893 = vunpack.c.l.b16 %v861
  %v894 = vunpack.c.h.b16 %v861
  %v895 = vunpack.c.l.b16 %v862
  %v896 = vunpack.c.h.b16 %v862
  %v897 = vunpack.c.l.b16 %v863
  %v898 = vunpack.c.h.b16 %v863
  %v899 = vunpack.c.l.b16 %v864
  %v900 = vunpack.c.h.b16 %v864
  %v901 = vunpack.c.l.b16 %v865
  %v902 = vunpack.c.h.b16 %v865
  %v903 = vunpack.c.l.b16 %v866
  %v904 = vunpack.c.h.b16 %v866
  %v905 = vunpack.c.l.b16 %v867
  %v906 = vunpack.c.h.b16 %v867
  %v907 = vunpack.c.l.b16 %v868
  %v908 = vunpack.c.h.b16 %v868
  %v909 = vunpack.c.l.b16 %v869
  %v910 = vunpack.c.h.b16 %v869
  %v911 = vunpack.c.l.b16 %v870
  %v912 = vunpack.c.h.b16 %v870
  %v913 = vunpack.c.l.b16 %v871
  %v914 = vunpack.c.h.b16 %v871
  %v915 = vunpack.c.l.b16 %v872
  %v916 = vunpack.c.h.b16 %v872
  %v917 = vunpack.c.l.b16 %v873
  %v918 = vunpack.c.h.b16 %v873
  %v919 = vunpack.c.l.b16 %v874
  %v920 = vunpack.c.h.b16 %v874
  %v921 = vunpack.c.l.b16 %v875
  %v922 = vunpack.c.h.b16 %v875
  %v923 = vunpack.c.l.b16 %v876
  %v924 = vunpack.c.h.b16 %v876
  %v925 = vpack.c.b16 %v895, %v893
  %v926 = vpack.c.b16 %v896, %v894
  %v927 = vpack.c.b16 %v899, %v897
  %v928 = vpack.c.b16 %v900, %v898
  %v929 = vpack.c.b16 %v903, %v901
  %v930 = vpack.c.b16 %v904, %v902
  %v931 = vpack.c.b16 %v907, %v905
  %v932 = vpack.c.b16 %v908, %v906
  %v933 = vpack.c.b16 %v911, %v909
  %v934 = vpack.c.b16 %v912, %v910
  %v935 = vpack.c.b16 %v915, %v913
  %v936 = vpack.c.b16 %v916, %v914
  %v937 = vpack.c.b16 %v919, %v917
  %v938 = vpack.c.b16 %v920, %v918
  %v939 = vpack.c.b16 %v923, %v921
  %v940 = vpack.c.b16 %v924, %v922
  %957 = vmatprep.subr.bf16.mxu0 %v940
  %958 = vmatpush1.bf16.msra.mxu0 %v939
  %959 = vmatprep.subr.bf16.mxu0 %v938
  %960 = vmatpush1.bf16.msra.mxu0 %v937
  %961 = vmatprep.subr.bf16.mxu0 %v936
  %962 = vmatpush1.bf16.msra.mxu0 %v935
  %963 = vmatprep.subr.bf16.mxu0 %v934
  %964 = vmatpush1.bf16.msra.mxu0 %v933
  %965 = vmatprep.subr.bf16.mxu0 %v932
  %966 = vmatpush1.bf16.msra.mxu0 %v931
  %967 = vmatprep.subr.bf16.mxu0 %v930
  %968 = vmatpush1.bf16.msra.mxu0 %v929
  %969 = vmatprep.subr.bf16.mxu0 %v928
  %970 = vmatpush1.bf16.msra.mxu0 %v927
  %971 = vmatprep.subr.bf16.mxu0 %v926
  %972 = vmatpush1.bf16.msra.mxu0 %v925
  %973 = vmatprep.subr.bf16.mxu0 0
  %974 = vmatpush2.bf16.msra.mxu0 0
  %975 = vmatprep.subr.bf16.mxu0 0
  %976 = vmatpush2.bf16.msra.mxu0 0
  %977 = vmatprep.subr.bf16.mxu0 0
  %978 = vmatpush2.bf16.msra.mxu0 0
  %979 = vmatprep.subr.bf16.mxu0 0
  %980 = vmatpush2.bf16.msra.mxu0 0
  %981 = vmatprep.subr.bf16.mxu0 0
  %982 = vmatpush2.bf16.msra.mxu0 0
  %983 = vmatprep.subr.bf16.mxu0 0
  %984 = vmatpush2.bf16.msra.mxu0 0
  %985 = vmatprep.subr.bf16.mxu0 0
  %986 = vmatpush2.bf16.msra.mxu0 0
  %987 = vmatprep.subr.bf16.mxu0 0
  %988 = vmatpush2.bf16.msra.mxu0 0
  %989 = vmatprep.mubr.bf16.mxu0 0
  %990 = vmatmul.mubr.bf16.gmra.mxu0 %v860
  %v991 = vpop.f32.mrf.mxu0
  %v992 = vadd.f32 0.0, %v991
  %v993 = vpop.f32.mrf.mxu0
  %v994 = vadd.f32 0.0, %v993
  %v995 = vpop.f32.mrf.mxu0
  %v996 = vpop.f32.mrf.mxu0
  %997 = vdwg.mxu0
  %v998 = vld [vmem:[%s5] sm:$0x3]
  %v1000 = vlaneseq
  %v1001 = vshrl.u32 %v1000, 7
  %v1002 = vsub.s32 0, %v1001
  %v1003 = vrot.slane %v998, %v1002
  %v1004 = vlaneseq
  %v1005 = vshrl.u32 %v1004, 7
  %v1006 = vsub.s32 1, %v1005
  %v1007 = vrot.slane %v998, %v1006
  %v1010 = vmul.f32 %v992, %v1003
  %v1011 = vmul.f32 %v994, %v1007
  %v1012 = vld [vmem:[%s6] sm:$0x3]
  %v1014 = vlaneseq
  %v1015 = vshrl.u32 %v1014, 7
  %v1016 = vsub.s32 0, %v1015
  %v1017 = vrot.slane %v1012, %v1016
  %v1018 = vlaneseq
  %v1019 = vshrl.u32 %v1018, 7
  %v1020 = vsub.s32 1, %v1019
  %v1021 = vrot.slane %v1012, %v1020
  %v1024 = vadd.f32 %v1010, %v1017
  %v1025 = vadd.f32 %v1011, %v1021
  %v1026 = vld [vmem:[%s7] sm:$0xff]
  %v1027 = vunpack.c.l.bf16 %v1026
  %v1028 = vunpack.c.h.bf16 %v1026
  %v1029 = vadd.f32 %v1024, %v1027
  %v1030 = vadd.f32 %v1025, %v1028
  %v1031 = vmax.f32 %v1029, 0.0
  %v1032 = vmax.f32 %v1030, 0.0
  %v1033 = vpack.c.bf16 %v1031, %v1031
  %v1034 = vpack.c.bf16 %v1032, %v1032
  %v1037 = vunpack.c.l.b16 %v1033
  %v1038 = vunpack.c.l.b16 %v1034
  %v1039 = vpack.c.b16 %v1038, %v1037
  %1041 = vst [vmem:[%s8] sm:$0xff] %v1039
  // Predicated region
  $region34: #{forward.59} parent=0 // pred_check
    _
  $region35: #{forward.59} parent=0 // pred_check_branch
    %1043 = sbr.rel (0) target = $region37
  $region36: #{forward.59} parent=0 // pred_region
    _
  $region37: #{forward.59} parent=0 // pred_fallthru
    _
  // Predicated region
  $region38: #{forward.59} parent=0 // pred_check
    _
  $region39: #{forward.59} parent=0 // pred_check_branch
    %1045 = sbr.rel (0) target = $region41
  $region40: #{forward.59} parent=0 // pred_region
    _
  $region41: #{forward.59} parent=0 // pred_fallthru
    _

// kernel: forward.73
$region0: #{forward.73}
  #allocation0 [shape = 'u32[]', space=smem, size = 0x4, offset = 0x4, fixed_abs, tag = 'smem constant byte address 0x4 - core index']
  #allocation1 [shape = 'u32[144,128]{1,0:T(1,128)}', space=vmem, size = 0x12000, scoped, tag = 'internal scratch']
  %s0 = inlined_call_operand.vmem [shape: bf16[8,512], index: 0, kind: input, shape index: {}]
  %s1 = inlined_call_operand.vmem [shape: bf16[512,128], index: 1, kind: input, shape index: {}]
  %s2 = inlined_call_operand.vmem [shape: f32[1,128], index: 2, kind: input, shape index: {}]
  %s3 = inlined_call_operand.vmem [shape: f32[1,128], index: 3, kind: input, shape index: {}]
  %s4 = inlined_call_operand.vmem [shape: bf16[8,128], index: 4, kind: output, shape index: {}]
  %s5 = sld [smem:[#allocation0]]
  $region26: #{forward.73} parent=0
    _
  %s7 = ssub.s32 1, %s5
  %s8 = scalar_select 0, %s7, %s5
  // Predicated region
  $region2: #{forward.73} parent=0 // pred_check
    _
  $region3: #{forward.73} parent=0 // pred_check_branch
    %10 = sbr.rel (0) target = $region5
  $region4: #{forward.73} parent=0 // pred_region
    _
  $region5: #{forward.73} parent=0 // pred_fallthru
    _
  // Predicated region
  $region6: #{forward.73} parent=0 // pred_check
    _
  $region7: #{forward.73} parent=0 // pred_check_branch
    %12 = sbr.rel (0) target = $region9
  $region8: #{forward.73} parent=0 // pred_region
    _
  $region9: #{forward.73} parent=0 // pred_fallthru
    _
  // Predicated region
  $region10: #{forward.73} parent=0 // pred_check
    _
  $region11: #{forward.73} parent=0 // pred_check_branch
    %14 = sbr.rel (0) target = $region13
  $region12: #{forward.73} parent=0 // pred_region
    _
  $region13: #{forward.73} parent=0 // pred_fallthru
    _
  // Predicated region
  $region14: #{forward.73} parent=0 // pred_check
    _
  $region15: #{forward.73} parent=0 // pred_check_branch
    %16 = sbr.rel (0) target = $region17
  $region16: #{forward.73} parent=0 // pred_region
    _
  $region17: #{forward.73} parent=0 // pred_fallthru
    _
  %v18 = vld [vmem:[%s0] sm:$0xff]
  %v19 = vld [vmem:[%s0 + $0x8] sm:$0xff]
  %v20 = vld [vmem:[%s1] sm:$0xf]
  %v21 = vld [vmem:[%s1 + $0x4] sm:$0xf]
  %v22 = vld [vmem:[%s1 + $0x8] sm:$0xf]
  %v23 = vld [vmem:[%s1 + $0xc] sm:$0xf]
  %v24 = vld [vmem:[%s1 + $0x10] sm:$0xf]
  %v25 = vld [vmem:[%s1 + $0x14] sm:$0xf]
  %v26 = vld [vmem:[%s1 + $0x18] sm:$0xf]
  %v27 = vld [vmem:[%s1 + $0x1c] sm:$0xf]
  %v28 = vld [vmem:[%s1 + $0x20] sm:$0xf]
  %v29 = vld [vmem:[%s1 + $0x24] sm:$0xf]
  %v30 = vld [vmem:[%s1 + $0x28] sm:$0xf]
  %v31 = vld [vmem:[%s1 + $0x2c] sm:$0xf]
  %v32 = vld [vmem:[%s1 + $0x30] sm:$0xf]
  %v33 = vld [vmem:[%s1 + $0x34] sm:$0xf]
  %v34 = vld [vmem:[%s1 + $0x38] sm:$0xf]
  %v35 = vld [vmem:[%s1 + $0x3c] sm:$0xf]
  %v36 = vld [vmem:[%s1 + $0x40] sm:$0xf]
  %v37 = vld [vmem:[%s1 + $0x44] sm:$0xf]
  %v38 = vld [vmem:[%s1 + $0x48] sm:$0xf]
  %v39 = vld [vmem:[%s1 + $0x4c] sm:$0xf]
  %v40 = vld [vmem:[%s1 + $0x50] sm:$0xf]
  %v41 = vld [vmem:[%s1 + $0x54] sm:$0xf]
  %v42 = vld [vmem:[%s1 + $0x58] sm:$0xf]
  %v43 = vld [vmem:[%s1 + $0x5c] sm:$0xf]
  %v44 = vld [vmem:[%s1 + $0x60] sm:$0xf]
  %v45 = vld [vmem:[%s1 + $0x64] sm:$0xf]
  %v46 = vld [vmem:[%s1 + $0x68] sm:$0xf]
  %v47 = vld [vmem:[%s1 + $0x6c] sm:$0xf]
  %v48 = vld [vmem:[%s1 + $0x70] sm:$0xf]
  %v49 = vld [vmem:[%s1 + $0x74] sm:$0xf]
  %v50 = vld [vmem:[%s1 + $0x78] sm:$0xf]
  %v51 = vld [vmem:[%s1 + $0x7c] sm:$0xf]
  %v52 = vld [vmem:[%s1 + $0x80] sm:$0xf]
  %v53 = vld [vmem:[%s1 + $0x84] sm:$0xf]
  %v54 = vld [vmem:[%s1 + $0x88] sm:$0xf]
  %v55 = vld [vmem:[%s1 + $0x8c] sm:$0xf]
  %v56 = vld [vmem:[%s1 + $0x90] sm:$0xf]
  %v57 = vld [vmem:[%s1 + $0x94] sm:$0xf]
  %v58 = vld [vmem:[%s1 + $0x98] sm:$0xf]
  %v59 = vld [vmem:[%s1 + $0x9c] sm:$0xf]
  %v60 = vld [vmem:[%s1 + $0xa0] sm:$0xf]
  %v61 = vld [vmem:[%s1 + $0xa4] sm:$0xf]
  %v62 = vld [vmem:[%s1 + $0xa8] sm:$0xf]
  %v63 = vld [vmem:[%s1 + $0xac] sm:$0xf]
  %v64 = vld [vmem:[%s1 + $0xb0] sm:$0xf]
  %v65 = vld [vmem:[%s1 + $0xb4] sm:$0xf]
  %v66 = vld [vmem:[%s1 + $0xb8] sm:$0xf]
  %v67 = vld [vmem:[%s1 + $0xbc] sm:$0xf]
  %v68 = vld [vmem:[%s1 + $0xc0] sm:$0xf]
  %v69 = vld [vmem:[%s1 + $0xc4] sm:$0xf]
  %v70 = vld [vmem:[%s1 + $0xc8] sm:$0xf]
  %v71 = vld [vmem:[%s1 + $0xcc] sm:$0xf]
  %v72 = vld [vmem:[%s1 + $0xd0] sm:$0xf]
  %v73 = vld [vmem:[%s1 + $0xd4] sm:$0xf]
  %v74 = vld [vmem:[%s1 + $0xd8] sm:$0xf]
  %v75 = vld [vmem:[%s1 + $0xdc] sm:$0xf]
  %v76 = vld [vmem:[%s1 + $0xe0] sm:$0xf]
  %v77 = vld [vmem:[%s1 + $0xe4] sm:$0xf]
  %v78 = vld [vmem:[%s1 + $0xe8] sm:$0xf]
  %v79 = vld [vmem:[%s1 + $0xec] sm:$0xf]
  %v80 = vld [vmem:[%s1 + $0xf0] sm:$0xf]
  %v81 = vld [vmem:[%s1 + $0xf4] sm:$0xf]
  %v82 = vld [vmem:[%s1 + $0xf8] sm:$0xf]
  %v83 = vld [vmem:[%s1 + $0xfc] sm:$0xf]
  %v86 = vunpack.c.l.b16 %v18
  %v87 = vunpack.c.h.b16 %v18
  %v88 = vunpack.c.l.b16 %v19
  %v89 = vunpack.c.h.b16 %v19
  %v90 = vpack.c.b16 %v86, %v86
  %v91 = vpack.c.b16 %v87, %v87
  %v92 = vpack.c.b16 %v88, %v88
  %v93 = vpack.c.b16 %v89, %v89
  %v162 = vunpack.c.l.b16 %v20
  %v163 = vunpack.c.l.b16 %v21
  %v164 = vunpack.c.l.b16 %v22
  %v165 = vunpack.c.l.b16 %v23
  %v166 = vunpack.c.l.b16 %v24
  %v167 = vunpack.c.l.b16 %v25
  %v168 = vunpack.c.l.b16 %v26
  %v169 = vunpack.c.l.b16 %v27
  %v170 = vunpack.c.l.b16 %v28
  %v171 = vunpack.c.l.b16 %v29
  %v172 = vunpack.c.l.b16 %v30
  %v173 = vunpack.c.l.b16 %v31
  %v174 = vunpack.c.l.b16 %v32
  %v175 = vunpack.c.l.b16 %v33
  %v176 = vunpack.c.l.b16 %v34
  %v177 = vunpack.c.l.b16 %v35
  %v178 = vunpack.c.l.b16 %v36
  %v179 = vunpack.c.l.b16 %v37
  %v180 = vunpack.c.l.b16 %v38
  %v181 = vunpack.c.l.b16 %v39
  %v182 = vunpack.c.l.b16 %v40
  %v183 = vunpack.c.l.b16 %v41
  %v184 = vunpack.c.l.b16 %v42
  %v185 = vunpack.c.l.b16 %v43
  %v186 = vunpack.c.l.b16 %v44
  %v187 = vunpack.c.l.b16 %v45
  %v188 = vunpack.c.l.b16 %v46
  %v189 = vunpack.c.l.b16 %v47
  %v190 = vunpack.c.l.b16 %v48
  %v191 = vunpack.c.l.b16 %v49
  %v192 = vunpack.c.l.b16 %v50
  %v193 = vunpack.c.l.b16 %v51
  %v194 = vunpack.c.l.b16 %v52
  %v195 = vunpack.c.l.b16 %v53
  %v196 = vunpack.c.l.b16 %v54
  %v197 = vunpack.c.l.b16 %v55
  %v198 = vunpack.c.l.b16 %v56
  %v199 = vunpack.c.l.b16 %v57
  %v200 = vunpack.c.l.b16 %v58
  %v201 = vunpack.c.l.b16 %v59
  %v202 = vunpack.c.l.b16 %v60
  %v203 = vunpack.c.l.b16 %v61
  %v204 = vunpack.c.l.b16 %v62
  %v205 = vunpack.c.l.b16 %v63
  %v206 = vunpack.c.l.b16 %v64
  %v207 = vunpack.c.l.b16 %v65
  %v208 = vunpack.c.l.b16 %v66
  %v209 = vunpack.c.l.b16 %v67
  %v210 = vunpack.c.l.b16 %v68
  %v211 = vunpack.c.l.b16 %v69
  %v212 = vunpack.c.l.b16 %v70
  %v213 = vunpack.c.l.b16 %v71
  %v214 = vunpack.c.l.b16 %v72
  %v215 = vunpack.c.l.b16 %v73
  %v216 = vunpack.c.l.b16 %v74
  %v217 = vunpack.c.l.b16 %v75
  %v218 = vunpack.c.l.b16 %v76
  %v219 = vunpack.c.l.b16 %v77
  %v220 = vunpack.c.l.b16 %v78
  %v221 = vunpack.c.l.b16 %v79
  %v222 = vunpack.c.l.b16 %v80
  %v223 = vunpack.c.l.b16 %v81
  %v224 = vunpack.c.l.b16 %v82
  %v225 = vunpack.c.l.b16 %v83
  %v226 = vpack.c.b16 %v163, %v162
  %v227 = vpack.c.b16 %v165, %v164
  %v228 = vpack.c.b16 %v167, %v166
  %v229 = vpack.c.b16 %v169, %v168
  %v230 = vpack.c.b16 %v171, %v170
  %v231 = vpack.c.b16 %v173, %v172
  %v232 = vpack.c.b16 %v175, %v174
  %v233 = vpack.c.b16 %v177, %v176
  %v234 = vpack.c.b16 %v179, %v178
  %v235 = vpack.c.b16 %v181, %v180
  %v236 = vpack.c.b16 %v183, %v182
  %v237 = vpack.c.b16 %v185, %v184
  %v238 = vpack.c.b16 %v187, %v186
  %v239 = vpack.c.b16 %v189, %v188
  %v240 = vpack.c.b16 %v191, %v190
  %v241 = vpack.c.b16 %v193, %v192
  %v242 = vpack.c.b16 %v195, %v194
  %v243 = vpack.c.b16 %v197, %v196
  %v244 = vpack.c.b16 %v199, %v198
  %v245 = vpack.c.b16 %v201, %v200
  %v246 = vpack.c.b16 %v203, %v202
  %v247 = vpack.c.b16 %v205, %v204
  %v248 = vpack.c.b16 %v207, %v206
  %v249 = vpack.c.b16 %v209, %v208
  %v250 = vpack.c.b16 %v211, %v210
  %v251 = vpack.c.b16 %v213, %v212
  %v252 = vpack.c.b16 %v215, %v214
  %v253 = vpack.c.b16 %v217, %v216
  %v254 = vpack.c.b16 %v219, %v218
  %v255 = vpack.c.b16 %v221, %v220
  %v256 = vpack.c.b16 %v223, %v222
  %v257 = vpack.c.b16 %v225, %v224
  %290 = vmatprep.subr.bf16.mxu0 0
  %291 = vmatpush1.bf16.msra.mxu0 %v233
  %292 = vmatprep.subr.bf16.mxu0 0
  %293 = vmatpush1.bf16.msra.mxu0 %v232
  %294 = vmatprep.subr.bf16.mxu0 0
  %295 = vmatpush1.bf16.msra.mxu0 %v231
  %296 = vmatprep.subr.bf16.mxu0 0
  %297 = vmatpush1.bf16.msra.mxu0 %v230
  %298 = vmatprep.subr.bf16.mxu0 0
  %299 = vmatpush1.bf16.msra.mxu0 %v229
  %300 = vmatprep.subr.bf16.mxu0 0
  %301 = vmatpush1.bf16.msra.mxu0 %v228
  %302 = vmatprep.subr.bf16.mxu0 0
  %303 = vmatpush1.bf16.msra.mxu0 %v227
  %304 = vmatprep.subr.bf16.mxu0 0
  %305 = vmatpush1.bf16.msra.mxu0 %v226
  %306 = vmatprep.subr.bf16.mxu0 0
  %307 = vmatpush2.bf16.msra.mxu0 %v241
  %308 = vmatprep.subr.bf16.mxu0 0
  %309 = vmatpush2.bf16.msra.mxu0 %v240
  %310 = vmatprep.subr.bf16.mxu0 0
  %311 = vmatpush2.bf16.msra.mxu0 %v239
  %312 = vmatprep.subr.bf16.mxu0 0
  %313 = vmatpush2.bf16.msra.mxu0 %v238
  %314 = vmatprep.subr.bf16.mxu0 0
  %315 = vmatpush2.bf16.msra.mxu0 %v237
  %316 = vmatprep.subr.bf16.mxu0 0
  %317 = vmatpush2.bf16.msra.mxu0 %v236
  %318 = vmatprep.subr.bf16.mxu0 0
  %319 = vmatpush2.bf16.msra.mxu0 %v235
  %320 = vmatprep.subr.bf16.mxu0 0
  %321 = vmatpush2.bf16.msra.mxu0 %v234
  %322 = vmatprep.mubr.bf16.mxu0 %v91
  %323 = vmatmul.mubr.bf16.gmra.mxu0 %v90
  %v324 = vpop.f32.mrf.mxu0
  %v325 = vadd.f32 0.0, %v324
  %v326 = vpop.f32.mrf.mxu0
  %v327 = vpop.f32.mrf.mxu0
  %v328 = vpop.f32.mrf.mxu0
  %329 = vdwg.mxu0
  %330 = vmatprep.subr.bf16.mxu0 0
  %331 = vmatpush1.bf16.msra.mxu0 %v249
  %332 = vmatprep.subr.bf16.mxu0 0
  %333 = vmatpush1.bf16.msra.mxu0 %v248
  %334 = vmatprep.subr.bf16.mxu0 0
  %335 = vmatpush1.bf16.msra.mxu0 %v247
  %336 = vmatprep.subr.bf16.mxu0 0
  %337 = vmatpush1.bf16.msra.mxu0 %v246
  %338 = vmatprep.subr.bf16.mxu0 0
  %339 = vmatpush1.bf16.msra.mxu0 %v245
  %340 = vmatprep.subr.bf16.mxu0 0
  %341 = vmatpush1.bf16.msra.mxu0 %v244
  %342 = vmatprep.subr.bf16.mxu0 0
  %343 = vmatpush1.bf16.msra.mxu0 %v243
  %344 = vmatprep.subr.bf16.mxu0 0
  %345 = vmatpush1.bf16.msra.mxu0 %v242
  %346 = vmatprep.subr.bf16.mxu0 0
  %347 = vmatpush2.bf16.msra.mxu0 %v257
  %348 = vmatprep.subr.bf16.mxu0 0
  %349 = vmatpush2.bf16.msra.mxu0 %v256
  %350 = vmatprep.subr.bf16.mxu0 0
  %351 = vmatpush2.bf16.msra.mxu0 %v255
  %352 = vmatprep.subr.bf16.mxu0 0
  %353 = vmatpush2.bf16.msra.mxu0 %v254
  %354 = vmatprep.subr.bf16.mxu0 0
  %355 = vmatpush2.bf16.msra.mxu0 %v253
  %356 = vmatprep.subr.bf16.mxu0 0
  %357 = vmatpush2.bf16.msra.mxu0 %v252
  %358 = vmatprep.subr.bf16.mxu0 0
  %359 = vmatpush2.bf16.msra.mxu0 %v251
  %360 = vmatprep.subr.bf16.mxu0 0
  %361 = vmatpush2.bf16.msra.mxu0 %v250
  %362 = vmatprep.mubr.bf16.mxu0 %v93
  %363 = vmatmul.mubr.bf16.gmra.mxu0 %v92
  %v364 = vpop.f32.mrf.mxu0
  %v365 = vadd.f32 %v325, %v364
  %v366 = vpop.f32.mrf.mxu0
  %v367 = vpop.f32.mrf.mxu0
  %v368 = vpop.f32.mrf.mxu0
  %369 = vdwg.mxu0
  %v370 = vld [vmem:[%s2] sm:$0x1]
  %v372 = vlaneseq
  %v373 = vshrl.u32 %v372, 7
  %v374 = vsub.s32 0, %v373
  %v375 = vrot.slane %v370, %v374
  %v377 = vmul.f32 %v365, %v375
  %v378 = vld [vmem:[%s3] sm:$0x1]
  %v380 = vlaneseq
  %v381 = vshrl.u32 %v380, 7
  %v382 = vsub.s32 0, %v381
  %v383 = vrot.slane %v378, %v382
  %v385 = vadd.f32 %v377, %v383
  %v386 = vmax.f32 %v385, 0.0
  %v387 = vpack.c.bf16 %v386, %v386
  %388 = vst [vmem:[%s4] sm:$0xf] %v387
  // Predicated region
  $region18: #{forward.73} parent=0 // pred_check
    _
  $region19: #{forward.73} parent=0 // pred_check_branch
    %390 = sbr.rel (0) target = $region21
  $region20: #{forward.73} parent=0 // pred_region
    _
  $region21: #{forward.73} parent=0 // pred_fallthru
    _
  // Predicated region
  $region22: #{forward.73} parent=0 // pred_check
    _
  $region23: #{forward.73} parent=0 // pred_check_branch
    %392 = sbr.rel (0) target = $region25
  $region24: #{forward.73} parent=0 // pred_region
    _
  $region25: #{forward.73} parent=0 // pred_fallthru
    _

// kernel: forward.71
$region0: #{forward.71}
  #allocation0 [shape = 'u32[]', space=smem, size = 0x4, offset = 0x4, fixed_abs, tag = 'smem constant byte address 0x4 - core index']
  #allocation1 [shape = 'u32[144,128]{1,0:T(1,128)}', space=vmem, size = 0x12000, scoped, tag = 'internal scratch']
  %s0 = inlined_call_operand.vmem [shape: bf16[8,256], index: 0, kind: input, shape index: {}]
  %s1 = inlined_call_operand.vmem [shape: bf16[256,512], index: 1, kind: input, shape index: {}]
  %s2 = inlined_call_operand.vmem [shape: f32[1,512], index: 2, kind: input, shape index: {}]
  %s3 = inlined_call_operand.vmem [shape: f32[1,512], index: 3, kind: input, shape index: {}]
  %s4 = inlined_call_operand.vmem [shape: bf16[8,512], index: 4, kind: output, shape index: {}]
  %s5 = sld [smem:[#allocation0]]
  $region26: #{forward.71} parent=0
    _
  %s7 = ssub.s32 1, %s5
  %s8 = scalar_select 0, %s7, %s5
  // Predicated region
  $region2: #{forward.71} parent=0 // pred_check
    _
  $region3: #{forward.71} parent=0 // pred_check_branch
    %10 = sbr.rel (0) target = $region5
  $region4: #{forward.71} parent=0 // pred_region
    _
  $region5: #{forward.71} parent=0 // pred_fallthru
    _
  // Predicated region
  $region6: #{forward.71} parent=0 // pred_check
    _
  $region7: #{forward.71} parent=0 // pred_check_branch
    %12 = sbr.rel (0) target = $region9
  $region8: #{forward.71} parent=0 // pred_region
    _
  $region9: #{forward.71} parent=0 // pred_fallthru
    _
  // Predicated region
  $region10: #{forward.71} parent=0 // pred_check
    _
  $region11: #{forward.71} parent=0 // pred_check_branch
    %14 = sbr.rel (0) target = $region13
  $region12: #{forward.71} parent=0 // pred_region
    _
  $region13: #{forward.71} parent=0 // pred_fallthru
    _
  // Predicated region
  $region14: #{forward.71} parent=0 // pred_check
    _
  $region15: #{forward.71} parent=0 // pred_check_branch
    %16 = sbr.rel (0) target = $region17
  $region16: #{forward.71} parent=0 // pred_region
    _
  $region17: #{forward.71} parent=0 // pred_fallthru
    _
  %v17 = vld [vmem:[%s0] sm:$0xff]
  %v18 = vld [vmem:[%s1] sm:$0xff]
  %v19 = vld [vmem:[%s1 + $0x8] sm:$0xff]
  %v20 = vld [vmem:[%s1 + $0x10] sm:$0xff]
  %v21 = vld [vmem:[%s1 + $0x18] sm:$0xff]
  %v22 = vld [vmem:[%s1 + $0x20] sm:$0xff]
  %v23 = vld [vmem:[%s1 + $0x28] sm:$0xff]
  %v24 = vld [vmem:[%s1 + $0x30] sm:$0xff]
  %v25 = vld [vmem:[%s1 + $0x38] sm:$0xff]
  %v26 = vld [vmem:[%s1 + $0x40] sm:$0xff]
  %v27 = vld [vmem:[%s1 + $0x48] sm:$0xff]
  %v28 = vld [vmem:[%s1 + $0x50] sm:$0xff]
  %v29 = vld [vmem:[%s1 + $0x58] sm:$0xff]
  %v30 = vld [vmem:[%s1 + $0x60] sm:$0xff]
  %v31 = vld [vmem:[%s1 + $0x68] sm:$0xff]
  %v32 = vld [vmem:[%s1 + $0x70] sm:$0xff]
  %v33 = vld [vmem:[%s1 + $0x78] sm:$0xff]
  %v34 = vld [vmem:[%s1 + $0x80] sm:$0xff]
  %v35 = vld [vmem:[%s1 + $0x88] sm:$0xff]
  %v36 = vld [vmem:[%s1 + $0x90] sm:$0xff]
  %v37 = vld [vmem:[%s1 + $0x98] sm:$0xff]
  %v38 = vld [vmem:[%s1 + $0xa0] sm:$0xff]
  %v39 = vld [vmem:[%s1 + $0xa8] sm:$0xff]
  %v40 = vld [vmem:[%s1 + $0xb0] sm:$0xff]
  %v41 = vld [vmem:[%s1 + $0xb8] sm:$0xff]
  %v42 = vld [vmem:[%s1 + $0xc0] sm:$0xff]
  %v43 = vld [vmem:[%s1 + $0xc8] sm:$0xff]
  %v44 = vld [vmem:[%s1 + $0xd0] sm:$0xff]
  %v45 = vld [vmem:[%s1 + $0xd8] sm:$0xff]
  %v46 = vld [vmem:[%s1 + $0xe0] sm:$0xff]
  %v47 = vld [vmem:[%s1 + $0xe8] sm:$0xff]
  %v48 = vld [vmem:[%s1 + $0xf0] sm:$0xff]
  %v49 = vld [vmem:[%s1 + $0xf8] sm:$0xff]
  %v50 = vld [vmem:[%s1 + $0x100] sm:$0xff]
  %v51 = vld [vmem:[%s1 + $0x108] sm:$0xff]
  %v52 = vld [vmem:[%s1 + $0x110] sm:$0xff]
  %v53 = vld [vmem:[%s1 + $0x118] sm:$0xff]
  %v54 = vld [vmem:[%s1 + $0x120] sm:$0xff]
  %v55 = vld [vmem:[%s1 + $0x128] sm:$0xff]
  %v56 = vld [vmem:[%s1 + $0x130] sm:$0xff]
  %v57 = vld [vmem:[%s1 + $0x138] sm:$0xff]
  %v58 = vld [vmem:[%s1 + $0x140] sm:$0xff]
  %v59 = vld [vmem:[%s1 + $0x148] sm:$0xff]
  %v60 = vld [vmem:[%s1 + $0x150] sm:$0xff]
  %v61 = vld [vmem:[%s1 + $0x158] sm:$0xff]
  %v62 = vld [vmem:[%s1 + $0x160] sm:$0xff]
  %v63 = vld [vmem:[%s1 + $0x168] sm:$0xff]
  %v64 = vld [vmem:[%s1 + $0x170] sm:$0xff]
  %v65 = vld [vmem:[%s1 + $0x178] sm:$0xff]
  %v66 = vld [vmem:[%s1 + $0x180] sm:$0xff]
  %v67 = vld [vmem:[%s1 + $0x188] sm:$0xff]
  %v68 = vld [vmem:[%s1 + $0x190] sm:$0xff]
  %v69 = vld [vmem:[%s1 + $0x198] sm:$0xff]
  %v70 = vld [vmem:[%s1 + $0x1a0] sm:$0xff]
  %v71 = vld [vmem:[%s1 + $0x1a8] sm:$0xff]
  %v72 = vld [vmem:[%s1 + $0x1b0] sm:$0xff]
  %v73 = vld [vmem:[%s1 + $0x1b8] sm:$0xff]
  %v74 = vld [vmem:[%s1 + $0x1c0] sm:$0xff]
  %v75 = vld [vmem:[%s1 + $0x1c8] sm:$0xff]
  %v76 = vld [vmem:[%s1 + $0x1d0] sm:$0xff]
  %v77 = vld [vmem:[%s1 + $0x1d8] sm:$0xff]
  %v78 = vld [vmem:[%s1 + $0x1e0] sm:$0xff]
  %v79 = vld [vmem:[%s1 + $0x1e8] sm:$0xff]
  %v80 = vld [vmem:[%s1 + $0x1f0] sm:$0xff]
  %v81 = vld [vmem:[%s1 + $0x1f8] sm:$0xff]
  %v83 = vunpack.c.l.b16 %v17
  %v84 = vunpack.c.h.b16 %v17
  %v85 = vpack.c.b16 %v83, %v83
  %v86 = vpack.c.b16 %v84, %v84
  %v153 = vunpack.c.l.b16 %v18
  %v154 = vunpack.c.h.b16 %v18
  %v155 = vunpack.c.l.b16 %v19
  %v156 = vunpack.c.h.b16 %v19
  %v157 = vunpack.c.l.b16 %v20
  %v158 = vunpack.c.h.b16 %v20
  %v159 = vunpack.c.l.b16 %v21
  %v160 = vunpack.c.h.b16 %v21
  %v161 = vunpack.c.l.b16 %v22
  %v162 = vunpack.c.h.b16 %v22
  %v163 = vunpack.c.l.b16 %v23
  %v164 = vunpack.c.h.b16 %v23
  %v165 = vunpack.c.l.b16 %v24
  %v166 = vunpack.c.h.b16 %v24
  %v167 = vunpack.c.l.b16 %v25
  %v168 = vunpack.c.h.b16 %v25
  %v169 = vunpack.c.l.b16 %v26
  %v170 = vunpack.c.h.b16 %v26
  %v171 = vunpack.c.l.b16 %v27
  %v172 = vunpack.c.h.b16 %v27
  %v173 = vunpack.c.l.b16 %v28
  %v174 = vunpack.c.h.b16 %v28
  %v175 = vunpack.c.l.b16 %v29
  %v176 = vunpack.c.h.b16 %v29
  %v177 = vunpack.c.l.b16 %v30
  %v178 = vunpack.c.h.b16 %v30
  %v179 = vunpack.c.l.b16 %v31
  %v180 = vunpack.c.h.b16 %v31
  %v181 = vunpack.c.l.b16 %v32
  %v182 = vunpack.c.h.b16 %v32
  %v183 = vunpack.c.l.b16 %v33
  %v184 = vunpack.c.h.b16 %v33
  %v185 = vunpack.c.l.b16 %v34
  %v186 = vunpack.c.h.b16 %v34
  %v187 = vunpack.c.l.b16 %v35
  %v188 = vunpack.c.h.b16 %v35
  %v189 = vunpack.c.l.b16 %v36
  %v190 = vunpack.c.h.b16 %v36
  %v191 = vunpack.c.l.b16 %v37
  %v192 = vunpack.c.h.b16 %v37
  %v193 = vunpack.c.l.b16 %v38
  %v194 = vunpack.c.h.b16 %v38
  %v195 = vunpack.c.l.b16 %v39
  %v196 = vunpack.c.h.b16 %v39
  %v197 = vunpack.c.l.b16 %v40
  %v198 = vunpack.c.h.b16 %v40
  %v199 = vunpack.c.l.b16 %v41
  %v200 = vunpack.c.h.b16 %v41
  %v201 = vunpack.c.l.b16 %v42
  %v202 = vunpack.c.h.b16 %v42
  %v203 = vunpack.c.l.b16 %v43
  %v204 = vunpack.c.h.b16 %v43
  %v205 = vunpack.c.l.b16 %v44
  %v206 = vunpack.c.h.b16 %v44
  %v207 = vunpack.c.l.b16 %v45
  %v208 = vunpack.c.h.b16 %v45
  %v209 = vunpack.c.l.b16 %v46
  %v210 = vunpack.c.h.b16 %v46
  %v211 = vunpack.c.l.b16 %v47
  %v212 = vunpack.c.h.b16 %v47
  %v213 = vunpack.c.l.b16 %v48
  %v214 = vunpack.c.h.b16 %v48
  %v215 = vunpack.c.l.b16 %v49
  %v216 = vunpack.c.h.b16 %v49
  %v217 = vunpack.c.l.b16 %v50
  %v218 = vunpack.c.h.b16 %v50
  %v219 = vunpack.c.l.b16 %v51
  %v220 = vunpack.c.h.b16 %v51
  %v221 = vunpack.c.l.b16 %v52
  %v222 = vunpack.c.h.b16 %v52
  %v223 = vunpack.c.l.b16 %v53
  %v224 = vunpack.c.h.b16 %v53
  %v225 = vunpack.c.l.b16 %v54
  %v226 = vunpack.c.h.b16 %v54
  %v227 = vunpack.c.l.b16 %v55
  %v228 = vunpack.c.h.b16 %v55
  %v229 = vunpack.c.l.b16 %v56
  %v230 = vunpack.c.h.b16 %v56
  %v231 = vunpack.c.l.b16 %v57
  %v232 = vunpack.c.h.b16 %v57
  %v233 = vunpack.c.l.b16 %v58
  %v234 = vunpack.c.h.b16 %v58
  %v235 = vunpack.c.l.b16 %v59
  %v236 = vunpack.c.h.b16 %v59
  %v237 = vunpack.c.l.b16 %v60
  %v238 = vunpack.c.h.b16 %v60
  %v239 = vunpack.c.l.b16 %v61
  %v240 = vunpack.c.h.b16 %v61
  %v241 = vunpack.c.l.b16 %v62
  %v242 = vunpack.c.h.b16 %v62
  %v243 = vunpack.c.l.b16 %v63
  %v244 = vunpack.c.h.b16 %v63
  %v245 = vunpack.c.l.b16 %v64
  %v246 = vunpack.c.h.b16 %v64
  %v247 = vunpack.c.l.b16 %v65
  %v248 = vunpack.c.h.b16 %v65
  %v249 = vunpack.c.l.b16 %v66
  %v250 = vunpack.c.h.b16 %v66
  %v251 = vunpack.c.l.b16 %v67
  %v252 = vunpack.c.h.b16 %v67
  %v253 = vunpack.c.l.b16 %v68
  %v254 = vunpack.c.h.b16 %v68
  %v255 = vunpack.c.l.b16 %v69
  %v256 = vunpack.c.h.b16 %v69
  %v257 = vunpack.c.l.b16 %v70
  %v258 = vunpack.c.h.b16 %v70
  %v259 = vunpack.c.l.b16 %v71
  %v260 = vunpack.c.h.b16 %v71
  %v261 = vunpack.c.l.b16 %v72
  %v262 = vunpack.c.h.b16 %v72
  %v263 = vunpack.c.l.b16 %v73
  %v264 = vunpack.c.h.b16 %v73
  %v265 = vunpack.c.l.b16 %v74
  %v266 = vunpack.c.h.b16 %v74
  %v267 = vunpack.c.l.b16 %v75
  %v268 = vunpack.c.h.b16 %v75
  %v269 = vunpack.c.l.b16 %v76
  %v270 = vunpack.c.h.b16 %v76
  %v271 = vunpack.c.l.b16 %v77
  %v272 = vunpack.c.h.b16 %v77
  %v273 = vunpack.c.l.b16 %v78
  %v274 = vunpack.c.h.b16 %v78
  %v275 = vunpack.c.l.b16 %v79
  %v276 = vunpack.c.h.b16 %v79
  %v277 = vunpack.c.l.b16 %v80
  %v278 = vunpack.c.h.b16 %v80
  %v279 = vunpack.c.l.b16 %v81
  %v280 = vunpack.c.h.b16 %v81
  %v281 = vpack.c.b16 %v157, %v153
  %v282 = vpack.c.b16 %v158, %v154
  %v283 = vpack.c.b16 %v159, %v155
  %v284 = vpack.c.b16 %v160, %v156
  %v285 = vpack.c.b16 %v165, %v161
  %v286 = vpack.c.b16 %v166, %v162
  %v287 = vpack.c.b16 %v167, %v163
  %v288 = vpack.c.b16 %v168, %v164
  %v289 = vpack.c.b16 %v173, %v169
  %v290 = vpack.c.b16 %v174, %v170
  %v291 = vpack.c.b16 %v175, %v171
  %v292 = vpack.c.b16 %v176, %v172
  %v293 = vpack.c.b16 %v181, %v177
  %v294 = vpack.c.b16 %v182, %v178
  %v295 = vpack.c.b16 %v183, %v179
  %v296 = vpack.c.b16 %v184, %v180
  %v297 = vpack.c.b16 %v189, %v185
  %v298 = vpack.c.b16 %v190, %v186
  %v299 = vpack.c.b16 %v191, %v187
  %v300 = vpack.c.b16 %v192, %v188
  %v301 = vpack.c.b16 %v197, %v193
  %v302 = vpack.c.b16 %v198, %v194
  %v303 = vpack.c.b16 %v199, %v195
  %v304 = vpack.c.b16 %v200, %v196
  %v305 = vpack.c.b16 %v205, %v201
  %v306 = vpack.c.b16 %v206, %v202
  %v307 = vpack.c.b16 %v207, %v203
  %v308 = vpack.c.b16 %v208, %v204
  %v309 = vpack.c.b16 %v213, %v209
  %v310 = vpack.c.b16 %v214, %v210
  %v311 = vpack.c.b16 %v215, %v211
  %v312 = vpack.c.b16 %v216, %v212
  %v313 = vpack.c.b16 %v221, %v217
  %v314 = vpack.c.b16 %v222, %v218
  %v315 = vpack.c.b16 %v223, %v219
  %v316 = vpack.c.b16 %v224, %v220
  %v317 = vpack.c.b16 %v229, %v225
  %v318 = vpack.c.b16 %v230, %v226
  %v319 = vpack.c.b16 %v231, %v227
  %v320 = vpack.c.b16 %v232, %v228
  %v321 = vpack.c.b16 %v237, %v233
  %v322 = vpack.c.b16 %v238, %v234
  %v323 = vpack.c.b16 %v239, %v235
  %v324 = vpack.c.b16 %v240, %v236
  %v325 = vpack.c.b16 %v245, %v241
  %v326 = vpack.c.b16 %v246, %v242
  %v327 = vpack.c.b16 %v247, %v243
  %v328 = vpack.c.b16 %v248, %v244
  %v329 = vpack.c.b16 %v253, %v249
  %v330 = vpack.c.b16 %v254, %v250
  %v331 = vpack.c.b16 %v255, %v251
  %v332 = vpack.c.b16 %v256, %v252
  %v333 = vpack.c.b16 %v261, %v257
  %v334 = vpack.c.b16 %v262, %v258
  %v335 = vpack.c.b16 %v263, %v259
  %v336 = vpack.c.b16 %v264, %v260
  %v337 = vpack.c.b16 %v269, %v265
  %v338 = vpack.c.b16 %v270, %v266
  %v339 = vpack.c.b16 %v271, %v267
  %v340 = vpack.c.b16 %v272, %v268
  %v341 = vpack.c.b16 %v277, %v273
  %v342 = vpack.c.b16 %v278, %v274
  %v343 = vpack.c.b16 %v279, %v275
  %v344 = vpack.c.b16 %v280, %v276
  %409 = vmatprep.subr.bf16.mxu0 %v310
  %410 = vmatpush1.bf16.msra.mxu0 %v309
  %411 = vmatprep.subr.bf16.mxu0 %v306
  %412 = vmatpush1.bf16.msra.mxu0 %v305
  %413 = vmatprep.subr.bf16.mxu0 %v302
  %414 = vmatpush1.bf16.msra.mxu0 %v301
  %415 = vmatprep.subr.bf16.mxu0 %v298
  %416 = vmatpush1.bf16.msra.mxu0 %v297
  %417 = vmatprep.subr.bf16.mxu0 %v294
  %418 = vmatpush1.bf16.msra.mxu0 %v293
  %419 = vmatprep.subr.bf16.mxu0 %v290
  %420 = vmatpush1.bf16.msra.mxu0 %v289
  %421 = vmatprep.subr.bf16.mxu0 %v286
  %422 = vmatpush1.bf16.msra.mxu0 %v285
  %423 = vmatprep.subr.bf16.mxu0 %v282
  %424 = vmatpush1.bf16.msra.mxu0 %v281
  %425 = vmatprep.subr.bf16.mxu0 %v342
  %426 = vmatpush2.bf16.msra.mxu0 %v341
  %427 = vmatprep.subr.bf16.mxu0 %v338
  %428 = vmatpush2.bf16.msra.mxu0 %v337
  %429 = vmatprep.subr.bf16.mxu0 %v334
  %430 = vmatpush2.bf16.msra.mxu0 %v333
  %431 = vmatprep.subr.bf16.mxu0 %v330
  %432 = vmatpush2.bf16.msra.mxu0 %v329
  %433 = vmatprep.subr.bf16.mxu0 %v326
  %434 = vmatpush2.bf16.msra.mxu0 %v325
  %435 = vmatprep.subr.bf16.mxu0 %v322
  %436 = vmatpush2.bf16.msra.mxu0 %v321
  %437 = vmatprep.subr.bf16.mxu0 %v318
  %438 = vmatpush2.bf16.msra.mxu0 %v317
  %439 = vmatprep.subr.bf16.mxu0 %v314
  %440 = vmatpush2.bf16.msra.mxu0 %v313
  %441 = vmatprep.mubr.bf16.mxu0 %v86
  %442 = vmatmul.mubr.bf16.gmra.mxu0 %v85
  %v443 = vpop.f32.mrf.mxu0
  %v444 = vadd.f32 0.0, %v443
  %v445 = vpop.f32.mrf.mxu0
  %v446 = vadd.f32 0.0, %v445
  %v447 = vpop.f32.mrf.mxu0
  %v448 = vpop.f32.mrf.mxu0
  %449 = vdwg.mxu0
  %450 = vmatprep.subr.bf16.mxu0 %v312
  %451 = vmatpush1.bf16.msra.mxu0 %v311
  %452 = vmatprep.subr.bf16.mxu0 %v308
  %453 = vmatpush1.bf16.msra.mxu0 %v307
  %454 = vmatprep.subr.bf16.mxu0 %v304
  %455 = vmatpush1.bf16.msra.mxu0 %v303
  %456 = vmatprep.subr.bf16.mxu0 %v300
  %457 = vmatpush1.bf16.msra.mxu0 %v299
  %458 = vmatprep.subr.bf16.mxu0 %v296
  %459 = vmatpush1.bf16.msra.mxu0 %v295
  %460 = vmatprep.subr.bf16.mxu0 %v292
  %461 = vmatpush1.bf16.msra.mxu0 %v291
  %462 = vmatprep.subr.bf16.mxu0 %v288
  %463 = vmatpush1.bf16.msra.mxu0 %v287
  %464 = vmatprep.subr.bf16.mxu0 %v284
  %465 = vmatpush1.bf16.msra.mxu0 %v283
  %466 = vmatprep.subr.bf16.mxu0 %v344
  %467 = vmatpush2.bf16.msra.mxu0 %v343
  %468 = vmatprep.subr.bf16.mxu0 %v340
  %469 = vmatpush2.bf16.msra.mxu0 %v339
  %470 = vmatprep.subr.bf16.mxu0 %v336
  %471 = vmatpush2.bf16.msra.mxu0 %v335
  %472 = vmatprep.subr.bf16.mxu0 %v332
  %473 = vmatpush2.bf16.msra.mxu0 %v331
  %474 = vmatprep.subr.bf16.mxu0 %v328
  %475 = vmatpush2.bf16.msra.mxu0 %v327
  %476 = vmatprep.subr.bf16.mxu0 %v324
  %477 = vmatpush2.bf16.msra.mxu0 %v323
  %478 = vmatprep.subr.bf16.mxu0 %v320
  %479 = vmatpush2.bf16.msra.mxu0 %v319
  %480 = vmatprep.subr.bf16.mxu0 %v316
  %481 = vmatpush2.bf16.msra.mxu0 %v315
  %482 = vmatprep.mubr.bf16.mxu0 %v86
  %483 = vmatmul.mubr.bf16.gmra.mxu0 %v85
  %v484 = vpop.f32.mrf.mxu0
  %v485 = vadd.f32 0.0, %v484
  %v486 = vpop.f32.mrf.mxu0
  %v487 = vadd.f32 0.0, %v486
  %v488 = vpop.f32.mrf.mxu0
  %v489 = vpop.f32.mrf.mxu0
  %490 = vdwg.mxu0
  %v491 = vld [vmem:[%s2] sm:$0xf]
  %v493 = vlaneseq
  %v494 = vshrl.u32 %v493, 7
  %v495 = vsub.s32 0, %v494
  %v496 = vrot.slane %v491, %v495
  %v497 = vlaneseq
  %v498 = vshrl.u32 %v497, 7
  %v499 = vsub.s32 1, %v498
  %v500 = vrot.slane %v491, %v499
  %v501 = vlaneseq
  %v502 = vshrl.u32 %v501, 7
  %v503 = vsub.s32 2, %v502
  %v504 = vrot.slane %v491, %v503
  %v505 = vlaneseq
  %v506 = vshrl.u32 %v505, 7
  %v507 = vsub.s32 3, %v506
  %v508 = vrot.slane %v491, %v507
  %v513 = vmul.f32 %v444, %v496
  %v514 = vmul.f32 %v446, %v500
  %v515 = vmul.f32 %v485, %v504
  %v516 = vmul.f32 %v487, %v508
  %v517 = vld [vmem:[%s3] sm:$0xf]
  %v519 = vlaneseq
  %v520 = vshrl.u32 %v519, 7
  %v521 = vsub.s32 0, %v520
  %v522 = vrot.slane %v517, %v521
  %v523 = vlaneseq
  %v524 = vshrl.u32 %v523, 7
  %v525 = vsub.s32 1, %v524
  %v526 = vrot.slane %v517, %v525
  %v527 = vlaneseq
  %v528 = vshrl.u32 %v527, 7
  %v529 = vsub.s32 2, %v528
  %v530 = vrot.slane %v517, %v529
  %v531 = vlaneseq
  %v532 = vshrl.u32 %v531, 7
  %v533 = vsub.s32 3, %v532
  %v534 = vrot.slane %v517, %v533
  %v539 = vadd.f32 %v513, %v522
  %v540 = vadd.f32 %v514, %v526
  %v541 = vadd.f32 %v515, %v530
  %v542 = vadd.f32 %v516, %v534
  %v543 = vpack.c.bf16 %v539, %v539
  %v544 = vpack.c.bf16 %v540, %v540
  %v545 = vpack.c.bf16 %v541, %v541
  %v546 = vpack.c.bf16 %v542, %v542
  %v551 = vunpack.c.l.b16 %v543
  %v552 = vunpack.c.l.b16 %v544
  %v553 = vunpack.c.l.b16 %v545
  %v554 = vunpack.c.l.b16 %v546
  %v555 = vpack.c.b16 %v552, %v551
  %v556 = vpack.c.b16 %v554, %v553
  %559 = vst [vmem:[%s4] sm:$0xff] %v555
  %560 = vst [vmem:[%s4 + $0x8] sm:$0xff] %v556
  // Predicated region
  $region18: #{forward.71} parent=0 // pred_check
    _
  $region19: #{forward.71} parent=0 // pred_check_branch
    %562 = sbr.rel (0) target = $region21
  $region20: #{forward.71} parent=0 // pred_region
    _
  $region21: #{forward.71} parent=0 // pred_fallthru
    _
  // Predicated region
  $region22: #{forward.71} parent=0 // pred_check
    _
  $region23: #{forward.71} parent=0 // pred_check_branch
    %564 = sbr.rel (0) target = $region25
  $region24: #{forward.71} parent=0 // pred_region
    _
  $region25: #{forward.71} parent=0 // pred_fallthru
    _

// kernel: forward.72
$region0: #{forward.72}
  #allocation0 [shape = 'u32[]', space=smem, size = 0x4, offset = 0x4, fixed_abs, tag = 'smem constant byte address 0x4 - core index']
  #allocation1 [shape = 'u32[144,128]{1,0:T(1,128)}', space=vmem, size = 0x12000, scoped, tag = 'internal scratch']
  %s0 = inlined_call_operand.vmem [shape: bf16[8,1152], index: 0, kind: input, shape index: {}]
  %s1 = inlined_call_operand.vmem [shape: bf16[1152,128], index: 1, kind: input, shape index: {}]
  %s2 = inlined_call_operand.vmem [shape: f32[1,128], index: 2, kind: input, shape index: {}]
  %s3 = inlined_call_operand.vmem [shape: f32[1,128], index: 3, kind: input, shape index: {}]
  %s4 = inlined_call_operand.vmem [shape: bf16[128,512], index: 4, kind: input, shape index: {}]
  %s5 = inlined_call_operand.vmem [shape: f32[1,512], index: 5, kind: input, shape index: {}]
  %s6 = inlined_call_operand.vmem [shape: f32[1,512], index: 6, kind: input, shape index: {}]
  %s7 = inlined_call_operand.vmem [shape: bf16[8,512], index: 7, kind: input, shape index: {}]
  %s8 = inlined_call_operand.vmem [shape: bf16[8,512], index: 8, kind: output, shape index: {}]
  %s9 = sld [smem:[#allocation0]]
  $region42: #{forward.72} parent=0
    _
  %s11 = ssub.s32 1, %s9
  %s12 = scalar_select 0, %s11, %s9
  // Predicated region
  $region2: #{forward.72} parent=0 // pred_check
    _
  $region3: #{forward.72} parent=0 // pred_check_branch
    %14 = sbr.rel (0) target = $region5
  $region4: #{forward.72} parent=0 // pred_region
    _
  $region5: #{forward.72} parent=0 // pred_fallthru
    _
  // Predicated region
  $region6: #{forward.72} parent=0 // pred_check
    _
  $region7: #{forward.72} parent=0 // pred_check_branch
    %16 = sbr.rel (0) target = $region9
  $region8: #{forward.72} parent=0 // pred_region
    _
  $region9: #{forward.72} parent=0 // pred_fallthru
    _
  // Predicated region
  $region10: #{forward.72} parent=0 // pred_check
    _
  $region11: #{forward.72} parent=0 // pred_check_branch
    %18 = sbr.rel (0) target = $region13
  $region12: #{forward.72} parent=0 // pred_region
    _
  $region13: #{forward.72} parent=0 // pred_fallthru
    _
  // Predicated region
  $region14: #{forward.72} parent=0 // pred_check
    _
  $region15: #{forward.72} parent=0 // pred_check_branch
    %20 = sbr.rel (0) target = $region17
  $region16: #{forward.72} parent=0 // pred_region
    _
  $region17: #{forward.72} parent=0 // pred_fallthru
    _
  // Predicated region
  $region18: #{forward.72} parent=0 // pred_check
    _
  $region19: #{forward.72} parent=0 // pred_check_branch
    %22 = sbr.rel (0) target = $region21
  $region20: #{forward.72} parent=0 // pred_region
    _
  $region21: #{forward.72} parent=0 // pred_fallthru
    _
  // Predicated region
  $region22: #{forward.72} parent=0 // pred_check
    _
  $region23: #{forward.72} parent=0 // pred_check_branch
    %24 = sbr.rel (0) target = $region25
  $region24: #{forward.72} parent=0 // pred_region
    _
  $region25: #{forward.72} parent=0 // pred_fallthru
    _
  // Predicated region
  $region26: #{forward.72} parent=0 // pred_check
    _
  $region27: #{forward.72} parent=0 // pred_check_branch
    %26 = sbr.rel (0) target = $region29
  $region28: #{forward.72} parent=0 // pred_region
    _
  $region29: #{forward.72} parent=0 // pred_fallthru
    _
  // Predicated region
  $region30: #{forward.72} parent=0 // pred_check
    _
  $region31: #{forward.72} parent=0 // pred_check_branch
    %28 = sbr.rel (0) target = $region33
  $region32: #{forward.72} parent=0 // pred_region
    _
  $region33: #{forward.72} parent=0 // pred_fallthru
    _
  %v30 = vld [vmem:[%s0] sm:$0xff]
  %v31 = vld [vmem:[%s0 + $0x8] sm:$0xff]
  %v32 = vld [vmem:[%s0 + $0x10] sm:$0xff]
  %v33 = vld [vmem:[%s0 + $0x18] sm:$0xff]
  %v34 = vld [vmem:[%s0 + $0x20] sm:$0xf]
  %v35 = vld [vmem:[%s1] sm:$0xf]
  %v36 = vld [vmem:[%s1 + $0x4] sm:$0xf]
  %v37 = vld [vmem:[%s1 + $0x8] sm:$0xf]
  %v38 = vld [vmem:[%s1 + $0xc] sm:$0xf]
  %v39 = vld [vmem:[%s1 + $0x10] sm:$0xf]
  %v40 = vld [vmem:[%s1 + $0x14] sm:$0xf]
  %v41 = vld [vmem:[%s1 + $0x18] sm:$0xf]
  %v42 = vld [vmem:[%s1 + $0x1c] sm:$0xf]
  %v43 = vld [vmem:[%s1 + $0x20] sm:$0xf]
  %v44 = vld [vmem:[%s1 + $0x24] sm:$0xf]
  %v45 = vld [vmem:[%s1 + $0x28] sm:$0xf]
  %v46 = vld [vmem:[%s1 + $0x2c] sm:$0xf]
  %v47 = vld [vmem:[%s1 + $0x30] sm:$0xf]
  %v48 = vld [vmem:[%s1 + $0x34] sm:$0xf]
  %v49 = vld [vmem:[%s1 + $0x38] sm:$0xf]
  %v50 = vld [vmem:[%s1 + $0x3c] sm:$0xf]
  %v51 = vld [vmem:[%s1 + $0x40] sm:$0xf]
  %v52 = vld [vmem:[%s1 + $0x44] sm:$0xf]
  %v53 = vld [vmem:[%s1 + $0x48] sm:$0xf]
  %v54 = vld [vmem:[%s1 + $0x4c] sm:$0xf]
  %v55 = vld [vmem:[%s1 + $0x50] sm:$0xf]
  %v56 = vld [vmem:[%s1 + $0x54] sm:$0xf]
  %v57 = vld [vmem:[%s1 + $0x58] sm:$0xf]
  %v58 = vld [vmem:[%s1 + $0x5c] sm:$0xf]
  %v59 = vld [vmem:[%s1 + $0x60] sm:$0xf]
  %v60 = vld [vmem:[%s1 + $0x64] sm:$0xf]
  %v61 = vld [vmem:[%s1 + $0x68] sm:$0xf]
  %v62 = vld [vmem:[%s1 + $0x6c] sm:$0xf]
  %v63 = vld [vmem:[%s1 + $0x70] sm:$0xf]
  %v64 = vld [vmem:[%s1 + $0x74] sm:$0xf]
  %v65 = vld [vmem:[%s1 + $0x78] sm:$0xf]
  %v66 = vld [vmem:[%s1 + $0x7c] sm:$0xf]
  %v67 = vld [vmem:[%s1 + $0x80] sm:$0xf]
  %v68 = vld [vmem:[%s1 + $0x84] sm:$0xf]
  %v69 = vld [vmem:[%s1 + $0x88] sm:$0xf]
  %v70 = vld [vmem:[%s1 + $0x8c] sm:$0xf]
  %v71 = vld [vmem:[%s1 + $0x90] sm:$0xf]
  %v72 = vld [vmem:[%s1 + $0x94] sm:$0xf]
  %v73 = vld [vmem:[%s1 + $0x98] sm:$0xf]
  %v74 = vld [vmem:[%s1 + $0x9c] sm:$0xf]
  %v75 = vld [vmem:[%s1 + $0xa0] sm:$0xf]
  %v76 = vld [vmem:[%s1 + $0xa4] sm:$0xf]
  %v77 = vld [vmem:[%s1 + $0xa8] sm:$0xf]
  %v78 = vld [vmem:[%s1 + $0xac] sm:$0xf]
  %v79 = vld [vmem:[%s1 + $0xb0] sm:$0xf]
  %v80 = vld [vmem:[%s1 + $0xb4] sm:$0xf]
  %v81 = vld [vmem:[%s1 + $0xb8] sm:$0xf]
  %v82 = vld [vmem:[%s1 + $0xbc] sm:$0xf]
  %v83 = vld [vmem:[%s1 + $0xc0] sm:$0xf]
  %v84 = vld [vmem:[%s1 + $0xc4] sm:$0xf]
  %v85 = vld [vmem:[%s1 + $0xc8] sm:$0xf]
  %v86 = vld [vmem:[%s1 + $0xcc] sm:$0xf]
  %v87 = vld [vmem:[%s1 + $0xd0] sm:$0xf]
  %v88 = vld [vmem:[%s1 + $0xd4] sm:$0xf]
  %v89 = vld [vmem:[%s1 + $0xd8] sm:$0xf]
  %v90 = vld [vmem:[%s1 + $0xdc] sm:$0xf]
  %v91 = vld [vmem:[%s1 + $0xe0] sm:$0xf]
  %v92 = vld [vmem:[%s1 + $0xe4] sm:$0xf]
  %v93 = vld [vmem:[%s1 + $0xe8] sm:$0xf]
  %v94 = vld [vmem:[%s1 + $0xec] sm:$0xf]
  %v95 = vld [vmem:[%s1 + $0xf0] sm:$0xf]
  %v96 = vld [vmem:[%s1 + $0xf4] sm:$0xf]
  %v97 = vld [vmem:[%s1 + $0xf8] sm:$0xf]
  %v98 = vld [vmem:[%s1 + $0xfc] sm:$0xf]
  %v99 = vld [vmem:[%s1 + $0x100] sm:$0xf]
  %v100 = vld [vmem:[%s1 + $0x104] sm:$0xf]
  %v101 = vld [vmem:[%s1 + $0x108] sm:$0xf]
  %v102 = vld [vmem:[%s1 + $0x10c] sm:$0xf]
  %v103 = vld [vmem:[%s1 + $0x110] sm:$0xf]
  %v104 = vld [vmem:[%s1 + $0x114] sm:$0xf]
  %v105 = vld [vmem:[%s1 + $0x118] sm:$0xf]
  %v106 = vld [vmem:[%s1 + $0x11c] sm:$0xf]
  %v107 = vld [vmem:[%s1 + $0x120] sm:$0xf]
  %v108 = vld [vmem:[%s1 + $0x124] sm:$0xf]
  %v109 = vld [vmem:[%s1 + $0x128] sm:$0xf]
  %v110 = vld [vmem:[%s1 + $0x12c] sm:$0xf]
  %v111 = vld [vmem:[%s1 + $0x130] sm:$0xf]
  %v112 = vld [vmem:[%s1 + $0x134] sm:$0xf]
  %v113 = vld [vmem:[%s1 + $0x138] sm:$0xf]
  %v114 = vld [vmem:[%s1 + $0x13c] sm:$0xf]
  %v115 = vld [vmem:[%s1 + $0x140] sm:$0xf]
  %v116 = vld [vmem:[%s1 + $0x144] sm:$0xf]
  %v117 = vld [vmem:[%s1 + $0x148] sm:$0xf]
  %v118 = vld [vmem:[%s1 + $0x14c] sm:$0xf]
  %v119 = vld [vmem:[%s1 + $0x150] sm:$0xf]
  %v120 = vld [vmem:[%s1 + $0x154] sm:$0xf]
  %v121 = vld [vmem:[%s1 + $0x158] sm:$0xf]
  %v122 = vld [vmem:[%s1 + $0x15c] sm:$0xf]
  %v123 = vld [vmem:[%s1 + $0x160] sm:$0xf]
  %v124 = vld [vmem:[%s1 + $0x164] sm:$0xf]
  %v125 = vld [vmem:[%s1 + $0x168] sm:$0xf]
  %v126 = vld [vmem:[%s1 + $0x16c] sm:$0xf]
  %v127 = vld [vmem:[%s1 + $0x170] sm:$0xf]
  %v128 = vld [vmem:[%s1 + $0x174] sm:$0xf]
  %v129 = vld [vmem:[%s1 + $0x178] sm:$0xf]
  %v130 = vld [vmem:[%s1 + $0x17c] sm:$0xf]
  %v131 = vld [vmem:[%s1 + $0x180] sm:$0xf]
  %v132 = vld [vmem:[%s1 + $0x184] sm:$0xf]
  %v133 = vld [vmem:[%s1 + $0x188] sm:$0xf]
  %v134 = vld [vmem:[%s1 + $0x18c] sm:$0xf]
  %v135 = vld [vmem:[%s1 + $0x190] sm:$0xf]
  %v136 = vld [vmem:[%s1 + $0x194] sm:$0xf]
  %v137 = vld [vmem:[%s1 + $0x198] sm:$0xf]
  %v138 = vld [vmem:[%s1 + $0x19c] sm:$0xf]
  %v139 = vld [vmem:[%s1 + $0x1a0] sm:$0xf]
  %v140 = vld [vmem:[%s1 + $0x1a4] sm:$0xf]
  %v141 = vld [vmem:[%s1 + $0x1a8] sm:$0xf]
  %v142 = vld [vmem:[%s1 + $0x1ac] sm:$0xf]
  %v143 = vld [vmem:[%s1 + $0x1b0] sm:$0xf]
  %v144 = vld [vmem:[%s1 + $0x1b4] sm:$0xf]
  %v145 = vld [vmem:[%s1 + $0x1b8] sm:$0xf]
  %v146 = vld [vmem:[%s1 + $0x1bc] sm:$0xf]
  %v147 = vld [vmem:[%s1 + $0x1c0] sm:$0xf]
  %v148 = vld [vmem:[%s1 + $0x1c4] sm:$0xf]
  %v149 = vld [vmem:[%s1 + $0x1c8] sm:$0xf]
  %v150 = vld [vmem:[%s1 + $0x1cc] sm:$0xf]
  %v151 = vld [vmem:[%s1 + $0x1d0] sm:$0xf]
  %v152 = vld [vmem:[%s1 + $0x1d4] sm:$0xf]
  %v153 = vld [vmem:[%s1 + $0x1d8] sm:$0xf]
  %v154 = vld [vmem:[%s1 + $0x1dc] sm:$0xf]
  %v155 = vld [vmem:[%s1 + $0x1e0] sm:$0xf]
  %v156 = vld [vmem:[%s1 + $0x1e4] sm:$0xf]
  %v157 = vld [vmem:[%s1 + $0x1e8] sm:$0xf]
  %v158 = vld [vmem:[%s1 + $0x1ec] sm:$0xf]
  %v159 = vld [vmem:[%s1 + $0x1f0] sm:$0xf]
  %v160 = vld [vmem:[%s1 + $0x1f4] sm:$0xf]
  %v161 = vld [vmem:[%s1 + $0x1f8] sm:$0xf]
  %v162 = vld [vmem:[%s1 + $0x1fc] sm:$0xf]
  %v163 = vld [vmem:[%s1 + $0x200] sm:$0xf]
  %v164 = vld [vmem:[%s1 + $0x204] sm:$0xf]
  %v165 = vld [vmem:[%s1 + $0x208] sm:$0xf]
  %v166 = vld [vmem:[%s1 + $0x20c] sm:$0xf]
  %v167 = vld [vmem:[%s1 + $0x210] sm:$0xf]
  %v168 = vld [vmem:[%s1 + $0x214] sm:$0xf]
  %v169 = vld [vmem:[%s1 + $0x218] sm:$0xf]
  %v170 = vld [vmem:[%s1 + $0x21c] sm:$0xf]
  %v171 = vld [vmem:[%s1 + $0x220] sm:$0xf]
  %v172 = vld [vmem:[%s1 + $0x224] sm:$0xf]
  %v173 = vld [vmem:[%s1 + $0x228] sm:$0xf]
  %v174 = vld [vmem:[%s1 + $0x22c] sm:$0xf]
  %v175 = vld [vmem:[%s1 + $0x230] sm:$0xf]
  %v176 = vld [vmem:[%s1 + $0x234] sm:$0xf]
  %v177 = vld [vmem:[%s1 + $0x238] sm:$0xf]
  %v178 = vld [vmem:[%s1 + $0x23c] sm:$0xf]
  %v184 = vunpack.c.l.b16 %v30
  %v185 = vunpack.c.h.b16 %v30
  %v186 = vunpack.c.l.b16 %v31
  %v187 = vunpack.c.h.b16 %v31
  %v188 = vunpack.c.l.b16 %v32
  %v189 = vunpack.c.h.b16 %v32
  %v190 = vunpack.c.l.b16 %v33
  %v191 = vunpack.c.h.b16 %v33
  %v192 = vunpack.c.l.b16 %v34
  %v193 = vpack.c.b16 %v184, %v184
  %v194 = vpack.c.b16 %v185, %v185
  %v195 = vpack.c.b16 %v186, %v186
  %v196 = vpack.c.b16 %v187, %v187
  %v197 = vpack.c.b16 %v188, %v188
  %v198 = vpack.c.b16 %v189, %v189
  %v199 = vpack.c.b16 %v190, %v190
  %v200 = vpack.c.b16 %v191, %v191
  %v201 = vpack.c.b16 %v192, %v192
  %v355 = vunpack.c.l.b16 %v35
  %v356 = vunpack.c.l.b16 %v36
  %v357 = vunpack.c.l.b16 %v37
  %v358 = vunpack.c.l.b16 %v38
  %v359 = vunpack.c.l.b16 %v39
  %v360 = vunpack.c.l.b16 %v40
  %v361 = vunpack.c.l.b16 %v41
  %v362 = vunpack.c.l.b16 %v42
  %v363 = vunpack.c.l.b16 %v43
  %v364 = vunpack.c.l.b16 %v44
  %v365 = vunpack.c.l.b16 %v45
  %v366 = vunpack.c.l.b16 %v46
  %v367 = vunpack.c.l.b16 %v47
  %v368 = vunpack.c.l.b16 %v48
  %v369 = vunpack.c.l.b16 %v49
  %v370 = vunpack.c.l.b16 %v50
  %v371 = vunpack.c.l.b16 %v51
  %v372 = vunpack.c.l.b16 %v52
  %v373 = vunpack.c.l.b16 %v53
  %v374 = vunpack.c.l.b16 %v54
  %v375 = vunpack.c.l.b16 %v55
  %v376 = vunpack.c.l.b16 %v56
  %v377 = vunpack.c.l.b16 %v57
  %v378 = vunpack.c.l.b16 %v58
  %v379 = vunpack.c.l.b16 %v59
  %v380 = vunpack.c.l.b16 %v60
  %v381 = vunpack.c.l.b16 %v61
  %v382 = vunpack.c.l.b16 %v62
  %v383 = vunpack.c.l.b16 %v63
  %v384 = vunpack.c.l.b16 %v64
  %v385 = vunpack.c.l.b16 %v65
  %v386 = vunpack.c.l.b16 %v66
  %v387 = vunpack.c.l.b16 %v67
  %v388 = vunpack.c.l.b16 %v68
  %v389 = vunpack.c.l.b16 %v69
  %v390 = vunpack.c.l.b16 %v70
  %v391 = vunpack.c.l.b16 %v71
  %v392 = vunpack.c.l.b16 %v72
  %v393 = vunpack.c.l.b16 %v73
  %v394 = vunpack.c.l.b16 %v74
  %v395 = vunpack.c.l.b16 %v75
  %v396 = vunpack.c.l.b16 %v76
  %v397 = vunpack.c.l.b16 %v77
  %v398 = vunpack.c.l.b16 %v78
  %v399 = vunpack.c.l.b16 %v79
  %v400 = vunpack.c.l.b16 %v80
  %v401 = vunpack.c.l.b16 %v81
  %v402 = vunpack.c.l.b16 %v82
  %v403 = vunpack.c.l.b16 %v83
  %v404 = vunpack.c.l.b16 %v84
  %v405 = vunpack.c.l.b16 %v85
  %v406 = vunpack.c.l.b16 %v86
  %v407 = vunpack.c.l.b16 %v87
  %v408 = vunpack.c.l.b16 %v88
  %v409 = vunpack.c.l.b16 %v89
  %v410 = vunpack.c.l.b16 %v90
  %v411 = vunpack.c.l.b16 %v91
  %v412 = vunpack.c.l.b16 %v92
  %v413 = vunpack.c.l.b16 %v93
  %v414 = vunpack.c.l.b16 %v94
  %v415 = vunpack.c.l.b16 %v95
  %v416 = vunpack.c.l.b16 %v96
  %v417 = vunpack.c.l.b16 %v97
  %v418 = vunpack.c.l.b16 %v98
  %v419 = vunpack.c.l.b16 %v99
  %v420 = vunpack.c.l.b16 %v100
  %v421 = vunpack.c.l.b16 %v101
  %v422 = vunpack.c.l.b16 %v102
  %v423 = vunpack.c.l.b16 %v103
  %v424 = vunpack.c.l.b16 %v104
  %v425 = vunpack.c.l.b16 %v105
  %v426 = vunpack.c.l.b16 %v106
  %v427 = vunpack.c.l.b16 %v107
  %v428 = vunpack.c.l.b16 %v108
  %v429 = vunpack.c.l.b16 %v109
  %v430 = vunpack.c.l.b16 %v110
  %v431 = vunpack.c.l.b16 %v111
  %v432 = vunpack.c.l.b16 %v112
  %v433 = vunpack.c.l.b16 %v113
  %v434 = vunpack.c.l.b16 %v114
  %v435 = vunpack.c.l.b16 %v115
  %v436 = vunpack.c.l.b16 %v116
  %v437 = vunpack.c.l.b16 %v117
  %v438 = vunpack.c.l.b16 %v118
  %v439 = vunpack.c.l.b16 %v119
  %v440 = vunpack.c.l.b16 %v120
  %v441 = vunpack.c.l.b16 %v121
  %v442 = vunpack.c.l.b16 %v122
  %v443 = vunpack.c.l.b16 %v123
  %v444 = vunpack.c.l.b16 %v124
  %v445 = vunpack.c.l.b16 %v125
  %v446 = vunpack.c.l.b16 %v126
  %v447 = vunpack.c.l.b16 %v127
  %v448 = vunpack.c.l.b16 %v128
  %v449 = vunpack.c.l.b16 %v129
  %v450 = vunpack.c.l.b16 %v130
  %v451 = vunpack.c.l.b16 %v131
  %v452 = vunpack.c.l.b16 %v132
  %v453 = vunpack.c.l.b16 %v133
  %v454 = vunpack.c.l.b16 %v134
  %v455 = vunpack.c.l.b16 %v135
  %v456 = vunpack.c.l.b16 %v136
  %v457 = vunpack.c.l.b16 %v137
  %v458 = vunpack.c.l.b16 %v138
  %v459 = vunpack.c.l.b16 %v139
  %v460 = vunpack.c.l.b16 %v140
  %v461 = vunpack.c.l.b16 %v141
  %v462 = vunpack.c.l.b16 %v142
  %v463 = vunpack.c.l.b16 %v143
  %v464 = vunpack.c.l.b16 %v144
  %v465 = vunpack.c.l.b16 %v145
  %v466 = vunpack.c.l.b16 %v146
  %v467 = vunpack.c.l.b16 %v147
  %v468 = vunpack.c.l.b16 %v148
  %v469 = vunpack.c.l.b16 %v149
  %v470 = vunpack.c.l.b16 %v150
  %v471 = vunpack.c.l.b16 %v151
  %v472 = vunpack.c.l.b16 %v152
  %v473 = vunpack.c.l.b16 %v153
  %v474 = vunpack.c.l.b16 %v154
  %v475 = vunpack.c.l.b16 %v155
  %v476 = vunpack.c.l.b16 %v156
  %v477 = vunpack.c.l.b16 %v157
  %v478 = vunpack.c.l.b16 %v158
  %v479 = vunpack.c.l.b16 %v159
  %v480 = vunpack.c.l.b16 %v160
  %v481 = vunpack.c.l.b16 %v161
  %v482 = vunpack.c.l.b16 %v162
  %v483 = vunpack.c.l.b16 %v163
  %v484 = vunpack.c.l.b16 %v164
  %v485 = vunpack.c.l.b16 %v165
  %v486 = vunpack.c.l.b16 %v166
  %v487 = vunpack.c.l.b16 %v167
  %v488 = vunpack.c.l.b16 %v168
  %v489 = vunpack.c.l.b16 %v169
  %v490 = vunpack.c.l.b16 %v170
  %v491 = vunpack.c.l.b16 %v171
  %v492 = vunpack.c.l.b16 %v172
  %v493 = vunpack.c.l.b16 %v173
  %v494 = vunpack.c.l.b16 %v174
  %v495 = vunpack.c.l.b16 %v175
  %v496 = vunpack.c.l.b16 %v176
  %v497 = vunpack.c.l.b16 %v177
  %v498 = vunpack.c.l.b16 %v178
  %v499 = vpack.c.b16 %v356, %v355
  %v500 = vpack.c.b16 %v358, %v357
  %v501 = vpack.c.b16 %v360, %v359
  %v502 = vpack.c.b16 %v362, %v361
  %v503 = vpack.c.b16 %v364, %v363
  %v504 = vpack.c.b16 %v366, %v365
  %v505 = vpack.c.b16 %v368, %v367
  %v506 = vpack.c.b16 %v370, %v369
  %v507 = vpack.c.b16 %v372, %v371
  %v508 = vpack.c.b16 %v374, %v373
  %v509 = vpack.c.b16 %v376, %v375
  %v510 = vpack.c.b16 %v378, %v377
  %v511 = vpack.c.b16 %v380, %v379
  %v512 = vpack.c.b16 %v382, %v381
  %v513 = vpack.c.b16 %v384, %v383
  %v514 = vpack.c.b16 %v386, %v385
  %v515 = vpack.c.b16 %v388, %v387
  %v516 = vpack.c.b16 %v390, %v389
  %v517 = vpack.c.b16 %v392, %v391
  %v518 = vpack.c.b16 %v394, %v393
  %v519 = vpack.c.b16 %v396, %v395
  %v520 = vpack.c.b16 %v398, %v397
  %v521 = vpack.c.b16 %v400, %v399
  %v522 = vpack.c.b16 %v402, %v401
  %v523 = vpack.c.b16 %v404, %v403
  %v524 = vpack.c.b16 %v406, %v405
  %v525 = vpack.c.b16 %v408, %v407
  %v526 = vpack.c.b16 %v410, %v409
  %v527 = vpack.c.b16 %v412, %v411
  %v528 = vpack.c.b16 %v414, %v413
  %v529 = vpack.c.b16 %v416, %v415
  %v530 = vpack.c.b16 %v418, %v417
  %v531 = vpack.c.b16 %v420, %v419
  %v532 = vpack.c.b16 %v422, %v421
  %v533 = vpack.c.b16 %v424, %v423
  %v534 = vpack.c.b16 %v426, %v425
  %v535 = vpack.c.b16 %v428, %v427
  %v536 = vpack.c.b16 %v430, %v429
  %v537 = vpack.c.b16 %v432, %v431
  %v538 = vpack.c.b16 %v434, %v433
  %v539 = vpack.c.b16 %v436, %v435
  %v540 = vpack.c.b16 %v438, %v437
  %v541 = vpack.c.b16 %v440, %v439
  %v542 = vpack.c.b16 %v442, %v441
  %v543 = vpack.c.b16 %v444, %v443
  %v544 = vpack.c.b16 %v446, %v445
  %v545 = vpack.c.b16 %v448, %v447
  %v546 = vpack.c.b16 %v450, %v449
  %v547 = vpack.c.b16 %v452, %v451
  %v548 = vpack.c.b16 %v454, %v453
  %v549 = vpack.c.b16 %v456, %v455
  %v550 = vpack.c.b16 %v458, %v457
  %v551 = vpack.c.b16 %v460, %v459
  %v552 = vpack.c.b16 %v462, %v461
  %v553 = vpack.c.b16 %v464, %v463
  %v554 = vpack.c.b16 %v466, %v465
  %v555 = vpack.c.b16 %v468, %v467
  %v556 = vpack.c.b16 %v470, %v469
  %v557 = vpack.c.b16 %v472, %v471
  %v558 = vpack.c.b16 %v474, %v473
  %v559 = vpack.c.b16 %v476, %v475
  %v560 = vpack.c.b16 %v478, %v477
  %v561 = vpack.c.b16 %v480, %v479
  %v562 = vpack.c.b16 %v482, %v481
  %v563 = vpack.c.b16 %v484, %v483
  %v564 = vpack.c.b16 %v486, %v485
  %v565 = vpack.c.b16 %v488, %v487
  %v566 = vpack.c.b16 %v490, %v489
  %v567 = vpack.c.b16 %v492, %v491
  %v568 = vpack.c.b16 %v494, %v493
  %v569 = vpack.c.b16 %v496, %v495
  %v570 = vpack.c.b16 %v498, %v497
  %643 = vmatprep.subr.bf16.mxu0 0
  %644 = vmatpush1.bf16.msra.mxu0 %v506
  %645 = vmatprep.subr.bf16.mxu0 0
  %646 = vmatpush1.bf16.msra.mxu0 %v505
  %647 = vmatprep.subr.bf16.mxu0 0
  %648 = vmatpush1.bf16.msra.mxu0 %v504
  %649 = vmatprep.subr.bf16.mxu0 0
  %650 = vmatpush1.bf16.msra.mxu0 %v503
  %651 = vmatprep.subr.bf16.mxu0 0
  %652 = vmatpush1.bf16.msra.mxu0 %v502
  %653 = vmatprep.subr.bf16.mxu0 0
  %654 = vmatpush1.bf16.msra.mxu0 %v501
  %655 = vmatprep.subr.bf16.mxu0 0
  %656 = vmatpush1.bf16.msra.mxu0 %v500
  %657 = vmatprep.subr.bf16.mxu0 0
  %658 = vmatpush1.bf16.msra.mxu0 %v499
  %659 = vmatprep.subr.bf16.mxu0 0
  %660 = vmatpush2.bf16.msra.mxu0 %v514
  %661 = vmatprep.subr.bf16.mxu0 0
  %662 = vmatpush2.bf16.msra.mxu0 %v513
  %663 = vmatprep.subr.bf16.mxu0 0
  %664 = vmatpush2.bf16.msra.mxu0 %v512
  %665 = vmatprep.subr.bf16.mxu0 0
  %666 = vmatpush2.bf16.msra.mxu0 %v511
  %667 = vmatprep.subr.bf16.mxu0 0
  %668 = vmatpush2.bf16.msra.mxu0 %v510
  %669 = vmatprep.subr.bf16.mxu0 0
  %670 = vmatpush2.bf16.msra.mxu0 %v509
  %671 = vmatprep.subr.bf16.mxu0 0
  %672 = vmatpush2.bf16.msra.mxu0 %v508
  %673 = vmatprep.subr.bf16.mxu0 0
  %674 = vmatpush2.bf16.msra.mxu0 %v507
  %675 = vmatprep.mubr.bf16.mxu0 %v194
  %676 = vmatmul.mubr.bf16.gmra.mxu0 %v193
  %v677 = vpop.f32.mrf.mxu0
  %v678 = vadd.f32 0.0, %v677
  %v679 = vpop.f32.mrf.mxu0
  %v680 = vpop.f32.mrf.mxu0
  %v681 = vpop.f32.mrf.mxu0
  %682 = vdwg.mxu0
  %683 = vmatprep.subr.bf16.mxu0 0
  %684 = vmatpush1.bf16.msra.mxu0 %v522
  %685 = vmatprep.subr.bf16.mxu0 0
  %686 = vmatpush1.bf16.msra.mxu0 %v521
  %687 = vmatprep.subr.bf16.mxu0 0
  %688 = vmatpush1.bf16.msra.mxu0 %v520
  %689 = vmatprep.subr.bf16.mxu0 0
  %690 = vmatpush1.bf16.msra.mxu0 %v519
  %691 = vmatprep.subr.bf16.mxu0 0
  %692 = vmatpush1.bf16.msra.mxu0 %v518
  %693 = vmatprep.subr.bf16.mxu0 0
  %694 = vmatpush1.bf16.msra.mxu0 %v517
  %695 = vmatprep.subr.bf16.mxu0 0
  %696 = vmatpush1.bf16.msra.mxu0 %v516
  %697 = vmatprep.subr.bf16.mxu0 0
  %698 = vmatpush1.bf16.msra.mxu0 %v515
  %699 = vmatprep.subr.bf16.mxu0 0
  %700 = vmatpush2.bf16.msra.mxu0 %v530
  %701 = vmatprep.subr.bf16.mxu0 0
  %702 = vmatpush2.bf16.msra.mxu0 %v529
  %703 = vmatprep.subr.bf16.mxu0 0
  %704 = vmatpush2.bf16.msra.mxu0 %v528
  %705 = vmatprep.subr.bf16.mxu0 0
  %706 = vmatpush2.bf16.msra.mxu0 %v527
  %707 = vmatprep.subr.bf16.mxu0 0
  %708 = vmatpush2.bf16.msra.mxu0 %v526
  %709 = vmatprep.subr.bf16.mxu0 0
  %710 = vmatpush2.bf16.msra.mxu0 %v525
  %711 = vmatprep.subr.bf16.mxu0 0
  %712 = vmatpush2.bf16.msra.mxu0 %v524
  %713 = vmatprep.subr.bf16.mxu0 0
  %714 = vmatpush2.bf16.msra.mxu0 %v523
  %715 = vmatprep.mubr.bf16.mxu0 %v196
  %716 = vmatmul.mubr.bf16.gmra.mxu0 %v195
  %v717 = vpop.f32.mrf.mxu0
  %v718 = vadd.f32 %v678, %v717
  %v719 = vpop.f32.mrf.mxu0
  %v720 = vpop.f32.mrf.mxu0
  %v721 = vpop.f32.mrf.mxu0
  %722 = vdwg.mxu0
  %723 = vmatprep.subr.bf16.mxu0 0
  %724 = vmatpush1.bf16.msra.mxu0 %v538
  %725 = vmatprep.subr.bf16.mxu0 0
  %726 = vmatpush1.bf16.msra.mxu0 %v537
  %727 = vmatprep.subr.bf16.mxu0 0
  %728 = vmatpush1.bf16.msra.mxu0 %v536
  %729 = vmatprep.subr.bf16.mxu0 0
  %730 = vmatpush1.bf16.msra.mxu0 %v535
  %731 = vmatprep.subr.bf16.mxu0 0
  %732 = vmatpush1.bf16.msra.mxu0 %v534
  %733 = vmatprep.subr.bf16.mxu0 0
  %734 = vmatpush1.bf16.msra.mxu0 %v533
  %735 = vmatprep.subr.bf16.mxu0 0
  %736 = vmatpush1.bf16.msra.mxu0 %v532
  %737 = vmatprep.subr.bf16.mxu0 0
  %738 = vmatpush1.bf16.msra.mxu0 %v531
  %739 = vmatprep.subr.bf16.mxu0 0
  %740 = vmatpush2.bf16.msra.mxu0 %v546
  %741 = vmatprep.subr.bf16.mxu0 0
  %742 = vmatpush2.bf16.msra.mxu0 %v545
  %743 = vmatprep.subr.bf16.mxu0 0
  %744 = vmatpush2.bf16.msra.mxu0 %v544
  %745 = vmatprep.subr.bf16.mxu0 0
  %746 = vmatpush2.bf16.msra.mxu0 %v543
  %747 = vmatprep.subr.bf16.mxu0 0
  %748 = vmatpush2.bf16.msra.mxu0 %v542
  %749 = vmatprep.subr.bf16.mxu0 0
  %750 = vmatpush2.bf16.msra.mxu0 %v541
  %751 = vmatprep.subr.bf16.mxu0 0
  %752 = vmatpush2.bf16.msra.mxu0 %v540
  %753 = vmatprep.subr.bf16.mxu0 0
  %754 = vmatpush2.bf16.msra.mxu0 %v539
  %755 = vmatprep.mubr.bf16.mxu0 %v198
  %756 = vmatmul.mubr.bf16.gmra.mxu0 %v197
  %v757 = vpop.f32.mrf.mxu0
  %v758 = vadd.f32 %v718, %v757
  %v759 = vpop.f32.mrf.mxu0
  %v760 = vpop.f32.mrf.mxu0
  %v761 = vpop.f32.mrf.mxu0
  %762 = vdwg.mxu0
  %763 = vmatprep.subr.bf16.mxu0 0
  %764 = vmatpush1.bf16.msra.mxu0 %v554
  %765 = vmatprep.subr.bf16.mxu0 0
  %766 = vmatpush1.bf16.msra.mxu0 %v553
  %767 = vmatprep.subr.bf16.mxu0 0
  %768 = vmatpush1.bf16.msra.mxu0 %v552
  %769 = vmatprep.subr.bf16.mxu0 0
  %770 = vmatpush1.bf16.msra.mxu0 %v551
  %771 = vmatprep.subr.bf16.mxu0 0
  %772 = vmatpush1.bf16.msra.mxu0 %v550
  %773 = vmatprep.subr.bf16.mxu0 0
  %774 = vmatpush1.bf16.msra.mxu0 %v549
  %775 = vmatprep.subr.bf16.mxu0 0
  %776 = vmatpush1.bf16.msra.mxu0 %v548
  %777 = vmatprep.subr.bf16.mxu0 0
  %778 = vmatpush1.bf16.msra.mxu0 %v547
  %779 = vmatprep.subr.bf16.mxu0 0
  %780 = vmatpush2.bf16.msra.mxu0 %v562
  %781 = vmatprep.subr.bf16.mxu0 0
  %782 = vmatpush2.bf16.msra.mxu0 %v561
  %783 = vmatprep.subr.bf16.mxu0 0
  %784 = vmatpush2.bf16.msra.mxu0 %v560
  %785 = vmatprep.subr.bf16.mxu0 0
  %786 = vmatpush2.bf16.msra.mxu0 %v559
  %787 = vmatprep.subr.bf16.mxu0 0
  %788 = vmatpush2.bf16.msra.mxu0 %v558
  %789 = vmatprep.subr.bf16.mxu0 0
  %790 = vmatpush2.bf16.msra.mxu0 %v557
  %791 = vmatprep.subr.bf16.mxu0 0
  %792 = vmatpush2.bf16.msra.mxu0 %v556
  %793 = vmatprep.subr.bf16.mxu0 0
  %794 = vmatpush2.bf16.msra.mxu0 %v555
  %795 = vmatprep.mubr.bf16.mxu0 %v200
  %796 = vmatmul.mubr.bf16.gmra.mxu0 %v199
  %v797 = vpop.f32.mrf.mxu0
  %v798 = vadd.f32 %v758, %v797
  %v799 = vpop.f32.mrf.mxu0
  %v800 = vpop.f32.mrf.mxu0
  %v801 = vpop.f32.mrf.mxu0
  %802 = vdwg.mxu0
  %803 = vmatprep.subr.bf16.mxu0 0
  %804 = vmatpush1.bf16.msra.mxu0 %v570
  %805 = vmatprep.subr.bf16.mxu0 0
  %806 = vmatpush1.bf16.msra.mxu0 %v569
  %807 = vmatprep.subr.bf16.mxu0 0
  %808 = vmatpush1.bf16.msra.mxu0 %v568
  %809 = vmatprep.subr.bf16.mxu0 0
  %810 = vmatpush1.bf16.msra.mxu0 %v567
  %811 = vmatprep.subr.bf16.mxu0 0
  %812 = vmatpush1.bf16.msra.mxu0 %v566
  %813 = vmatprep.subr.bf16.mxu0 0
  %814 = vmatpush1.bf16.msra.mxu0 %v565
  %815 = vmatprep.subr.bf16.mxu0 0
  %816 = vmatpush1.bf16.msra.mxu0 %v564
  %817 = vmatprep.subr.bf16.mxu0 0
  %818 = vmatpush1.bf16.msra.mxu0 %v563
  %819 = vmatprep.subr.bf16.mxu0 0
  %820 = vmatpush2.bf16.msra.mxu0 0
  %821 = vmatprep.subr.bf16.mxu0 0
  %822 = vmatpush2.bf16.msra.mxu0 0
  %823 = vmatprep.subr.bf16.mxu0 0
  %824 = vmatpush2.bf16.msra.mxu0 0
  %825 = vmatprep.subr.bf16.mxu0 0
  %826 = vmatpush2.bf16.msra.mxu0 0
  %827 = vmatprep.subr.bf16.mxu0 0
  %828 = vmatpush2.bf16.msra.mxu0 0
  %829 = vmatprep.subr.bf16.mxu0 0
  %830 = vmatpush2.bf16.msra.mxu0 0
  %831 = vmatprep.subr.bf16.mxu0 0
  %832 = vmatpush2.bf16.msra.mxu0 0
  %833 = vmatprep.subr.bf16.mxu0 0
  %834 = vmatpush2.bf16.msra.mxu0 0
  %835 = vmatprep.mubr.bf16.mxu0 0
  %836 = vmatmul.mubr.bf16.gmra.mxu0 %v201
  %v837 = vpop.f32.mrf.mxu0
  %v838 = vadd.f32 %v798, %v837
  %v839 = vpop.f32.mrf.mxu0
  %v840 = vpop.f32.mrf.mxu0
  %v841 = vpop.f32.mrf.mxu0
  %842 = vdwg.mxu0
  %v843 = vld [vmem:[%s2] sm:$0x1]
  %v845 = vlaneseq
  %v846 = vshrl.u32 %v845, 7
  %v847 = vsub.s32 0, %v846
  %v848 = vrot.slane %v843, %v847
  %v850 = vmul.f32 %v838, %v848
  %v851 = vld [vmem:[%s3] sm:$0x1]
  %v853 = vlaneseq
  %v854 = vshrl.u32 %v853, 7
  %v855 = vsub.s32 0, %v854
  %v856 = vrot.slane %v851, %v855
  %v858 = vadd.f32 %v850, %v856
  %v859 = vmax.f32 %v858, 0.0
  %v860 = vpack.c.bf16 %v859, %v859
  %v861 = vld [vmem:[%s4] sm:$0xff]
  %v862 = vld [vmem:[%s4 + $0x8] sm:$0xff]
  %v863 = vld [vmem:[%s4 + $0x10] sm:$0xff]
  %v864 = vld [vmem:[%s4 + $0x18] sm:$0xff]
  %v865 = vld [vmem:[%s4 + $0x20] sm:$0xff]
  %v866 = vld [vmem:[%s4 + $0x28] sm:$0xff]
  %v867 = vld [vmem:[%s4 + $0x30] sm:$0xff]
  %v868 = vld [vmem:[%s4 + $0x38] sm:$0xff]
  %v869 = vld [vmem:[%s4 + $0x40] sm:$0xff]
  %v870 = vld [vmem:[%s4 + $0x48] sm:$0xff]
  %v871 = vld [vmem:[%s4 + $0x50] sm:$0xff]
  %v872 = vld [vmem:[%s4 + $0x58] sm:$0xff]
  %v873 = vld [vmem:[%s4 + $0x60] sm:$0xff]
  %v874 = vld [vmem:[%s4 + $0x68] sm:$0xff]
  %v875 = vld [vmem:[%s4 + $0x70] sm:$0xff]
  %v876 = vld [vmem:[%s4 + $0x78] sm:$0xff]
  %v877 = vld [vmem:[%s4 + $0x80] sm:$0xff]
  %v878 = vld [vmem:[%s4 + $0x88] sm:$0xff]
  %v879 = vld [vmem:[%s4 + $0x90] sm:$0xff]
  %v880 = vld [vmem:[%s4 + $0x98] sm:$0xff]
  %v881 = vld [vmem:[%s4 + $0xa0] sm:$0xff]
  %v882 = vld [vmem:[%s4 + $0xa8] sm:$0xff]
  %v883 = vld [vmem:[%s4 + $0xb0] sm:$0xff]
  %v884 = vld [vmem:[%s4 + $0xb8] sm:$0xff]
  %v885 = vld [vmem:[%s4 + $0xc0] sm:$0xff]
  %v886 = vld [vmem:[%s4 + $0xc8] sm:$0xff]
  %v887 = vld [vmem:[%s4 + $0xd0] sm:$0xff]
  %v888 = vld [vmem:[%s4 + $0xd8] sm:$0xff]
  %v889 = vld [vmem:[%s4 + $0xe0] sm:$0xff]
  %v890 = vld [vmem:[%s4 + $0xe8] sm:$0xff]
  %v891 = vld [vmem:[%s4 + $0xf0] sm:$0xff]
  %v892 = vld [vmem:[%s4 + $0xf8] sm:$0xff]
  %v925 = vunpack.c.l.b16 %v861
  %v926 = vunpack.c.h.b16 %v861
  %v927 = vunpack.c.l.b16 %v862
  %v928 = vunpack.c.h.b16 %v862
  %v929 = vunpack.c.l.b16 %v863
  %v930 = vunpack.c.h.b16 %v863
  %v931 = vunpack.c.l.b16 %v864
  %v932 = vunpack.c.h.b16 %v864
  %v933 = vunpack.c.l.b16 %v865
  %v934 = vunpack.c.h.b16 %v865
  %v935 = vunpack.c.l.b16 %v866
  %v936 = vunpack.c.h.b16 %v866
  %v937 = vunpack.c.l.b16 %v867
  %v938 = vunpack.c.h.b16 %v867
  %v939 = vunpack.c.l.b16 %v868
  %v940 = vunpack.c.h.b16 %v868
  %v941 = vunpack.c.l.b16 %v869
  %v942 = vunpack.c.h.b16 %v869
  %v943 = vunpack.c.l.b16 %v870
  %v944 = vunpack.c.h.b16 %v870
  %v945 = vunpack.c.l.b16 %v871
  %v946 = vunpack.c.h.b16 %v871
  %v947 = vunpack.c.l.b16 %v872
  %v948 = vunpack.c.h.b16 %v872
  %v949 = vunpack.c.l.b16 %v873
  %v950 = vunpack.c.h.b16 %v873
  %v951 = vunpack.c.l.b16 %v874
  %v952 = vunpack.c.h.b16 %v874
  %v953 = vunpack.c.l.b16 %v875
  %v954 = vunpack.c.h.b16 %v875
  %v955 = vunpack.c.l.b16 %v876
  %v956 = vunpack.c.h.b16 %v876
  %v957 = vunpack.c.l.b16 %v877
  %v958 = vunpack.c.h.b16 %v877
  %v959 = vunpack.c.l.b16 %v878
  %v960 = vunpack.c.h.b16 %v878
  %v961 = vunpack.c.l.b16 %v879
  %v962 = vunpack.c.h.b16 %v879
  %v963 = vunpack.c.l.b16 %v880
  %v964 = vunpack.c.h.b16 %v880
  %v965 = vunpack.c.l.b16 %v881
  %v966 = vunpack.c.h.b16 %v881
  %v967 = vunpack.c.l.b16 %v882
  %v968 = vunpack.c.h.b16 %v882
  %v969 = vunpack.c.l.b16 %v883
  %v970 = vunpack.c.h.b16 %v883
  %v971 = vunpack.c.l.b16 %v884
  %v972 = vunpack.c.h.b16 %v884
  %v973 = vunpack.c.l.b16 %v885
  %v974 = vunpack.c.h.b16 %v885
  %v975 = vunpack.c.l.b16 %v886
  %v976 = vunpack.c.h.b16 %v886
  %v977 = vunpack.c.l.b16 %v887
  %v978 = vunpack.c.h.b16 %v887
  %v979 = vunpack.c.l.b16 %v888
  %v980 = vunpack.c.h.b16 %v888
  %v981 = vunpack.c.l.b16 %v889
  %v982 = vunpack.c.h.b16 %v889
  %v983 = vunpack.c.l.b16 %v890
  %v984 = vunpack.c.h.b16 %v890
  %v985 = vunpack.c.l.b16 %v891
  %v986 = vunpack.c.h.b16 %v891
  %v987 = vunpack.c.l.b16 %v892
  %v988 = vunpack.c.h.b16 %v892
  %v989 = vpack.c.b16 %v929, %v925
  %v990 = vpack.c.b16 %v930, %v926
  %v991 = vpack.c.b16 %v931, %v927
  %v992 = vpack.c.b16 %v932, %v928
  %v993 = vpack.c.b16 %v937, %v933
  %v994 = vpack.c.b16 %v938, %v934
  %v995 = vpack.c.b16 %v939, %v935
  %v996 = vpack.c.b16 %v940, %v936
  %v997 = vpack.c.b16 %v945, %v941
  %v998 = vpack.c.b16 %v946, %v942
  %v999 = vpack.c.b16 %v947, %v943
  %v1000 = vpack.c.b16 %v948, %v944
  %v1001 = vpack.c.b16 %v953, %v949
  %v1002 = vpack.c.b16 %v954, %v950
  %v1003 = vpack.c.b16 %v955, %v951
  %v1004 = vpack.c.b16 %v956, %v952
  %v1005 = vpack.c.b16 %v961, %v957
  %v1006 = vpack.c.b16 %v962, %v958
  %v1007 = vpack.c.b16 %v963, %v959
  %v1008 = vpack.c.b16 %v964, %v960
  %v1009 = vpack.c.b16 %v969, %v965
  %v1010 = vpack.c.b16 %v970, %v966
  %v1011 = vpack.c.b16 %v971, %v967
  %v1012 = vpack.c.b16 %v972, %v968
  %v1013 = vpack.c.b16 %v977, %v973
  %v1014 = vpack.c.b16 %v978, %v974
  %v1015 = vpack.c.b16 %v979, %v975
  %v1016 = vpack.c.b16 %v980, %v976
  %v1017 = vpack.c.b16 %v985, %v981
  %v1018 = vpack.c.b16 %v986, %v982
  %v1019 = vpack.c.b16 %v987, %v983
  %v1020 = vpack.c.b16 %v988, %v984
  %1053 = vmatprep.subr.bf16.mxu0 %v1018
  %1054 = vmatpush1.bf16.msra.mxu0 %v1017
  %1055 = vmatprep.subr.bf16.mxu0 %v1014
  %1056 = vmatpush1.bf16.msra.mxu0 %v1013
  %1057 = vmatprep.subr.bf16.mxu0 %v1010
  %1058 = vmatpush1.bf16.msra.mxu0 %v1009
  %1059 = vmatprep.subr.bf16.mxu0 %v1006
  %1060 = vmatpush1.bf16.msra.mxu0 %v1005
  %1061 = vmatprep.subr.bf16.mxu0 %v1002
  %1062 = vmatpush1.bf16.msra.mxu0 %v1001
  %1063 = vmatprep.subr.bf16.mxu0 %v998
  %1064 = vmatpush1.bf16.msra.mxu0 %v997
  %1065 = vmatprep.subr.bf16.mxu0 %v994
  %1066 = vmatpush1.bf16.msra.mxu0 %v993
  %1067 = vmatprep.subr.bf16.mxu0 %v990
  %1068 = vmatpush1.bf16.msra.mxu0 %v989
  %1069 = vmatprep.subr.bf16.mxu0 0
  %1070 = vmatpush2.bf16.msra.mxu0 0
  %1071 = vmatprep.subr.bf16.mxu0 0
  %1072 = vmatpush2.bf16.msra.mxu0 0
  %1073 = vmatprep.subr.bf16.mxu0 0
  %1074 = vmatpush2.bf16.msra.mxu0 0
  %1075 = vmatprep.subr.bf16.mxu0 0
  %1076 = vmatpush2.bf16.msra.mxu0 0
  %1077 = vmatprep.subr.bf16.mxu0 0
  %1078 = vmatpush2.bf16.msra.mxu0 0
  %1079 = vmatprep.subr.bf16.mxu0 0
  %1080 = vmatpush2.bf16.msra.mxu0 0
  %1081 = vmatprep.subr.bf16.mxu0 0
  %1082 = vmatpush2.bf16.msra.mxu0 0
  %1083 = vmatprep.subr.bf16.mxu0 0
  %1084 = vmatpush2.bf16.msra.mxu0 0
  %1085 = vmatprep.mubr.bf16.mxu0 0
  %1086 = vmatmul.mubr.bf16.gmra.mxu0 %v860
  %v1087 = vpop.f32.mrf.mxu0
  %v1088 = vadd.f32 0.0, %v1087
  %v1089 = vpop.f32.mrf.mxu0
  %v1090 = vadd.f32 0.0, %v1089
  %v1091 = vpop.f32.mrf.mxu0
  %v1092 = vpop.f32.mrf.mxu0
  %1093 = vdwg.mxu0
  %1094 = vmatprep.subr.bf16.mxu0 %v1020
  %1095 = vmatpush1.bf16.msra.mxu0 %v1019
  %1096 = vmatprep.subr.bf16.mxu0 %v1016
  %1097 = vmatpush1.bf16.msra.mxu0 %v1015
  %1098 = vmatprep.subr.bf16.mxu0 %v1012
  %1099 = vmatpush1.bf16.msra.mxu0 %v1011
  %1100 = vmatprep.subr.bf16.mxu0 %v1008
  %1101 = vmatpush1.bf16.msra.mxu0 %v1007
  %1102 = vmatprep.subr.bf16.mxu0 %v1004
  %1103 = vmatpush1.bf16.msra.mxu0 %v1003
  %1104 = vmatprep.subr.bf16.mxu0 %v1000
  %1105 = vmatpush1.bf16.msra.mxu0 %v999
  %1106 = vmatprep.subr.bf16.mxu0 %v996
  %1107 = vmatpush1.bf16.msra.mxu0 %v995
  %1108 = vmatprep.subr.bf16.mxu0 %v992
  %1109 = vmatpush1.bf16.msra.mxu0 %v991
  %1110 = vmatprep.subr.bf16.mxu0 0
  %1111 = vmatpush2.bf16.msra.mxu0 0
  %1112 = vmatprep.subr.bf16.mxu0 0
  %1113 = vmatpush2.bf16.msra.mxu0 0
  %1114 = vmatprep.subr.bf16.mxu0 0
  %1115 = vmatpush2.bf16.msra.mxu0 0
  %1116 = vmatprep.subr.bf16.mxu0 0
  %1117 = vmatpush2.bf16.msra.mxu0 0
  %1118 = vmatprep.subr.bf16.mxu0 0
  %1119 = vmatpush2.bf16.msra.mxu0 0
  %1120 = vmatprep.subr.bf16.mxu0 0
  %1121 = vmatpush2.bf16.msra.mxu0 0
  %1122 = vmatprep.subr.bf16.mxu0 0
  %1123 = vmatpush2.bf16.msra.mxu0 0
  %1124 = vmatprep.subr.bf16.mxu0 0
  %1125 = vmatpush2.bf16.msra.mxu0 0
  %1126 = vmatprep.mubr.bf16.mxu0 0
  %1127 = vmatmul.mubr.bf16.gmra.mxu0 %v860
  %v1128 = vpop.f32.mrf.mxu0
  %v1129 = vadd.f32 0.0, %v1128
  %v1130 = vpop.f32.mrf.mxu0
  %v1131 = vadd.f32 0.0, %v1130
  %v1132 = vpop.f32.mrf.mxu0
  %v1133 = vpop.f32.mrf.mxu0
  %1134 = vdwg.mxu0
  %v1135 = vld [vmem:[%s5] sm:$0xf]
  %v1137 = vlaneseq
  %v1138 = vshrl.u32 %v1137, 7
  %v1139 = vsub.s32 0, %v1138
  %v1140 = vrot.slane %v1135, %v1139
  %v1141 = vlaneseq
  %v1142 = vshrl.u32 %v1141, 7
  %v1143 = vsub.s32 1, %v1142
  %v1144 = vrot.slane %v1135, %v1143
  %v1145 = vlaneseq
  %v1146 = vshrl.u32 %v1145, 7
  %v1147 = vsub.s32 2, %v1146
  %v1148 = vrot.slane %v1135, %v1147
  %v1149 = vlaneseq
  %v1150 = vshrl.u32 %v1149, 7
  %v1151 = vsub.s32 3, %v1150
  %v1152 = vrot.slane %v1135, %v1151
  %v1157 = vmul.f32 %v1088, %v1140
  %v1158 = vmul.f32 %v1090, %v1144
  %v1159 = vmul.f32 %v1129, %v1148
  %v1160 = vmul.f32 %v1131, %v1152
  %v1161 = vld [vmem:[%s6] sm:$0xf]
  %v1163 = vlaneseq
  %v1164 = vshrl.u32 %v1163, 7
  %v1165 = vsub.s32 0, %v1164
  %v1166 = vrot.slane %v1161, %v1165
  %v1167 = vlaneseq
  %v1168 = vshrl.u32 %v1167, 7
  %v1169 = vsub.s32 1, %v1168
  %v1170 = vrot.slane %v1161, %v1169
  %v1171 = vlaneseq
  %v1172 = vshrl.u32 %v1171, 7
  %v1173 = vsub.s32 2, %v1172
  %v1174 = vrot.slane %v1161, %v1173
  %v1175 = vlaneseq
  %v1176 = vshrl.u32 %v1175, 7
  %v1177 = vsub.s32 3, %v1176
  %v1178 = vrot.slane %v1161, %v1177
  %v1183 = vadd.f32 %v1157, %v1166
  %v1184 = vadd.f32 %v1158, %v1170
  %v1185 = vadd.f32 %v1159, %v1174
  %v1186 = vadd.f32 %v1160, %v1178
  %v1187 = vld [vmem:[%s7] sm:$0xff]
  %v1188 = vld [vmem:[%s7 + $0x8] sm:$0xff]
  %v1189 = vunpack.c.l.bf16 %v1187
  %v1190 = vunpack.c.h.bf16 %v1187
  %v1191 = vunpack.c.l.bf16 %v1188
  %v1192 = vunpack.c.h.bf16 %v1188
  %v1193 = vadd.f32 %v1183, %v1189
  %v1194 = vadd.f32 %v1184, %v1190
  %v1195 = vadd.f32 %v1185, %v1191
  %v1196 = vadd.f32 %v1186, %v1192
  %v1197 = vmax.f32 %v1193, 0.0
  %v1198 = vmax.f32 %v1194, 0.0
  %v1199 = vmax.f32 %v1195, 0.0
  %v1200 = vmax.f32 %v1196, 0.0
  %v1201 = vpack.c.bf16 %v1197, %v1197
  %v1202 = vpack.c.bf16 %v1198, %v1198
  %v1203 = vpack.c.bf16 %v1199, %v1199
  %v1204 = vpack.c.bf16 %v1200, %v1200
  %v1209 = vunpack.c.l.b16 %v1201
  %v1210 = vunpack.c.l.b16 %v1202
  %v1211 = vunpack.c.l.b16 %v1203
  %v1212 = vunpack.c.l.b16 %v1204
  %v1213 = vpack.c.b16 %v1210, %v1209
  %v1214 = vpack.c.b16 %v1212, %v1211
  %1217 = vst [vmem:[%s8] sm:$0xff] %v1213
  %1218 = vst [vmem:[%s8 + $0x8] sm:$0xff] %v1214
  // Predicated region
  $region34: #{forward.72} parent=0 // pred_check
    _
  $region35: #{forward.72} parent=0 // pred_check_branch
    %1220 = sbr.rel (0) target = $region37
  $region36: #{forward.72} parent=0 // pred_region
    _
  $region37: #{forward.72} parent=0 // pred_fallthru
    _
  // Predicated region
  $region38: #{forward.72} parent=0 // pred_check
    _
  $region39: #{forward.72} parent=0 // pred_check_branch
    %1222 = sbr.rel (0) target = $region41
  $region40: #{forward.72} parent=0 // pred_region
    _
  $region41: #{forward.72} parent=0 // pred_fallthru
    _

// kernel: forward.77
$region0: #{forward.77}
  #allocation0 [shape = 'u32[]', space=smem, size = 0x4, offset = 0x4, fixed_abs, tag = 'smem constant byte address 0x4 - core index']
  #allocation1 [shape = 'u32[144,128]{1,0:T(1,128)}', space=vmem, size = 0x12000, scoped, tag = 'internal scratch']
  %s0 = inlined_call_operand.vmem [shape: bf16[8,512], index: 0, kind: input, shape index: {}]
  %s1 = inlined_call_operand.vmem [shape: bf16[512,128], index: 1, kind: input, shape index: {}]
  %s2 = inlined_call_operand.vmem [shape: f32[1,128], index: 2, kind: input, shape index: {}]
  %s3 = inlined_call_operand.vmem [shape: f32[1,128], index: 3, kind: input, shape index: {}]
  %s4 = inlined_call_operand.vmem [shape: f32[8,128], index: 4, kind: output, shape index: {}]
  %s5 = sld [smem:[#allocation0]]
  $region26: #{forward.77} parent=0
    _
  %s7 = ssub.s32 1, %s5
  %s8 = scalar_select 0, %s7, %s5
  // Predicated region
  $region2: #{forward.77} parent=0 // pred_check
    _
  $region3: #{forward.77} parent=0 // pred_check_branch
    %10 = sbr.rel (0) target = $region5
  $region4: #{forward.77} parent=0 // pred_region
    _
  $region5: #{forward.77} parent=0 // pred_fallthru
    _
  // Predicated region
  $region6: #{forward.77} parent=0 // pred_check
    _
  $region7: #{forward.77} parent=0 // pred_check_branch
    %12 = sbr.rel (0) target = $region9
  $region8: #{forward.77} parent=0 // pred_region
    _
  $region9: #{forward.77} parent=0 // pred_fallthru
    _
  // Predicated region
  $region10: #{forward.77} parent=0 // pred_check
    _
  $region11: #{forward.77} parent=0 // pred_check_branch
    %14 = sbr.rel (0) target = $region13
  $region12: #{forward.77} parent=0 // pred_region
    _
  $region13: #{forward.77} parent=0 // pred_fallthru
    _
  // Predicated region
  $region14: #{forward.77} parent=0 // pred_check
    _
  $region15: #{forward.77} parent=0 // pred_check_branch
    %16 = sbr.rel (0) target = $region17
  $region16: #{forward.77} parent=0 // pred_region
    _
  $region17: #{forward.77} parent=0 // pred_fallthru
    _
  %v18 = vld [vmem:[%s0] sm:$0xff]
  %v19 = vld [vmem:[%s0 + $0x8] sm:$0xff]
  %v20 = vld [vmem:[%s1] sm:$0xf]
  %v21 = vld [vmem:[%s1 + $0x4] sm:$0xf]
  %v22 = vld [vmem:[%s1 + $0x8] sm:$0xf]
  %v23 = vld [vmem:[%s1 + $0xc] sm:$0xf]
  %v24 = vld [vmem:[%s1 + $0x10] sm:$0xf]
  %v25 = vld [vmem:[%s1 + $0x14] sm:$0xf]
  %v26 = vld [vmem:[%s1 + $0x18] sm:$0xf]
  %v27 = vld [vmem:[%s1 + $0x1c] sm:$0xf]
  %v28 = vld [vmem:[%s1 + $0x20] sm:$0xf]
  %v29 = vld [vmem:[%s1 + $0x24] sm:$0xf]
  %v30 = vld [vmem:[%s1 + $0x28] sm:$0xf]
  %v31 = vld [vmem:[%s1 + $0x2c] sm:$0xf]
  %v32 = vld [vmem:[%s1 + $0x30] sm:$0xf]
  %v33 = vld [vmem:[%s1 + $0x34] sm:$0xf]
  %v34 = vld [vmem:[%s1 + $0x38] sm:$0xf]
  %v35 = vld [vmem:[%s1 + $0x3c] sm:$0xf]
  %v36 = vld [vmem:[%s1 + $0x40] sm:$0xf]
  %v37 = vld [vmem:[%s1 + $0x44] sm:$0xf]
  %v38 = vld [vmem:[%s1 + $0x48] sm:$0xf]
  %v39 = vld [vmem:[%s1 + $0x4c] sm:$0xf]
  %v40 = vld [vmem:[%s1 + $0x50] sm:$0xf]
  %v41 = vld [vmem:[%s1 + $0x54] sm:$0xf]
  %v42 = vld [vmem:[%s1 + $0x58] sm:$0xf]
  %v43 = vld [vmem:[%s1 + $0x5c] sm:$0xf]
  %v44 = vld [vmem:[%s1 + $0x60] sm:$0xf]
  %v45 = vld [vmem:[%s1 + $0x64] sm:$0xf]
  %v46 = vld [vmem:[%s1 + $0x68] sm:$0xf]
  %v47 = vld [vmem:[%s1 + $0x6c] sm:$0xf]
  %v48 = vld [vmem:[%s1 + $0x70] sm:$0xf]
  %v49 = vld [vmem:[%s1 + $0x74] sm:$0xf]
  %v50 = vld [vmem:[%s1 + $0x78] sm:$0xf]
  %v51 = vld [vmem:[%s1 + $0x7c] sm:$0xf]
  %v52 = vld [vmem:[%s1 + $0x80] sm:$0xf]
  %v53 = vld [vmem:[%s1 + $0x84] sm:$0xf]
  %v54 = vld [vmem:[%s1 + $0x88] sm:$0xf]
  %v55 = vld [vmem:[%s1 + $0x8c] sm:$0xf]
  %v56 = vld [vmem:[%s1 + $0x90] sm:$0xf]
  %v57 = vld [vmem:[%s1 + $0x94] sm:$0xf]
  %v58 = vld [vmem:[%s1 + $0x98] sm:$0xf]
  %v59 = vld [vmem:[%s1 + $0x9c] sm:$0xf]
  %v60 = vld [vmem:[%s1 + $0xa0] sm:$0xf]
  %v61 = vld [vmem:[%s1 + $0xa4] sm:$0xf]
  %v62 = vld [vmem:[%s1 + $0xa8] sm:$0xf]
  %v63 = vld [vmem:[%s1 + $0xac] sm:$0xf]
  %v64 = vld [vmem:[%s1 + $0xb0] sm:$0xf]
  %v65 = vld [vmem:[%s1 + $0xb4] sm:$0xf]
  %v66 = vld [vmem:[%s1 + $0xb8] sm:$0xf]
  %v67 = vld [vmem:[%s1 + $0xbc] sm:$0xf]
  %v68 = vld [vmem:[%s1 + $0xc0] sm:$0xf]
  %v69 = vld [vmem:[%s1 + $0xc4] sm:$0xf]
  %v70 = vld [vmem:[%s1 + $0xc8] sm:$0xf]
  %v71 = vld [vmem:[%s1 + $0xcc] sm:$0xf]
  %v72 = vld [vmem:[%s1 + $0xd0] sm:$0xf]
  %v73 = vld [vmem:[%s1 + $0xd4] sm:$0xf]
  %v74 = vld [vmem:[%s1 + $0xd8] sm:$0xf]
  %v75 = vld [vmem:[%s1 + $0xdc] sm:$0xf]
  %v76 = vld [vmem:[%s1 + $0xe0] sm:$0xf]
  %v77 = vld [vmem:[%s1 + $0xe4] sm:$0xf]
  %v78 = vld [vmem:[%s1 + $0xe8] sm:$0xf]
  %v79 = vld [vmem:[%s1 + $0xec] sm:$0xf]
  %v80 = vld [vmem:[%s1 + $0xf0] sm:$0xf]
  %v81 = vld [vmem:[%s1 + $0xf4] sm:$0xf]
  %v82 = vld [vmem:[%s1 + $0xf8] sm:$0xf]
  %v83 = vld [vmem:[%s1 + $0xfc] sm:$0xf]
  %v86 = vunpack.c.l.b16 %v18
  %v87 = vunpack.c.h.b16 %v18
  %v88 = vunpack.c.l.b16 %v19
  %v89 = vunpack.c.h.b16 %v19
  %v90 = vpack.c.b16 %v86, %v86
  %v91 = vpack.c.b16 %v87, %v87
  %v92 = vpack.c.b16 %v88, %v88
  %v93 = vpack.c.b16 %v89, %v89
  %v162 = vunpack.c.l.b16 %v20
  %v163 = vunpack.c.l.b16 %v21
  %v164 = vunpack.c.l.b16 %v22
  %v165 = vunpack.c.l.b16 %v23
  %v166 = vunpack.c.l.b16 %v24
  %v167 = vunpack.c.l.b16 %v25
  %v168 = vunpack.c.l.b16 %v26
  %v169 = vunpack.c.l.b16 %v27
  %v170 = vunpack.c.l.b16 %v28
  %v171 = vunpack.c.l.b16 %v29
  %v172 = vunpack.c.l.b16 %v30
  %v173 = vunpack.c.l.b16 %v31
  %v174 = vunpack.c.l.b16 %v32
  %v175 = vunpack.c.l.b16 %v33
  %v176 = vunpack.c.l.b16 %v34
  %v177 = vunpack.c.l.b16 %v35
  %v178 = vunpack.c.l.b16 %v36
  %v179 = vunpack.c.l.b16 %v37
  %v180 = vunpack.c.l.b16 %v38
  %v181 = vunpack.c.l.b16 %v39
  %v182 = vunpack.c.l.b16 %v40
  %v183 = vunpack.c.l.b16 %v41
  %v184 = vunpack.c.l.b16 %v42
  %v185 = vunpack.c.l.b16 %v43
  %v186 = vunpack.c.l.b16 %v44
  %v187 = vunpack.c.l.b16 %v45
  %v188 = vunpack.c.l.b16 %v46
  %v189 = vunpack.c.l.b16 %v47
  %v190 = vunpack.c.l.b16 %v48
  %v191 = vunpack.c.l.b16 %v49
  %v192 = vunpack.c.l.b16 %v50
  %v193 = vunpack.c.l.b16 %v51
  %v194 = vunpack.c.l.b16 %v52
  %v195 = vunpack.c.l.b16 %v53
  %v196 = vunpack.c.l.b16 %v54
  %v197 = vunpack.c.l.b16 %v55
  %v198 = vunpack.c.l.b16 %v56
  %v199 = vunpack.c.l.b16 %v57
  %v200 = vunpack.c.l.b16 %v58
  %v201 = vunpack.c.l.b16 %v59
  %v202 = vunpack.c.l.b16 %v60
  %v203 = vunpack.c.l.b16 %v61
  %v204 = vunpack.c.l.b16 %v62
  %v205 = vunpack.c.l.b16 %v63
  %v206 = vunpack.c.l.b16 %v64
  %v207 = vunpack.c.l.b16 %v65
  %v208 = vunpack.c.l.b16 %v66
  %v209 = vunpack.c.l.b16 %v67
  %v210 = vunpack.c.l.b16 %v68
  %v211 = vunpack.c.l.b16 %v69
  %v212 = vunpack.c.l.b16 %v70
  %v213 = vunpack.c.l.b16 %v71
  %v214 = vunpack.c.l.b16 %v72
  %v215 = vunpack.c.l.b16 %v73
  %v216 = vunpack.c.l.b16 %v74
  %v217 = vunpack.c.l.b16 %v75
  %v218 = vunpack.c.l.b16 %v76
  %v219 = vunpack.c.l.b16 %v77
  %v220 = vunpack.c.l.b16 %v78
  %v221 = vunpack.c.l.b16 %v79
  %v222 = vunpack.c.l.b16 %v80
  %v223 = vunpack.c.l.b16 %v81
  %v224 = vunpack.c.l.b16 %v82
  %v225 = vunpack.c.l.b16 %v83
  %v226 = vpack.c.b16 %v163, %v162
  %v227 = vpack.c.b16 %v165, %v164
  %v228 = vpack.c.b16 %v167, %v166
  %v229 = vpack.c.b16 %v169, %v168
  %v230 = vpack.c.b16 %v171, %v170
  %v231 = vpack.c.b16 %v173, %v172
  %v232 = vpack.c.b16 %v175, %v174
  %v233 = vpack.c.b16 %v177, %v176
  %v234 = vpack.c.b16 %v179, %v178
  %v235 = vpack.c.b16 %v181, %v180
  %v236 = vpack.c.b16 %v183, %v182
  %v237 = vpack.c.b16 %v185, %v184
  %v238 = vpack.c.b16 %v187, %v186
  %v239 = vpack.c.b16 %v189, %v188
  %v240 = vpack.c.b16 %v191, %v190
  %v241 = vpack.c.b16 %v193, %v192
  %v242 = vpack.c.b16 %v195, %v194
  %v243 = vpack.c.b16 %v197, %v196
  %v244 = vpack.c.b16 %v199, %v198
  %v245 = vpack.c.b16 %v201, %v200
  %v246 = vpack.c.b16 %v203, %v202
  %v247 = vpack.c.b16 %v205, %v204
  %v248 = vpack.c.b16 %v207, %v206
  %v249 = vpack.c.b16 %v209, %v208
  %v250 = vpack.c.b16 %v211, %v210
  %v251 = vpack.c.b16 %v213, %v212
  %v252 = vpack.c.b16 %v215, %v214
  %v253 = vpack.c.b16 %v217, %v216
  %v254 = vpack.c.b16 %v219, %v218
  %v255 = vpack.c.b16 %v221, %v220
  %v256 = vpack.c.b16 %v223, %v222
  %v257 = vpack.c.b16 %v225, %v224
  %290 = vmatprep.subr.bf16.mxu0 0
  %291 = vmatpush1.bf16.msra.mxu0 %v233
  %292 = vmatprep.subr.bf16.mxu0 0
  %293 = vmatpush1.bf16.msra.mxu0 %v232
  %294 = vmatprep.subr.bf16.mxu0 0
  %295 = vmatpush1.bf16.msra.mxu0 %v231
  %296 = vmatprep.subr.bf16.mxu0 0
  %297 = vmatpush1.bf16.msra.mxu0 %v230
  %298 = vmatprep.subr.bf16.mxu0 0
  %299 = vmatpush1.bf16.msra.mxu0 %v229
  %300 = vmatprep.subr.bf16.mxu0 0
  %301 = vmatpush1.bf16.msra.mxu0 %v228
  %302 = vmatprep.subr.bf16.mxu0 0
  %303 = vmatpush1.bf16.msra.mxu0 %v227
  %304 = vmatprep.subr.bf16.mxu0 0
  %305 = vmatpush1.bf16.msra.mxu0 %v226
  %306 = vmatprep.subr.bf16.mxu0 0
  %307 = vmatpush2.bf16.msra.mxu0 %v241
  %308 = vmatprep.subr.bf16.mxu0 0
  %309 = vmatpush2.bf16.msra.mxu0 %v240
  %310 = vmatprep.subr.bf16.mxu0 0
  %311 = vmatpush2.bf16.msra.mxu0 %v239
  %312 = vmatprep.subr.bf16.mxu0 0
  %313 = vmatpush2.bf16.msra.mxu0 %v238
  %314 = vmatprep.subr.bf16.mxu0 0
  %315 = vmatpush2.bf16.msra.mxu0 %v237
  %316 = vmatprep.subr.bf16.mxu0 0
  %317 = vmatpush2.bf16.msra.mxu0 %v236
  %318 = vmatprep.subr.bf16.mxu0 0
  %319 = vmatpush2.bf16.msra.mxu0 %v235
  %320 = vmatprep.subr.bf16.mxu0 0
  %321 = vmatpush2.bf16.msra.mxu0 %v234
  %322 = vmatprep.mubr.bf16.mxu0 %v91
  %323 = vmatmul.mubr.bf16.gmra.mxu0 %v90
  %v324 = vpop.f32.mrf.mxu0
  %v325 = vadd.f32 0.0, %v324
  %v326 = vpop.f32.mrf.mxu0
  %v327 = vpop.f32.mrf.mxu0
  %v328 = vpop.f32.mrf.mxu0
  %329 = vdwg.mxu0
  %330 = vmatprep.subr.bf16.mxu0 0
  %331 = vmatpush1.bf16.msra.mxu0 %v249
  %332 = vmatprep.subr.bf16.mxu0 0
  %333 = vmatpush1.bf16.msra.mxu0 %v248
  %334 = vmatprep.subr.bf16.mxu0 0
  %335 = vmatpush1.bf16.msra.mxu0 %v247
  %336 = vmatprep.subr.bf16.mxu0 0
  %337 = vmatpush1.bf16.msra.mxu0 %v246
  %338 = vmatprep.subr.bf16.mxu0 0
  %339 = vmatpush1.bf16.msra.mxu0 %v245
  %340 = vmatprep.subr.bf16.mxu0 0
  %341 = vmatpush1.bf16.msra.mxu0 %v244
  %342 = vmatprep.subr.bf16.mxu0 0
  %343 = vmatpush1.bf16.msra.mxu0 %v243
  %344 = vmatprep.subr.bf16.mxu0 0
  %345 = vmatpush1.bf16.msra.mxu0 %v242
  %346 = vmatprep.subr.bf16.mxu0 0
  %347 = vmatpush2.bf16.msra.mxu0 %v257
  %348 = vmatprep.subr.bf16.mxu0 0
  %349 = vmatpush2.bf16.msra.mxu0 %v256
  %350 = vmatprep.subr.bf16.mxu0 0
  %351 = vmatpush2.bf16.msra.mxu0 %v255
  %352 = vmatprep.subr.bf16.mxu0 0
  %353 = vmatpush2.bf16.msra.mxu0 %v254
  %354 = vmatprep.subr.bf16.mxu0 0
  %355 = vmatpush2.bf16.msra.mxu0 %v253
  %356 = vmatprep.subr.bf16.mxu0 0
  %357 = vmatpush2.bf16.msra.mxu0 %v252
  %358 = vmatprep.subr.bf16.mxu0 0
  %359 = vmatpush2.bf16.msra.mxu0 %v251
  %360 = vmatprep.subr.bf16.mxu0 0
  %361 = vmatpush2.bf16.msra.mxu0 %v250
  %362 = vmatprep.mubr.bf16.mxu0 %v93
  %363 = vmatmul.mubr.bf16.gmra.mxu0 %v92
  %v364 = vpop.f32.mrf.mxu0
  %v365 = vadd.f32 %v325, %v364
  %v366 = vpop.f32.mrf.mxu0
  %v367 = vpop.f32.mrf.mxu0
  %v368 = vpop.f32.mrf.mxu0
  %369 = vdwg.mxu0
  %v370 = vld [vmem:[%s2] sm:$0x1]
  %v372 = vlaneseq
  %v373 = vshrl.u32 %v372, 7
  %v374 = vsub.s32 0, %v373
  %v375 = vrot.slane %v370, %v374
  %v377 = vmul.f32 %v365, %v375
  %v378 = vld [vmem:[%s3] sm:$0x1]
  %v380 = vlaneseq
  %v381 = vshrl.u32 %v380, 7
  %v382 = vsub.s32 0, %v381
  %v383 = vrot.slane %v378, %v382
  %v385 = vadd.f32 %v377, %v383
  %386 = vst [vmem:[%s4] sm:$0xff] %v385
  // Predicated region
  $region18: #{forward.77} parent=0 // pred_check
    _
  $region19: #{forward.77} parent=0 // pred_check_branch
    %388 = sbr.rel (0) target = $region21
  $region20: #{forward.77} parent=0 // pred_region
    _
  $region21: #{forward.77} parent=0 // pred_fallthru
    _
  // Predicated region
  $region22: #{forward.77} parent=0 // pred_check
    _
  $region23: #{forward.77} parent=0 // pred_check_branch
    %390 = sbr.rel (0) target = $region25
  $region24: #{forward.77} parent=0 // pred_region
    _
  $region25: #{forward.77} parent=0 // pred_fallthru
    _

</llo_original>
